<compile_context>
chip_gen: v7x
topology: tpu7x:2x2x1
jax: 0.10.0
libtpu: 0.0.40
codegen_flags: <defaults>
</compile_context>

<pallas_src>
import jax
import jax.numpy as jnp
from jax import lax
from jax.experimental import pallas as pl
from jax.experimental.pallas import tpu as pltpu

EPS = 1e-12    # F.normalize epsilon
LANE = 128     # TPU lane width
N_LAYERS = 5


def _round_up(x, m):
    return (x + m - 1) // m * m


def _pad_to(x, shape):
    return jnp.pad(x, [(0, t - s) for s, t in zip(x.shape, shape)])


# ---------------------------------------------------------------------------
# Fused kernel: both branches, gc1..gc5, batched MLP head, score1*score2.
# ---------------------------------------------------------------------------
def gnn_bet_fused_kernel(adj1_ref, adj2_ref,
                         w1_ref, w2_ref, w3_ref, w4_ref, w5_ref,
                         mw1_ref, mb1_ref, mw2_ref, mb2_ref, mw3_ref, mb3_ref,
                         out_ref, xs_ref):
    n = adj1_ref.shape[0]

    adj1 = adj1_ref[...]                                             # (N, N) f32
    adj2 = adj2_ref[...]

    def normalize(h):
        # F.normalize(h, p=2, dim=1) == h * rsqrt(max(sum(h^2), eps^2))
        sumsq = jnp.sum(h * h, axis=1, keepdims=True)
        return h * lax.rsqrt(jnp.maximum(sumsq, EPS * EPS))

    def gcn(adj, x, w_ref):
        # GNN_Layer: relu(adj @ (x @ W))  (original association -> matches reference)
        support = jnp.dot(x, w_ref[...], preferred_element_type=jnp.float32)
        h = jnp.dot(adj, support, preferred_element_type=jnp.float32)
        return jnp.maximum(h, 0.0)

    def stash(layer, x1, x2):
        # Slab layout (branch-major): branch1 layers at rows [0, 5N), branch2 at [5N, 10N).
        xs_ref[pl.ds(layer * n, n), :] = x1
        xs_ref[pl.ds((N_LAYERS + layer) * n, n), :] = x2

    # gc1 (GNN_Layer_Init): relu(adj @ W1), then row-L2 normalize.
    x1 = normalize(jnp.maximum(
        jnp.dot(adj1, w1_ref[...], preferred_element_type=jnp.float32), 0.0))
    x2 = normalize(jnp.maximum(
        jnp.dot(adj2, w1_ref[...], preferred_element_type=jnp.float32), 0.0))
    stash(0, x1, x2)

    # gc2..gc4: relu + normalize.
    for layer, w_ref in enumerate((w2_ref, w3_ref, w4_ref), start=1):
        x1 = normalize(gcn(adj1, x1, w_ref))
        x2 = normalize(gcn(adj2, x2, w_ref))
        stash(layer, x1, x2)

    # gc5: relu only, no normalize.
    x1 = gcn(adj1, x1, w5_ref)
    x2 = gcn(adj2, x2, w5_ref)
    stash(N_LAYERS - 1, x1, x2)

    # Batched MLP head over all 10 (layer, branch) activations: 2 tall matmuls.
    xs = xs_ref[...]                                                 # (10N, nh_p)
    h = jnp.dot(xs, mw1_ref[...], preferred_element_type=jnp.float32) + mb1_ref[...]
    h = jnp.maximum(h, 0.0)
    h = jnp.dot(h, mw2_ref[...], preferred_element_type=jnp.float32) + mb2_ref[...]
    h = jnp.maximum(h, 0.0)                                          # (10N, nh2_p)

    # Deferred final projection: sum post-ReLU hidden over the 5 layers per branch,
    # then apply mw3 once per branch (exact: last MLP layer is linear).
    hsum1 = h[0:n]
    hsum2 = h[N_LAYERS * n:(N_LAYERS + 1) * n]
    for layer in range(1, N_LAYERS):
        hsum1 = hsum1 + h[layer * n:(layer + 1) * n]
        hsum2 = hsum2 + h[(N_LAYERS + layer) * n:(N_LAYERS + layer + 1) * n]

    mb3 = mb3_ref[0, 0]                                              # SMEM scalar
    score1 = jnp.dot(hsum1, mw3_ref[...], preferred_element_type=jnp.float32) + N_LAYERS * mb3
    score2 = jnp.dot(hsum2, mw3_ref[...], preferred_element_type=jnp.float32) + N_LAYERS * mb3

    out_ref[...] = score1 * score2                                   # torch.mul(score1, score2)


# ---------------------------------------------------------------------------
# Wrapper: pad weights to lane-dense shapes, one fused pallas_call.
# ---------------------------------------------------------------------------
def gnn_bet_forward(params, adj1, adj2):
    n = adj1.shape[0]
    assert adj1.shape == (n, n) and adj2.shape == (n, n)
    nin, nhid = params["gc1_w"].shape
    assert nin == n, "GNN_Layer_Init consumes adj directly -> ninput must equal N"

    nh_p = _round_up(nhid, LANE)           # hidden width padded to full lanes
    nh2_p = _round_up(2 * nhid, LANE)      # MLP hidden width padded to full lanes

    f32 = jnp.float32
    w1 = _pad_to(params["gc1_w"].astype(f32), (n, nh_p))
    w2 = _pad_to(params["gc2_w"].astype(f32), (nh_p, nh_p))
    w3 = _pad_to(params["gc3_w"].astype(f32), (nh_p, nh_p))
    w4 = _pad_to(params["gc4_w"].astype(f32), (nh_p, nh_p))
    w5 = _pad_to(params["gc5_w"].astype(f32), (nh_p, nh_p))
    mw1 = _pad_to(params["mlp_w1"].astype(f32), (nh_p, nh2_p))
    mb1 = _pad_to(params["mlp_b1"].astype(f32), (1, nh2_p))
    mw2 = _pad_to(params["mlp_w2"].astype(f32), (nh2_p, nh2_p))
    mb2 = _pad_to(params["mlp_b2"].astype(f32), (1, nh2_p))
    mw3 = _pad_to(params["mlp_w3"].astype(f32), (nh2_p, 1))
    mb3 = params["mlp_b3"].astype(f32).reshape(1, 1)

    def full_vmem(shape):
        return pl.BlockSpec(shape, lambda i: (0,) * len(shape))

    out = pl.pallas_call(
        gnn_bet_fused_kernel,
        out_shape=jax.ShapeDtypeStruct((n, 1), jnp.float32),
        grid=(1,),
        in_specs=[
            full_vmem((n, n)), full_vmem((n, n)),            # adj1, adj2
            full_vmem((n, nh_p)),                            # gc1
            full_vmem((nh_p, nh_p)), full_vmem((nh_p, nh_p)),# gc2, gc3
            full_vmem((nh_p, nh_p)), full_vmem((nh_p, nh_p)),# gc4, gc5
            full_vmem((nh_p, nh2_p)), full_vmem((1, nh2_p)), # mlp_w1, mlp_b1
            full_vmem((nh2_p, nh2_p)), full_vmem((1, nh2_p)),# mlp_w2, mlp_b2
            full_vmem((nh2_p, 1)),                           # mlp_w3
            pl.BlockSpec(memory_space=pltpu.MemorySpace.SMEM),  # mlp_b3 scalar
        ],
        out_specs=pl.BlockSpec((n, 1), lambda i: (0, 0)),
        scratch_shapes=[
            pltpu.VMEM((2 * N_LAYERS * n, nh_p), jnp.float32),   # x1..x5 of both branches
        ],
        compiler_params=pltpu.CompilerParams(
            dimension_semantics=("arbitrary",),
        ),
    )(adj1, adj2, w1, w2, w3, w4, w5, mw1, mb1, mw2, mb2, mw3, mb3)

    return out


# ---------------------------------------------------------------------------
# Parameter init (unpadded, PyTorch-module shapes)
# ---------------------------------------------------------------------------
def init_params(key, ninput, nhid):
    ks = jax.random.split(key, 10)
    scale = 0.1
    return {
        "gc1_w": scale * jax.random.normal(ks[0], (ninput, nhid), jnp.float32),
        "gc2_w": scale * jax.random.normal(ks[1], (nhid, nhid), jnp.float32),
        "gc3_w": scale * jax.random.normal(ks[2], (nhid, nhid), jnp.float32),
        "gc4_w": scale * jax.random.normal(ks[3], (nhid, nhid), jnp.float32),
        "gc5_w": scale * jax.random.normal(ks[4], (nhid, nhid), jnp.float32),
        # MLP: Linear(nhid, 2*nhid) -> Linear(2*nhid, 2*nhid) -> Linear(2*nhid, 1)
        "mlp_w1": scale * jax.random.normal(ks[5], (nhid, 2 * nhid), jnp.float32),
        "mlp_b1": scale * jax.random.normal(ks[6], (1, 2 * nhid), jnp.float32),
        "mlp_w2": scale * jax.random.normal(ks[7], (2 * nhid, 2 * nhid), jnp.float32),
        "mlp_b2": scale * jax.random.normal(ks[8], (1, 2 * nhid), jnp.float32),
        "mlp_w3": scale * jax.random.normal(ks[9], (2 * nhid, 1), jnp.float32),
        "mlp_b3": scale * jax.random.normal(jax.random.fold_in(key, 99), (1, 1), jnp.float32),
    }


# ---------------------------------------------------------------------------
# Pure-JAX reference (original PyTorch semantics) for correctness check
# ---------------------------------------------------------------------------
def gnn_bet_reference(params, adj1, adj2):
    def norm(h):
        return h / jnp.maximum(jnp.sqrt(jnp.sum(h * h, axis=1, keepdims=True)), EPS)

    def mlp(x):
        h = jnp.maximum(x @ params["mlp_w1"] + params["mlp_b1"], 0.0)
        h = jnp.maximum(h @ params["mlp_w2"] + params["mlp_b2"], 0.0)
        return h @ params["mlp_w3"] + params["mlp_b3"]

    def branch(adj):
        x1 = norm(jnp.maximum(adj @ params["gc1_w"], 0.0))
        x2 = norm(jnp.maximum(adj @ (x1 @ params["gc2_w"]), 0.0))
        x3 = norm(jnp.maximum(adj @ (x2 @ params["gc3_w"]), 0.0))
        x4 = norm(jnp.maximum(adj @ (x3 @ params["gc4_w"]), 0.0))
        x5 = jnp.maximum(adj @ (x4 @ params["gc5_w"]), 0.0)
        return mlp(x1) + mlp(x2) + mlp(x3) + mlp(x4) + mlp(x5)

    return branch(adj1) * branch(adj2)


if __name__ == "__main__":
    N = 128        # number of nodes == ninput (gc1 weight is (ninput, nhid))
    NHID = 32
    DROPOUT = 0.5  # unused at inference (eval mode)

    key = jax.random.PRNGKey(0)
    k_adj1, k_adj2, k_params = jax.random.split(key, 3)

    # Dense "normalized adjacency"-like inputs (non-negative, scaled).
    adj1 = jax.random.uniform(k_adj1, (N, N), jnp.float32) / N
    adj2 = jax.random.uniform(k_adj2, (N, N), jnp.float32) / N

    params = init_params(k_params, N, NHID)

    fwd = jax.jit(gnn_bet_forward)
    out = jax.block_until_ready(fwd(params, adj1, adj2))
    ref = jax.block_until_ready(gnn_bet_reference(params, adj1, adj2))

    assert out.shape == (N, 1), out.shape
    assert jnp.allclose(out, ref, rtol=1e-5, atol=1e-5), (
        float(jnp.max(jnp.abs(out - ref))))
    print("KERNEL_OK")
</pallas_src>

<mosaic_0001>
module attributes {stable_mosaic.version = 11 : i64} {
  func.func @gnn_bet_fused_kernel(%arg0: i32, %arg1: memref<128x128xf32, #tpu.memory_space<vmem>>, %arg2: memref<128x128xf32, #tpu.memory_space<vmem>>, %arg3: memref<128x128xf32, #tpu.memory_space<vmem>>, %arg4: memref<128x128xf32, #tpu.memory_space<vmem>>, %arg5: memref<128x128xf32, #tpu.memory_space<vmem>>, %arg6: memref<128x128xf32, #tpu.memory_space<vmem>>, %arg7: memref<128x128xf32, #tpu.memory_space<vmem>>, %arg8: memref<128x128xf32, #tpu.memory_space<vmem>>, %arg9: memref<1x128xf32, #tpu.memory_space<vmem>>, %arg10: memref<128x128xf32, #tpu.memory_space<vmem>>, %arg11: memref<1x128xf32, #tpu.memory_space<vmem>>, %arg12: memref<128x1xf32, #tpu.memory_space<vmem>>, %arg13: memref<1x1xf32, #tpu.memory_space<smem>>, %arg14: memref<128x1xf32, #tpu.memory_space<vmem>>, %arg15: memref<1280x128xf32, #tpu.memory_space<vmem>>) attributes {dimension_semantics = [#tpu.dimension_semantics<arbitrary>], iteration_bounds = array<i64: 1>, scalar_prefetch = 0 : i64, scratch_operands = 1 : i64, tpu.core_type = #tpu.core_type<tc>, window_params = [{pipeline_mode = #tpu.pipeline_mode<synchronous>, transform_indices = @transform_0, window_bounds = array<i64: 128, 128>}, {pipeline_mode = #tpu.pipeline_mode<synchronous>, transform_indices = @transform_1, window_bounds = array<i64: 128, 128>}, {pipeline_mode = #tpu.pipeline_mode<synchronous>, transform_indices = @transform_2, window_bounds = array<i64: 128, 128>}, {pipeline_mode = #tpu.pipeline_mode<synchronous>, transform_indices = @transform_3, window_bounds = array<i64: 128, 128>}, {pipeline_mode = #tpu.pipeline_mode<synchronous>, transform_indices = @transform_4, window_bounds = array<i64: 128, 128>}, {pipeline_mode = #tpu.pipeline_mode<synchronous>, transform_indices = @transform_5, window_bounds = array<i64: 128, 128>}, {pipeline_mode = #tpu.pipeline_mode<synchronous>, transform_indices = @transform_6, window_bounds = array<i64: 128, 128>}, {pipeline_mode = #tpu.pipeline_mode<synchronous>, transform_indices = @transform_7, window_bounds = array<i64: 128, 128>}, {pipeline_mode = #tpu.pipeline_mode<synchronous>, transform_indices = @transform_8, window_bounds = array<i64: 1, 128>}, {pipeline_mode = #tpu.pipeline_mode<synchronous>, transform_indices = @transform_9, window_bounds = array<i64: 128, 128>}, {pipeline_mode = #tpu.pipeline_mode<synchronous>, transform_indices = @transform_10, window_bounds = array<i64: 1, 128>}, {pipeline_mode = #tpu.pipeline_mode<synchronous>, transform_indices = @transform_11, window_bounds = array<i64: 128, 1>}, {transform_indices = @transform_12, window_bounds = array<i64: 1, 1>}, {pipeline_mode = #tpu.pipeline_mode<synchronous>, transform_indices = @transform_13, window_bounds = array<i64: 128, 1>}]} {
    %c0 = arith.constant 0 : index
    %c0_0 = arith.constant 0 : index
    %0 = vector.load %arg1[%c0, %c0_0] : memref<128x128xf32, #tpu.memory_space<vmem>>, vector<128x128xf32>
    %c0_1 = arith.constant 0 : index
    %c0_2 = arith.constant 0 : index
    %1 = vector.load %arg2[%c0_1, %c0_2] : memref<128x128xf32, #tpu.memory_space<vmem>>, vector<128x128xf32>
    %c0_3 = arith.constant 0 : index
    %c0_4 = arith.constant 0 : index
    %2 = vector.load %arg3[%c0_3, %c0_4] : memref<128x128xf32, #tpu.memory_space<vmem>>, vector<128x128xf32>
    %cst = arith.constant dense<0.000000e+00> : vector<128x128xf32>
    %3 = tpu.matmul %0, %2, %cst {dimension_numbers = #tpu.dot_dimension_numbers<[1], [0], [0], [1], [0, 0, 1, 1], [], []>} : vector<128x128xf32>, vector<128x128xf32>, vector<128x128xf32> -> vector<128x128xf32>
    %cst_5 = arith.constant 0.000000e+00 : f32
    %4 = vector.broadcast %cst_5 : f32 to vector<128x128xf32>
    %5 = arith.maximumf %3, %4 : vector<128x128xf32>
    %6 = arith.mulf %5, %5 : vector<128x128xf32>
    %cst_6 = arith.constant dense<0.000000e+00> : vector<128xf32>
    %7 = vector.multi_reduction <add>, %6, %cst_6 [1] : vector<128x128xf32> to vector<128xf32>
    %8 = vector.shape_cast %7 : vector<128xf32> to vector<128x1xf32>
    %cst_7 = arith.constant 1.000000e-24 : f32
    %9 = vector.broadcast %cst_7 : f32 to vector<128x1xf32>
    %10 = arith.maximumf %8, %9 : vector<128x1xf32>
    %11 = math.rsqrt %10 : vector<128x1xf32>
    %12 = vector.broadcast %11 : vector<128x1xf32> to vector<128x128xf32>
    %13 = arith.mulf %5, %12 : vector<128x128xf32>
    %c0_8 = arith.constant 0 : index
    %c0_9 = arith.constant 0 : index
    %14 = vector.load %arg3[%c0_8, %c0_9] : memref<128x128xf32, #tpu.memory_space<vmem>>, vector<128x128xf32>
    %cst_10 = arith.constant dense<0.000000e+00> : vector<128x128xf32>
    %15 = tpu.matmul %1, %14, %cst_10 {dimension_numbers = #tpu.dot_dimension_numbers<[1], [0], [0], [1], [0, 0, 1, 1], [], []>} : vector<128x128xf32>, vector<128x128xf32>, vector<128x128xf32> -> vector<128x128xf32>
    %cst_11 = arith.constant 0.000000e+00 : f32
    %16 = vector.broadcast %cst_11 : f32 to vector<128x128xf32>
    %17 = arith.maximumf %15, %16 : vector<128x128xf32>
    %18 = arith.mulf %17, %17 : vector<128x128xf32>
    %cst_12 = arith.constant dense<0.000000e+00> : vector<128xf32>
    %19 = vector.multi_reduction <add>, %18, %cst_12 [1] : vector<128x128xf32> to vector<128xf32>
    %20 = vector.shape_cast %19 : vector<128xf32> to vector<128x1xf32>
    %cst_13 = arith.constant 1.000000e-24 : f32
    %21 = vector.broadcast %cst_13 : f32 to vector<128x1xf32>
    %22 = arith.maximumf %20, %21 : vector<128x1xf32>
    %23 = math.rsqrt %22 : vector<128x1xf32>
    %24 = vector.broadcast %23 : vector<128x1xf32> to vector<128x128xf32>
    %25 = arith.mulf %17, %24 : vector<128x128xf32>
    %c0_14 = arith.constant 0 : index
    %c0_15 = arith.constant 0 : index
    %26 = vector.load %arg15[%c0_14, %c0_15] : memref<1280x128xf32, #tpu.memory_space<vmem>>, vector<128x128xf32>
    tpu.vector_store %arg15[%c0_14, %c0_15], %13 {strides = array<i32>} : memref<1280x128xf32, #tpu.memory_space<vmem>>, vector<128x128xf32>,
    %c640 = arith.constant 640 : index
    %c0_16 = arith.constant 0 : index
    %27 = vector.load %arg15[%c640, %c0_16] : memref<1280x128xf32, #tpu.memory_space<vmem>>, vector<128x128xf32>
    tpu.vector_store %arg15[%c640, %c0_16], %25 {strides = array<i32>} : memref<1280x128xf32, #tpu.memory_space<vmem>>, vector<128x128xf32>,
    %c0_17 = arith.constant 0 : index
    %c0_18 = arith.constant 0 : index
    %28 = vector.load %arg4[%c0_17, %c0_18] : memref<128x128xf32, #tpu.memory_space<vmem>>, vector<128x128xf32>
    %cst_19 = arith.constant dense<0.000000e+00> : vector<128x128xf32>
    %29 = tpu.matmul %13, %28, %cst_19 {dimension_numbers = #tpu.dot_dimension_numbers<[1], [0], [0], [1], [0, 0, 1, 1], [], []>} : vector<128x128xf32>, vector<128x128xf32>, vector<128x128xf32> -> vector<128x128xf32>
    %cst_20 = arith.constant dense<0.000000e+00> : vector<128x128xf32>
    %30 = tpu.matmul %0, %29, %cst_20 {dimension_numbers = #tpu.dot_dimension_numbers<[1], [0], [0], [1], [0, 0, 1, 1], [], []>} : vector<128x128xf32>, vector<128x128xf32>, vector<128x128xf32> -> vector<128x128xf32>
    %cst_21 = arith.constant 0.000000e+00 : f32
    %31 = vector.broadcast %cst_21 : f32 to vector<128x128xf32>
    %32 = arith.maximumf %30, %31 : vector<128x128xf32>
    %33 = arith.mulf %32, %32 : vector<128x128xf32>
    %cst_22 = arith.constant dense<0.000000e+00> : vector<128xf32>
    %34 = vector.multi_reduction <add>, %33, %cst_22 [1] : vector<128x128xf32> to vector<128xf32>
    %35 = vector.shape_cast %34 : vector<128xf32> to vector<128x1xf32>
    %cst_23 = arith.constant 1.000000e-24 : f32
    %36 = vector.broadcast %cst_23 : f32 to vector<128x1xf32>
    %37 = arith.maximumf %35, %36 : vector<128x1xf32>
    %38 = math.rsqrt %37 : vector<128x1xf32>
    %39 = vector.broadcast %38 : vector<128x1xf32> to vector<128x128xf32>
    %40 = arith.mulf %32, %39 : vector<128x128xf32>
    %c0_24 = arith.constant 0 : index
    %c0_25 = arith.constant 0 : index
    %41 = vector.load %arg4[%c0_24, %c0_25] : memref<128x128xf32, #tpu.memory_space<vmem>>, vector<128x128xf32>
    %cst_26 = arith.constant dense<0.000000e+00> : vector<128x128xf32>
    %42 = tpu.matmul %25, %41, %cst_26 {dimension_numbers = #tpu.dot_dimension_numbers<[1], [0], [0], [1], [0, 0, 1, 1], [], []>} : vector<128x128xf32>, vector<128x128xf32>, vector<128x128xf32> -> vector<128x128xf32>
    %cst_27 = arith.constant dense<0.000000e+00> : vector<128x128xf32>
    %43 = tpu.matmul %1, %42, %cst_27 {dimension_numbers = #tpu.dot_dimension_numbers<[1], [0], [0], [1], [0, 0, 1, 1], [], []>} : vector<128x128xf32>, vector<128x128xf32>, vector<128x128xf32> -> vector<128x128xf32>
    %cst_28 = arith.constant 0.000000e+00 : f32
    %44 = vector.broadcast %cst_28 : f32 to vector<128x128xf32>
    %45 = arith.maximumf %43, %44 : vector<128x128xf32>
    %46 = arith.mulf %45, %45 : vector<128x128xf32>
    %cst_29 = arith.constant dense<0.000000e+00> : vector<128xf32>
    %47 = vector.multi_reduction <add>, %46, %cst_29 [1] : vector<128x128xf32> to vector<128xf32>
    %48 = vector.shape_cast %47 : vector<128xf32> to vector<128x1xf32>
    %cst_30 = arith.constant 1.000000e-24 : f32
    %49 = vector.broadcast %cst_30 : f32 to vector<128x1xf32>
    %50 = arith.maximumf %48, %49 : vector<128x1xf32>
    %51 = math.rsqrt %50 : vector<128x1xf32>
    %52 = vector.broadcast %51 : vector<128x1xf32> to vector<128x128xf32>
    %53 = arith.mulf %45, %52 : vector<128x128xf32>
    %c128 = arith.constant 128 : index
    %c0_31 = arith.constant 0 : index
    %54 = vector.load %arg15[%c128, %c0_31] : memref<1280x128xf32, #tpu.memory_space<vmem>>, vector<128x128xf32>
    tpu.vector_store %arg15[%c128, %c0_31], %40 {strides = array<i32>} : memref<1280x128xf32, #tpu.memory_space<vmem>>, vector<128x128xf32>,
    %c768 = arith.constant 768 : index
    %c0_32 = arith.constant 0 : index
    %55 = vector.load %arg15[%c768, %c0_32] : memref<1280x128xf32, #tpu.memory_space<vmem>>, vector<128x128xf32>
    tpu.vector_store %arg15[%c768, %c0_32], %53 {strides = array<i32>} : memref<1280x128xf32, #tpu.memory_space<vmem>>, vector<128x128xf32>,
    %c0_33 = arith.constant 0 : index
    %c0_34 = arith.constant 0 : index
    %56 = vector.load %arg5[%c0_33, %c0_34] : memref<128x128xf32, #tpu.memory_space<vmem>>, vector<128x128xf32>
    %cst_35 = arith.constant dense<0.000000e+00> : vector<128x128xf32>
    %57 = tpu.matmul %40, %56, %cst_35 {dimension_numbers = #tpu.dot_dimension_numbers<[1], [0], [0], [1], [0, 0, 1, 1], [], []>} : vector<128x128xf32>, vector<128x128xf32>, vector<128x128xf32> -> vector<128x128xf32>
    %cst_36 = arith.constant dense<0.000000e+00> : vector<128x128xf32>
    %58 = tpu.matmul %0, %57, %cst_36 {dimension_numbers = #tpu.dot_dimension_numbers<[1], [0], [0], [1], [0, 0, 1, 1], [], []>} : vector<128x128xf32>, vector<128x128xf32>, vector<128x128xf32> -> vector<128x128xf32>
    %cst_37 = arith.constant 0.000000e+00 : f32
    %59 = vector.broadcast %cst_37 : f32 to vector<128x128xf32>
    %60 = arith.maximumf %58, %59 : vector<128x128xf32>
    %61 = arith.mulf %60, %60 : vector<128x128xf32>
    %cst_38 = arith.constant dense<0.000000e+00> : vector<128xf32>
    %62 = vector.multi_reduction <add>, %61, %cst_38 [1] : vector<128x128xf32> to vector<128xf32>
    %63 = vector.shape_cast %62 : vector<128xf32> to vector<128x1xf32>
    %cst_39 = arith.constant 1.000000e-24 : f32
    %64 = vector.broadcast %cst_39 : f32 to vector<128x1xf32>
    %65 = arith.maximumf %63, %64 : vector<128x1xf32>
    %66 = math.rsqrt %65 : vector<128x1xf32>
    %67 = vector.broadcast %66 : vector<128x1xf32> to vector<128x128xf32>
    %68 = arith.mulf %60, %67 : vector<128x128xf32>
    %c0_40 = arith.constant 0 : index
    %c0_41 = arith.constant 0 : index
    %69 = vector.load %arg5[%c0_40, %c0_41] : memref<128x128xf32, #tpu.memory_space<vmem>>, vector<128x128xf32>
    %cst_42 = arith.constant dense<0.000000e+00> : vector<128x128xf32>
    %70 = tpu.matmul %53, %69, %cst_42 {dimension_numbers = #tpu.dot_dimension_numbers<[1], [0], [0], [1], [0, 0, 1, 1], [], []>} : vector<128x128xf32>, vector<128x128xf32>, vector<128x128xf32> -> vector<128x128xf32>
    %cst_43 = arith.constant dense<0.000000e+00> : vector<128x128xf32>
    %71 = tpu.matmul %1, %70, %cst_43 {dimension_numbers = #tpu.dot_dimension_numbers<[1], [0], [0], [1], [0, 0, 1, 1], [], []>} : vector<128x128xf32>, vector<128x128xf32>, vector<128x128xf32> -> vector<128x128xf32>
    %cst_44 = arith.constant 0.000000e+00 : f32
    %72 = vector.broadcast %cst_44 : f32 to vector<128x128xf32>
    %73 = arith.maximumf %71, %72 : vector<128x128xf32>
    %74 = arith.mulf %73, %73 : vector<128x128xf32>
    %cst_45 = arith.constant dense<0.000000e+00> : vector<128xf32>
    %75 = vector.multi_reduction <add>, %74, %cst_45 [1] : vector<128x128xf32> to vector<128xf32>
    %76 = vector.shape_cast %75 : vector<128xf32> to vector<128x1xf32>
    %cst_46 = arith.constant 1.000000e-24 : f32
    %77 = vector.broadcast %cst_46 : f32 to vector<128x1xf32>
    %78 = arith.maximumf %76, %77 : vector<128x1xf32>
    %79 = math.rsqrt %78 : vector<128x1xf32>
    %80 = vector.broadcast %79 : vector<128x1xf32> to vector<128x128xf32>
    %81 = arith.mulf %73, %80 : vector<128x128xf32>
    %c256 = arith.constant 256 : index
    %c0_47 = arith.constant 0 : index
    %82 = vector.load %arg15[%c256, %c0_47] : memref<1280x128xf32, #tpu.memory_space<vmem>>, vector<128x128xf32>
    tpu.vector_store %arg15[%c256, %c0_47], %68 {strides = array<i32>} : memref<1280x128xf32, #tpu.memory_space<vmem>>, vector<128x128xf32>,
    %c896 = arith.constant 896 : index
    %c0_48 = arith.constant 0 : index
    %83 = vector.load %arg15[%c896, %c0_48] : memref<1280x128xf32, #tpu.memory_space<vmem>>, vector<128x128xf32>
    tpu.vector_store %arg15[%c896, %c0_48], %81 {strides = array<i32>} : memref<1280x128xf32, #tpu.memory_space<vmem>>, vector<128x128xf32>,
    %c0_49 = arith.constant 0 : index
    %c0_50 = arith.constant 0 : index
    %84 = vector.load %arg6[%c0_49, %c0_50] : memref<128x128xf32, #tpu.memory_space<vmem>>, vector<128x128xf32>
    %cst_51 = arith.constant dense<0.000000e+00> : vector<128x128xf32>
    %85 = tpu.matmul %68, %84, %cst_51 {dimension_numbers = #tpu.dot_dimension_numbers<[1], [0], [0], [1], [0, 0, 1, 1], [], []>} : vector<128x128xf32>, vector<128x128xf32>, vector<128x128xf32> -> vector<128x128xf32>
    %cst_52 = arith.constant dense<0.000000e+00> : vector<128x128xf32>
    %86 = tpu.matmul %0, %85, %cst_52 {dimension_numbers = #tpu.dot_dimension_numbers<[1], [0], [0], [1], [0, 0, 1, 1], [], []>} : vector<128x128xf32>, vector<128x128xf32>, vector<128x128xf32> -> vector<128x128xf32>
    %cst_53 = arith.constant 0.000000e+00 : f32
    %87 = vector.broadcast %cst_53 : f32 to vector<128x128xf32>
    %88 = arith.maximumf %86, %87 : vector<128x128xf32>
    %89 = arith.mulf %88, %88 : vector<128x128xf32>
    %cst_54 = arith.constant dense<0.000000e+00> : vector<128xf32>
    %90 = vector.multi_reduction <add>, %89, %cst_54 [1] : vector<128x128xf32> to vector<128xf32>
    %91 = vector.shape_cast %90 : vector<128xf32> to vector<128x1xf32>
    %cst_55 = arith.constant 1.000000e-24 : f32
    %92 = vector.broadcast %cst_55 : f32 to vector<128x1xf32>
    %93 = arith.maximumf %91, %92 : vector<128x1xf32>
    %94 = math.rsqrt %93 : vector<128x1xf32>
    %95 = vector.broadcast %94 : vector<128x1xf32> to vector<128x128xf32>
    %96 = arith.mulf %88, %95 : vector<128x128xf32>
    %c0_56 = arith.constant 0 : index
    %c0_57 = arith.constant 0 : index
    %97 = vector.load %arg6[%c0_56, %c0_57] : memref<128x128xf32, #tpu.memory_space<vmem>>, vector<128x128xf32>
    %cst_58 = arith.constant dense<0.000000e+00> : vector<128x128xf32>
    %98 = tpu.matmul %81, %97, %cst_58 {dimension_numbers = #tpu.dot_dimension_numbers<[1], [0], [0], [1], [0, 0, 1, 1], [], []>} : vector<128x128xf32>, vector<128x128xf32>, vector<128x128xf32> -> vector<128x128xf32>
    %cst_59 = arith.constant dense<0.000000e+00> : vector<128x128xf32>
    %99 = tpu.matmul %1, %98, %cst_59 {dimension_numbers = #tpu.dot_dimension_numbers<[1], [0], [0], [1], [0, 0, 1, 1], [], []>} : vector<128x128xf32>, vector<128x128xf32>, vector<128x128xf32> -> vector<128x128xf32>
    %cst_60 = arith.constant 0.000000e+00 : f32
    %100 = vector.broadcast %cst_60 : f32 to vector<128x128xf32>
    %101 = arith.maximumf %99, %100 : vector<128x128xf32>
    %102 = arith.mulf %101, %101 : vector<128x128xf32>
    %cst_61 = arith.constant dense<0.000000e+00> : vector<128xf32>
    %103 = vector.multi_reduction <add>, %102, %cst_61 [1] : vector<128x128xf32> to vector<128xf32>
    %104 = vector.shape_cast %103 : vector<128xf32> to vector<128x1xf32>
    %cst_62 = arith.constant 1.000000e-24 : f32
    %105 = vector.broadcast %cst_62 : f32 to vector<128x1xf32>
    %106 = arith.maximumf %104, %105 : vector<128x1xf32>
    %107 = math.rsqrt %106 : vector<128x1xf32>
    %108 = vector.broadcast %107 : vector<128x1xf32> to vector<128x128xf32>
    %109 = arith.mulf %101, %108 : vector<128x128xf32>
    %c384 = arith.constant 384 : index
    %c0_63 = arith.constant 0 : index
    %110 = vector.load %arg15[%c384, %c0_63] : memref<1280x128xf32, #tpu.memory_space<vmem>>, vector<128x128xf32>
    tpu.vector_store %arg15[%c384, %c0_63], %96 {strides = array<i32>} : memref<1280x128xf32, #tpu.memory_space<vmem>>, vector<128x128xf32>,
    %c1024 = arith.constant 1024 : index
    %c0_64 = arith.constant 0 : index
    %111 = vector.load %arg15[%c1024, %c0_64] : memref<1280x128xf32, #tpu.memory_space<vmem>>, vector<128x128xf32>
    tpu.vector_store %arg15[%c1024, %c0_64], %109 {strides = array<i32>} : memref<1280x128xf32, #tpu.memory_space<vmem>>, vector<128x128xf32>,
    %c0_65 = arith.constant 0 : index
    %c0_66 = arith.constant 0 : index
    %112 = vector.load %arg7[%c0_65, %c0_66] : memref<128x128xf32, #tpu.memory_space<vmem>>, vector<128x128xf32>
    %cst_67 = arith.constant dense<0.000000e+00> : vector<128x128xf32>
    %113 = tpu.matmul %96, %112, %cst_67 {dimension_numbers = #tpu.dot_dimension_numbers<[1], [0], [0], [1], [0, 0, 1, 1], [], []>} : vector<128x128xf32>, vector<128x128xf32>, vector<128x128xf32> -> vector<128x128xf32>
    %cst_68 = arith.constant dense<0.000000e+00> : vector<128x128xf32>
    %114 = tpu.matmul %0, %113, %cst_68 {dimension_numbers = #tpu.dot_dimension_numbers<[1], [0], [0], [1], [0, 0, 1, 1], [], []>} : vector<128x128xf32>, vector<128x128xf32>, vector<128x128xf32> -> vector<128x128xf32>
    %cst_69 = arith.constant 0.000000e+00 : f32
    %115 = vector.broadcast %cst_69 : f32 to vector<128x128xf32>
    %116 = arith.maximumf %114, %115 : vector<128x128xf32>
    %c0_70 = arith.constant 0 : index
    %c0_71 = arith.constant 0 : index
    %117 = vector.load %arg7[%c0_70, %c0_71] : memref<128x128xf32, #tpu.memory_space<vmem>>, vector<128x128xf32>
    %cst_72 = arith.constant dense<0.000000e+00> : vector<128x128xf32>
    %118 = tpu.matmul %109, %117, %cst_72 {dimension_numbers = #tpu.dot_dimension_numbers<[1], [0], [0], [1], [0, 0, 1, 1], [], []>} : vector<128x128xf32>, vector<128x128xf32>, vector<128x128xf32> -> vector<128x128xf32>
    %cst_73 = arith.constant dense<0.000000e+00> : vector<128x128xf32>
    %119 = tpu.matmul %1, %118, %cst_73 {dimension_numbers = #tpu.dot_dimension_numbers<[1], [0], [0], [1], [0, 0, 1, 1], [], []>} : vector<128x128xf32>, vector<128x128xf32>, vector<128x128xf32> -> vector<128x128xf32>
    %cst_74 = arith.constant 0.000000e+00 : f32
    %120 = vector.broadcast %cst_74 : f32 to vector<128x128xf32>
    %121 = arith.maximumf %119, %120 : vector<128x128xf32>
    %c512 = arith.constant 512 : index
    %c0_75 = arith.constant 0 : index
    %122 = vector.load %arg15[%c512, %c0_75] : memref<1280x128xf32, #tpu.memory_space<vmem>>, vector<128x128xf32>
    tpu.vector_store %arg15[%c512, %c0_75], %116 {strides = array<i32>} : memref<1280x128xf32, #tpu.memory_space<vmem>>, vector<128x128xf32>,
    %c1152 = arith.constant 1152 : index
    %c0_76 = arith.constant 0 : index
    %123 = vector.load %arg15[%c1152, %c0_76] : memref<1280x128xf32, #tpu.memory_space<vmem>>, vector<128x128xf32>
    tpu.vector_store %arg15[%c1152, %c0_76], %121 {strides = array<i32>} : memref<1280x128xf32, #tpu.memory_space<vmem>>, vector<128x128xf32>,
    %c0_77 = arith.constant 0 : index
    %c0_78 = arith.constant 0 : index
    %124 = vector.load %arg15[%c0_77, %c0_78] : memref<1280x128xf32, #tpu.memory_space<vmem>>, vector<1280x128xf32>
    %c0_79 = arith.constant 0 : index
    %c0_80 = arith.constant 0 : index
    %125 = vector.load %arg8[%c0_79, %c0_80] : memref<128x128xf32, #tpu.memory_space<vmem>>, vector<128x128xf32>
    %cst_81 = arith.constant dense<0.000000e+00> : vector<1280x128xf32>
    %126 = tpu.matmul %124, %125, %cst_81 {dimension_numbers = #tpu.dot_dimension_numbers<[1], [0], [0], [1], [0, 0, 1, 1], [], []>} : vector<1280x128xf32>, vector<128x128xf32>, vector<1280x128xf32> -> vector<1280x128xf32>
    %c0_82 = arith.constant 0 : index
    %c0_83 = arith.constant 0 : index
    %127 = vector.load %arg9[%c0_82, %c0_83] : memref<1x128xf32, #tpu.memory_space<vmem>>, vector<1x128xf32>
    %128 = vector.broadcast %127 : vector<1x128xf32> to vector<1280x128xf32>
    %129 = arith.addf %126, %128 : vector<1280x128xf32>
    %cst_84 = arith.constant 0.000000e+00 : f32
    %130 = vector.broadcast %cst_84 : f32 to vector<1280x128xf32>
    %131 = arith.maximumf %129, %130 : vector<1280x128xf32>
    %c0_85 = arith.constant 0 : index
    %c0_86 = arith.constant 0 : index
    %132 = vector.load %arg10[%c0_85, %c0_86] : memref<128x128xf32, #tpu.memory_space<vmem>>, vector<128x128xf32>
    %cst_87 = arith.constant dense<0.000000e+00> : vector<1280x128xf32>
    %133 = tpu.matmul %131, %132, %cst_87 {dimension_numbers = #tpu.dot_dimension_numbers<[1], [0], [0], [1], [0, 0, 1, 1], [], []>} : vector<1280x128xf32>, vector<128x128xf32>, vector<1280x128xf32> -> vector<1280x128xf32>
    %c0_88 = arith.constant 0 : index
    %c0_89 = arith.constant 0 : index
    %134 = vector.load %arg11[%c0_88, %c0_89] : memref<1x128xf32, #tpu.memory_space<vmem>>, vector<1x128xf32>
    %135 = vector.broadcast %134 : vector<1x128xf32> to vector<1280x128xf32>
    %136 = arith.addf %133, %135 : vector<1280x128xf32>
    %cst_90 = arith.constant 0.000000e+00 : f32
    %137 = vector.broadcast %cst_90 : f32 to vector<1280x128xf32>
    %138 = arith.maximumf %136, %137 : vector<1280x128xf32>
    %139 = vector.extract_strided_slice %138 {offsets = [0, 0], sizes = [128, 128], strides = [1, 1]} : vector<1280x128xf32> to vector<128x128xf32>
    %140 = vector.extract_strided_slice %138 {offsets = [640, 0], sizes = [128, 128], strides = [1, 1]} : vector<1280x128xf32> to vector<128x128xf32>
    %141 = vector.extract_strided_slice %138 {offsets = [128, 0], sizes = [128, 128], strides = [1, 1]} : vector<1280x128xf32> to vector<128x128xf32>
    %142 = arith.addf %139, %141 : vector<128x128xf32>
    %143 = vector.extract_strided_slice %138 {offsets = [768, 0], sizes = [128, 128], strides = [1, 1]} : vector<1280x128xf32> to vector<128x128xf32>
    %144 = arith.addf %140, %143 : vector<128x128xf32>
    %145 = vector.extract_strided_slice %138 {offsets = [256, 0], sizes = [128, 128], strides = [1, 1]} : vector<1280x128xf32> to vector<128x128xf32>
    %146 = arith.addf %142, %145 : vector<128x128xf32>
    %147 = vector.extract_strided_slice %138 {offsets = [896, 0], sizes = [128, 128], strides = [1, 1]} : vector<1280x128xf32> to vector<128x128xf32>
    %148 = arith.addf %144, %147 : vector<128x128xf32>
    %149 = vector.extract_strided_slice %138 {offsets = [384, 0], sizes = [128, 128], strides = [1, 1]} : vector<1280x128xf32> to vector<128x128xf32>
    %150 = arith.addf %146, %149 : vector<128x128xf32>
    %151 = vector.extract_strided_slice %138 {offsets = [1024, 0], sizes = [128, 128], strides = [1, 1]} : vector<1280x128xf32> to vector<128x128xf32>
    %152 = arith.addf %148, %151 : vector<128x128xf32>
    %153 = vector.extract_strided_slice %138 {offsets = [512, 0], sizes = [128, 128], strides = [1, 1]} : vector<1280x128xf32> to vector<128x128xf32>
    %154 = arith.addf %150, %153 : vector<128x128xf32>
    %155 = vector.extract_strided_slice %138 {offsets = [1152, 0], sizes = [128, 128], strides = [1, 1]} : vector<1280x128xf32> to vector<128x128xf32>
    %156 = arith.addf %152, %155 : vector<128x128xf32>
    %c0_91 = arith.constant 0 : index
    %c0_92 = arith.constant 0 : index
    %157 = memref.load %arg13[%c0_91, %c0_92] : memref<1x1xf32, #tpu.memory_space<smem>>
    %c0_93 = arith.constant 0 : index
    %c0_94 = arith.constant 0 : index
    %158 = vector.load %arg12[%c0_93, %c0_94] : memref<128x1xf32, #tpu.memory_space<vmem>>, vector<128x1xf32>
    %cst_95 = arith.constant dense<0.000000e+00> : vector<128x1xf32>
    %159 = tpu.matmul %154, %158, %cst_95 {dimension_numbers = #tpu.dot_dimension_numbers<[1], [0], [0], [1], [0, 0, 1, 1], [], []>} : vector<128x128xf32>, vector<128x1xf32>, vector<128x1xf32> -> vector<128x1xf32>
    %cst_96 = arith.constant 5.000000e+00 : f32
    %160 = arith.mulf %cst_96, %157 : f32
    %161 = vector.broadcast %160 : f32 to vector<128x1xf32>
    %162 = arith.addf %159, %161 : vector<128x1xf32>
    %c0_97 = arith.constant 0 : index
    %c0_98 = arith.constant 0 : index
    %163 = vector.load %arg12[%c0_97, %c0_98] : memref<128x1xf32, #tpu.memory_space<vmem>>, vector<128x1xf32>
    %cst_99 = arith.constant dense<0.000000e+00> : vector<128x1xf32>
    %164 = tpu.matmul %156, %163, %cst_99 {dimension_numbers = #tpu.dot_dimension_numbers<[1], [0], [0], [1], [0, 0, 1, 1], [], []>} : vector<128x128xf32>, vector<128x1xf32>, vector<128x1xf32> -> vector<128x1xf32>
    %cst_100 = arith.constant 5.000000e+00 : f32
    %165 = arith.mulf %cst_100, %157 : f32
    %166 = vector.broadcast %165 : f32 to vector<128x1xf32>
    %167 = arith.addf %164, %166 : vector<128x1xf32>
    %168 = arith.mulf %162, %167 : vector<128x1xf32>
    %c0_101 = arith.constant 0 : index
    %c0_102 = arith.constant 0 : index
    %169 = vector.load %arg14[%c0_101, %c0_102] : memref<128x1xf32, #tpu.memory_space<vmem>>, vector<128x1xf32>
    tpu.vector_store %arg14[%c0_101, %c0_102], %168 {strides = array<i32>} : memref<128x1xf32, #tpu.memory_space<vmem>>, vector<128x1xf32>,
    return
  }
  func.func @transform_0(%arg0: i32) -> (i32, i32) {
    %c0_i32 = arith.constant 0 : i32
    %c0_i32_0 = arith.constant 0 : i32
    %c0_i32_1 = arith.constant 0 : i32
    return %c0_i32, %c0_i32_0 : i32, i32
  }
  func.func @transform_1(%arg0: i32) -> (i32, i32) {
    %c0_i32 = arith.constant 0 : i32
    %c0_i32_0 = arith.constant 0 : i32
    %c0_i32_1 = arith.constant 0 : i32
    return %c0_i32, %c0_i32_0 : i32, i32
  }
  func.func @transform_2(%arg0: i32) -> (i32, i32) {
    %c0_i32 = arith.constant 0 : i32
    %c0_i32_0 = arith.constant 0 : i32
    %c0_i32_1 = arith.constant 0 : i32
    return %c0_i32, %c0_i32_0 : i32, i32
  }
  func.func @transform_3(%arg0: i32) -> (i32, i32) {
    %c0_i32 = arith.constant 0 : i32
    %c0_i32_0 = arith.constant 0 : i32
    %c0_i32_1 = arith.constant 0 : i32
    return %c0_i32, %c0_i32_0 : i32, i32
  }
  func.func @transform_4(%arg0: i32) -> (i32, i32) {
    %c0_i32 = arith.constant 0 : i32
    %c0_i32_0 = arith.constant 0 : i32
    %c0_i32_1 = arith.constant 0 : i32
    return %c0_i32, %c0_i32_0 : i32, i32
  }
  func.func @transform_5(%arg0: i32) -> (i32, i32) {
    %c0_i32 = arith.constant 0 : i32
    %c0_i32_0 = arith.constant 0 : i32
    %c0_i32_1 = arith.constant 0 : i32
    return %c0_i32, %c0_i32_0 : i32, i32
  }
  func.func @transform_6(%arg0: i32) -> (i32, i32) {
    %c0_i32 = arith.constant 0 : i32
    %c0_i32_0 = arith.constant 0 : i32
    %c0_i32_1 = arith.constant 0 : i32
    return %c0_i32, %c0_i32_0 : i32, i32
  }
  func.func @transform_7(%arg0: i32) -> (i32, i32) {
    %c0_i32 = arith.constant 0 : i32
    %c0_i32_0 = arith.constant 0 : i32
    %c0_i32_1 = arith.constant 0 : i32
    return %c0_i32, %c0_i32_0 : i32, i32
  }
  func.func @transform_8(%arg0: i32) -> (i32, i32) {
    %c0_i32 = arith.constant 0 : i32
    %c0_i32_0 = arith.constant 0 : i32
    %c0_i32_1 = arith.constant 0 : i32
    return %c0_i32, %c0_i32_0 : i32, i32
  }
  func.func @transform_9(%arg0: i32) -> (i32, i32) {
    %c0_i32 = arith.constant 0 : i32
    %c0_i32_0 = arith.constant 0 : i32
    %c0_i32_1 = arith.constant 0 : i32
    return %c0_i32, %c0_i32_0 : i32, i32
  }
  func.func @transform_10(%arg0: i32) -> (i32, i32) {
    %c0_i32 = arith.constant 0 : i32
    %c0_i32_0 = arith.constant 0 : i32
    %c0_i32_1 = arith.constant 0 : i32
    return %c0_i32, %c0_i32_0 : i32, i32
  }
  func.func @transform_11(%arg0: i32) -> (i32, i32) {
    %c0_i32 = arith.constant 0 : i32
    %c0_i32_0 = arith.constant 0 : i32
    %c0_i32_1 = arith.constant 0 : i32
    return %c0_i32, %c0_i32_0 : i32, i32
  }
  func.func @transform_12(%arg0: i32) -> (i32, i32) {
    %c0_i32 = arith.constant 0 : i32
    %c0_i32_0 = arith.constant 0 : i32
    %c0_i32_1 = arith.constant 0 : i32
    return %c0_i32, %c0_i32_0 : i32, i32
  }
  func.func @transform_13(%arg0: i32) -> (i32, i32) {
    %c0_i32 = arith.constant 0 : i32
    %c0_i32_0 = arith.constant 0 : i32
    %c0_i32_1 = arith.constant 0 : i32
    return %c0_i32, %c0_i32_0 : i32, i32
  }
}

</mosaic_0001>

<llo_original>
// kernel: gnn_bet_forward.1
$region0: #{gnn_bet_forward.1}
  #allocation0 [shape = 'u32[]', space=smem, size = 0x4, offset = 0x4, fixed_abs, tag = 'smem constant byte address 0x4 - core index']
  #allocation1 [shape = 'u32[144,128]{1,0:T(1,128)}', space=vmem, size = 0x12000, scoped, tag = 'internal scratch']
  #allocation2 [shape = 'f32[1280,128]{1,0:T(8,128)}', space=vmem, size = 0xa0000, scoped, tag = 'scratch operand']
  #allocation3 [shape = 'f32[1,1]{1,0:T(1,128)S(6)}', space=smem, size = 0x200, scoped, tag = 'scoped memory for gnn_bet_forward.1']
  %s0 = inlined_call_operand.vmem [shape: f32[128,128], index: 0, kind: input, shape index: {}]
  %s1 = inlined_call_operand.vmem [shape: f32[128,128], index: 1, kind: input, shape index: {}]
  %s2 = inlined_call_operand.vmem [shape: f32[128,128], index: 2, kind: input, shape index: {}]
  %s3 = inlined_call_operand.vmem [shape: f32[128,128], index: 3, kind: input, shape index: {}]
  %s4 = inlined_call_operand.vmem [shape: f32[128,128], index: 4, kind: input, shape index: {}]
  %s5 = inlined_call_operand.vmem [shape: f32[128,128], index: 5, kind: input, shape index: {}]
  %s6 = inlined_call_operand.vmem [shape: f32[128,128], index: 6, kind: input, shape index: {}]
  %s7 = inlined_call_operand.vmem [shape: f32[128,128], index: 7, kind: input, shape index: {}]
  %s8 = inlined_call_operand.vmem [shape: f32[1,128], index: 8, kind: input, shape index: {}]
  %s9 = inlined_call_operand.vmem [shape: f32[128,128], index: 9, kind: input, shape index: {}]
  %s10 = inlined_call_operand.vmem [shape: f32[1,128], index: 10, kind: input, shape index: {}]
  %s11 = inlined_call_operand.vmem [shape: f32[128,1], index: 11, kind: input, shape index: {}]
  %s12 = inlined_call_operand.<no memory space> [shape: f32[1,1], index: 12, kind: input, shape index: {}]
  %s13 = inlined_call_operand.vmem [shape: f32[128,1], index: 13, kind: output, shape index: {}]
  %s14 = sld [smem:[#allocation0]]
  $region62: #{gnn_bet_forward.1} parent=0
    _
  %s16 = ssub.s32 1, %s14
  %s17 = scalar_select 0, %s16, %s14
  %18 = sst [smem:[#allocation3]] %s12
  // Predicated region
  $region2: #{gnn_bet_forward.1} parent=0 // pred_check
    _
  $region3: #{gnn_bet_forward.1} parent=0 // pred_check_branch
    %20 = sbr.rel (0) target = $region5
  $region4: #{gnn_bet_forward.1} parent=0 // pred_region
    _
  $region5: #{gnn_bet_forward.1} parent=0 // pred_fallthru
    _
  // Predicated region
  $region6: #{gnn_bet_forward.1} parent=0 // pred_check
    _
  $region7: #{gnn_bet_forward.1} parent=0 // pred_check_branch
    %22 = sbr.rel (0) target = $region9
  $region8: #{gnn_bet_forward.1} parent=0 // pred_region
    _
  $region9: #{gnn_bet_forward.1} parent=0 // pred_fallthru
    _
  // Predicated region
  $region10: #{gnn_bet_forward.1} parent=0 // pred_check
    _
  $region11: #{gnn_bet_forward.1} parent=0 // pred_check_branch
    %24 = sbr.rel (0) target = $region13
  $region12: #{gnn_bet_forward.1} parent=0 // pred_region
    _
  $region13: #{gnn_bet_forward.1} parent=0 // pred_fallthru
    _
  // Predicated region
  $region14: #{gnn_bet_forward.1} parent=0 // pred_check
    _
  $region15: #{gnn_bet_forward.1} parent=0 // pred_check_branch
    %26 = sbr.rel (0) target = $region17
  $region16: #{gnn_bet_forward.1} parent=0 // pred_region
    _
  $region17: #{gnn_bet_forward.1} parent=0 // pred_fallthru
    _
  // Predicated region
  $region18: #{gnn_bet_forward.1} parent=0 // pred_check
    _
  $region19: #{gnn_bet_forward.1} parent=0 // pred_check_branch
    %28 = sbr.rel (0) target = $region21
  $region20: #{gnn_bet_forward.1} parent=0 // pred_region
    _
  $region21: #{gnn_bet_forward.1} parent=0 // pred_fallthru
    _
  // Predicated region
  $region22: #{gnn_bet_forward.1} parent=0 // pred_check
    _
  $region23: #{gnn_bet_forward.1} parent=0 // pred_check_branch
    %30 = sbr.rel (0) target = $region25
  $region24: #{gnn_bet_forward.1} parent=0 // pred_region
    _
  $region25: #{gnn_bet_forward.1} parent=0 // pred_fallthru
    _
  // Predicated region
  $region26: #{gnn_bet_forward.1} parent=0 // pred_check
    _
  $region27: #{gnn_bet_forward.1} parent=0 // pred_check_branch
    %32 = sbr.rel (0) target = $region29
  $region28: #{gnn_bet_forward.1} parent=0 // pred_region
    _
  $region29: #{gnn_bet_forward.1} parent=0 // pred_fallthru
    _
  // Predicated region
  $region30: #{gnn_bet_forward.1} parent=0 // pred_check
    _
  $region31: #{gnn_bet_forward.1} parent=0 // pred_check_branch
    %34 = sbr.rel (0) target = $region33
  $region32: #{gnn_bet_forward.1} parent=0 // pred_region
    _
  $region33: #{gnn_bet_forward.1} parent=0 // pred_fallthru
    _
  // Predicated region
  $region34: #{gnn_bet_forward.1} parent=0 // pred_check
    _
  $region35: #{gnn_bet_forward.1} parent=0 // pred_check_branch
    %36 = sbr.rel (0) target = $region37
  $region36: #{gnn_bet_forward.1} parent=0 // pred_region
    _
  $region37: #{gnn_bet_forward.1} parent=0 // pred_fallthru
    _
  // Predicated region
  $region38: #{gnn_bet_forward.1} parent=0 // pred_check
    _
  $region39: #{gnn_bet_forward.1} parent=0 // pred_check_branch
    %38 = sbr.rel (0) target = $region41
  $region40: #{gnn_bet_forward.1} parent=0 // pred_region
    _
  $region41: #{gnn_bet_forward.1} parent=0 // pred_fallthru
    _
  // Predicated region
  $region42: #{gnn_bet_forward.1} parent=0 // pred_check
    _
  $region43: #{gnn_bet_forward.1} parent=0 // pred_check_branch
    %40 = sbr.rel (0) target = $region45
  $region44: #{gnn_bet_forward.1} parent=0 // pred_region
    _
  $region45: #{gnn_bet_forward.1} parent=0 // pred_fallthru
    _
  // Predicated region
  $region46: #{gnn_bet_forward.1} parent=0 // pred_check
    _
  $region47: #{gnn_bet_forward.1} parent=0 // pred_check_branch
    %42 = sbr.rel (0) target = $region49
  $region48: #{gnn_bet_forward.1} parent=0 // pred_region
    _
  $region49: #{gnn_bet_forward.1} parent=0 // pred_fallthru
    _
  // Predicated region
  $region50: #{gnn_bet_forward.1} parent=0 // pred_check
    _
  $region51: #{gnn_bet_forward.1} parent=0 // pred_check_branch
    %44 = sbr.rel (0) target = $region53
  $region52: #{gnn_bet_forward.1} parent=0 // pred_region
    _
  $region53: #{gnn_bet_forward.1} parent=0 // pred_fallthru
    _
  %v45 = vld [vmem:[%s0] sm:$0xff]
  %v46 = vld [vmem:[%s0 + $0x8] sm:$0xff]
  %v47 = vld [vmem:[%s0 + $0x10] sm:$0xff]
  %v48 = vld [vmem:[%s0 + $0x18] sm:$0xff]
  %v49 = vld [vmem:[%s0 + $0x20] sm:$0xff]
  %v50 = vld [vmem:[%s0 + $0x28] sm:$0xff]
  %v51 = vld [vmem:[%s0 + $0x30] sm:$0xff]
  %v52 = vld [vmem:[%s0 + $0x38] sm:$0xff]
  %v53 = vld [vmem:[%s0 + $0x40] sm:$0xff]
  %v54 = vld [vmem:[%s0 + $0x48] sm:$0xff]
  %v55 = vld [vmem:[%s0 + $0x50] sm:$0xff]
  %v56 = vld [vmem:[%s0 + $0x58] sm:$0xff]
  %v57 = vld [vmem:[%s0 + $0x60] sm:$0xff]
  %v58 = vld [vmem:[%s0 + $0x68] sm:$0xff]
  %v59 = vld [vmem:[%s0 + $0x70] sm:$0xff]
  %v60 = vld [vmem:[%s0 + $0x78] sm:$0xff]
  %v61 = vld [vmem:[%s1] sm:$0xff]
  %v62 = vld [vmem:[%s1 + $0x8] sm:$0xff]
  %v63 = vld [vmem:[%s1 + $0x10] sm:$0xff]
  %v64 = vld [vmem:[%s1 + $0x18] sm:$0xff]
  %v65 = vld [vmem:[%s1 + $0x20] sm:$0xff]
  %v66 = vld [vmem:[%s1 + $0x28] sm:$0xff]
  %v67 = vld [vmem:[%s1 + $0x30] sm:$0xff]
  %v68 = vld [vmem:[%s1 + $0x38] sm:$0xff]
  %v69 = vld [vmem:[%s1 + $0x40] sm:$0xff]
  %v70 = vld [vmem:[%s1 + $0x48] sm:$0xff]
  %v71 = vld [vmem:[%s1 + $0x50] sm:$0xff]
  %v72 = vld [vmem:[%s1 + $0x58] sm:$0xff]
  %v73 = vld [vmem:[%s1 + $0x60] sm:$0xff]
  %v74 = vld [vmem:[%s1 + $0x68] sm:$0xff]
  %v75 = vld [vmem:[%s1 + $0x70] sm:$0xff]
  %v76 = vld [vmem:[%s1 + $0x78] sm:$0xff]
  %v77 = vld [vmem:[%s2] sm:$0xff]
  %v78 = vld [vmem:[%s2 + $0x8] sm:$0xff]
  %v79 = vld [vmem:[%s2 + $0x10] sm:$0xff]
  %v80 = vld [vmem:[%s2 + $0x18] sm:$0xff]
  %v81 = vld [vmem:[%s2 + $0x20] sm:$0xff]
  %v82 = vld [vmem:[%s2 + $0x28] sm:$0xff]
  %v83 = vld [vmem:[%s2 + $0x30] sm:$0xff]
  %v84 = vld [vmem:[%s2 + $0x38] sm:$0xff]
  %v85 = vld [vmem:[%s2 + $0x40] sm:$0xff]
  %v86 = vld [vmem:[%s2 + $0x48] sm:$0xff]
  %v87 = vld [vmem:[%s2 + $0x50] sm:$0xff]
  %v88 = vld [vmem:[%s2 + $0x58] sm:$0xff]
  %v89 = vld [vmem:[%s2 + $0x60] sm:$0xff]
  %v90 = vld [vmem:[%s2 + $0x68] sm:$0xff]
  %v91 = vld [vmem:[%s2 + $0x70] sm:$0xff]
  %v92 = vld [vmem:[%s2 + $0x78] sm:$0xff]
  %93 = vmatprep.subr.mxu0 0.0
  %94 = vmatpush1.msra.mxu0 %v77
  %95 = vmatprep.subr.mxu0 0.0
  %96 = vmatpush1.msra.mxu0 %v78
  %97 = vmatprep.subr.mxu0 0.0
  %98 = vmatpush1.msra.mxu0 %v79
  %99 = vmatprep.subr.mxu0 0.0
  %100 = vmatpush1.msra.mxu0 %v80
  %101 = vmatprep.subr.mxu0 0.0
  %102 = vmatpush1.msra.mxu0 %v81
  %103 = vmatprep.subr.mxu0 0.0
  %104 = vmatpush1.msra.mxu0 %v82
  %105 = vmatprep.subr.mxu0 0.0
  %106 = vmatpush1.msra.mxu0 %v83
  %107 = vmatprep.subr.mxu0 0.0
  %108 = vmatpush1.msra.mxu0 %v84
  %109 = vmatprep.subr.mxu0 0.0
  %110 = vmatpush1.msra.mxu0 %v85
  %111 = vmatprep.subr.mxu0 0.0
  %112 = vmatpush1.msra.mxu0 %v86
  %113 = vmatprep.subr.mxu0 0.0
  %114 = vmatpush1.msra.mxu0 %v87
  %115 = vmatprep.subr.mxu0 0.0
  %116 = vmatpush1.msra.mxu0 %v88
  %117 = vmatprep.subr.mxu0 0.0
  %118 = vmatpush1.msra.mxu0 %v89
  %119 = vmatprep.subr.mxu0 0.0
  %120 = vmatpush1.msra.mxu0 %v90
  %121 = vmatprep.subr.mxu0 0.0
  %122 = vmatpush1.msra.mxu0 %v91
  %123 = vmatprep.subr.mxu0 0.0
  %124 = vmatpush1.msra.mxu0 %v92
  %125 = vmatprep.subr.mxu0 0.0
  %126 = vmatpush1.msra.mxu0 0.0
  %127 = vmatprep.subr.mxu0 0.0
  %128 = vmatpush1.msra.mxu0 0.0
  %129 = vmatprep.subr.mxu0 0.0
  %130 = vmatpush1.msra.mxu0 0.0
  %131 = vmatprep.subr.mxu0 0.0
  %132 = vmatpush1.msra.mxu0 0.0
  %133 = vmatprep.subr.mxu0 0.0
  %134 = vmatpush1.msra.mxu0 0.0
  %135 = vmatprep.subr.mxu0 0.0
  %136 = vmatpush1.msra.mxu0 0.0
  %137 = vmatprep.subr.mxu0 0.0
  %138 = vmatpush1.msra.mxu0 0.0
  %139 = vmatprep.subr.mxu0 0.0
  %140 = vmatpush1.msra.mxu0 0.0
  %141 = vmatprep.subr.mxu0 0.0
  %142 = vmatpush1.msra.mxu0 0.0
  %143 = vmatprep.subr.mxu0 0.0
  %144 = vmatpush1.msra.mxu0 0.0
  %145 = vmatprep.subr.mxu0 0.0
  %146 = vmatpush1.msra.mxu0 0.0
  %147 = vmatprep.subr.mxu0 0.0
  %148 = vmatpush1.msra.mxu0 0.0
  %149 = vmatprep.subr.mxu0 0.0
  %150 = vmatpush1.msra.mxu0 0.0
  %151 = vmatprep.subr.mxu0 0.0
  %152 = vmatpush1.msra.mxu0 0.0
  %153 = vmatprep.subr.mxu0 0.0
  %154 = vmatpush1.msra.mxu0 0.0
  %155 = vmatprep.subr.mxu0 0.0
  %156 = vmatpush1.msra.mxu0 0.0
  %157 = vmatprep.mubr.f32.mxu0 0.0
  %158 = vmatmul.mubr.f32.gmra.mrb[0].mxu0 %v45
  %v159 = vpop.f32.mrb[0].mxu0
  %v160 = vadd.f32 0.0, %v159
  %v161 = vpop.f32.mrb[0].mxu0
  %162 = vmatprep.mubr.f32.mxu0 0.0
  %163 = vmatmul.mubr.f32.gmra.mrb[0].mxu0 %v46
  %v164 = vpop.f32.mrb[0].mxu0
  %v165 = vadd.f32 0.0, %v164
  %v166 = vpop.f32.mrb[0].mxu0
  %167 = vmatprep.mubr.f32.mxu0 0.0
  %168 = vmatmul.mubr.f32.gmra.mrb[0].mxu0 %v47
  %v169 = vpop.f32.mrb[0].mxu0
  %v170 = vadd.f32 0.0, %v169
  %v171 = vpop.f32.mrb[0].mxu0
  %172 = vmatprep.mubr.f32.mxu0 0.0
  %173 = vmatmul.mubr.f32.gmra.mrb[0].mxu0 %v48
  %v174 = vpop.f32.mrb[0].mxu0
  %v175 = vadd.f32 0.0, %v174
  %v176 = vpop.f32.mrb[0].mxu0
  %177 = vmatprep.mubr.f32.mxu0 0.0
  %178 = vmatmul.mubr.f32.gmra.mrb[0].mxu0 %v49
  %v179 = vpop.f32.mrb[0].mxu0
  %v180 = vadd.f32 0.0, %v179
  %v181 = vpop.f32.mrb[0].mxu0
  %182 = vmatprep.mubr.f32.mxu0 0.0
  %183 = vmatmul.mubr.f32.gmra.mrb[0].mxu0 %v50
  %v184 = vpop.f32.mrb[0].mxu0
  %v185 = vadd.f32 0.0, %v184
  %v186 = vpop.f32.mrb[0].mxu0
  %187 = vmatprep.mubr.f32.mxu0 0.0
  %188 = vmatmul.mubr.f32.gmra.mrb[0].mxu0 %v51
  %v189 = vpop.f32.mrb[0].mxu0
  %v190 = vadd.f32 0.0, %v189
  %v191 = vpop.f32.mrb[0].mxu0
  %192 = vmatprep.mubr.f32.mxu0 0.0
  %193 = vmatmul.mubr.f32.gmra.mrb[0].mxu0 %v52
  %v194 = vpop.f32.mrb[0].mxu0
  %v195 = vadd.f32 0.0, %v194
  %v196 = vpop.f32.mrb[0].mxu0
  %197 = vmatprep.mubr.f32.mxu0 0.0
  %198 = vmatmul.mubr.f32.gmra.mrb[0].mxu0 %v53
  %v199 = vpop.f32.mrb[0].mxu0
  %v200 = vadd.f32 0.0, %v199
  %v201 = vpop.f32.mrb[0].mxu0
  %202 = vmatprep.mubr.f32.mxu0 0.0
  %203 = vmatmul.mubr.f32.gmra.mrb[0].mxu0 %v54
  %v204 = vpop.f32.mrb[0].mxu0
  %v205 = vadd.f32 0.0, %v204
  %v206 = vpop.f32.mrb[0].mxu0
  %207 = vmatprep.mubr.f32.mxu0 0.0
  %208 = vmatmul.mubr.f32.gmra.mrb[0].mxu0 %v55
  %v209 = vpop.f32.mrb[0].mxu0
  %v210 = vadd.f32 0.0, %v209
  %v211 = vpop.f32.mrb[0].mxu0
  %212 = vmatprep.mubr.f32.mxu0 0.0
  %213 = vmatmul.mubr.f32.gmra.mrb[0].mxu0 %v56
  %v214 = vpop.f32.mrb[0].mxu0
  %v215 = vadd.f32 0.0, %v214
  %v216 = vpop.f32.mrb[0].mxu0
  %217 = vmatprep.mubr.f32.mxu0 0.0
  %218 = vmatmul.mubr.f32.gmra.mrb[0].mxu0 %v57
  %v219 = vpop.f32.mrb[0].mxu0
  %v220 = vadd.f32 0.0, %v219
  %v221 = vpop.f32.mrb[0].mxu0
  %222 = vmatprep.mubr.f32.mxu0 0.0
  %223 = vmatmul.mubr.f32.gmra.mrb[0].mxu0 %v58
  %v224 = vpop.f32.mrb[0].mxu0
  %v225 = vadd.f32 0.0, %v224
  %v226 = vpop.f32.mrb[0].mxu0
  %227 = vmatprep.mubr.f32.mxu0 0.0
  %228 = vmatmul.mubr.f32.gmra.mrb[0].mxu0 %v59
  %v229 = vpop.f32.mrb[0].mxu0
  %v230 = vadd.f32 0.0, %v229
  %v231 = vpop.f32.mrb[0].mxu0
  %232 = vmatprep.mubr.f32.mxu0 0.0
  %233 = vmatmul.mubr.f32.gmra.mrb[0].mxu0 %v60
  %v234 = vpop.f32.mrb[0].mxu0
  %v235 = vadd.f32 0.0, %v234
  %v236 = vpop.f32.mrb[0].mxu0
  %237 = vdwg.mxu0
  %v238 = vmax.f32 %v160, 0.0
  %v239 = vmax.f32 %v165, 0.0
  %v240 = vmax.f32 %v170, 0.0
  %v241 = vmax.f32 %v175, 0.0
  %v242 = vmax.f32 %v180, 0.0
  %v243 = vmax.f32 %v185, 0.0
  %v244 = vmax.f32 %v190, 0.0
  %v245 = vmax.f32 %v195, 0.0
  %v246 = vmax.f32 %v200, 0.0
  %v247 = vmax.f32 %v205, 0.0
  %v248 = vmax.f32 %v210, 0.0
  %v249 = vmax.f32 %v215, 0.0
  %v250 = vmax.f32 %v220, 0.0
  %v251 = vmax.f32 %v225, 0.0
  %v252 = vmax.f32 %v230, 0.0
  %v253 = vmax.f32 %v235, 0.0
  %v254 = vmul.f32 %v238, %v238
  %v255 = vmul.f32 %v239, %v239
  %v256 = vmul.f32 %v240, %v240
  %v257 = vmul.f32 %v241, %v241
  %v258 = vmul.f32 %v242, %v242
  %v259 = vmul.f32 %v243, %v243
  %v260 = vmul.f32 %v244, %v244
  %v261 = vmul.f32 %v245, %v245
  %v262 = vmul.f32 %v246, %v246
  %v263 = vmul.f32 %v247, %v247
  %v264 = vmul.f32 %v248, %v248
  %v265 = vmul.f32 %v249, %v249
  %v266 = vmul.f32 %v250, %v250
  %v267 = vmul.f32 %v251, %v251
  %v268 = vmul.f32 %v252, %v252
  %v269 = vmul.f32 %v253, %v253
  %270 = vadd.xlane.f32.xlu0 %v254
  %v271 = vpop.xlane.xlu0 %270
  %272 = vadd.xlane.f32.xlu0 %v255
  %v273 = vpop.xlane.xlu0 %272
  %274 = vadd.xlane.f32.xlu0 %v256
  %v275 = vpop.xlane.xlu0 %274
  %276 = vadd.xlane.f32.xlu0 %v257
  %v277 = vpop.xlane.xlu0 %276
  %278 = vadd.xlane.f32.xlu0 %v258
  %v279 = vpop.xlane.xlu0 %278
  %280 = vadd.xlane.f32.xlu0 %v259
  %v281 = vpop.xlane.xlu0 %280
  %282 = vadd.xlane.f32.xlu0 %v260
  %v283 = vpop.xlane.xlu0 %282
  %284 = vadd.xlane.f32.xlu0 %v261
  %v285 = vpop.xlane.xlu0 %284
  %286 = vadd.xlane.f32.xlu0 %v262
  %v287 = vpop.xlane.xlu0 %286
  %288 = vadd.xlane.f32.xlu0 %v263
  %v289 = vpop.xlane.xlu0 %288
  %290 = vadd.xlane.f32.xlu0 %v264
  %v291 = vpop.xlane.xlu0 %290
  %292 = vadd.xlane.f32.xlu0 %v265
  %v293 = vpop.xlane.xlu0 %292
  %294 = vadd.xlane.f32.xlu0 %v266
  %v295 = vpop.xlane.xlu0 %294
  %296 = vadd.xlane.f32.xlu0 %v267
  %v297 = vpop.xlane.xlu0 %296
  %298 = vadd.xlane.f32.xlu0 %v268
  %v299 = vpop.xlane.xlu0 %298
  %300 = vadd.xlane.f32.xlu0 %v269
  %v301 = vpop.xlane.xlu0 %300
  %v302 = vmax.f32 %v271, 1e-24
  %v303 = vmax.f32 %v273, 1e-24
  %v304 = vmax.f32 %v275, 1e-24
  %v305 = vmax.f32 %v277, 1e-24
  %v306 = vmax.f32 %v279, 1e-24
  %v307 = vmax.f32 %v281, 1e-24
  %v308 = vmax.f32 %v283, 1e-24
  %v309 = vmax.f32 %v285, 1e-24
  %v310 = vmax.f32 %v287, 1e-24
  %v311 = vmax.f32 %v289, 1e-24
  %v312 = vmax.f32 %v291, 1e-24
  %v313 = vmax.f32 %v293, 1e-24
  %v314 = vmax.f32 %v295, 1e-24
  %v315 = vmax.f32 %v297, 1e-24
  %v316 = vmax.f32 %v299, 1e-24
  %v317 = vmax.f32 %v301, 1e-24
  %v318 = vrsqrt.pop %v302
  %v319 = vrsqrt.pop %v303
  %v320 = vrsqrt.pop %v304
  %v321 = vrsqrt.pop %v305
  %v322 = vrsqrt.pop %v306
  %v323 = vrsqrt.pop %v307
  %v324 = vrsqrt.pop %v308
  %v325 = vrsqrt.pop %v309
  %v326 = vrsqrt.pop %v310
  %v327 = vrsqrt.pop %v311
  %v328 = vrsqrt.pop %v312
  %v329 = vrsqrt.pop %v313
  %v330 = vrsqrt.pop %v314
  %v331 = vrsqrt.pop %v315
  %v332 = vrsqrt.pop %v316
  %v333 = vrsqrt.pop %v317
  %v334 = vmul.f32 %v238, %v318
  %v335 = vmul.f32 %v239, %v319
  %v336 = vmul.f32 %v240, %v320
  %v337 = vmul.f32 %v241, %v321
  %v338 = vmul.f32 %v242, %v322
  %v339 = vmul.f32 %v243, %v323
  %v340 = vmul.f32 %v244, %v324
  %v341 = vmul.f32 %v245, %v325
  %v342 = vmul.f32 %v246, %v326
  %v343 = vmul.f32 %v247, %v327
  %v344 = vmul.f32 %v248, %v328
  %v345 = vmul.f32 %v249, %v329
  %v346 = vmul.f32 %v250, %v330
  %v347 = vmul.f32 %v251, %v331
  %v348 = vmul.f32 %v252, %v332
  %v349 = vmul.f32 %v253, %v333
  %350 = vmatprep.subr.mxu0 0.0
  %351 = vmatpush1.msra.mxu0 %v77
  %352 = vmatprep.subr.mxu0 0.0
  %353 = vmatpush1.msra.mxu0 %v78
  %354 = vmatprep.subr.mxu0 0.0
  %355 = vmatpush1.msra.mxu0 %v79
  %356 = vmatprep.subr.mxu0 0.0
  %357 = vmatpush1.msra.mxu0 %v80
  %358 = vmatprep.subr.mxu0 0.0
  %359 = vmatpush1.msra.mxu0 %v81
  %360 = vmatprep.subr.mxu0 0.0
  %361 = vmatpush1.msra.mxu0 %v82
  %362 = vmatprep.subr.mxu0 0.0
  %363 = vmatpush1.msra.mxu0 %v83
  %364 = vmatprep.subr.mxu0 0.0
  %365 = vmatpush1.msra.mxu0 %v84
  %366 = vmatprep.subr.mxu0 0.0
  %367 = vmatpush1.msra.mxu0 %v85
  %368 = vmatprep.subr.mxu0 0.0
  %369 = vmatpush1.msra.mxu0 %v86
  %370 = vmatprep.subr.mxu0 0.0
  %371 = vmatpush1.msra.mxu0 %v87
  %372 = vmatprep.subr.mxu0 0.0
  %373 = vmatpush1.msra.mxu0 %v88
  %374 = vmatprep.subr.mxu0 0.0
  %375 = vmatpush1.msra.mxu0 %v89
  %376 = vmatprep.subr.mxu0 0.0
  %377 = vmatpush1.msra.mxu0 %v90
  %378 = vmatprep.subr.mxu0 0.0
  %379 = vmatpush1.msra.mxu0 %v91
  %380 = vmatprep.subr.mxu0 0.0
  %381 = vmatpush1.msra.mxu0 %v92
  %382 = vmatprep.subr.mxu0 0.0
  %383 = vmatpush1.msra.mxu0 0.0
  %384 = vmatprep.subr.mxu0 0.0
  %385 = vmatpush1.msra.mxu0 0.0
  %386 = vmatprep.subr.mxu0 0.0
  %387 = vmatpush1.msra.mxu0 0.0
  %388 = vmatprep.subr.mxu0 0.0
  %389 = vmatpush1.msra.mxu0 0.0
  %390 = vmatprep.subr.mxu0 0.0
  %391 = vmatpush1.msra.mxu0 0.0
  %392 = vmatprep.subr.mxu0 0.0
  %393 = vmatpush1.msra.mxu0 0.0
  %394 = vmatprep.subr.mxu0 0.0
  %395 = vmatpush1.msra.mxu0 0.0
  %396 = vmatprep.subr.mxu0 0.0
  %397 = vmatpush1.msra.mxu0 0.0
  %398 = vmatprep.subr.mxu0 0.0
  %399 = vmatpush1.msra.mxu0 0.0
  %400 = vmatprep.subr.mxu0 0.0
  %401 = vmatpush1.msra.mxu0 0.0
  %402 = vmatprep.subr.mxu0 0.0
  %403 = vmatpush1.msra.mxu0 0.0
  %404 = vmatprep.subr.mxu0 0.0
  %405 = vmatpush1.msra.mxu0 0.0
  %406 = vmatprep.subr.mxu0 0.0
  %407 = vmatpush1.msra.mxu0 0.0
  %408 = vmatprep.subr.mxu0 0.0
  %409 = vmatpush1.msra.mxu0 0.0
  %410 = vmatprep.subr.mxu0 0.0
  %411 = vmatpush1.msra.mxu0 0.0
  %412 = vmatprep.subr.mxu0 0.0
  %413 = vmatpush1.msra.mxu0 0.0
  %414 = vmatprep.mubr.f32.mxu0 0.0
  %415 = vmatmul.mubr.f32.gmra.mrb[0].mxu0 %v61
  %v416 = vpop.f32.mrb[0].mxu0
  %v417 = vadd.f32 0.0, %v416
  %v418 = vpop.f32.mrb[0].mxu0
  %419 = vmatprep.mubr.f32.mxu0 0.0
  %420 = vmatmul.mubr.f32.gmra.mrb[0].mxu0 %v62
  %v421 = vpop.f32.mrb[0].mxu0
  %v422 = vadd.f32 0.0, %v421
  %v423 = vpop.f32.mrb[0].mxu0
  %424 = vmatprep.mubr.f32.mxu0 0.0
  %425 = vmatmul.mubr.f32.gmra.mrb[0].mxu0 %v63
  %v426 = vpop.f32.mrb[0].mxu0
  %v427 = vadd.f32 0.0, %v426
  %v428 = vpop.f32.mrb[0].mxu0
  %429 = vmatprep.mubr.f32.mxu0 0.0
  %430 = vmatmul.mubr.f32.gmra.mrb[0].mxu0 %v64
  %v431 = vpop.f32.mrb[0].mxu0
  %v432 = vadd.f32 0.0, %v431
  %v433 = vpop.f32.mrb[0].mxu0
  %434 = vmatprep.mubr.f32.mxu0 0.0
  %435 = vmatmul.mubr.f32.gmra.mrb[0].mxu0 %v65
  %v436 = vpop.f32.mrb[0].mxu0
  %v437 = vadd.f32 0.0, %v436
  %v438 = vpop.f32.mrb[0].mxu0
  %439 = vmatprep.mubr.f32.mxu0 0.0
  %440 = vmatmul.mubr.f32.gmra.mrb[0].mxu0 %v66
  %v441 = vpop.f32.mrb[0].mxu0
  %v442 = vadd.f32 0.0, %v441
  %v443 = vpop.f32.mrb[0].mxu0
  %444 = vmatprep.mubr.f32.mxu0 0.0
  %445 = vmatmul.mubr.f32.gmra.mrb[0].mxu0 %v67
  %v446 = vpop.f32.mrb[0].mxu0
  %v447 = vadd.f32 0.0, %v446
  %v448 = vpop.f32.mrb[0].mxu0
  %449 = vmatprep.mubr.f32.mxu0 0.0
  %450 = vmatmul.mubr.f32.gmra.mrb[0].mxu0 %v68
  %v451 = vpop.f32.mrb[0].mxu0
  %v452 = vadd.f32 0.0, %v451
  %v453 = vpop.f32.mrb[0].mxu0
  %454 = vmatprep.mubr.f32.mxu0 0.0
  %455 = vmatmul.mubr.f32.gmra.mrb[0].mxu0 %v69
  %v456 = vpop.f32.mrb[0].mxu0
  %v457 = vadd.f32 0.0, %v456
  %v458 = vpop.f32.mrb[0].mxu0
  %459 = vmatprep.mubr.f32.mxu0 0.0
  %460 = vmatmul.mubr.f32.gmra.mrb[0].mxu0 %v70
  %v461 = vpop.f32.mrb[0].mxu0
  %v462 = vadd.f32 0.0, %v461
  %v463 = vpop.f32.mrb[0].mxu0
  %464 = vmatprep.mubr.f32.mxu0 0.0
  %465 = vmatmul.mubr.f32.gmra.mrb[0].mxu0 %v71
  %v466 = vpop.f32.mrb[0].mxu0
  %v467 = vadd.f32 0.0, %v466
  %v468 = vpop.f32.mrb[0].mxu0
  %469 = vmatprep.mubr.f32.mxu0 0.0
  %470 = vmatmul.mubr.f32.gmra.mrb[0].mxu0 %v72
  %v471 = vpop.f32.mrb[0].mxu0
  %v472 = vadd.f32 0.0, %v471
  %v473 = vpop.f32.mrb[0].mxu0
  %474 = vmatprep.mubr.f32.mxu0 0.0
  %475 = vmatmul.mubr.f32.gmra.mrb[0].mxu0 %v73
  %v476 = vpop.f32.mrb[0].mxu0
  %v477 = vadd.f32 0.0, %v476
  %v478 = vpop.f32.mrb[0].mxu0
  %479 = vmatprep.mubr.f32.mxu0 0.0
  %480 = vmatmul.mubr.f32.gmra.mrb[0].mxu0 %v74
  %v481 = vpop.f32.mrb[0].mxu0
  %v482 = vadd.f32 0.0, %v481
  %v483 = vpop.f32.mrb[0].mxu0
  %484 = vmatprep.mubr.f32.mxu0 0.0
  %485 = vmatmul.mubr.f32.gmra.mrb[0].mxu0 %v75
  %v486 = vpop.f32.mrb[0].mxu0
  %v487 = vadd.f32 0.0, %v486
  %v488 = vpop.f32.mrb[0].mxu0
  %489 = vmatprep.mubr.f32.mxu0 0.0
  %490 = vmatmul.mubr.f32.gmra.mrb[0].mxu0 %v76
  %v491 = vpop.f32.mrb[0].mxu0
  %v492 = vadd.f32 0.0, %v491
  %v493 = vpop.f32.mrb[0].mxu0
  %494 = vdwg.mxu0
  %v495 = vmax.f32 %v417, 0.0
  %v496 = vmax.f32 %v422, 0.0
  %v497 = vmax.f32 %v427, 0.0
  %v498 = vmax.f32 %v432, 0.0
  %v499 = vmax.f32 %v437, 0.0
  %v500 = vmax.f32 %v442, 0.0
  %v501 = vmax.f32 %v447, 0.0
  %v502 = vmax.f32 %v452, 0.0
  %v503 = vmax.f32 %v457, 0.0
  %v504 = vmax.f32 %v462, 0.0
  %v505 = vmax.f32 %v467, 0.0
  %v506 = vmax.f32 %v472, 0.0
  %v507 = vmax.f32 %v477, 0.0
  %v508 = vmax.f32 %v482, 0.0
  %v509 = vmax.f32 %v487, 0.0
  %v510 = vmax.f32 %v492, 0.0
  %v511 = vmul.f32 %v495, %v495
  %v512 = vmul.f32 %v496, %v496
  %v513 = vmul.f32 %v497, %v497
  %v514 = vmul.f32 %v498, %v498
  %v515 = vmul.f32 %v499, %v499
  %v516 = vmul.f32 %v500, %v500
  %v517 = vmul.f32 %v501, %v501
  %v518 = vmul.f32 %v502, %v502
  %v519 = vmul.f32 %v503, %v503
  %v520 = vmul.f32 %v504, %v504
  %v521 = vmul.f32 %v505, %v505
  %v522 = vmul.f32 %v506, %v506
  %v523 = vmul.f32 %v507, %v507
  %v524 = vmul.f32 %v508, %v508
  %v525 = vmul.f32 %v509, %v509
  %v526 = vmul.f32 %v510, %v510
  %527 = vadd.xlane.f32.xlu0 %v511
  %v528 = vpop.xlane.xlu0 %527
  %529 = vadd.xlane.f32.xlu0 %v512
  %v530 = vpop.xlane.xlu0 %529
  %531 = vadd.xlane.f32.xlu0 %v513
  %v532 = vpop.xlane.xlu0 %531
  %533 = vadd.xlane.f32.xlu0 %v514
  %v534 = vpop.xlane.xlu0 %533
  %535 = vadd.xlane.f32.xlu0 %v515
  %v536 = vpop.xlane.xlu0 %535
  %537 = vadd.xlane.f32.xlu0 %v516
  %v538 = vpop.xlane.xlu0 %537
  %539 = vadd.xlane.f32.xlu0 %v517
  %v540 = vpop.xlane.xlu0 %539
  %541 = vadd.xlane.f32.xlu0 %v518
  %v542 = vpop.xlane.xlu0 %541
  %543 = vadd.xlane.f32.xlu0 %v519
  %v544 = vpop.xlane.xlu0 %543
  %545 = vadd.xlane.f32.xlu0 %v520
  %v546 = vpop.xlane.xlu0 %545
  %547 = vadd.xlane.f32.xlu0 %v521
  %v548 = vpop.xlane.xlu0 %547
  %549 = vadd.xlane.f32.xlu0 %v522
  %v550 = vpop.xlane.xlu0 %549
  %551 = vadd.xlane.f32.xlu0 %v523
  %v552 = vpop.xlane.xlu0 %551
  %553 = vadd.xlane.f32.xlu0 %v524
  %v554 = vpop.xlane.xlu0 %553
  %555 = vadd.xlane.f32.xlu0 %v525
  %v556 = vpop.xlane.xlu0 %555
  %557 = vadd.xlane.f32.xlu0 %v526
  %v558 = vpop.xlane.xlu0 %557
  %v559 = vmax.f32 %v528, 1e-24
  %v560 = vmax.f32 %v530, 1e-24
  %v561 = vmax.f32 %v532, 1e-24
  %v562 = vmax.f32 %v534, 1e-24
  %v563 = vmax.f32 %v536, 1e-24
  %v564 = vmax.f32 %v538, 1e-24
  %v565 = vmax.f32 %v540, 1e-24
  %v566 = vmax.f32 %v542, 1e-24
  %v567 = vmax.f32 %v544, 1e-24
  %v568 = vmax.f32 %v546, 1e-24
  %v569 = vmax.f32 %v548, 1e-24
  %v570 = vmax.f32 %v550, 1e-24
  %v571 = vmax.f32 %v552, 1e-24
  %v572 = vmax.f32 %v554, 1e-24
  %v573 = vmax.f32 %v556, 1e-24
  %v574 = vmax.f32 %v558, 1e-24
  %v575 = vrsqrt.pop %v559
  %v576 = vrsqrt.pop %v560
  %v577 = vrsqrt.pop %v561
  %v578 = vrsqrt.pop %v562
  %v579 = vrsqrt.pop %v563
  %v580 = vrsqrt.pop %v564
  %v581 = vrsqrt.pop %v565
  %v582 = vrsqrt.pop %v566
  %v583 = vrsqrt.pop %v567
  %v584 = vrsqrt.pop %v568
  %v585 = vrsqrt.pop %v569
  %v586 = vrsqrt.pop %v570
  %v587 = vrsqrt.pop %v571
  %v588 = vrsqrt.pop %v572
  %v589 = vrsqrt.pop %v573
  %v590 = vrsqrt.pop %v574
  %v591 = vmul.f32 %v495, %v575
  %v592 = vmul.f32 %v496, %v576
  %v593 = vmul.f32 %v497, %v577
  %v594 = vmul.f32 %v498, %v578
  %v595 = vmul.f32 %v499, %v579
  %v596 = vmul.f32 %v500, %v580
  %v597 = vmul.f32 %v501, %v581
  %v598 = vmul.f32 %v502, %v582
  %v599 = vmul.f32 %v503, %v583
  %v600 = vmul.f32 %v504, %v584
  %v601 = vmul.f32 %v505, %v585
  %v602 = vmul.f32 %v506, %v586
  %v603 = vmul.f32 %v507, %v587
  %v604 = vmul.f32 %v508, %v588
  %v605 = vmul.f32 %v509, %v589
  %v606 = vmul.f32 %v510, %v590
  %607 = vst [vmem:[#allocation2] sm:$0xff] %v334
  %608 = vst [vmem:[#allocation2 + $0x8] sm:$0xff] %v335
  %609 = vst [vmem:[#allocation2 + $0x10] sm:$0xff] %v336
  %610 = vst [vmem:[#allocation2 + $0x18] sm:$0xff] %v337
  %611 = vst [vmem:[#allocation2 + $0x20] sm:$0xff] %v338
  %612 = vst [vmem:[#allocation2 + $0x28] sm:$0xff] %v339
  %613 = vst [vmem:[#allocation2 + $0x30] sm:$0xff] %v340
  %614 = vst [vmem:[#allocation2 + $0x38] sm:$0xff] %v341
  %615 = vst [vmem:[#allocation2 + $0x40] sm:$0xff] %v342
  %616 = vst [vmem:[#allocation2 + $0x48] sm:$0xff] %v343
  %617 = vst [vmem:[#allocation2 + $0x50] sm:$0xff] %v344
  %618 = vst [vmem:[#allocation2 + $0x58] sm:$0xff] %v345
  %619 = vst [vmem:[#allocation2 + $0x60] sm:$0xff] %v346
  %620 = vst [vmem:[#allocation2 + $0x68] sm:$0xff] %v347
  %621 = vst [vmem:[#allocation2 + $0x70] sm:$0xff] %v348
  %622 = vst [vmem:[#allocation2 + $0x78] sm:$0xff] %v349
  %623 = vst [vmem:[#allocation2 + $0x280] sm:$0xff] %v591
  %624 = vst [vmem:[#allocation2 + $0x288] sm:$0xff] %v592
  %625 = vst [vmem:[#allocation2 + $0x290] sm:$0xff] %v593
  %626 = vst [vmem:[#allocation2 + $0x298] sm:$0xff] %v594
  %627 = vst [vmem:[#allocation2 + $0x2a0] sm:$0xff] %v595
  %628 = vst [vmem:[#allocation2 + $0x2a8] sm:$0xff] %v596
  %629 = vst [vmem:[#allocation2 + $0x2b0] sm:$0xff] %v597
  %630 = vst [vmem:[#allocation2 + $0x2b8] sm:$0xff] %v598
  %631 = vst [vmem:[#allocation2 + $0x2c0] sm:$0xff] %v599
  %632 = vst [vmem:[#allocation2 + $0x2c8] sm:$0xff] %v600
  %633 = vst [vmem:[#allocation2 + $0x2d0] sm:$0xff] %v601
  %634 = vst [vmem:[#allocation2 + $0x2d8] sm:$0xff] %v602
  %635 = vst [vmem:[#allocation2 + $0x2e0] sm:$0xff] %v603
  %636 = vst [vmem:[#allocation2 + $0x2e8] sm:$0xff] %v604
  %637 = vst [vmem:[#allocation2 + $0x2f0] sm:$0xff] %v605
  %638 = vst [vmem:[#allocation2 + $0x2f8] sm:$0xff] %v606
  %v639 = vld [vmem:[%s3] sm:$0xff]
  %v640 = vld [vmem:[%s3 + $0x8] sm:$0xff]
  %v641 = vld [vmem:[%s3 + $0x10] sm:$0xff]
  %v642 = vld [vmem:[%s3 + $0x18] sm:$0xff]
  %v643 = vld [vmem:[%s3 + $0x20] sm:$0xff]
  %v644 = vld [vmem:[%s3 + $0x28] sm:$0xff]
  %v645 = vld [vmem:[%s3 + $0x30] sm:$0xff]
  %v646 = vld [vmem:[%s3 + $0x38] sm:$0xff]
  %v647 = vld [vmem:[%s3 + $0x40] sm:$0xff]
  %v648 = vld [vmem:[%s3 + $0x48] sm:$0xff]
  %v649 = vld [vmem:[%s3 + $0x50] sm:$0xff]
  %v650 = vld [vmem:[%s3 + $0x58] sm:$0xff]
  %v651 = vld [vmem:[%s3 + $0x60] sm:$0xff]
  %v652 = vld [vmem:[%s3 + $0x68] sm:$0xff]
  %v653 = vld [vmem:[%s3 + $0x70] sm:$0xff]
  %v654 = vld [vmem:[%s3 + $0x78] sm:$0xff]
  %655 = vmatprep.subr.mxu0 0.0
  %656 = vmatpush1.msra.mxu0 %v639
  %657 = vmatprep.subr.mxu0 0.0
  %658 = vmatpush1.msra.mxu0 %v640
  %659 = vmatprep.subr.mxu0 0.0
  %660 = vmatpush1.msra.mxu0 %v641
  %661 = vmatprep.subr.mxu0 0.0
  %662 = vmatpush1.msra.mxu0 %v642
  %663 = vmatprep.subr.mxu0 0.0
  %664 = vmatpush1.msra.mxu0 %v643
  %665 = vmatprep.subr.mxu0 0.0
  %666 = vmatpush1.msra.mxu0 %v644
  %667 = vmatprep.subr.mxu0 0.0
  %668 = vmatpush1.msra.mxu0 %v645
  %669 = vmatprep.subr.mxu0 0.0
  %670 = vmatpush1.msra.mxu0 %v646
  %671 = vmatprep.subr.mxu0 0.0
  %672 = vmatpush1.msra.mxu0 %v647
  %673 = vmatprep.subr.mxu0 0.0
  %674 = vmatpush1.msra.mxu0 %v648
  %675 = vmatprep.subr.mxu0 0.0
  %676 = vmatpush1.msra.mxu0 %v649
  %677 = vmatprep.subr.mxu0 0.0
  %678 = vmatpush1.msra.mxu0 %v650
  %679 = vmatprep.subr.mxu0 0.0
  %680 = vmatpush1.msra.mxu0 %v651
  %681 = vmatprep.subr.mxu0 0.0
  %682 = vmatpush1.msra.mxu0 %v652
  %683 = vmatprep.subr.mxu0 0.0
  %684 = vmatpush1.msra.mxu0 %v653
  %685 = vmatprep.subr.mxu0 0.0
  %686 = vmatpush1.msra.mxu0 %v654
  %687 = vmatprep.subr.mxu0 0.0
  %688 = vmatpush1.msra.mxu0 0.0
  %689 = vmatprep.subr.mxu0 0.0
  %690 = vmatpush1.msra.mxu0 0.0
  %691 = vmatprep.subr.mxu0 0.0
  %692 = vmatpush1.msra.mxu0 0.0
  %693 = vmatprep.subr.mxu0 0.0
  %694 = vmatpush1.msra.mxu0 0.0
  %695 = vmatprep.subr.mxu0 0.0
  %696 = vmatpush1.msra.mxu0 0.0
  %697 = vmatprep.subr.mxu0 0.0
  %698 = vmatpush1.msra.mxu0 0.0
  %699 = vmatprep.subr.mxu0 0.0
  %700 = vmatpush1.msra.mxu0 0.0
  %701 = vmatprep.subr.mxu0 0.0
  %702 = vmatpush1.msra.mxu0 0.0
  %703 = vmatprep.subr.mxu0 0.0
  %704 = vmatpush1.msra.mxu0 0.0
  %705 = vmatprep.subr.mxu0 0.0
  %706 = vmatpush1.msra.mxu0 0.0
  %707 = vmatprep.subr.mxu0 0.0
  %708 = vmatpush1.msra.mxu0 0.0
  %709 = vmatprep.subr.mxu0 0.0
  %710 = vmatpush1.msra.mxu0 0.0
  %711 = vmatprep.subr.mxu0 0.0
  %712 = vmatpush1.msra.mxu0 0.0
  %713 = vmatprep.subr.mxu0 0.0
  %714 = vmatpush1.msra.mxu0 0.0
  %715 = vmatprep.subr.mxu0 0.0
  %716 = vmatpush1.msra.mxu0 0.0
  %717 = vmatprep.subr.mxu0 0.0
  %718 = vmatpush1.msra.mxu0 0.0
  %719 = vmatprep.mubr.f32.mxu0 0.0
  %720 = vmatmul.mubr.f32.gmra.mrb[0].mxu0 %v334
  %v721 = vpop.f32.mrb[0].mxu0
  %v722 = vadd.f32 0.0, %v721
  %v723 = vpop.f32.mrb[0].mxu0
  %724 = vmatprep.mubr.f32.mxu0 0.0
  %725 = vmatmul.mubr.f32.gmra.mrb[0].mxu0 %v335
  %v726 = vpop.f32.mrb[0].mxu0
  %v727 = vadd.f32 0.0, %v726
  %v728 = vpop.f32.mrb[0].mxu0
  %729 = vmatprep.mubr.f32.mxu0 0.0
  %730 = vmatmul.mubr.f32.gmra.mrb[0].mxu0 %v336
  %v731 = vpop.f32.mrb[0].mxu0
  %v732 = vadd.f32 0.0, %v731
  %v733 = vpop.f32.mrb[0].mxu0
  %734 = vmatprep.mubr.f32.mxu0 0.0
  %735 = vmatmul.mubr.f32.gmra.mrb[0].mxu0 %v337
  %v736 = vpop.f32.mrb[0].mxu0
  %v737 = vadd.f32 0.0, %v736
  %v738 = vpop.f32.mrb[0].mxu0
  %739 = vmatprep.mubr.f32.mxu0 0.0
  %740 = vmatmul.mubr.f32.gmra.mrb[0].mxu0 %v338
  %v741 = vpop.f32.mrb[0].mxu0
  %v742 = vadd.f32 0.0, %v741
  %v743 = vpop.f32.mrb[0].mxu0
  %744 = vmatprep.mubr.f32.mxu0 0.0
  %745 = vmatmul.mubr.f32.gmra.mrb[0].mxu0 %v339
  %v746 = vpop.f32.mrb[0].mxu0
  %v747 = vadd.f32 0.0, %v746
  %v748 = vpop.f32.mrb[0].mxu0
  %749 = vmatprep.mubr.f32.mxu0 0.0
  %750 = vmatmul.mubr.f32.gmra.mrb[0].mxu0 %v340
  %v751 = vpop.f32.mrb[0].mxu0
  %v752 = vadd.f32 0.0, %v751
  %v753 = vpop.f32.mrb[0].mxu0
  %754 = vmatprep.mubr.f32.mxu0 0.0
  %755 = vmatmul.mubr.f32.gmra.mrb[0].mxu0 %v341
  %v756 = vpop.f32.mrb[0].mxu0
  %v757 = vadd.f32 0.0, %v756
  %v758 = vpop.f32.mrb[0].mxu0
  %759 = vmatprep.mubr.f32.mxu0 0.0
  %760 = vmatmul.mubr.f32.gmra.mrb[0].mxu0 %v342
  %v761 = vpop.f32.mrb[0].mxu0
  %v762 = vadd.f32 0.0, %v761
  %v763 = vpop.f32.mrb[0].mxu0
  %764 = vmatprep.mubr.f32.mxu0 0.0
  %765 = vmatmul.mubr.f32.gmra.mrb[0].mxu0 %v343
  %v766 = vpop.f32.mrb[0].mxu0
  %v767 = vadd.f32 0.0, %v766
  %v768 = vpop.f32.mrb[0].mxu0
  %769 = vmatprep.mubr.f32.mxu0 0.0
  %770 = vmatmul.mubr.f32.gmra.mrb[0].mxu0 %v344
  %v771 = vpop.f32.mrb[0].mxu0
  %v772 = vadd.f32 0.0, %v771
  %v773 = vpop.f32.mrb[0].mxu0
  %774 = vmatprep.mubr.f32.mxu0 0.0
  %775 = vmatmul.mubr.f32.gmra.mrb[0].mxu0 %v345
  %v776 = vpop.f32.mrb[0].mxu0
  %v777 = vadd.f32 0.0, %v776
  %v778 = vpop.f32.mrb[0].mxu0
  %779 = vmatprep.mubr.f32.mxu0 0.0
  %780 = vmatmul.mubr.f32.gmra.mrb[0].mxu0 %v346
  %v781 = vpop.f32.mrb[0].mxu0
  %v782 = vadd.f32 0.0, %v781
  %v783 = vpop.f32.mrb[0].mxu0
  %784 = vmatprep.mubr.f32.mxu0 0.0
  %785 = vmatmul.mubr.f32.gmra.mrb[0].mxu0 %v347
  %v786 = vpop.f32.mrb[0].mxu0
  %v787 = vadd.f32 0.0, %v786
  %v788 = vpop.f32.mrb[0].mxu0
  %789 = vmatprep.mubr.f32.mxu0 0.0
  %790 = vmatmul.mubr.f32.gmra.mrb[0].mxu0 %v348
  %v791 = vpop.f32.mrb[0].mxu0
  %v792 = vadd.f32 0.0, %v791
  %v793 = vpop.f32.mrb[0].mxu0
  %794 = vmatprep.mubr.f32.mxu0 0.0
  %795 = vmatmul.mubr.f32.gmra.mrb[0].mxu0 %v349
  %v796 = vpop.f32.mrb[0].mxu0
  %v797 = vadd.f32 0.0, %v796
  %v798 = vpop.f32.mrb[0].mxu0
  %799 = vdwg.mxu0
  %800 = vmatprep.subr.mxu0 0.0
  %801 = vmatpush1.msra.mxu0 %v722
  %802 = vmatprep.subr.mxu0 0.0
  %803 = vmatpush1.msra.mxu0 %v727
  %804 = vmatprep.subr.mxu0 0.0
  %805 = vmatpush1.msra.mxu0 %v732
  %806 = vmatprep.subr.mxu0 0.0
  %807 = vmatpush1.msra.mxu0 %v737
  %808 = vmatprep.subr.mxu0 0.0
  %809 = vmatpush1.msra.mxu0 %v742
  %810 = vmatprep.subr.mxu0 0.0
  %811 = vmatpush1.msra.mxu0 %v747
  %812 = vmatprep.subr.mxu0 0.0
  %813 = vmatpush1.msra.mxu0 %v752
  %814 = vmatprep.subr.mxu0 0.0
  %815 = vmatpush1.msra.mxu0 %v757
  %816 = vmatprep.subr.mxu0 0.0
  %817 = vmatpush1.msra.mxu0 %v762
  %818 = vmatprep.subr.mxu0 0.0
  %819 = vmatpush1.msra.mxu0 %v767
  %820 = vmatprep.subr.mxu0 0.0
  %821 = vmatpush1.msra.mxu0 %v772
  %822 = vmatprep.subr.mxu0 0.0
  %823 = vmatpush1.msra.mxu0 %v777
  %824 = vmatprep.subr.mxu0 0.0
  %825 = vmatpush1.msra.mxu0 %v782
  %826 = vmatprep.subr.mxu0 0.0
  %827 = vmatpush1.msra.mxu0 %v787
  %828 = vmatprep.subr.mxu0 0.0
  %829 = vmatpush1.msra.mxu0 %v792
  %830 = vmatprep.subr.mxu0 0.0
  %831 = vmatpush1.msra.mxu0 %v797
  %832 = vmatprep.subr.mxu0 0.0
  %833 = vmatpush1.msra.mxu0 0.0
  %834 = vmatprep.subr.mxu0 0.0
  %835 = vmatpush1.msra.mxu0 0.0
  %836 = vmatprep.subr.mxu0 0.0
  %837 = vmatpush1.msra.mxu0 0.0
  %838 = vmatprep.subr.mxu0 0.0
  %839 = vmatpush1.msra.mxu0 0.0
  %840 = vmatprep.subr.mxu0 0.0
  %841 = vmatpush1.msra.mxu0 0.0
  %842 = vmatprep.subr.mxu0 0.0
  %843 = vmatpush1.msra.mxu0 0.0
  %844 = vmatprep.subr.mxu0 0.0
  %845 = vmatpush1.msra.mxu0 0.0
  %846 = vmatprep.subr.mxu0 0.0
  %847 = vmatpush1.msra.mxu0 0.0
  %848 = vmatprep.subr.mxu0 0.0
  %849 = vmatpush1.msra.mxu0 0.0
  %850 = vmatprep.subr.mxu0 0.0
  %851 = vmatpush1.msra.mxu0 0.0
  %852 = vmatprep.subr.mxu0 0.0
  %853 = vmatpush1.msra.mxu0 0.0
  %854 = vmatprep.subr.mxu0 0.0
  %855 = vmatpush1.msra.mxu0 0.0
  %856 = vmatprep.subr.mxu0 0.0
  %857 = vmatpush1.msra.mxu0 0.0
  %858 = vmatprep.subr.mxu0 0.0
  %859 = vmatpush1.msra.mxu0 0.0
  %860 = vmatprep.subr.mxu0 0.0
  %861 = vmatpush1.msra.mxu0 0.0
  %862 = vmatprep.subr.mxu0 0.0
  %863 = vmatpush1.msra.mxu0 0.0
  %864 = vmatprep.mubr.f32.mxu0 0.0
  %865 = vmatmul.mubr.f32.gmra.mrb[0].mxu0 %v45
  %v866 = vpop.f32.mrb[0].mxu0
  %v867 = vadd.f32 0.0, %v866
  %v868 = vpop.f32.mrb[0].mxu0
  %869 = vmatprep.mubr.f32.mxu0 0.0
  %870 = vmatmul.mubr.f32.gmra.mrb[0].mxu0 %v46
  %v871 = vpop.f32.mrb[0].mxu0
  %v872 = vadd.f32 0.0, %v871
  %v873 = vpop.f32.mrb[0].mxu0
  %874 = vmatprep.mubr.f32.mxu0 0.0
  %875 = vmatmul.mubr.f32.gmra.mrb[0].mxu0 %v47
  %v876 = vpop.f32.mrb[0].mxu0
  %v877 = vadd.f32 0.0, %v876
  %v878 = vpop.f32.mrb[0].mxu0
  %879 = vmatprep.mubr.f32.mxu0 0.0
  %880 = vmatmul.mubr.f32.gmra.mrb[0].mxu0 %v48
  %v881 = vpop.f32.mrb[0].mxu0
  %v882 = vadd.f32 0.0, %v881
  %v883 = vpop.f32.mrb[0].mxu0
  %884 = vmatprep.mubr.f32.mxu0 0.0
  %885 = vmatmul.mubr.f32.gmra.mrb[0].mxu0 %v49
  %v886 = vpop.f32.mrb[0].mxu0
  %v887 = vadd.f32 0.0, %v886
  %v888 = vpop.f32.mrb[0].mxu0
  %889 = vmatprep.mubr.f32.mxu0 0.0
  %890 = vmatmul.mubr.f32.gmra.mrb[0].mxu0 %v50
  %v891 = vpop.f32.mrb[0].mxu0
  %v892 = vadd.f32 0.0, %v891
  %v893 = vpop.f32.mrb[0].mxu0
  %894 = vmatprep.mubr.f32.mxu0 0.0
  %895 = vmatmul.mubr.f32.gmra.mrb[0].mxu0 %v51
  %v896 = vpop.f32.mrb[0].mxu0
  %v897 = vadd.f32 0.0, %v896
  %v898 = vpop.f32.mrb[0].mxu0
  %899 = vmatprep.mubr.f32.mxu0 0.0
  %900 = vmatmul.mubr.f32.gmra.mrb[0].mxu0 %v52
  %v901 = vpop.f32.mrb[0].mxu0
  %v902 = vadd.f32 0.0, %v901
  %v903 = vpop.f32.mrb[0].mxu0
  %904 = vmatprep.mubr.f32.mxu0 0.0
  %905 = vmatmul.mubr.f32.gmra.mrb[0].mxu0 %v53
  %v906 = vpop.f32.mrb[0].mxu0
  %v907 = vadd.f32 0.0, %v906
  %v908 = vpop.f32.mrb[0].mxu0
  %909 = vmatprep.mubr.f32.mxu0 0.0
  %910 = vmatmul.mubr.f32.gmra.mrb[0].mxu0 %v54
  %v911 = vpop.f32.mrb[0].mxu0
  %v912 = vadd.f32 0.0, %v911
  %v913 = vpop.f32.mrb[0].mxu0
  %914 = vmatprep.mubr.f32.mxu0 0.0
  %915 = vmatmul.mubr.f32.gmra.mrb[0].mxu0 %v55
  %v916 = vpop.f32.mrb[0].mxu0
  %v917 = vadd.f32 0.0, %v916
  %v918 = vpop.f32.mrb[0].mxu0
  %919 = vmatprep.mubr.f32.mxu0 0.0
  %920 = vmatmul.mubr.f32.gmra.mrb[0].mxu0 %v56
  %v921 = vpop.f32.mrb[0].mxu0
  %v922 = vadd.f32 0.0, %v921
  %v923 = vpop.f32.mrb[0].mxu0
  %924 = vmatprep.mubr.f32.mxu0 0.0
  %925 = vmatmul.mubr.f32.gmra.mrb[0].mxu0 %v57
  %v926 = vpop.f32.mrb[0].mxu0
  %v927 = vadd.f32 0.0, %v926
  %v928 = vpop.f32.mrb[0].mxu0
  %929 = vmatprep.mubr.f32.mxu0 0.0
  %930 = vmatmul.mubr.f32.gmra.mrb[0].mxu0 %v58
  %v931 = vpop.f32.mrb[0].mxu0
  %v932 = vadd.f32 0.0, %v931
  %v933 = vpop.f32.mrb[0].mxu0
  %934 = vmatprep.mubr.f32.mxu0 0.0
  %935 = vmatmul.mubr.f32.gmra.mrb[0].mxu0 %v59
  %v936 = vpop.f32.mrb[0].mxu0
  %v937 = vadd.f32 0.0, %v936
  %v938 = vpop.f32.mrb[0].mxu0
  %939 = vmatprep.mubr.f32.mxu0 0.0
  %940 = vmatmul.mubr.f32.gmra.mrb[0].mxu0 %v60
  %v941 = vpop.f32.mrb[0].mxu0
  %v942 = vadd.f32 0.0, %v941
  %v943 = vpop.f32.mrb[0].mxu0
  %944 = vdwg.mxu0
  %v945 = vmax.f32 %v867, 0.0
  %v946 = vmax.f32 %v872, 0.0
  %v947 = vmax.f32 %v877, 0.0
  %v948 = vmax.f32 %v882, 0.0
  %v949 = vmax.f32 %v887, 0.0
  %v950 = vmax.f32 %v892, 0.0
  %v951 = vmax.f32 %v897, 0.0
  %v952 = vmax.f32 %v902, 0.0
  %v953 = vmax.f32 %v907, 0.0
  %v954 = vmax.f32 %v912, 0.0
  %v955 = vmax.f32 %v917, 0.0
  %v956 = vmax.f32 %v922, 0.0
  %v957 = vmax.f32 %v927, 0.0
  %v958 = vmax.f32 %v932, 0.0
  %v959 = vmax.f32 %v937, 0.0
  %v960 = vmax.f32 %v942, 0.0
  %v961 = vmul.f32 %v945, %v945
  %v962 = vmul.f32 %v946, %v946
  %v963 = vmul.f32 %v947, %v947
  %v964 = vmul.f32 %v948, %v948
  %v965 = vmul.f32 %v949, %v949
  %v966 = vmul.f32 %v950, %v950
  %v967 = vmul.f32 %v951, %v951
  %v968 = vmul.f32 %v952, %v952
  %v969 = vmul.f32 %v953, %v953
  %v970 = vmul.f32 %v954, %v954
  %v971 = vmul.f32 %v955, %v955
  %v972 = vmul.f32 %v956, %v956
  %v973 = vmul.f32 %v957, %v957
  %v974 = vmul.f32 %v958, %v958
  %v975 = vmul.f32 %v959, %v959
  %v976 = vmul.f32 %v960, %v960
  %977 = vadd.xlane.f32.xlu0 %v961
  %v978 = vpop.xlane.xlu0 %977
  %979 = vadd.xlane.f32.xlu0 %v962
  %v980 = vpop.xlane.xlu0 %979
  %981 = vadd.xlane.f32.xlu0 %v963
  %v982 = vpop.xlane.xlu0 %981
  %983 = vadd.xlane.f32.xlu0 %v964
  %v984 = vpop.xlane.xlu0 %983
  %985 = vadd.xlane.f32.xlu0 %v965
  %v986 = vpop.xlane.xlu0 %985
  %987 = vadd.xlane.f32.xlu0 %v966
  %v988 = vpop.xlane.xlu0 %987
  %989 = vadd.xlane.f32.xlu0 %v967
  %v990 = vpop.xlane.xlu0 %989
  %991 = vadd.xlane.f32.xlu0 %v968
  %v992 = vpop.xlane.xlu0 %991
  %993 = vadd.xlane.f32.xlu0 %v969
  %v994 = vpop.xlane.xlu0 %993
  %995 = vadd.xlane.f32.xlu0 %v970
  %v996 = vpop.xlane.xlu0 %995
  %997 = vadd.xlane.f32.xlu0 %v971
  %v998 = vpop.xlane.xlu0 %997
  %999 = vadd.xlane.f32.xlu0 %v972
  %v1000 = vpop.xlane.xlu0 %999
  %1001 = vadd.xlane.f32.xlu0 %v973
  %v1002 = vpop.xlane.xlu0 %1001
  %1003 = vadd.xlane.f32.xlu0 %v974
  %v1004 = vpop.xlane.xlu0 %1003
  %1005 = vadd.xlane.f32.xlu0 %v975
  %v1006 = vpop.xlane.xlu0 %1005
  %1007 = vadd.xlane.f32.xlu0 %v976
  %v1008 = vpop.xlane.xlu0 %1007
  %v1009 = vmax.f32 %v978, 1e-24
  %v1010 = vmax.f32 %v980, 1e-24
  %v1011 = vmax.f32 %v982, 1e-24
  %v1012 = vmax.f32 %v984, 1e-24
  %v1013 = vmax.f32 %v986, 1e-24
  %v1014 = vmax.f32 %v988, 1e-24
  %v1015 = vmax.f32 %v990, 1e-24
  %v1016 = vmax.f32 %v992, 1e-24
  %v1017 = vmax.f32 %v994, 1e-24
  %v1018 = vmax.f32 %v996, 1e-24
  %v1019 = vmax.f32 %v998, 1e-24
  %v1020 = vmax.f32 %v1000, 1e-24
  %v1021 = vmax.f32 %v1002, 1e-24
  %v1022 = vmax.f32 %v1004, 1e-24
  %v1023 = vmax.f32 %v1006, 1e-24
  %v1024 = vmax.f32 %v1008, 1e-24
  %v1025 = vrsqrt.pop %v1009
  %v1026 = vrsqrt.pop %v1010
  %v1027 = vrsqrt.pop %v1011
  %v1028 = vrsqrt.pop %v1012
  %v1029 = vrsqrt.pop %v1013
  %v1030 = vrsqrt.pop %v1014
  %v1031 = vrsqrt.pop %v1015
  %v1032 = vrsqrt.pop %v1016
  %v1033 = vrsqrt.pop %v1017
  %v1034 = vrsqrt.pop %v1018
  %v1035 = vrsqrt.pop %v1019
  %v1036 = vrsqrt.pop %v1020
  %v1037 = vrsqrt.pop %v1021
  %v1038 = vrsqrt.pop %v1022
  %v1039 = vrsqrt.pop %v1023
  %v1040 = vrsqrt.pop %v1024
  %v1041 = vmul.f32 %v945, %v1025
  %v1042 = vmul.f32 %v946, %v1026
  %v1043 = vmul.f32 %v947, %v1027
  %v1044 = vmul.f32 %v948, %v1028
  %v1045 = vmul.f32 %v949, %v1029
  %v1046 = vmul.f32 %v950, %v1030
  %v1047 = vmul.f32 %v951, %v1031
  %v1048 = vmul.f32 %v952, %v1032
  %v1049 = vmul.f32 %v953, %v1033
  %v1050 = vmul.f32 %v954, %v1034
  %v1051 = vmul.f32 %v955, %v1035
  %v1052 = vmul.f32 %v956, %v1036
  %v1053 = vmul.f32 %v957, %v1037
  %v1054 = vmul.f32 %v958, %v1038
  %v1055 = vmul.f32 %v959, %v1039
  %v1056 = vmul.f32 %v960, %v1040
  %1057 = vmatprep.subr.mxu0 0.0
  %1058 = vmatpush1.msra.mxu0 %v639
  %1059 = vmatprep.subr.mxu0 0.0
  %1060 = vmatpush1.msra.mxu0 %v640
  %1061 = vmatprep.subr.mxu0 0.0
  %1062 = vmatpush1.msra.mxu0 %v641
  %1063 = vmatprep.subr.mxu0 0.0
  %1064 = vmatpush1.msra.mxu0 %v642
  %1065 = vmatprep.subr.mxu0 0.0
  %1066 = vmatpush1.msra.mxu0 %v643
  %1067 = vmatprep.subr.mxu0 0.0
  %1068 = vmatpush1.msra.mxu0 %v644
  %1069 = vmatprep.subr.mxu0 0.0
  %1070 = vmatpush1.msra.mxu0 %v645
  %1071 = vmatprep.subr.mxu0 0.0
  %1072 = vmatpush1.msra.mxu0 %v646
  %1073 = vmatprep.subr.mxu0 0.0
  %1074 = vmatpush1.msra.mxu0 %v647
  %1075 = vmatprep.subr.mxu0 0.0
  %1076 = vmatpush1.msra.mxu0 %v648
  %1077 = vmatprep.subr.mxu0 0.0
  %1078 = vmatpush1.msra.mxu0 %v649
  %1079 = vmatprep.subr.mxu0 0.0
  %1080 = vmatpush1.msra.mxu0 %v650
  %1081 = vmatprep.subr.mxu0 0.0
  %1082 = vmatpush1.msra.mxu0 %v651
  %1083 = vmatprep.subr.mxu0 0.0
  %1084 = vmatpush1.msra.mxu0 %v652
  %1085 = vmatprep.subr.mxu0 0.0
  %1086 = vmatpush1.msra.mxu0 %v653
  %1087 = vmatprep.subr.mxu0 0.0
  %1088 = vmatpush1.msra.mxu0 %v654
  %1089 = vmatprep.subr.mxu0 0.0
  %1090 = vmatpush1.msra.mxu0 0.0
  %1091 = vmatprep.subr.mxu0 0.0
  %1092 = vmatpush1.msra.mxu0 0.0
  %1093 = vmatprep.subr.mxu0 0.0
  %1094 = vmatpush1.msra.mxu0 0.0
  %1095 = vmatprep.subr.mxu0 0.0
  %1096 = vmatpush1.msra.mxu0 0.0
  %1097 = vmatprep.subr.mxu0 0.0
  %1098 = vmatpush1.msra.mxu0 0.0
  %1099 = vmatprep.subr.mxu0 0.0
  %1100 = vmatpush1.msra.mxu0 0.0
  %1101 = vmatprep.subr.mxu0 0.0
  %1102 = vmatpush1.msra.mxu0 0.0
  %1103 = vmatprep.subr.mxu0 0.0
  %1104 = vmatpush1.msra.mxu0 0.0
  %1105 = vmatprep.subr.mxu0 0.0
  %1106 = vmatpush1.msra.mxu0 0.0
  %1107 = vmatprep.subr.mxu0 0.0
  %1108 = vmatpush1.msra.mxu0 0.0
  %1109 = vmatprep.subr.mxu0 0.0
  %1110 = vmatpush1.msra.mxu0 0.0
  %1111 = vmatprep.subr.mxu0 0.0
  %1112 = vmatpush1.msra.mxu0 0.0
  %1113 = vmatprep.subr.mxu0 0.0
  %1114 = vmatpush1.msra.mxu0 0.0
  %1115 = vmatprep.subr.mxu0 0.0
  %1116 = vmatpush1.msra.mxu0 0.0
  %1117 = vmatprep.subr.mxu0 0.0
  %1118 = vmatpush1.msra.mxu0 0.0
  %1119 = vmatprep.subr.mxu0 0.0
  %1120 = vmatpush1.msra.mxu0 0.0
  %1121 = vmatprep.mubr.f32.mxu0 0.0
  %1122 = vmatmul.mubr.f32.gmra.mrb[0].mxu0 %v591
  %v1123 = vpop.f32.mrb[0].mxu0
  %v1124 = vadd.f32 0.0, %v1123
  %v1125 = vpop.f32.mrb[0].mxu0
  %1126 = vmatprep.mubr.f32.mxu0 0.0
  %1127 = vmatmul.mubr.f32.gmra.mrb[0].mxu0 %v592
  %v1128 = vpop.f32.mrb[0].mxu0
  %v1129 = vadd.f32 0.0, %v1128
  %v1130 = vpop.f32.mrb[0].mxu0
  %1131 = vmatprep.mubr.f32.mxu0 0.0
  %1132 = vmatmul.mubr.f32.gmra.mrb[0].mxu0 %v593
  %v1133 = vpop.f32.mrb[0].mxu0
  %v1134 = vadd.f32 0.0, %v1133
  %v1135 = vpop.f32.mrb[0].mxu0
  %1136 = vmatprep.mubr.f32.mxu0 0.0
  %1137 = vmatmul.mubr.f32.gmra.mrb[0].mxu0 %v594
  %v1138 = vpop.f32.mrb[0].mxu0
  %v1139 = vadd.f32 0.0, %v1138
  %v1140 = vpop.f32.mrb[0].mxu0
  %1141 = vmatprep.mubr.f32.mxu0 0.0
  %1142 = vmatmul.mubr.f32.gmra.mrb[0].mxu0 %v595
  %v1143 = vpop.f32.mrb[0].mxu0
  %v1144 = vadd.f32 0.0, %v1143
  %v1145 = vpop.f32.mrb[0].mxu0
  %1146 = vmatprep.mubr.f32.mxu0 0.0
  %1147 = vmatmul.mubr.f32.gmra.mrb[0].mxu0 %v596
  %v1148 = vpop.f32.mrb[0].mxu0
  %v1149 = vadd.f32 0.0, %v1148
  %v1150 = vpop.f32.mrb[0].mxu0
  %1151 = vmatprep.mubr.f32.mxu0 0.0
  %1152 = vmatmul.mubr.f32.gmra.mrb[0].mxu0 %v597
  %v1153 = vpop.f32.mrb[0].mxu0
  %v1154 = vadd.f32 0.0, %v1153
  %v1155 = vpop.f32.mrb[0].mxu0
  %1156 = vmatprep.mubr.f32.mxu0 0.0
  %1157 = vmatmul.mubr.f32.gmra.mrb[0].mxu0 %v598
  %v1158 = vpop.f32.mrb[0].mxu0
  %v1159 = vadd.f32 0.0, %v1158
  %v1160 = vpop.f32.mrb[0].mxu0
  %1161 = vmatprep.mubr.f32.mxu0 0.0
  %1162 = vmatmul.mubr.f32.gmra.mrb[0].mxu0 %v599
  %v1163 = vpop.f32.mrb[0].mxu0
  %v1164 = vadd.f32 0.0, %v1163
  %v1165 = vpop.f32.mrb[0].mxu0
  %1166 = vmatprep.mubr.f32.mxu0 0.0
  %1167 = vmatmul.mubr.f32.gmra.mrb[0].mxu0 %v600
  %v1168 = vpop.f32.mrb[0].mxu0
  %v1169 = vadd.f32 0.0, %v1168
  %v1170 = vpop.f32.mrb[0].mxu0
  %1171 = vmatprep.mubr.f32.mxu0 0.0
  %1172 = vmatmul.mubr.f32.gmra.mrb[0].mxu0 %v601
  %v1173 = vpop.f32.mrb[0].mxu0
  %v1174 = vadd.f32 0.0, %v1173
  %v1175 = vpop.f32.mrb[0].mxu0
  %1176 = vmatprep.mubr.f32.mxu0 0.0
  %1177 = vmatmul.mubr.f32.gmra.mrb[0].mxu0 %v602
  %v1178 = vpop.f32.mrb[0].mxu0
  %v1179 = vadd.f32 0.0, %v1178
  %v1180 = vpop.f32.mrb[0].mxu0
  %1181 = vmatprep.mubr.f32.mxu0 0.0
  %1182 = vmatmul.mubr.f32.gmra.mrb[0].mxu0 %v603
  %v1183 = vpop.f32.mrb[0].mxu0
  %v1184 = vadd.f32 0.0, %v1183
  %v1185 = vpop.f32.mrb[0].mxu0
  %1186 = vmatprep.mubr.f32.mxu0 0.0
  %1187 = vmatmul.mubr.f32.gmra.mrb[0].mxu0 %v604
  %v1188 = vpop.f32.mrb[0].mxu0
  %v1189 = vadd.f32 0.0, %v1188
  %v1190 = vpop.f32.mrb[0].mxu0
  %1191 = vmatprep.mubr.f32.mxu0 0.0
  %1192 = vmatmul.mubr.f32.gmra.mrb[0].mxu0 %v605
  %v1193 = vpop.f32.mrb[0].mxu0
  %v1194 = vadd.f32 0.0, %v1193
  %v1195 = vpop.f32.mrb[0].mxu0
  %1196 = vmatprep.mubr.f32.mxu0 0.0
  %1197 = vmatmul.mubr.f32.gmra.mrb[0].mxu0 %v606
  %v1198 = vpop.f32.mrb[0].mxu0
  %v1199 = vadd.f32 0.0, %v1198
  %v1200 = vpop.f32.mrb[0].mxu0
  %1201 = vdwg.mxu0
  %1202 = vmatprep.subr.mxu0 0.0
  %1203 = vmatpush1.msra.mxu0 %v1124
  %1204 = vmatprep.subr.mxu0 0.0
  %1205 = vmatpush1.msra.mxu0 %v1129
  %1206 = vmatprep.subr.mxu0 0.0
  %1207 = vmatpush1.msra.mxu0 %v1134
  %1208 = vmatprep.subr.mxu0 0.0
  %1209 = vmatpush1.msra.mxu0 %v1139
  %1210 = vmatprep.subr.mxu0 0.0
  %1211 = vmatpush1.msra.mxu0 %v1144
  %1212 = vmatprep.subr.mxu0 0.0
  %1213 = vmatpush1.msra.mxu0 %v1149
  %1214 = vmatprep.subr.mxu0 0.0
  %1215 = vmatpush1.msra.mxu0 %v1154
  %1216 = vmatprep.subr.mxu0 0.0
  %1217 = vmatpush1.msra.mxu0 %v1159
  %1218 = vmatprep.subr.mxu0 0.0
  %1219 = vmatpush1.msra.mxu0 %v1164
  %1220 = vmatprep.subr.mxu0 0.0
  %1221 = vmatpush1.msra.mxu0 %v1169
  %1222 = vmatprep.subr.mxu0 0.0
  %1223 = vmatpush1.msra.mxu0 %v1174
  %1224 = vmatprep.subr.mxu0 0.0
  %1225 = vmatpush1.msra.mxu0 %v1179
  %1226 = vmatprep.subr.mxu0 0.0
  %1227 = vmatpush1.msra.mxu0 %v1184
  %1228 = vmatprep.subr.mxu0 0.0
  %1229 = vmatpush1.msra.mxu0 %v1189
  %1230 = vmatprep.subr.mxu0 0.0
  %1231 = vmatpush1.msra.mxu0 %v1194
  %1232 = vmatprep.subr.mxu0 0.0
  %1233 = vmatpush1.msra.mxu0 %v1199
  %1234 = vmatprep.subr.mxu0 0.0
  %1235 = vmatpush1.msra.mxu0 0.0
  %1236 = vmatprep.subr.mxu0 0.0
  %1237 = vmatpush1.msra.mxu0 0.0
  %1238 = vmatprep.subr.mxu0 0.0
  %1239 = vmatpush1.msra.mxu0 0.0
  %1240 = vmatprep.subr.mxu0 0.0
  %1241 = vmatpush1.msra.mxu0 0.0
  %1242 = vmatprep.subr.mxu0 0.0
  %1243 = vmatpush1.msra.mxu0 0.0
  %1244 = vmatprep.subr.mxu0 0.0
  %1245 = vmatpush1.msra.mxu0 0.0
  %1246 = vmatprep.subr.mxu0 0.0
  %1247 = vmatpush1.msra.mxu0 0.0
  %1248 = vmatprep.subr.mxu0 0.0
  %1249 = vmatpush1.msra.mxu0 0.0
  %1250 = vmatprep.subr.mxu0 0.0
  %1251 = vmatpush1.msra.mxu0 0.0
  %1252 = vmatprep.subr.mxu0 0.0
  %1253 = vmatpush1.msra.mxu0 0.0
  %1254 = vmatprep.subr.mxu0 0.0
  %1255 = vmatpush1.msra.mxu0 0.0
  %1256 = vmatprep.subr.mxu0 0.0
  %1257 = vmatpush1.msra.mxu0 0.0
  %1258 = vmatprep.subr.mxu0 0.0
  %1259 = vmatpush1.msra.mxu0 0.0
  %1260 = vmatprep.subr.mxu0 0.0
  %1261 = vmatpush1.msra.mxu0 0.0
  %1262 = vmatprep.subr.mxu0 0.0
  %1263 = vmatpush1.msra.mxu0 0.0
  %1264 = vmatprep.subr.mxu0 0.0
  %1265 = vmatpush1.msra.mxu0 0.0
  %1266 = vmatprep.mubr.f32.mxu0 0.0
  %1267 = vmatmul.mubr.f32.gmra.mrb[0].mxu0 %v61
  %v1268 = vpop.f32.mrb[0].mxu0
  %v1269 = vadd.f32 0.0, %v1268
  %v1270 = vpop.f32.mrb[0].mxu0
  %1271 = vmatprep.mubr.f32.mxu0 0.0
  %1272 = vmatmul.mubr.f32.gmra.mrb[0].mxu0 %v62
  %v1273 = vpop.f32.mrb[0].mxu0
  %v1274 = vadd.f32 0.0, %v1273
  %v1275 = vpop.f32.mrb[0].mxu0
  %1276 = vmatprep.mubr.f32.mxu0 0.0
  %1277 = vmatmul.mubr.f32.gmra.mrb[0].mxu0 %v63
  %v1278 = vpop.f32.mrb[0].mxu0
  %v1279 = vadd.f32 0.0, %v1278
  %v1280 = vpop.f32.mrb[0].mxu0
  %1281 = vmatprep.mubr.f32.mxu0 0.0
  %1282 = vmatmul.mubr.f32.gmra.mrb[0].mxu0 %v64
  %v1283 = vpop.f32.mrb[0].mxu0
  %v1284 = vadd.f32 0.0, %v1283
  %v1285 = vpop.f32.mrb[0].mxu0
  %1286 = vmatprep.mubr.f32.mxu0 0.0
  %1287 = vmatmul.mubr.f32.gmra.mrb[0].mxu0 %v65
  %v1288 = vpop.f32.mrb[0].mxu0
  %v1289 = vadd.f32 0.0, %v1288
  %v1290 = vpop.f32.mrb[0].mxu0
  %1291 = vmatprep.mubr.f32.mxu0 0.0
  %1292 = vmatmul.mubr.f32.gmra.mrb[0].mxu0 %v66
  %v1293 = vpop.f32.mrb[0].mxu0
  %v1294 = vadd.f32 0.0, %v1293
  %v1295 = vpop.f32.mrb[0].mxu0
  %1296 = vmatprep.mubr.f32.mxu0 0.0
  %1297 = vmatmul.mubr.f32.gmra.mrb[0].mxu0 %v67
  %v1298 = vpop.f32.mrb[0].mxu0
  %v1299 = vadd.f32 0.0, %v1298
  %v1300 = vpop.f32.mrb[0].mxu0
  %1301 = vmatprep.mubr.f32.mxu0 0.0
  %1302 = vmatmul.mubr.f32.gmra.mrb[0].mxu0 %v68
  %v1303 = vpop.f32.mrb[0].mxu0
  %v1304 = vadd.f32 0.0, %v1303
  %v1305 = vpop.f32.mrb[0].mxu0
  %1306 = vmatprep.mubr.f32.mxu0 0.0
  %1307 = vmatmul.mubr.f32.gmra.mrb[0].mxu0 %v69
  %v1308 = vpop.f32.mrb[0].mxu0
  %v1309 = vadd.f32 0.0, %v1308
  %v1310 = vpop.f32.mrb[0].mxu0
  %1311 = vmatprep.mubr.f32.mxu0 0.0
  %1312 = vmatmul.mubr.f32.gmra.mrb[0].mxu0 %v70
  %v1313 = vpop.f32.mrb[0].mxu0
  %v1314 = vadd.f32 0.0, %v1313
  %v1315 = vpop.f32.mrb[0].mxu0
  %1316 = vmatprep.mubr.f32.mxu0 0.0
  %1317 = vmatmul.mubr.f32.gmra.mrb[0].mxu0 %v71
  %v1318 = vpop.f32.mrb[0].mxu0
  %v1319 = vadd.f32 0.0, %v1318
  %v1320 = vpop.f32.mrb[0].mxu0
  %1321 = vmatprep.mubr.f32.mxu0 0.0
  %1322 = vmatmul.mubr.f32.gmra.mrb[0].mxu0 %v72
  %v1323 = vpop.f32.mrb[0].mxu0
  %v1324 = vadd.f32 0.0, %v1323
  %v1325 = vpop.f32.mrb[0].mxu0
  %1326 = vmatprep.mubr.f32.mxu0 0.0
  %1327 = vmatmul.mubr.f32.gmra.mrb[0].mxu0 %v73
  %v1328 = vpop.f32.mrb[0].mxu0
  %v1329 = vadd.f32 0.0, %v1328
  %v1330 = vpop.f32.mrb[0].mxu0
  %1331 = vmatprep.mubr.f32.mxu0 0.0
  %1332 = vmatmul.mubr.f32.gmra.mrb[0].mxu0 %v74
  %v1333 = vpop.f32.mrb[0].mxu0
  %v1334 = vadd.f32 0.0, %v1333
  %v1335 = vpop.f32.mrb[0].mxu0
  %1336 = vmatprep.mubr.f32.mxu0 0.0
  %1337 = vmatmul.mubr.f32.gmra.mrb[0].mxu0 %v75
  %v1338 = vpop.f32.mrb[0].mxu0
  %v1339 = vadd.f32 0.0, %v1338
  %v1340 = vpop.f32.mrb[0].mxu0
  %1341 = vmatprep.mubr.f32.mxu0 0.0
  %1342 = vmatmul.mubr.f32.gmra.mrb[0].mxu0 %v76
  %v1343 = vpop.f32.mrb[0].mxu0
  %v1344 = vadd.f32 0.0, %v1343
  %v1345 = vpop.f32.mrb[0].mxu0
  %1346 = vdwg.mxu0
  %v1347 = vmax.f32 %v1269, 0.0
  %v1348 = vmax.f32 %v1274, 0.0
  %v1349 = vmax.f32 %v1279, 0.0
  %v1350 = vmax.f32 %v1284, 0.0
  %v1351 = vmax.f32 %v1289, 0.0
  %v1352 = vmax.f32 %v1294, 0.0
  %v1353 = vmax.f32 %v1299, 0.0
  %v1354 = vmax.f32 %v1304, 0.0
  %v1355 = vmax.f32 %v1309, 0.0
  %v1356 = vmax.f32 %v1314, 0.0
  %v1357 = vmax.f32 %v1319, 0.0
  %v1358 = vmax.f32 %v1324, 0.0
  %v1359 = vmax.f32 %v1329, 0.0
  %v1360 = vmax.f32 %v1334, 0.0
  %v1361 = vmax.f32 %v1339, 0.0
  %v1362 = vmax.f32 %v1344, 0.0
  %v1363 = vmul.f32 %v1347, %v1347
  %v1364 = vmul.f32 %v1348, %v1348
  %v1365 = vmul.f32 %v1349, %v1349
  %v1366 = vmul.f32 %v1350, %v1350
  %v1367 = vmul.f32 %v1351, %v1351
  %v1368 = vmul.f32 %v1352, %v1352
  %v1369 = vmul.f32 %v1353, %v1353
  %v1370 = vmul.f32 %v1354, %v1354
  %v1371 = vmul.f32 %v1355, %v1355
  %v1372 = vmul.f32 %v1356, %v1356
  %v1373 = vmul.f32 %v1357, %v1357
  %v1374 = vmul.f32 %v1358, %v1358
  %v1375 = vmul.f32 %v1359, %v1359
  %v1376 = vmul.f32 %v1360, %v1360
  %v1377 = vmul.f32 %v1361, %v1361
  %v1378 = vmul.f32 %v1362, %v1362
  %1379 = vadd.xlane.f32.xlu0 %v1363
  %v1380 = vpop.xlane.xlu0 %1379
  %1381 = vadd.xlane.f32.xlu0 %v1364
  %v1382 = vpop.xlane.xlu0 %1381
  %1383 = vadd.xlane.f32.xlu0 %v1365
  %v1384 = vpop.xlane.xlu0 %1383
  %1385 = vadd.xlane.f32.xlu0 %v1366
  %v1386 = vpop.xlane.xlu0 %1385
  %1387 = vadd.xlane.f32.xlu0 %v1367
  %v1388 = vpop.xlane.xlu0 %1387
  %1389 = vadd.xlane.f32.xlu0 %v1368
  %v1390 = vpop.xlane.xlu0 %1389
  %1391 = vadd.xlane.f32.xlu0 %v1369
  %v1392 = vpop.xlane.xlu0 %1391
  %1393 = vadd.xlane.f32.xlu0 %v1370
  %v1394 = vpop.xlane.xlu0 %1393
  %1395 = vadd.xlane.f32.xlu0 %v1371
  %v1396 = vpop.xlane.xlu0 %1395
  %1397 = vadd.xlane.f32.xlu0 %v1372
  %v1398 = vpop.xlane.xlu0 %1397
  %1399 = vadd.xlane.f32.xlu0 %v1373
  %v1400 = vpop.xlane.xlu0 %1399
  %1401 = vadd.xlane.f32.xlu0 %v1374
  %v1402 = vpop.xlane.xlu0 %1401
  %1403 = vadd.xlane.f32.xlu0 %v1375
  %v1404 = vpop.xlane.xlu0 %1403
  %1405 = vadd.xlane.f32.xlu0 %v1376
  %v1406 = vpop.xlane.xlu0 %1405
  %1407 = vadd.xlane.f32.xlu0 %v1377
  %v1408 = vpop.xlane.xlu0 %1407
  %1409 = vadd.xlane.f32.xlu0 %v1378
  %v1410 = vpop.xlane.xlu0 %1409
  %v1411 = vmax.f32 %v1380, 1e-24
  %v1412 = vmax.f32 %v1382, 1e-24
  %v1413 = vmax.f32 %v1384, 1e-24
  %v1414 = vmax.f32 %v1386, 1e-24
  %v1415 = vmax.f32 %v1388, 1e-24
  %v1416 = vmax.f32 %v1390, 1e-24
  %v1417 = vmax.f32 %v1392, 1e-24
  %v1418 = vmax.f32 %v1394, 1e-24
  %v1419 = vmax.f32 %v1396, 1e-24
  %v1420 = vmax.f32 %v1398, 1e-24
  %v1421 = vmax.f32 %v1400, 1e-24
  %v1422 = vmax.f32 %v1402, 1e-24
  %v1423 = vmax.f32 %v1404, 1e-24
  %v1424 = vmax.f32 %v1406, 1e-24
  %v1425 = vmax.f32 %v1408, 1e-24
  %v1426 = vmax.f32 %v1410, 1e-24
  %v1427 = vrsqrt.pop %v1411
  %v1428 = vrsqrt.pop %v1412
  %v1429 = vrsqrt.pop %v1413
  %v1430 = vrsqrt.pop %v1414
  %v1431 = vrsqrt.pop %v1415
  %v1432 = vrsqrt.pop %v1416
  %v1433 = vrsqrt.pop %v1417
  %v1434 = vrsqrt.pop %v1418
  %v1435 = vrsqrt.pop %v1419
  %v1436 = vrsqrt.pop %v1420
  %v1437 = vrsqrt.pop %v1421
  %v1438 = vrsqrt.pop %v1422
  %v1439 = vrsqrt.pop %v1423
  %v1440 = vrsqrt.pop %v1424
  %v1441 = vrsqrt.pop %v1425
  %v1442 = vrsqrt.pop %v1426
  %v1443 = vmul.f32 %v1347, %v1427
  %v1444 = vmul.f32 %v1348, %v1428
  %v1445 = vmul.f32 %v1349, %v1429
  %v1446 = vmul.f32 %v1350, %v1430
  %v1447 = vmul.f32 %v1351, %v1431
  %v1448 = vmul.f32 %v1352, %v1432
  %v1449 = vmul.f32 %v1353, %v1433
  %v1450 = vmul.f32 %v1354, %v1434
  %v1451 = vmul.f32 %v1355, %v1435
  %v1452 = vmul.f32 %v1356, %v1436
  %v1453 = vmul.f32 %v1357, %v1437
  %v1454 = vmul.f32 %v1358, %v1438
  %v1455 = vmul.f32 %v1359, %v1439
  %v1456 = vmul.f32 %v1360, %v1440
  %v1457 = vmul.f32 %v1361, %v1441
  %v1458 = vmul.f32 %v1362, %v1442
  %1459 = vst [vmem:[#allocation2 + $0x80] sm:$0xff] %v1041
  %1460 = vst [vmem:[#allocation2 + $0x88] sm:$0xff] %v1042
  %1461 = vst [vmem:[#allocation2 + $0x90] sm:$0xff] %v1043
  %1462 = vst [vmem:[#allocation2 + $0x98] sm:$0xff] %v1044
  %1463 = vst [vmem:[#allocation2 + $0xa0] sm:$0xff] %v1045
  %1464 = vst [vmem:[#allocation2 + $0xa8] sm:$0xff] %v1046
  %1465 = vst [vmem:[#allocation2 + $0xb0] sm:$0xff] %v1047
  %1466 = vst [vmem:[#allocation2 + $0xb8] sm:$0xff] %v1048
  %1467 = vst [vmem:[#allocation2 + $0xc0] sm:$0xff] %v1049
  %1468 = vst [vmem:[#allocation2 + $0xc8] sm:$0xff] %v1050
  %1469 = vst [vmem:[#allocation2 + $0xd0] sm:$0xff] %v1051
  %1470 = vst [vmem:[#allocation2 + $0xd8] sm:$0xff] %v1052
  %1471 = vst [vmem:[#allocation2 + $0xe0] sm:$0xff] %v1053
  %1472 = vst [vmem:[#allocation2 + $0xe8] sm:$0xff] %v1054
  %1473 = vst [vmem:[#allocation2 + $0xf0] sm:$0xff] %v1055
  %1474 = vst [vmem:[#allocation2 + $0xf8] sm:$0xff] %v1056
  %1475 = vst [vmem:[#allocation2 + $0x300] sm:$0xff] %v1443
  %1476 = vst [vmem:[#allocation2 + $0x308] sm:$0xff] %v1444
  %1477 = vst [vmem:[#allocation2 + $0x310] sm:$0xff] %v1445
  %1478 = vst [vmem:[#allocation2 + $0x318] sm:$0xff] %v1446
  %1479 = vst [vmem:[#allocation2 + $0x320] sm:$0xff] %v1447
  %1480 = vst [vmem:[#allocation2 + $0x328] sm:$0xff] %v1448
  %1481 = vst [vmem:[#allocation2 + $0x330] sm:$0xff] %v1449
  %1482 = vst [vmem:[#allocation2 + $0x338] sm:$0xff] %v1450
  %1483 = vst [vmem:[#allocation2 + $0x340] sm:$0xff] %v1451
  %1484 = vst [vmem:[#allocation2 + $0x348] sm:$0xff] %v1452
  %1485 = vst [vmem:[#allocation2 + $0x350] sm:$0xff] %v1453
  %1486 = vst [vmem:[#allocation2 + $0x358] sm:$0xff] %v1454
  %1487 = vst [vmem:[#allocation2 + $0x360] sm:$0xff] %v1455
  %1488 = vst [vmem:[#allocation2 + $0x368] sm:$0xff] %v1456
  %1489 = vst [vmem:[#allocation2 + $0x370] sm:$0xff] %v1457
  %1490 = vst [vmem:[#allocation2 + $0x378] sm:$0xff] %v1458
  %v1491 = vld [vmem:[%s4] sm:$0xff]
  %v1492 = vld [vmem:[%s4 + $0x8] sm:$0xff]
  %v1493 = vld [vmem:[%s4 + $0x10] sm:$0xff]
  %v1494 = vld [vmem:[%s4 + $0x18] sm:$0xff]
  %v1495 = vld [vmem:[%s4 + $0x20] sm:$0xff]
  %v1496 = vld [vmem:[%s4 + $0x28] sm:$0xff]
  %v1497 = vld [vmem:[%s4 + $0x30] sm:$0xff]
  %v1498 = vld [vmem:[%s4 + $0x38] sm:$0xff]
  %v1499 = vld [vmem:[%s4 + $0x40] sm:$0xff]
  %v1500 = vld [vmem:[%s4 + $0x48] sm:$0xff]
  %v1501 = vld [vmem:[%s4 + $0x50] sm:$0xff]
  %v1502 = vld [vmem:[%s4 + $0x58] sm:$0xff]
  %v1503 = vld [vmem:[%s4 + $0x60] sm:$0xff]
  %v1504 = vld [vmem:[%s4 + $0x68] sm:$0xff]
  %v1505 = vld [vmem:[%s4 + $0x70] sm:$0xff]
  %v1506 = vld [vmem:[%s4 + $0x78] sm:$0xff]
  %1507 = vmatprep.subr.mxu0 0.0
  %1508 = vmatpush1.msra.mxu0 %v1491
  %1509 = vmatprep.subr.mxu0 0.0
  %1510 = vmatpush1.msra.mxu0 %v1492
  %1511 = vmatprep.subr.mxu0 0.0
  %1512 = vmatpush1.msra.mxu0 %v1493
  %1513 = vmatprep.subr.mxu0 0.0
  %1514 = vmatpush1.msra.mxu0 %v1494
  %1515 = vmatprep.subr.mxu0 0.0
  %1516 = vmatpush1.msra.mxu0 %v1495
  %1517 = vmatprep.subr.mxu0 0.0
  %1518 = vmatpush1.msra.mxu0 %v1496
  %1519 = vmatprep.subr.mxu0 0.0
  %1520 = vmatpush1.msra.mxu0 %v1497
  %1521 = vmatprep.subr.mxu0 0.0
  %1522 = vmatpush1.msra.mxu0 %v1498
  %1523 = vmatprep.subr.mxu0 0.0
  %1524 = vmatpush1.msra.mxu0 %v1499
  %1525 = vmatprep.subr.mxu0 0.0
  %1526 = vmatpush1.msra.mxu0 %v1500
  %1527 = vmatprep.subr.mxu0 0.0
  %1528 = vmatpush1.msra.mxu0 %v1501
  %1529 = vmatprep.subr.mxu0 0.0
  %1530 = vmatpush1.msra.mxu0 %v1502
  %1531 = vmatprep.subr.mxu0 0.0
  %1532 = vmatpush1.msra.mxu0 %v1503
  %1533 = vmatprep.subr.mxu0 0.0
  %1534 = vmatpush1.msra.mxu0 %v1504
  %1535 = vmatprep.subr.mxu0 0.0
  %1536 = vmatpush1.msra.mxu0 %v1505
  %1537 = vmatprep.subr.mxu0 0.0
  %1538 = vmatpush1.msra.mxu0 %v1506
  %1539 = vmatprep.subr.mxu0 0.0
  %1540 = vmatpush1.msra.mxu0 0.0
  %1541 = vmatprep.subr.mxu0 0.0
  %1542 = vmatpush1.msra.mxu0 0.0
  %1543 = vmatprep.subr.mxu0 0.0
  %1544 = vmatpush1.msra.mxu0 0.0
  %1545 = vmatprep.subr.mxu0 0.0
  %1546 = vmatpush1.msra.mxu0 0.0
  %1547 = vmatprep.subr.mxu0 0.0
  %1548 = vmatpush1.msra.mxu0 0.0
  %1549 = vmatprep.subr.mxu0 0.0
  %1550 = vmatpush1.msra.mxu0 0.0
  %1551 = vmatprep.subr.mxu0 0.0
  %1552 = vmatpush1.msra.mxu0 0.0
  %1553 = vmatprep.subr.mxu0 0.0
  %1554 = vmatpush1.msra.mxu0 0.0
  %1555 = vmatprep.subr.mxu0 0.0
  %1556 = vmatpush1.msra.mxu0 0.0
  %1557 = vmatprep.subr.mxu0 0.0
  %1558 = vmatpush1.msra.mxu0 0.0
  %1559 = vmatprep.subr.mxu0 0.0
  %1560 = vmatpush1.msra.mxu0 0.0
  %1561 = vmatprep.subr.mxu0 0.0
  %1562 = vmatpush1.msra.mxu0 0.0
  %1563 = vmatprep.subr.mxu0 0.0
  %1564 = vmatpush1.msra.mxu0 0.0
  %1565 = vmatprep.subr.mxu0 0.0
  %1566 = vmatpush1.msra.mxu0 0.0
  %1567 = vmatprep.subr.mxu0 0.0
  %1568 = vmatpush1.msra.mxu0 0.0
  %1569 = vmatprep.subr.mxu0 0.0
  %1570 = vmatpush1.msra.mxu0 0.0
  %1571 = vmatprep.mubr.f32.mxu0 0.0
  %1572 = vmatmul.mubr.f32.gmra.mrb[0].mxu0 %v1041
  %v1573 = vpop.f32.mrb[0].mxu0
  %v1574 = vadd.f32 0.0, %v1573
  %v1575 = vpop.f32.mrb[0].mxu0
  %1576 = vmatprep.mubr.f32.mxu0 0.0
  %1577 = vmatmul.mubr.f32.gmra.mrb[0].mxu0 %v1042
  %v1578 = vpop.f32.mrb[0].mxu0
  %v1579 = vadd.f32 0.0, %v1578
  %v1580 = vpop.f32.mrb[0].mxu0
  %1581 = vmatprep.mubr.f32.mxu0 0.0
  %1582 = vmatmul.mubr.f32.gmra.mrb[0].mxu0 %v1043
  %v1583 = vpop.f32.mrb[0].mxu0
  %v1584 = vadd.f32 0.0, %v1583
  %v1585 = vpop.f32.mrb[0].mxu0
  %1586 = vmatprep.mubr.f32.mxu0 0.0
  %1587 = vmatmul.mubr.f32.gmra.mrb[0].mxu0 %v1044
  %v1588 = vpop.f32.mrb[0].mxu0
  %v1589 = vadd.f32 0.0, %v1588
  %v1590 = vpop.f32.mrb[0].mxu0
  %1591 = vmatprep.mubr.f32.mxu0 0.0
  %1592 = vmatmul.mubr.f32.gmra.mrb[0].mxu0 %v1045
  %v1593 = vpop.f32.mrb[0].mxu0
  %v1594 = vadd.f32 0.0, %v1593
  %v1595 = vpop.f32.mrb[0].mxu0
  %1596 = vmatprep.mubr.f32.mxu0 0.0
  %1597 = vmatmul.mubr.f32.gmra.mrb[0].mxu0 %v1046
  %v1598 = vpop.f32.mrb[0].mxu0
  %v1599 = vadd.f32 0.0, %v1598
  %v1600 = vpop.f32.mrb[0].mxu0
  %1601 = vmatprep.mubr.f32.mxu0 0.0
  %1602 = vmatmul.mubr.f32.gmra.mrb[0].mxu0 %v1047
  %v1603 = vpop.f32.mrb[0].mxu0
  %v1604 = vadd.f32 0.0, %v1603
  %v1605 = vpop.f32.mrb[0].mxu0
  %1606 = vmatprep.mubr.f32.mxu0 0.0
  %1607 = vmatmul.mubr.f32.gmra.mrb[0].mxu0 %v1048
  %v1608 = vpop.f32.mrb[0].mxu0
  %v1609 = vadd.f32 0.0, %v1608
  %v1610 = vpop.f32.mrb[0].mxu0
  %1611 = vmatprep.mubr.f32.mxu0 0.0
  %1612 = vmatmul.mubr.f32.gmra.mrb[0].mxu0 %v1049
  %v1613 = vpop.f32.mrb[0].mxu0
  %v1614 = vadd.f32 0.0, %v1613
  %v1615 = vpop.f32.mrb[0].mxu0
  %1616 = vmatprep.mubr.f32.mxu0 0.0
  %1617 = vmatmul.mubr.f32.gmra.mrb[0].mxu0 %v1050
  %v1618 = vpop.f32.mrb[0].mxu0
  %v1619 = vadd.f32 0.0, %v1618
  %v1620 = vpop.f32.mrb[0].mxu0
  %1621 = vmatprep.mubr.f32.mxu0 0.0
  %1622 = vmatmul.mubr.f32.gmra.mrb[0].mxu0 %v1051
  %v1623 = vpop.f32.mrb[0].mxu0
  %v1624 = vadd.f32 0.0, %v1623
  %v1625 = vpop.f32.mrb[0].mxu0
  %1626 = vmatprep.mubr.f32.mxu0 0.0
  %1627 = vmatmul.mubr.f32.gmra.mrb[0].mxu0 %v1052
  %v1628 = vpop.f32.mrb[0].mxu0
  %v1629 = vadd.f32 0.0, %v1628
  %v1630 = vpop.f32.mrb[0].mxu0
  %1631 = vmatprep.mubr.f32.mxu0 0.0
  %1632 = vmatmul.mubr.f32.gmra.mrb[0].mxu0 %v1053
  %v1633 = vpop.f32.mrb[0].mxu0
  %v1634 = vadd.f32 0.0, %v1633
  %v1635 = vpop.f32.mrb[0].mxu0
  %1636 = vmatprep.mubr.f32.mxu0 0.0
  %1637 = vmatmul.mubr.f32.gmra.mrb[0].mxu0 %v1054
  %v1638 = vpop.f32.mrb[0].mxu0
  %v1639 = vadd.f32 0.0, %v1638
  %v1640 = vpop.f32.mrb[0].mxu0
  %1641 = vmatprep.mubr.f32.mxu0 0.0
  %1642 = vmatmul.mubr.f32.gmra.mrb[0].mxu0 %v1055
  %v1643 = vpop.f32.mrb[0].mxu0
  %v1644 = vadd.f32 0.0, %v1643
  %v1645 = vpop.f32.mrb[0].mxu0
  %1646 = vmatprep.mubr.f32.mxu0 0.0
  %1647 = vmatmul.mubr.f32.gmra.mrb[0].mxu0 %v1056
  %v1648 = vpop.f32.mrb[0].mxu0
  %v1649 = vadd.f32 0.0, %v1648
  %v1650 = vpop.f32.mrb[0].mxu0
  %1651 = vdwg.mxu0
  %1652 = vmatprep.subr.mxu0 0.0
  %1653 = vmatpush1.msra.mxu0 %v1574
  %1654 = vmatprep.subr.mxu0 0.0
  %1655 = vmatpush1.msra.mxu0 %v1579
  %1656 = vmatprep.subr.mxu0 0.0
  %1657 = vmatpush1.msra.mxu0 %v1584
  %1658 = vmatprep.subr.mxu0 0.0
  %1659 = vmatpush1.msra.mxu0 %v1589
  %1660 = vmatprep.subr.mxu0 0.0
  %1661 = vmatpush1.msra.mxu0 %v1594
  %1662 = vmatprep.subr.mxu0 0.0
  %1663 = vmatpush1.msra.mxu0 %v1599
  %1664 = vmatprep.subr.mxu0 0.0
  %1665 = vmatpush1.msra.mxu0 %v1604
  %1666 = vmatprep.subr.mxu0 0.0
  %1667 = vmatpush1.msra.mxu0 %v1609
  %1668 = vmatprep.subr.mxu0 0.0
  %1669 = vmatpush1.msra.mxu0 %v1614
  %1670 = vmatprep.subr.mxu0 0.0
  %1671 = vmatpush1.msra.mxu0 %v1619
  %1672 = vmatprep.subr.mxu0 0.0
  %1673 = vmatpush1.msra.mxu0 %v1624
  %1674 = vmatprep.subr.mxu0 0.0
  %1675 = vmatpush1.msra.mxu0 %v1629
  %1676 = vmatprep.subr.mxu0 0.0
  %1677 = vmatpush1.msra.mxu0 %v1634
  %1678 = vmatprep.subr.mxu0 0.0
  %1679 = vmatpush1.msra.mxu0 %v1639
  %1680 = vmatprep.subr.mxu0 0.0
  %1681 = vmatpush1.msra.mxu0 %v1644
  %1682 = vmatprep.subr.mxu0 0.0
  %1683 = vmatpush1.msra.mxu0 %v1649
  %1684 = vmatprep.subr.mxu0 0.0
  %1685 = vmatpush1.msra.mxu0 0.0
  %1686 = vmatprep.subr.mxu0 0.0
  %1687 = vmatpush1.msra.mxu0 0.0
  %1688 = vmatprep.subr.mxu0 0.0
  %1689 = vmatpush1.msra.mxu0 0.0
  %1690 = vmatprep.subr.mxu0 0.0
  %1691 = vmatpush1.msra.mxu0 0.0
  %1692 = vmatprep.subr.mxu0 0.0
  %1693 = vmatpush1.msra.mxu0 0.0
  %1694 = vmatprep.subr.mxu0 0.0
  %1695 = vmatpush1.msra.mxu0 0.0
  %1696 = vmatprep.subr.mxu0 0.0
  %1697 = vmatpush1.msra.mxu0 0.0
  %1698 = vmatprep.subr.mxu0 0.0
  %1699 = vmatpush1.msra.mxu0 0.0
  %1700 = vmatprep.subr.mxu0 0.0
  %1701 = vmatpush1.msra.mxu0 0.0
  %1702 = vmatprep.subr.mxu0 0.0
  %1703 = vmatpush1.msra.mxu0 0.0
  %1704 = vmatprep.subr.mxu0 0.0
  %1705 = vmatpush1.msra.mxu0 0.0
  %1706 = vmatprep.subr.mxu0 0.0
  %1707 = vmatpush1.msra.mxu0 0.0
  %1708 = vmatprep.subr.mxu0 0.0
  %1709 = vmatpush1.msra.mxu0 0.0
  %1710 = vmatprep.subr.mxu0 0.0
  %1711 = vmatpush1.msra.mxu0 0.0
  %1712 = vmatprep.subr.mxu0 0.0
  %1713 = vmatpush1.msra.mxu0 0.0
  %1714 = vmatprep.subr.mxu0 0.0
  %1715 = vmatpush1.msra.mxu0 0.0
  %1716 = vmatprep.mubr.f32.mxu0 0.0
  %1717 = vmatmul.mubr.f32.gmra.mrb[0].mxu0 %v45
  %v1718 = vpop.f32.mrb[0].mxu0
  %v1719 = vadd.f32 0.0, %v1718
  %v1720 = vpop.f32.mrb[0].mxu0
  %1721 = vmatprep.mubr.f32.mxu0 0.0
  %1722 = vmatmul.mubr.f32.gmra.mrb[0].mxu0 %v46
  %v1723 = vpop.f32.mrb[0].mxu0
  %v1724 = vadd.f32 0.0, %v1723
  %v1725 = vpop.f32.mrb[0].mxu0
  %1726 = vmatprep.mubr.f32.mxu0 0.0
  %1727 = vmatmul.mubr.f32.gmra.mrb[0].mxu0 %v47
  %v1728 = vpop.f32.mrb[0].mxu0
  %v1729 = vadd.f32 0.0, %v1728
  %v1730 = vpop.f32.mrb[0].mxu0
  %1731 = vmatprep.mubr.f32.mxu0 0.0
  %1732 = vmatmul.mubr.f32.gmra.mrb[0].mxu0 %v48
  %v1733 = vpop.f32.mrb[0].mxu0
  %v1734 = vadd.f32 0.0, %v1733
  %v1735 = vpop.f32.mrb[0].mxu0
  %1736 = vmatprep.mubr.f32.mxu0 0.0
  %1737 = vmatmul.mubr.f32.gmra.mrb[0].mxu0 %v49
  %v1738 = vpop.f32.mrb[0].mxu0
  %v1739 = vadd.f32 0.0, %v1738
  %v1740 = vpop.f32.mrb[0].mxu0
  %1741 = vmatprep.mubr.f32.mxu0 0.0
  %1742 = vmatmul.mubr.f32.gmra.mrb[0].mxu0 %v50
  %v1743 = vpop.f32.mrb[0].mxu0
  %v1744 = vadd.f32 0.0, %v1743
  %v1745 = vpop.f32.mrb[0].mxu0
  %1746 = vmatprep.mubr.f32.mxu0 0.0
  %1747 = vmatmul.mubr.f32.gmra.mrb[0].mxu0 %v51
  %v1748 = vpop.f32.mrb[0].mxu0
  %v1749 = vadd.f32 0.0, %v1748
  %v1750 = vpop.f32.mrb[0].mxu0
  %1751 = vmatprep.mubr.f32.mxu0 0.0
  %1752 = vmatmul.mubr.f32.gmra.mrb[0].mxu0 %v52
  %v1753 = vpop.f32.mrb[0].mxu0
  %v1754 = vadd.f32 0.0, %v1753
  %v1755 = vpop.f32.mrb[0].mxu0
  %1756 = vmatprep.mubr.f32.mxu0 0.0
  %1757 = vmatmul.mubr.f32.gmra.mrb[0].mxu0 %v53
  %v1758 = vpop.f32.mrb[0].mxu0
  %v1759 = vadd.f32 0.0, %v1758
  %v1760 = vpop.f32.mrb[0].mxu0
  %1761 = vmatprep.mubr.f32.mxu0 0.0
  %1762 = vmatmul.mubr.f32.gmra.mrb[0].mxu0 %v54
  %v1763 = vpop.f32.mrb[0].mxu0
  %v1764 = vadd.f32 0.0, %v1763
  %v1765 = vpop.f32.mrb[0].mxu0
  %1766 = vmatprep.mubr.f32.mxu0 0.0
  %1767 = vmatmul.mubr.f32.gmra.mrb[0].mxu0 %v55
  %v1768 = vpop.f32.mrb[0].mxu0
  %v1769 = vadd.f32 0.0, %v1768
  %v1770 = vpop.f32.mrb[0].mxu0
  %1771 = vmatprep.mubr.f32.mxu0 0.0
  %1772 = vmatmul.mubr.f32.gmra.mrb[0].mxu0 %v56
  %v1773 = vpop.f32.mrb[0].mxu0
  %v1774 = vadd.f32 0.0, %v1773
  %v1775 = vpop.f32.mrb[0].mxu0
  %1776 = vmatprep.mubr.f32.mxu0 0.0
  %1777 = vmatmul.mubr.f32.gmra.mrb[0].mxu0 %v57
  %v1778 = vpop.f32.mrb[0].mxu0
  %v1779 = vadd.f32 0.0, %v1778
  %v1780 = vpop.f32.mrb[0].mxu0
  %1781 = vmatprep.mubr.f32.mxu0 0.0
  %1782 = vmatmul.mubr.f32.gmra.mrb[0].mxu0 %v58
  %v1783 = vpop.f32.mrb[0].mxu0
  %v1784 = vadd.f32 0.0, %v1783
  %v1785 = vpop.f32.mrb[0].mxu0
  %1786 = vmatprep.mubr.f32.mxu0 0.0
  %1787 = vmatmul.mubr.f32.gmra.mrb[0].mxu0 %v59
  %v1788 = vpop.f32.mrb[0].mxu0
  %v1789 = vadd.f32 0.0, %v1788
  %v1790 = vpop.f32.mrb[0].mxu0
  %1791 = vmatprep.mubr.f32.mxu0 0.0
  %1792 = vmatmul.mubr.f32.gmra.mrb[0].mxu0 %v60
  %v1793 = vpop.f32.mrb[0].mxu0
  %v1794 = vadd.f32 0.0, %v1793
  %v1795 = vpop.f32.mrb[0].mxu0
  %1796 = vdwg.mxu0
  %v1797 = vmax.f32 %v1719, 0.0
  %v1798 = vmax.f32 %v1724, 0.0
  %v1799 = vmax.f32 %v1729, 0.0
  %v1800 = vmax.f32 %v1734, 0.0
  %v1801 = vmax.f32 %v1739, 0.0
  %v1802 = vmax.f32 %v1744, 0.0
  %v1803 = vmax.f32 %v1749, 0.0
  %v1804 = vmax.f32 %v1754, 0.0
  %v1805 = vmax.f32 %v1759, 0.0
  %v1806 = vmax.f32 %v1764, 0.0
  %v1807 = vmax.f32 %v1769, 0.0
  %v1808 = vmax.f32 %v1774, 0.0
  %v1809 = vmax.f32 %v1779, 0.0
  %v1810 = vmax.f32 %v1784, 0.0
  %v1811 = vmax.f32 %v1789, 0.0
  %v1812 = vmax.f32 %v1794, 0.0
  %v1813 = vmul.f32 %v1797, %v1797
  %v1814 = vmul.f32 %v1798, %v1798
  %v1815 = vmul.f32 %v1799, %v1799
  %v1816 = vmul.f32 %v1800, %v1800
  %v1817 = vmul.f32 %v1801, %v1801
  %v1818 = vmul.f32 %v1802, %v1802
  %v1819 = vmul.f32 %v1803, %v1803
  %v1820 = vmul.f32 %v1804, %v1804
  %v1821 = vmul.f32 %v1805, %v1805
  %v1822 = vmul.f32 %v1806, %v1806
  %v1823 = vmul.f32 %v1807, %v1807
  %v1824 = vmul.f32 %v1808, %v1808
  %v1825 = vmul.f32 %v1809, %v1809
  %v1826 = vmul.f32 %v1810, %v1810
  %v1827 = vmul.f32 %v1811, %v1811
  %v1828 = vmul.f32 %v1812, %v1812
  %1829 = vadd.xlane.f32.xlu0 %v1813
  %v1830 = vpop.xlane.xlu0 %1829
  %1831 = vadd.xlane.f32.xlu0 %v1814
  %v1832 = vpop.xlane.xlu0 %1831
  %1833 = vadd.xlane.f32.xlu0 %v1815
  %v1834 = vpop.xlane.xlu0 %1833
  %1835 = vadd.xlane.f32.xlu0 %v1816
  %v1836 = vpop.xlane.xlu0 %1835
  %1837 = vadd.xlane.f32.xlu0 %v1817
  %v1838 = vpop.xlane.xlu0 %1837
  %1839 = vadd.xlane.f32.xlu0 %v1818
  %v1840 = vpop.xlane.xlu0 %1839
  %1841 = vadd.xlane.f32.xlu0 %v1819
  %v1842 = vpop.xlane.xlu0 %1841
  %1843 = vadd.xlane.f32.xlu0 %v1820
  %v1844 = vpop.xlane.xlu0 %1843
  %1845 = vadd.xlane.f32.xlu0 %v1821
  %v1846 = vpop.xlane.xlu0 %1845
  %1847 = vadd.xlane.f32.xlu0 %v1822
  %v1848 = vpop.xlane.xlu0 %1847
  %1849 = vadd.xlane.f32.xlu0 %v1823
  %v1850 = vpop.xlane.xlu0 %1849
  %1851 = vadd.xlane.f32.xlu0 %v1824
  %v1852 = vpop.xlane.xlu0 %1851
  %1853 = vadd.xlane.f32.xlu0 %v1825
  %v1854 = vpop.xlane.xlu0 %1853
  %1855 = vadd.xlane.f32.xlu0 %v1826
  %v1856 = vpop.xlane.xlu0 %1855
  %1857 = vadd.xlane.f32.xlu0 %v1827
  %v1858 = vpop.xlane.xlu0 %1857
  %1859 = vadd.xlane.f32.xlu0 %v1828
  %v1860 = vpop.xlane.xlu0 %1859
  %v1861 = vmax.f32 %v1830, 1e-24
  %v1862 = vmax.f32 %v1832, 1e-24
  %v1863 = vmax.f32 %v1834, 1e-24
  %v1864 = vmax.f32 %v1836, 1e-24
  %v1865 = vmax.f32 %v1838, 1e-24
  %v1866 = vmax.f32 %v1840, 1e-24
  %v1867 = vmax.f32 %v1842, 1e-24
  %v1868 = vmax.f32 %v1844, 1e-24
  %v1869 = vmax.f32 %v1846, 1e-24
  %v1870 = vmax.f32 %v1848, 1e-24
  %v1871 = vmax.f32 %v1850, 1e-24
  %v1872 = vmax.f32 %v1852, 1e-24
  %v1873 = vmax.f32 %v1854, 1e-24
  %v1874 = vmax.f32 %v1856, 1e-24
  %v1875 = vmax.f32 %v1858, 1e-24
  %v1876 = vmax.f32 %v1860, 1e-24
  %v1877 = vrsqrt.pop %v1861
  %v1878 = vrsqrt.pop %v1862
  %v1879 = vrsqrt.pop %v1863
  %v1880 = vrsqrt.pop %v1864
  %v1881 = vrsqrt.pop %v1865
  %v1882 = vrsqrt.pop %v1866
  %v1883 = vrsqrt.pop %v1867
  %v1884 = vrsqrt.pop %v1868
  %v1885 = vrsqrt.pop %v1869
  %v1886 = vrsqrt.pop %v1870
  %v1887 = vrsqrt.pop %v1871
  %v1888 = vrsqrt.pop %v1872
  %v1889 = vrsqrt.pop %v1873
  %v1890 = vrsqrt.pop %v1874
  %v1891 = vrsqrt.pop %v1875
  %v1892 = vrsqrt.pop %v1876
  %v1893 = vmul.f32 %v1797, %v1877
  %v1894 = vmul.f32 %v1798, %v1878
  %v1895 = vmul.f32 %v1799, %v1879
  %v1896 = vmul.f32 %v1800, %v1880
  %v1897 = vmul.f32 %v1801, %v1881
  %v1898 = vmul.f32 %v1802, %v1882
  %v1899 = vmul.f32 %v1803, %v1883
  %v1900 = vmul.f32 %v1804, %v1884
  %v1901 = vmul.f32 %v1805, %v1885
  %v1902 = vmul.f32 %v1806, %v1886
  %v1903 = vmul.f32 %v1807, %v1887
  %v1904 = vmul.f32 %v1808, %v1888
  %v1905 = vmul.f32 %v1809, %v1889
  %v1906 = vmul.f32 %v1810, %v1890
  %v1907 = vmul.f32 %v1811, %v1891
  %v1908 = vmul.f32 %v1812, %v1892
  %1909 = vmatprep.subr.mxu0 0.0
  %1910 = vmatpush1.msra.mxu0 %v1491
  %1911 = vmatprep.subr.mxu0 0.0
  %1912 = vmatpush1.msra.mxu0 %v1492
  %1913 = vmatprep.subr.mxu0 0.0
  %1914 = vmatpush1.msra.mxu0 %v1493
  %1915 = vmatprep.subr.mxu0 0.0
  %1916 = vmatpush1.msra.mxu0 %v1494
  %1917 = vmatprep.subr.mxu0 0.0
  %1918 = vmatpush1.msra.mxu0 %v1495
  %1919 = vmatprep.subr.mxu0 0.0
  %1920 = vmatpush1.msra.mxu0 %v1496
  %1921 = vmatprep.subr.mxu0 0.0
  %1922 = vmatpush1.msra.mxu0 %v1497
  %1923 = vmatprep.subr.mxu0 0.0
  %1924 = vmatpush1.msra.mxu0 %v1498
  %1925 = vmatprep.subr.mxu0 0.0
  %1926 = vmatpush1.msra.mxu0 %v1499
  %1927 = vmatprep.subr.mxu0 0.0
  %1928 = vmatpush1.msra.mxu0 %v1500
  %1929 = vmatprep.subr.mxu0 0.0
  %1930 = vmatpush1.msra.mxu0 %v1501
  %1931 = vmatprep.subr.mxu0 0.0
  %1932 = vmatpush1.msra.mxu0 %v1502
  %1933 = vmatprep.subr.mxu0 0.0
  %1934 = vmatpush1.msra.mxu0 %v1503
  %1935 = vmatprep.subr.mxu0 0.0
  %1936 = vmatpush1.msra.mxu0 %v1504
  %1937 = vmatprep.subr.mxu0 0.0
  %1938 = vmatpush1.msra.mxu0 %v1505
  %1939 = vmatprep.subr.mxu0 0.0
  %1940 = vmatpush1.msra.mxu0 %v1506
  %1941 = vmatprep.subr.mxu0 0.0
  %1942 = vmatpush1.msra.mxu0 0.0
  %1943 = vmatprep.subr.mxu0 0.0
  %1944 = vmatpush1.msra.mxu0 0.0
  %1945 = vmatprep.subr.mxu0 0.0
  %1946 = vmatpush1.msra.mxu0 0.0
  %1947 = vmatprep.subr.mxu0 0.0
  %1948 = vmatpush1.msra.mxu0 0.0
  %1949 = vmatprep.subr.mxu0 0.0
  %1950 = vmatpush1.msra.mxu0 0.0
  %1951 = vmatprep.subr.mxu0 0.0
  %1952 = vmatpush1.msra.mxu0 0.0
  %1953 = vmatprep.subr.mxu0 0.0
  %1954 = vmatpush1.msra.mxu0 0.0
  %1955 = vmatprep.subr.mxu0 0.0
  %1956 = vmatpush1.msra.mxu0 0.0
  %1957 = vmatprep.subr.mxu0 0.0
  %1958 = vmatpush1.msra.mxu0 0.0
  %1959 = vmatprep.subr.mxu0 0.0
  %1960 = vmatpush1.msra.mxu0 0.0
  %1961 = vmatprep.subr.mxu0 0.0
  %1962 = vmatpush1.msra.mxu0 0.0
  %1963 = vmatprep.subr.mxu0 0.0
  %1964 = vmatpush1.msra.mxu0 0.0
  %1965 = vmatprep.subr.mxu0 0.0
  %1966 = vmatpush1.msra.mxu0 0.0
  %1967 = vmatprep.subr.mxu0 0.0
  %1968 = vmatpush1.msra.mxu0 0.0
  %1969 = vmatprep.subr.mxu0 0.0
  %1970 = vmatpush1.msra.mxu0 0.0
  %1971 = vmatprep.subr.mxu0 0.0
  %1972 = vmatpush1.msra.mxu0 0.0
  %1973 = vmatprep.mubr.f32.mxu0 0.0
  %1974 = vmatmul.mubr.f32.gmra.mrb[0].mxu0 %v1443
  %v1975 = vpop.f32.mrb[0].mxu0
  %v1976 = vadd.f32 0.0, %v1975
  %v1977 = vpop.f32.mrb[0].mxu0
  %1978 = vmatprep.mubr.f32.mxu0 0.0
  %1979 = vmatmul.mubr.f32.gmra.mrb[0].mxu0 %v1444
  %v1980 = vpop.f32.mrb[0].mxu0
  %v1981 = vadd.f32 0.0, %v1980
  %v1982 = vpop.f32.mrb[0].mxu0
  %1983 = vmatprep.mubr.f32.mxu0 0.0
  %1984 = vmatmul.mubr.f32.gmra.mrb[0].mxu0 %v1445
  %v1985 = vpop.f32.mrb[0].mxu0
  %v1986 = vadd.f32 0.0, %v1985
  %v1987 = vpop.f32.mrb[0].mxu0
  %1988 = vmatprep.mubr.f32.mxu0 0.0
  %1989 = vmatmul.mubr.f32.gmra.mrb[0].mxu0 %v1446
  %v1990 = vpop.f32.mrb[0].mxu0
  %v1991 = vadd.f32 0.0, %v1990
  %v1992 = vpop.f32.mrb[0].mxu0
  %1993 = vmatprep.mubr.f32.mxu0 0.0
  %1994 = vmatmul.mubr.f32.gmra.mrb[0].mxu0 %v1447
  %v1995 = vpop.f32.mrb[0].mxu0
  %v1996 = vadd.f32 0.0, %v1995
  %v1997 = vpop.f32.mrb[0].mxu0
  %1998 = vmatprep.mubr.f32.mxu0 0.0
  %1999 = vmatmul.mubr.f32.gmra.mrb[0].mxu0 %v1448
  %v2000 = vpop.f32.mrb[0].mxu0
  %v2001 = vadd.f32 0.0, %v2000
  %v2002 = vpop.f32.mrb[0].mxu0
  %2003 = vmatprep.mubr.f32.mxu0 0.0
  %2004 = vmatmul.mubr.f32.gmra.mrb[0].mxu0 %v1449
  %v2005 = vpop.f32.mrb[0].mxu0
  %v2006 = vadd.f32 0.0, %v2005
  %v2007 = vpop.f32.mrb[0].mxu0
  %2008 = vmatprep.mubr.f32.mxu0 0.0
  %2009 = vmatmul.mubr.f32.gmra.mrb[0].mxu0 %v1450
  %v2010 = vpop.f32.mrb[0].mxu0
  %v2011 = vadd.f32 0.0, %v2010
  %v2012 = vpop.f32.mrb[0].mxu0
  %2013 = vmatprep.mubr.f32.mxu0 0.0
  %2014 = vmatmul.mubr.f32.gmra.mrb[0].mxu0 %v1451
  %v2015 = vpop.f32.mrb[0].mxu0
  %v2016 = vadd.f32 0.0, %v2015
  %v2017 = vpop.f32.mrb[0].mxu0
  %2018 = vmatprep.mubr.f32.mxu0 0.0
  %2019 = vmatmul.mubr.f32.gmra.mrb[0].mxu0 %v1452
  %v2020 = vpop.f32.mrb[0].mxu0
  %v2021 = vadd.f32 0.0, %v2020
  %v2022 = vpop.f32.mrb[0].mxu0
  %2023 = vmatprep.mubr.f32.mxu0 0.0
  %2024 = vmatmul.mubr.f32.gmra.mrb[0].mxu0 %v1453
  %v2025 = vpop.f32.mrb[0].mxu0
  %v2026 = vadd.f32 0.0, %v2025
  %v2027 = vpop.f32.mrb[0].mxu0
  %2028 = vmatprep.mubr.f32.mxu0 0.0
  %2029 = vmatmul.mubr.f32.gmra.mrb[0].mxu0 %v1454
  %v2030 = vpop.f32.mrb[0].mxu0
  %v2031 = vadd.f32 0.0, %v2030
  %v2032 = vpop.f32.mrb[0].mxu0
  %2033 = vmatprep.mubr.f32.mxu0 0.0
  %2034 = vmatmul.mubr.f32.gmra.mrb[0].mxu0 %v1455
  %v2035 = vpop.f32.mrb[0].mxu0
  %v2036 = vadd.f32 0.0, %v2035
  %v2037 = vpop.f32.mrb[0].mxu0
  %2038 = vmatprep.mubr.f32.mxu0 0.0
  %2039 = vmatmul.mubr.f32.gmra.mrb[0].mxu0 %v1456
  %v2040 = vpop.f32.mrb[0].mxu0
  %v2041 = vadd.f32 0.0, %v2040
  %v2042 = vpop.f32.mrb[0].mxu0
  %2043 = vmatprep.mubr.f32.mxu0 0.0
  %2044 = vmatmul.mubr.f32.gmra.mrb[0].mxu0 %v1457
  %v2045 = vpop.f32.mrb[0].mxu0
  %v2046 = vadd.f32 0.0, %v2045
  %v2047 = vpop.f32.mrb[0].mxu0
  %2048 = vmatprep.mubr.f32.mxu0 0.0
  %2049 = vmatmul.mubr.f32.gmra.mrb[0].mxu0 %v1458
  %v2050 = vpop.f32.mrb[0].mxu0
  %v2051 = vadd.f32 0.0, %v2050
  %v2052 = vpop.f32.mrb[0].mxu0
  %2053 = vdwg.mxu0
  %2054 = vmatprep.subr.mxu0 0.0
  %2055 = vmatpush1.msra.mxu0 %v1976
  %2056 = vmatprep.subr.mxu0 0.0
  %2057 = vmatpush1.msra.mxu0 %v1981
  %2058 = vmatprep.subr.mxu0 0.0
  %2059 = vmatpush1.msra.mxu0 %v1986
  %2060 = vmatprep.subr.mxu0 0.0
  %2061 = vmatpush1.msra.mxu0 %v1991
  %2062 = vmatprep.subr.mxu0 0.0
  %2063 = vmatpush1.msra.mxu0 %v1996
  %2064 = vmatprep.subr.mxu0 0.0
  %2065 = vmatpush1.msra.mxu0 %v2001
  %2066 = vmatprep.subr.mxu0 0.0
  %2067 = vmatpush1.msra.mxu0 %v2006
  %2068 = vmatprep.subr.mxu0 0.0
  %2069 = vmatpush1.msra.mxu0 %v2011
  %2070 = vmatprep.subr.mxu0 0.0
  %2071 = vmatpush1.msra.mxu0 %v2016
  %2072 = vmatprep.subr.mxu0 0.0
  %2073 = vmatpush1.msra.mxu0 %v2021
  %2074 = vmatprep.subr.mxu0 0.0
  %2075 = vmatpush1.msra.mxu0 %v2026
  %2076 = vmatprep.subr.mxu0 0.0
  %2077 = vmatpush1.msra.mxu0 %v2031
  %2078 = vmatprep.subr.mxu0 0.0
  %2079 = vmatpush1.msra.mxu0 %v2036
  %2080 = vmatprep.subr.mxu0 0.0
  %2081 = vmatpush1.msra.mxu0 %v2041
  %2082 = vmatprep.subr.mxu0 0.0
  %2083 = vmatpush1.msra.mxu0 %v2046
  %2084 = vmatprep.subr.mxu0 0.0
  %2085 = vmatpush1.msra.mxu0 %v2051
  %2086 = vmatprep.subr.mxu0 0.0
  %2087 = vmatpush1.msra.mxu0 0.0
  %2088 = vmatprep.subr.mxu0 0.0
  %2089 = vmatpush1.msra.mxu0 0.0
  %2090 = vmatprep.subr.mxu0 0.0
  %2091 = vmatpush1.msra.mxu0 0.0
  %2092 = vmatprep.subr.mxu0 0.0
  %2093 = vmatpush1.msra.mxu0 0.0
  %2094 = vmatprep.subr.mxu0 0.0
  %2095 = vmatpush1.msra.mxu0 0.0
  %2096 = vmatprep.subr.mxu0 0.0
  %2097 = vmatpush1.msra.mxu0 0.0
  %2098 = vmatprep.subr.mxu0 0.0
  %2099 = vmatpush1.msra.mxu0 0.0
  %2100 = vmatprep.subr.mxu0 0.0
  %2101 = vmatpush1.msra.mxu0 0.0
  %2102 = vmatprep.subr.mxu0 0.0
  %2103 = vmatpush1.msra.mxu0 0.0
  %2104 = vmatprep.subr.mxu0 0.0
  %2105 = vmatpush1.msra.mxu0 0.0
  %2106 = vmatprep.subr.mxu0 0.0
  %2107 = vmatpush1.msra.mxu0 0.0
  %2108 = vmatprep.subr.mxu0 0.0
  %2109 = vmatpush1.msra.mxu0 0.0
  %2110 = vmatprep.subr.mxu0 0.0
  %2111 = vmatpush1.msra.mxu0 0.0
  %2112 = vmatprep.subr.mxu0 0.0
  %2113 = vmatpush1.msra.mxu0 0.0
  %2114 = vmatprep.subr.mxu0 0.0
  %2115 = vmatpush1.msra.mxu0 0.0
  %2116 = vmatprep.subr.mxu0 0.0
  %2117 = vmatpush1.msra.mxu0 0.0
  %2118 = vmatprep.mubr.f32.mxu0 0.0
  %2119 = vmatmul.mubr.f32.gmra.mrb[0].mxu0 %v61
  %v2120 = vpop.f32.mrb[0].mxu0
  %v2121 = vadd.f32 0.0, %v2120
  %v2122 = vpop.f32.mrb[0].mxu0
  %2123 = vmatprep.mubr.f32.mxu0 0.0
  %2124 = vmatmul.mubr.f32.gmra.mrb[0].mxu0 %v62
  %v2125 = vpop.f32.mrb[0].mxu0
  %v2126 = vadd.f32 0.0, %v2125
  %v2127 = vpop.f32.mrb[0].mxu0
  %2128 = vmatprep.mubr.f32.mxu0 0.0
  %2129 = vmatmul.mubr.f32.gmra.mrb[0].mxu0 %v63
  %v2130 = vpop.f32.mrb[0].mxu0
  %v2131 = vadd.f32 0.0, %v2130
  %v2132 = vpop.f32.mrb[0].mxu0
  %2133 = vmatprep.mubr.f32.mxu0 0.0
  %2134 = vmatmul.mubr.f32.gmra.mrb[0].mxu0 %v64
  %v2135 = vpop.f32.mrb[0].mxu0
  %v2136 = vadd.f32 0.0, %v2135
  %v2137 = vpop.f32.mrb[0].mxu0
  %2138 = vmatprep.mubr.f32.mxu0 0.0
  %2139 = vmatmul.mubr.f32.gmra.mrb[0].mxu0 %v65
  %v2140 = vpop.f32.mrb[0].mxu0
  %v2141 = vadd.f32 0.0, %v2140
  %v2142 = vpop.f32.mrb[0].mxu0
  %2143 = vmatprep.mubr.f32.mxu0 0.0
  %2144 = vmatmul.mubr.f32.gmra.mrb[0].mxu0 %v66
  %v2145 = vpop.f32.mrb[0].mxu0
  %v2146 = vadd.f32 0.0, %v2145
  %v2147 = vpop.f32.mrb[0].mxu0
  %2148 = vmatprep.mubr.f32.mxu0 0.0
  %2149 = vmatmul.mubr.f32.gmra.mrb[0].mxu0 %v67
  %v2150 = vpop.f32.mrb[0].mxu0
  %v2151 = vadd.f32 0.0, %v2150
  %v2152 = vpop.f32.mrb[0].mxu0
  %2153 = vmatprep.mubr.f32.mxu0 0.0
  %2154 = vmatmul.mubr.f32.gmra.mrb[0].mxu0 %v68
  %v2155 = vpop.f32.mrb[0].mxu0
  %v2156 = vadd.f32 0.0, %v2155
  %v2157 = vpop.f32.mrb[0].mxu0
  %2158 = vmatprep.mubr.f32.mxu0 0.0
  %2159 = vmatmul.mubr.f32.gmra.mrb[0].mxu0 %v69
  %v2160 = vpop.f32.mrb[0].mxu0
  %v2161 = vadd.f32 0.0, %v2160
  %v2162 = vpop.f32.mrb[0].mxu0
  %2163 = vmatprep.mubr.f32.mxu0 0.0
  %2164 = vmatmul.mubr.f32.gmra.mrb[0].mxu0 %v70
  %v2165 = vpop.f32.mrb[0].mxu0
  %v2166 = vadd.f32 0.0, %v2165
  %v2167 = vpop.f32.mrb[0].mxu0
  %2168 = vmatprep.mubr.f32.mxu0 0.0
  %2169 = vmatmul.mubr.f32.gmra.mrb[0].mxu0 %v71
  %v2170 = vpop.f32.mrb[0].mxu0
  %v2171 = vadd.f32 0.0, %v2170
  %v2172 = vpop.f32.mrb[0].mxu0
  %2173 = vmatprep.mubr.f32.mxu0 0.0
  %2174 = vmatmul.mubr.f32.gmra.mrb[0].mxu0 %v72
  %v2175 = vpop.f32.mrb[0].mxu0
  %v2176 = vadd.f32 0.0, %v2175
  %v2177 = vpop.f32.mrb[0].mxu0
  %2178 = vmatprep.mubr.f32.mxu0 0.0
  %2179 = vmatmul.mubr.f32.gmra.mrb[0].mxu0 %v73
  %v2180 = vpop.f32.mrb[0].mxu0
  %v2181 = vadd.f32 0.0, %v2180
  %v2182 = vpop.f32.mrb[0].mxu0
  %2183 = vmatprep.mubr.f32.mxu0 0.0
  %2184 = vmatmul.mubr.f32.gmra.mrb[0].mxu0 %v74
  %v2185 = vpop.f32.mrb[0].mxu0
  %v2186 = vadd.f32 0.0, %v2185
  %v2187 = vpop.f32.mrb[0].mxu0
  %2188 = vmatprep.mubr.f32.mxu0 0.0
  %2189 = vmatmul.mubr.f32.gmra.mrb[0].mxu0 %v75
  %v2190 = vpop.f32.mrb[0].mxu0
  %v2191 = vadd.f32 0.0, %v2190
  %v2192 = vpop.f32.mrb[0].mxu0
  %2193 = vmatprep.mubr.f32.mxu0 0.0
  %2194 = vmatmul.mubr.f32.gmra.mrb[0].mxu0 %v76
  %v2195 = vpop.f32.mrb[0].mxu0
  %v2196 = vadd.f32 0.0, %v2195
  %v2197 = vpop.f32.mrb[0].mxu0
  %2198 = vdwg.mxu0
  %v2199 = vmax.f32 %v2121, 0.0
  %v2200 = vmax.f32 %v2126, 0.0
  %v2201 = vmax.f32 %v2131, 0.0
  %v2202 = vmax.f32 %v2136, 0.0
  %v2203 = vmax.f32 %v2141, 0.0
  %v2204 = vmax.f32 %v2146, 0.0
  %v2205 = vmax.f32 %v2151, 0.0
  %v2206 = vmax.f32 %v2156, 0.0
  %v2207 = vmax.f32 %v2161, 0.0
  %v2208 = vmax.f32 %v2166, 0.0
  %v2209 = vmax.f32 %v2171, 0.0
  %v2210 = vmax.f32 %v2176, 0.0
  %v2211 = vmax.f32 %v2181, 0.0
  %v2212 = vmax.f32 %v2186, 0.0
  %v2213 = vmax.f32 %v2191, 0.0
  %v2214 = vmax.f32 %v2196, 0.0
  %v2215 = vmul.f32 %v2199, %v2199
  %v2216 = vmul.f32 %v2200, %v2200
  %v2217 = vmul.f32 %v2201, %v2201
  %v2218 = vmul.f32 %v2202, %v2202
  %v2219 = vmul.f32 %v2203, %v2203
  %v2220 = vmul.f32 %v2204, %v2204
  %v2221 = vmul.f32 %v2205, %v2205
  %v2222 = vmul.f32 %v2206, %v2206
  %v2223 = vmul.f32 %v2207, %v2207
  %v2224 = vmul.f32 %v2208, %v2208
  %v2225 = vmul.f32 %v2209, %v2209
  %v2226 = vmul.f32 %v2210, %v2210
  %v2227 = vmul.f32 %v2211, %v2211
  %v2228 = vmul.f32 %v2212, %v2212
  %v2229 = vmul.f32 %v2213, %v2213
  %v2230 = vmul.f32 %v2214, %v2214
  %2231 = vadd.xlane.f32.xlu0 %v2215
  %v2232 = vpop.xlane.xlu0 %2231
  %2233 = vadd.xlane.f32.xlu0 %v2216
  %v2234 = vpop.xlane.xlu0 %2233
  %2235 = vadd.xlane.f32.xlu0 %v2217
  %v2236 = vpop.xlane.xlu0 %2235
  %2237 = vadd.xlane.f32.xlu0 %v2218
  %v2238 = vpop.xlane.xlu0 %2237
  %2239 = vadd.xlane.f32.xlu0 %v2219
  %v2240 = vpop.xlane.xlu0 %2239
  %2241 = vadd.xlane.f32.xlu0 %v2220
  %v2242 = vpop.xlane.xlu0 %2241
  %2243 = vadd.xlane.f32.xlu0 %v2221
  %v2244 = vpop.xlane.xlu0 %2243
  %2245 = vadd.xlane.f32.xlu0 %v2222
  %v2246 = vpop.xlane.xlu0 %2245
  %2247 = vadd.xlane.f32.xlu0 %v2223
  %v2248 = vpop.xlane.xlu0 %2247
  %2249 = vadd.xlane.f32.xlu0 %v2224
  %v2250 = vpop.xlane.xlu0 %2249
  %2251 = vadd.xlane.f32.xlu0 %v2225
  %v2252 = vpop.xlane.xlu0 %2251
  %2253 = vadd.xlane.f32.xlu0 %v2226
  %v2254 = vpop.xlane.xlu0 %2253
  %2255 = vadd.xlane.f32.xlu0 %v2227
  %v2256 = vpop.xlane.xlu0 %2255
  %2257 = vadd.xlane.f32.xlu0 %v2228
  %v2258 = vpop.xlane.xlu0 %2257
  %2259 = vadd.xlane.f32.xlu0 %v2229
  %v2260 = vpop.xlane.xlu0 %2259
  %2261 = vadd.xlane.f32.xlu0 %v2230
  %v2262 = vpop.xlane.xlu0 %2261
  %v2263 = vmax.f32 %v2232, 1e-24
  %v2264 = vmax.f32 %v2234, 1e-24
  %v2265 = vmax.f32 %v2236, 1e-24
  %v2266 = vmax.f32 %v2238, 1e-24
  %v2267 = vmax.f32 %v2240, 1e-24
  %v2268 = vmax.f32 %v2242, 1e-24
  %v2269 = vmax.f32 %v2244, 1e-24
  %v2270 = vmax.f32 %v2246, 1e-24
  %v2271 = vmax.f32 %v2248, 1e-24
  %v2272 = vmax.f32 %v2250, 1e-24
  %v2273 = vmax.f32 %v2252, 1e-24
  %v2274 = vmax.f32 %v2254, 1e-24
  %v2275 = vmax.f32 %v2256, 1e-24
  %v2276 = vmax.f32 %v2258, 1e-24
  %v2277 = vmax.f32 %v2260, 1e-24
  %v2278 = vmax.f32 %v2262, 1e-24
  %v2279 = vrsqrt.pop %v2263
  %v2280 = vrsqrt.pop %v2264
  %v2281 = vrsqrt.pop %v2265
  %v2282 = vrsqrt.pop %v2266
  %v2283 = vrsqrt.pop %v2267
  %v2284 = vrsqrt.pop %v2268
  %v2285 = vrsqrt.pop %v2269
  %v2286 = vrsqrt.pop %v2270
  %v2287 = vrsqrt.pop %v2271
  %v2288 = vrsqrt.pop %v2272
  %v2289 = vrsqrt.pop %v2273
  %v2290 = vrsqrt.pop %v2274
  %v2291 = vrsqrt.pop %v2275
  %v2292 = vrsqrt.pop %v2276
  %v2293 = vrsqrt.pop %v2277
  %v2294 = vrsqrt.pop %v2278
  %v2295 = vmul.f32 %v2199, %v2279
  %v2296 = vmul.f32 %v2200, %v2280
  %v2297 = vmul.f32 %v2201, %v2281
  %v2298 = vmul.f32 %v2202, %v2282
  %v2299 = vmul.f32 %v2203, %v2283
  %v2300 = vmul.f32 %v2204, %v2284
  %v2301 = vmul.f32 %v2205, %v2285
  %v2302 = vmul.f32 %v2206, %v2286
  %v2303 = vmul.f32 %v2207, %v2287
  %v2304 = vmul.f32 %v2208, %v2288
  %v2305 = vmul.f32 %v2209, %v2289
  %v2306 = vmul.f32 %v2210, %v2290
  %v2307 = vmul.f32 %v2211, %v2291
  %v2308 = vmul.f32 %v2212, %v2292
  %v2309 = vmul.f32 %v2213, %v2293
  %v2310 = vmul.f32 %v2214, %v2294
  %2311 = vst [vmem:[#allocation2 + $0x100] sm:$0xff] %v1893
  %2312 = vst [vmem:[#allocation2 + $0x108] sm:$0xff] %v1894
  %2313 = vst [vmem:[#allocation2 + $0x110] sm:$0xff] %v1895
  %2314 = vst [vmem:[#allocation2 + $0x118] sm:$0xff] %v1896
  %2315 = vst [vmem:[#allocation2 + $0x120] sm:$0xff] %v1897
  %2316 = vst [vmem:[#allocation2 + $0x128] sm:$0xff] %v1898
  %2317 = vst [vmem:[#allocation2 + $0x130] sm:$0xff] %v1899
  %2318 = vst [vmem:[#allocation2 + $0x138] sm:$0xff] %v1900
  %2319 = vst [vmem:[#allocation2 + $0x140] sm:$0xff] %v1901
  %2320 = vst [vmem:[#allocation2 + $0x148] sm:$0xff] %v1902
  %2321 = vst [vmem:[#allocation2 + $0x150] sm:$0xff] %v1903
  %2322 = vst [vmem:[#allocation2 + $0x158] sm:$0xff] %v1904
  %2323 = vst [vmem:[#allocation2 + $0x160] sm:$0xff] %v1905
  %2324 = vst [vmem:[#allocation2 + $0x168] sm:$0xff] %v1906
  %2325 = vst [vmem:[#allocation2 + $0x170] sm:$0xff] %v1907
  %2326 = vst [vmem:[#allocation2 + $0x178] sm:$0xff] %v1908
  %2327 = vst [vmem:[#allocation2 + $0x380] sm:$0xff] %v2295
  %2328 = vst [vmem:[#allocation2 + $0x388] sm:$0xff] %v2296
  %2329 = vst [vmem:[#allocation2 + $0x390] sm:$0xff] %v2297
  %2330 = vst [vmem:[#allocation2 + $0x398] sm:$0xff] %v2298
  %2331 = vst [vmem:[#allocation2 + $0x3a0] sm:$0xff] %v2299
  %2332 = vst [vmem:[#allocation2 + $0x3a8] sm:$0xff] %v2300
  %2333 = vst [vmem:[#allocation2 + $0x3b0] sm:$0xff] %v2301
  %2334 = vst [vmem:[#allocation2 + $0x3b8] sm:$0xff] %v2302
  %2335 = vst [vmem:[#allocation2 + $0x3c0] sm:$0xff] %v2303
  %2336 = vst [vmem:[#allocation2 + $0x3c8] sm:$0xff] %v2304
  %2337 = vst [vmem:[#allocation2 + $0x3d0] sm:$0xff] %v2305
  %2338 = vst [vmem:[#allocation2 + $0x3d8] sm:$0xff] %v2306
  %2339 = vst [vmem:[#allocation2 + $0x3e0] sm:$0xff] %v2307
  %2340 = vst [vmem:[#allocation2 + $0x3e8] sm:$0xff] %v2308
  %2341 = vst [vmem:[#allocation2 + $0x3f0] sm:$0xff] %v2309
  %2342 = vst [vmem:[#allocation2 + $0x3f8] sm:$0xff] %v2310
  %v2343 = vld [vmem:[%s5] sm:$0xff]
  %v2344 = vld [vmem:[%s5 + $0x8] sm:$0xff]
  %v2345 = vld [vmem:[%s5 + $0x10] sm:$0xff]
  %v2346 = vld [vmem:[%s5 + $0x18] sm:$0xff]
  %v2347 = vld [vmem:[%s5 + $0x20] sm:$0xff]
  %v2348 = vld [vmem:[%s5 + $0x28] sm:$0xff]
  %v2349 = vld [vmem:[%s5 + $0x30] sm:$0xff]
  %v2350 = vld [vmem:[%s5 + $0x38] sm:$0xff]
  %v2351 = vld [vmem:[%s5 + $0x40] sm:$0xff]
  %v2352 = vld [vmem:[%s5 + $0x48] sm:$0xff]
  %v2353 = vld [vmem:[%s5 + $0x50] sm:$0xff]
  %v2354 = vld [vmem:[%s5 + $0x58] sm:$0xff]
  %v2355 = vld [vmem:[%s5 + $0x60] sm:$0xff]
  %v2356 = vld [vmem:[%s5 + $0x68] sm:$0xff]
  %v2357 = vld [vmem:[%s5 + $0x70] sm:$0xff]
  %v2358 = vld [vmem:[%s5 + $0x78] sm:$0xff]
  %2359 = vmatprep.subr.mxu0 0.0
  %2360 = vmatpush1.msra.mxu0 %v2343
  %2361 = vmatprep.subr.mxu0 0.0
  %2362 = vmatpush1.msra.mxu0 %v2344
  %2363 = vmatprep.subr.mxu0 0.0
  %2364 = vmatpush1.msra.mxu0 %v2345
  %2365 = vmatprep.subr.mxu0 0.0
  %2366 = vmatpush1.msra.mxu0 %v2346
  %2367 = vmatprep.subr.mxu0 0.0
  %2368 = vmatpush1.msra.mxu0 %v2347
  %2369 = vmatprep.subr.mxu0 0.0
  %2370 = vmatpush1.msra.mxu0 %v2348
  %2371 = vmatprep.subr.mxu0 0.0
  %2372 = vmatpush1.msra.mxu0 %v2349
  %2373 = vmatprep.subr.mxu0 0.0
  %2374 = vmatpush1.msra.mxu0 %v2350
  %2375 = vmatprep.subr.mxu0 0.0
  %2376 = vmatpush1.msra.mxu0 %v2351
  %2377 = vmatprep.subr.mxu0 0.0
  %2378 = vmatpush1.msra.mxu0 %v2352
  %2379 = vmatprep.subr.mxu0 0.0
  %2380 = vmatpush1.msra.mxu0 %v2353
  %2381 = vmatprep.subr.mxu0 0.0
  %2382 = vmatpush1.msra.mxu0 %v2354
  %2383 = vmatprep.subr.mxu0 0.0
  %2384 = vmatpush1.msra.mxu0 %v2355
  %2385 = vmatprep.subr.mxu0 0.0
  %2386 = vmatpush1.msra.mxu0 %v2356
  %2387 = vmatprep.subr.mxu0 0.0
  %2388 = vmatpush1.msra.mxu0 %v2357
  %2389 = vmatprep.subr.mxu0 0.0
  %2390 = vmatpush1.msra.mxu0 %v2358
  %2391 = vmatprep.subr.mxu0 0.0
  %2392 = vmatpush1.msra.mxu0 0.0
  %2393 = vmatprep.subr.mxu0 0.0
  %2394 = vmatpush1.msra.mxu0 0.0
  %2395 = vmatprep.subr.mxu0 0.0
  %2396 = vmatpush1.msra.mxu0 0.0
  %2397 = vmatprep.subr.mxu0 0.0
  %2398 = vmatpush1.msra.mxu0 0.0
  %2399 = vmatprep.subr.mxu0 0.0
  %2400 = vmatpush1.msra.mxu0 0.0
  %2401 = vmatprep.subr.mxu0 0.0
  %2402 = vmatpush1.msra.mxu0 0.0
  %2403 = vmatprep.subr.mxu0 0.0
  %2404 = vmatpush1.msra.mxu0 0.0
  %2405 = vmatprep.subr.mxu0 0.0
  %2406 = vmatpush1.msra.mxu0 0.0
  %2407 = vmatprep.subr.mxu0 0.0
  %2408 = vmatpush1.msra.mxu0 0.0
  %2409 = vmatprep.subr.mxu0 0.0
  %2410 = vmatpush1.msra.mxu0 0.0
  %2411 = vmatprep.subr.mxu0 0.0
  %2412 = vmatpush1.msra.mxu0 0.0
  %2413 = vmatprep.subr.mxu0 0.0
  %2414 = vmatpush1.msra.mxu0 0.0
  %2415 = vmatprep.subr.mxu0 0.0
  %2416 = vmatpush1.msra.mxu0 0.0
  %2417 = vmatprep.subr.mxu0 0.0
  %2418 = vmatpush1.msra.mxu0 0.0
  %2419 = vmatprep.subr.mxu0 0.0
  %2420 = vmatpush1.msra.mxu0 0.0
  %2421 = vmatprep.subr.mxu0 0.0
  %2422 = vmatpush1.msra.mxu0 0.0
  %2423 = vmatprep.mubr.f32.mxu0 0.0
  %2424 = vmatmul.mubr.f32.gmra.mrb[0].mxu0 %v1893
  %v2425 = vpop.f32.mrb[0].mxu0
  %v2426 = vadd.f32 0.0, %v2425
  %v2427 = vpop.f32.mrb[0].mxu0
  %2428 = vmatprep.mubr.f32.mxu0 0.0
  %2429 = vmatmul.mubr.f32.gmra.mrb[0].mxu0 %v1894
  %v2430 = vpop.f32.mrb[0].mxu0
  %v2431 = vadd.f32 0.0, %v2430
  %v2432 = vpop.f32.mrb[0].mxu0
  %2433 = vmatprep.mubr.f32.mxu0 0.0
  %2434 = vmatmul.mubr.f32.gmra.mrb[0].mxu0 %v1895
  %v2435 = vpop.f32.mrb[0].mxu0
  %v2436 = vadd.f32 0.0, %v2435
  %v2437 = vpop.f32.mrb[0].mxu0
  %2438 = vmatprep.mubr.f32.mxu0 0.0
  %2439 = vmatmul.mubr.f32.gmra.mrb[0].mxu0 %v1896
  %v2440 = vpop.f32.mrb[0].mxu0
  %v2441 = vadd.f32 0.0, %v2440
  %v2442 = vpop.f32.mrb[0].mxu0
  %2443 = vmatprep.mubr.f32.mxu0 0.0
  %2444 = vmatmul.mubr.f32.gmra.mrb[0].mxu0 %v1897
  %v2445 = vpop.f32.mrb[0].mxu0
  %v2446 = vadd.f32 0.0, %v2445
  %v2447 = vpop.f32.mrb[0].mxu0
  %2448 = vmatprep.mubr.f32.mxu0 0.0
  %2449 = vmatmul.mubr.f32.gmra.mrb[0].mxu0 %v1898
  %v2450 = vpop.f32.mrb[0].mxu0
  %v2451 = vadd.f32 0.0, %v2450
  %v2452 = vpop.f32.mrb[0].mxu0
  %2453 = vmatprep.mubr.f32.mxu0 0.0
  %2454 = vmatmul.mubr.f32.gmra.mrb[0].mxu0 %v1899
  %v2455 = vpop.f32.mrb[0].mxu0
  %v2456 = vadd.f32 0.0, %v2455
  %v2457 = vpop.f32.mrb[0].mxu0
  %2458 = vmatprep.mubr.f32.mxu0 0.0
  %2459 = vmatmul.mubr.f32.gmra.mrb[0].mxu0 %v1900
  %v2460 = vpop.f32.mrb[0].mxu0
  %v2461 = vadd.f32 0.0, %v2460
  %v2462 = vpop.f32.mrb[0].mxu0
  %2463 = vmatprep.mubr.f32.mxu0 0.0
  %2464 = vmatmul.mubr.f32.gmra.mrb[0].mxu0 %v1901
  %v2465 = vpop.f32.mrb[0].mxu0
  %v2466 = vadd.f32 0.0, %v2465
  %v2467 = vpop.f32.mrb[0].mxu0
  %2468 = vmatprep.mubr.f32.mxu0 0.0
  %2469 = vmatmul.mubr.f32.gmra.mrb[0].mxu0 %v1902
  %v2470 = vpop.f32.mrb[0].mxu0
  %v2471 = vadd.f32 0.0, %v2470
  %v2472 = vpop.f32.mrb[0].mxu0
  %2473 = vmatprep.mubr.f32.mxu0 0.0
  %2474 = vmatmul.mubr.f32.gmra.mrb[0].mxu0 %v1903
  %v2475 = vpop.f32.mrb[0].mxu0
  %v2476 = vadd.f32 0.0, %v2475
  %v2477 = vpop.f32.mrb[0].mxu0
  %2478 = vmatprep.mubr.f32.mxu0 0.0
  %2479 = vmatmul.mubr.f32.gmra.mrb[0].mxu0 %v1904
  %v2480 = vpop.f32.mrb[0].mxu0
  %v2481 = vadd.f32 0.0, %v2480
  %v2482 = vpop.f32.mrb[0].mxu0
  %2483 = vmatprep.mubr.f32.mxu0 0.0
  %2484 = vmatmul.mubr.f32.gmra.mrb[0].mxu0 %v1905
  %v2485 = vpop.f32.mrb[0].mxu0
  %v2486 = vadd.f32 0.0, %v2485
  %v2487 = vpop.f32.mrb[0].mxu0
  %2488 = vmatprep.mubr.f32.mxu0 0.0
  %2489 = vmatmul.mubr.f32.gmra.mrb[0].mxu0 %v1906
  %v2490 = vpop.f32.mrb[0].mxu0
  %v2491 = vadd.f32 0.0, %v2490
  %v2492 = vpop.f32.mrb[0].mxu0
  %2493 = vmatprep.mubr.f32.mxu0 0.0
  %2494 = vmatmul.mubr.f32.gmra.mrb[0].mxu0 %v1907
  %v2495 = vpop.f32.mrb[0].mxu0
  %v2496 = vadd.f32 0.0, %v2495
  %v2497 = vpop.f32.mrb[0].mxu0
  %2498 = vmatprep.mubr.f32.mxu0 0.0
  %2499 = vmatmul.mubr.f32.gmra.mrb[0].mxu0 %v1908
  %v2500 = vpop.f32.mrb[0].mxu0
  %v2501 = vadd.f32 0.0, %v2500
  %v2502 = vpop.f32.mrb[0].mxu0
  %2503 = vdwg.mxu0
  %2504 = vmatprep.subr.mxu0 0.0
  %2505 = vmatpush1.msra.mxu0 %v2426
  %2506 = vmatprep.subr.mxu0 0.0
  %2507 = vmatpush1.msra.mxu0 %v2431
  %2508 = vmatprep.subr.mxu0 0.0
  %2509 = vmatpush1.msra.mxu0 %v2436
  %2510 = vmatprep.subr.mxu0 0.0
  %2511 = vmatpush1.msra.mxu0 %v2441
  %2512 = vmatprep.subr.mxu0 0.0
  %2513 = vmatpush1.msra.mxu0 %v2446
  %2514 = vmatprep.subr.mxu0 0.0
  %2515 = vmatpush1.msra.mxu0 %v2451
  %2516 = vmatprep.subr.mxu0 0.0
  %2517 = vmatpush1.msra.mxu0 %v2456
  %2518 = vmatprep.subr.mxu0 0.0
  %2519 = vmatpush1.msra.mxu0 %v2461
  %2520 = vmatprep.subr.mxu0 0.0
  %2521 = vmatpush1.msra.mxu0 %v2466
  %2522 = vmatprep.subr.mxu0 0.0
  %2523 = vmatpush1.msra.mxu0 %v2471
  %2524 = vmatprep.subr.mxu0 0.0
  %2525 = vmatpush1.msra.mxu0 %v2476
  %2526 = vmatprep.subr.mxu0 0.0
  %2527 = vmatpush1.msra.mxu0 %v2481
  %2528 = vmatprep.subr.mxu0 0.0
  %2529 = vmatpush1.msra.mxu0 %v2486
  %2530 = vmatprep.subr.mxu0 0.0
  %2531 = vmatpush1.msra.mxu0 %v2491
  %2532 = vmatprep.subr.mxu0 0.0
  %2533 = vmatpush1.msra.mxu0 %v2496
  %2534 = vmatprep.subr.mxu0 0.0
  %2535 = vmatpush1.msra.mxu0 %v2501
  %2536 = vmatprep.subr.mxu0 0.0
  %2537 = vmatpush1.msra.mxu0 0.0
  %2538 = vmatprep.subr.mxu0 0.0
  %2539 = vmatpush1.msra.mxu0 0.0
  %2540 = vmatprep.subr.mxu0 0.0
  %2541 = vmatpush1.msra.mxu0 0.0
  %2542 = vmatprep.subr.mxu0 0.0
  %2543 = vmatpush1.msra.mxu0 0.0
  %2544 = vmatprep.subr.mxu0 0.0
  %2545 = vmatpush1.msra.mxu0 0.0
  %2546 = vmatprep.subr.mxu0 0.0
  %2547 = vmatpush1.msra.mxu0 0.0
  %2548 = vmatprep.subr.mxu0 0.0
  %2549 = vmatpush1.msra.mxu0 0.0
  %2550 = vmatprep.subr.mxu0 0.0
  %2551 = vmatpush1.msra.mxu0 0.0
  %2552 = vmatprep.subr.mxu0 0.0
  %2553 = vmatpush1.msra.mxu0 0.0
  %2554 = vmatprep.subr.mxu0 0.0
  %2555 = vmatpush1.msra.mxu0 0.0
  %2556 = vmatprep.subr.mxu0 0.0
  %2557 = vmatpush1.msra.mxu0 0.0
  %2558 = vmatprep.subr.mxu0 0.0
  %2559 = vmatpush1.msra.mxu0 0.0
  %2560 = vmatprep.subr.mxu0 0.0
  %2561 = vmatpush1.msra.mxu0 0.0
  %2562 = vmatprep.subr.mxu0 0.0
  %2563 = vmatpush1.msra.mxu0 0.0
  %2564 = vmatprep.subr.mxu0 0.0
  %2565 = vmatpush1.msra.mxu0 0.0
  %2566 = vmatprep.subr.mxu0 0.0
  %2567 = vmatpush1.msra.mxu0 0.0
  %2568 = vmatprep.mubr.f32.mxu0 0.0
  %2569 = vmatmul.mubr.f32.gmra.mrb[0].mxu0 %v45
  %v2570 = vpop.f32.mrb[0].mxu0
  %v2571 = vadd.f32 0.0, %v2570
  %v2572 = vpop.f32.mrb[0].mxu0
  %2573 = vmatprep.mubr.f32.mxu0 0.0
  %2574 = vmatmul.mubr.f32.gmra.mrb[0].mxu0 %v46
  %v2575 = vpop.f32.mrb[0].mxu0
  %v2576 = vadd.f32 0.0, %v2575
  %v2577 = vpop.f32.mrb[0].mxu0
  %2578 = vmatprep.mubr.f32.mxu0 0.0
  %2579 = vmatmul.mubr.f32.gmra.mrb[0].mxu0 %v47
  %v2580 = vpop.f32.mrb[0].mxu0
  %v2581 = vadd.f32 0.0, %v2580
  %v2582 = vpop.f32.mrb[0].mxu0
  %2583 = vmatprep.mubr.f32.mxu0 0.0
  %2584 = vmatmul.mubr.f32.gmra.mrb[0].mxu0 %v48
  %v2585 = vpop.f32.mrb[0].mxu0
  %v2586 = vadd.f32 0.0, %v2585
  %v2587 = vpop.f32.mrb[0].mxu0
  %2588 = vmatprep.mubr.f32.mxu0 0.0
  %2589 = vmatmul.mubr.f32.gmra.mrb[0].mxu0 %v49
  %v2590 = vpop.f32.mrb[0].mxu0
  %v2591 = vadd.f32 0.0, %v2590
  %v2592 = vpop.f32.mrb[0].mxu0
  %2593 = vmatprep.mubr.f32.mxu0 0.0
  %2594 = vmatmul.mubr.f32.gmra.mrb[0].mxu0 %v50
  %v2595 = vpop.f32.mrb[0].mxu0
  %v2596 = vadd.f32 0.0, %v2595
  %v2597 = vpop.f32.mrb[0].mxu0
  %2598 = vmatprep.mubr.f32.mxu0 0.0
  %2599 = vmatmul.mubr.f32.gmra.mrb[0].mxu0 %v51
  %v2600 = vpop.f32.mrb[0].mxu0
  %v2601 = vadd.f32 0.0, %v2600
  %v2602 = vpop.f32.mrb[0].mxu0
  %2603 = vmatprep.mubr.f32.mxu0 0.0
  %2604 = vmatmul.mubr.f32.gmra.mrb[0].mxu0 %v52
  %v2605 = vpop.f32.mrb[0].mxu0
  %v2606 = vadd.f32 0.0, %v2605
  %v2607 = vpop.f32.mrb[0].mxu0
  %2608 = vmatprep.mubr.f32.mxu0 0.0
  %2609 = vmatmul.mubr.f32.gmra.mrb[0].mxu0 %v53
  %v2610 = vpop.f32.mrb[0].mxu0
  %v2611 = vadd.f32 0.0, %v2610
  %v2612 = vpop.f32.mrb[0].mxu0
  %2613 = vmatprep.mubr.f32.mxu0 0.0
  %2614 = vmatmul.mubr.f32.gmra.mrb[0].mxu0 %v54
  %v2615 = vpop.f32.mrb[0].mxu0
  %v2616 = vadd.f32 0.0, %v2615
  %v2617 = vpop.f32.mrb[0].mxu0
  %2618 = vmatprep.mubr.f32.mxu0 0.0
  %2619 = vmatmul.mubr.f32.gmra.mrb[0].mxu0 %v55
  %v2620 = vpop.f32.mrb[0].mxu0
  %v2621 = vadd.f32 0.0, %v2620
  %v2622 = vpop.f32.mrb[0].mxu0
  %2623 = vmatprep.mubr.f32.mxu0 0.0
  %2624 = vmatmul.mubr.f32.gmra.mrb[0].mxu0 %v56
  %v2625 = vpop.f32.mrb[0].mxu0
  %v2626 = vadd.f32 0.0, %v2625
  %v2627 = vpop.f32.mrb[0].mxu0
  %2628 = vmatprep.mubr.f32.mxu0 0.0
  %2629 = vmatmul.mubr.f32.gmra.mrb[0].mxu0 %v57
  %v2630 = vpop.f32.mrb[0].mxu0
  %v2631 = vadd.f32 0.0, %v2630
  %v2632 = vpop.f32.mrb[0].mxu0
  %2633 = vmatprep.mubr.f32.mxu0 0.0
  %2634 = vmatmul.mubr.f32.gmra.mrb[0].mxu0 %v58
  %v2635 = vpop.f32.mrb[0].mxu0
  %v2636 = vadd.f32 0.0, %v2635
  %v2637 = vpop.f32.mrb[0].mxu0
  %2638 = vmatprep.mubr.f32.mxu0 0.0
  %2639 = vmatmul.mubr.f32.gmra.mrb[0].mxu0 %v59
  %v2640 = vpop.f32.mrb[0].mxu0
  %v2641 = vadd.f32 0.0, %v2640
  %v2642 = vpop.f32.mrb[0].mxu0
  %2643 = vmatprep.mubr.f32.mxu0 0.0
  %2644 = vmatmul.mubr.f32.gmra.mrb[0].mxu0 %v60
  %v2645 = vpop.f32.mrb[0].mxu0
  %v2646 = vadd.f32 0.0, %v2645
  %v2647 = vpop.f32.mrb[0].mxu0
  %2648 = vdwg.mxu0
  %v2649 = vmax.f32 %v2571, 0.0
  %v2650 = vmax.f32 %v2576, 0.0
  %v2651 = vmax.f32 %v2581, 0.0
  %v2652 = vmax.f32 %v2586, 0.0
  %v2653 = vmax.f32 %v2591, 0.0
  %v2654 = vmax.f32 %v2596, 0.0
  %v2655 = vmax.f32 %v2601, 0.0
  %v2656 = vmax.f32 %v2606, 0.0
  %v2657 = vmax.f32 %v2611, 0.0
  %v2658 = vmax.f32 %v2616, 0.0
  %v2659 = vmax.f32 %v2621, 0.0
  %v2660 = vmax.f32 %v2626, 0.0
  %v2661 = vmax.f32 %v2631, 0.0
  %v2662 = vmax.f32 %v2636, 0.0
  %v2663 = vmax.f32 %v2641, 0.0
  %v2664 = vmax.f32 %v2646, 0.0
  %v2665 = vmul.f32 %v2649, %v2649
  %v2666 = vmul.f32 %v2650, %v2650
  %v2667 = vmul.f32 %v2651, %v2651
  %v2668 = vmul.f32 %v2652, %v2652
  %v2669 = vmul.f32 %v2653, %v2653
  %v2670 = vmul.f32 %v2654, %v2654
  %v2671 = vmul.f32 %v2655, %v2655
  %v2672 = vmul.f32 %v2656, %v2656
  %v2673 = vmul.f32 %v2657, %v2657
  %v2674 = vmul.f32 %v2658, %v2658
  %v2675 = vmul.f32 %v2659, %v2659
  %v2676 = vmul.f32 %v2660, %v2660
  %v2677 = vmul.f32 %v2661, %v2661
  %v2678 = vmul.f32 %v2662, %v2662
  %v2679 = vmul.f32 %v2663, %v2663
  %v2680 = vmul.f32 %v2664, %v2664
  %2681 = vadd.xlane.f32.xlu0 %v2665
  %v2682 = vpop.xlane.xlu0 %2681
  %2683 = vadd.xlane.f32.xlu0 %v2666
  %v2684 = vpop.xlane.xlu0 %2683
  %2685 = vadd.xlane.f32.xlu0 %v2667
  %v2686 = vpop.xlane.xlu0 %2685
  %2687 = vadd.xlane.f32.xlu0 %v2668
  %v2688 = vpop.xlane.xlu0 %2687
  %2689 = vadd.xlane.f32.xlu0 %v2669
  %v2690 = vpop.xlane.xlu0 %2689
  %2691 = vadd.xlane.f32.xlu0 %v2670
  %v2692 = vpop.xlane.xlu0 %2691
  %2693 = vadd.xlane.f32.xlu0 %v2671
  %v2694 = vpop.xlane.xlu0 %2693
  %2695 = vadd.xlane.f32.xlu0 %v2672
  %v2696 = vpop.xlane.xlu0 %2695
  %2697 = vadd.xlane.f32.xlu0 %v2673
  %v2698 = vpop.xlane.xlu0 %2697
  %2699 = vadd.xlane.f32.xlu0 %v2674
  %v2700 = vpop.xlane.xlu0 %2699
  %2701 = vadd.xlane.f32.xlu0 %v2675
  %v2702 = vpop.xlane.xlu0 %2701
  %2703 = vadd.xlane.f32.xlu0 %v2676
  %v2704 = vpop.xlane.xlu0 %2703
  %2705 = vadd.xlane.f32.xlu0 %v2677
  %v2706 = vpop.xlane.xlu0 %2705
  %2707 = vadd.xlane.f32.xlu0 %v2678
  %v2708 = vpop.xlane.xlu0 %2707
  %2709 = vadd.xlane.f32.xlu0 %v2679
  %v2710 = vpop.xlane.xlu0 %2709
  %2711 = vadd.xlane.f32.xlu0 %v2680
  %v2712 = vpop.xlane.xlu0 %2711
  %v2713 = vmax.f32 %v2682, 1e-24
  %v2714 = vmax.f32 %v2684, 1e-24
  %v2715 = vmax.f32 %v2686, 1e-24
  %v2716 = vmax.f32 %v2688, 1e-24
  %v2717 = vmax.f32 %v2690, 1e-24
  %v2718 = vmax.f32 %v2692, 1e-24
  %v2719 = vmax.f32 %v2694, 1e-24
  %v2720 = vmax.f32 %v2696, 1e-24
  %v2721 = vmax.f32 %v2698, 1e-24
  %v2722 = vmax.f32 %v2700, 1e-24
  %v2723 = vmax.f32 %v2702, 1e-24
  %v2724 = vmax.f32 %v2704, 1e-24
  %v2725 = vmax.f32 %v2706, 1e-24
  %v2726 = vmax.f32 %v2708, 1e-24
  %v2727 = vmax.f32 %v2710, 1e-24
  %v2728 = vmax.f32 %v2712, 1e-24
  %v2729 = vrsqrt.pop %v2713
  %v2730 = vrsqrt.pop %v2714
  %v2731 = vrsqrt.pop %v2715
  %v2732 = vrsqrt.pop %v2716
  %v2733 = vrsqrt.pop %v2717
  %v2734 = vrsqrt.pop %v2718
  %v2735 = vrsqrt.pop %v2719
  %v2736 = vrsqrt.pop %v2720
  %v2737 = vrsqrt.pop %v2721
  %v2738 = vrsqrt.pop %v2722
  %v2739 = vrsqrt.pop %v2723
  %v2740 = vrsqrt.pop %v2724
  %v2741 = vrsqrt.pop %v2725
  %v2742 = vrsqrt.pop %v2726
  %v2743 = vrsqrt.pop %v2727
  %v2744 = vrsqrt.pop %v2728
  %v2745 = vmul.f32 %v2649, %v2729
  %v2746 = vmul.f32 %v2650, %v2730
  %v2747 = vmul.f32 %v2651, %v2731
  %v2748 = vmul.f32 %v2652, %v2732
  %v2749 = vmul.f32 %v2653, %v2733
  %v2750 = vmul.f32 %v2654, %v2734
  %v2751 = vmul.f32 %v2655, %v2735
  %v2752 = vmul.f32 %v2656, %v2736
  %v2753 = vmul.f32 %v2657, %v2737
  %v2754 = vmul.f32 %v2658, %v2738
  %v2755 = vmul.f32 %v2659, %v2739
  %v2756 = vmul.f32 %v2660, %v2740
  %v2757 = vmul.f32 %v2661, %v2741
  %v2758 = vmul.f32 %v2662, %v2742
  %v2759 = vmul.f32 %v2663, %v2743
  %v2760 = vmul.f32 %v2664, %v2744
  %2761 = vmatprep.subr.mxu0 0.0
  %2762 = vmatpush1.msra.mxu0 %v2343
  %2763 = vmatprep.subr.mxu0 0.0
  %2764 = vmatpush1.msra.mxu0 %v2344
  %2765 = vmatprep.subr.mxu0 0.0
  %2766 = vmatpush1.msra.mxu0 %v2345
  %2767 = vmatprep.subr.mxu0 0.0
  %2768 = vmatpush1.msra.mxu0 %v2346
  %2769 = vmatprep.subr.mxu0 0.0
  %2770 = vmatpush1.msra.mxu0 %v2347
  %2771 = vmatprep.subr.mxu0 0.0
  %2772 = vmatpush1.msra.mxu0 %v2348
  %2773 = vmatprep.subr.mxu0 0.0
  %2774 = vmatpush1.msra.mxu0 %v2349
  %2775 = vmatprep.subr.mxu0 0.0
  %2776 = vmatpush1.msra.mxu0 %v2350
  %2777 = vmatprep.subr.mxu0 0.0
  %2778 = vmatpush1.msra.mxu0 %v2351
  %2779 = vmatprep.subr.mxu0 0.0
  %2780 = vmatpush1.msra.mxu0 %v2352
  %2781 = vmatprep.subr.mxu0 0.0
  %2782 = vmatpush1.msra.mxu0 %v2353
  %2783 = vmatprep.subr.mxu0 0.0
  %2784 = vmatpush1.msra.mxu0 %v2354
  %2785 = vmatprep.subr.mxu0 0.0
  %2786 = vmatpush1.msra.mxu0 %v2355
  %2787 = vmatprep.subr.mxu0 0.0
  %2788 = vmatpush1.msra.mxu0 %v2356
  %2789 = vmatprep.subr.mxu0 0.0
  %2790 = vmatpush1.msra.mxu0 %v2357
  %2791 = vmatprep.subr.mxu0 0.0
  %2792 = vmatpush1.msra.mxu0 %v2358
  %2793 = vmatprep.subr.mxu0 0.0
  %2794 = vmatpush1.msra.mxu0 0.0
  %2795 = vmatprep.subr.mxu0 0.0
  %2796 = vmatpush1.msra.mxu0 0.0
  %2797 = vmatprep.subr.mxu0 0.0
  %2798 = vmatpush1.msra.mxu0 0.0
  %2799 = vmatprep.subr.mxu0 0.0
  %2800 = vmatpush1.msra.mxu0 0.0
  %2801 = vmatprep.subr.mxu0 0.0
  %2802 = vmatpush1.msra.mxu0 0.0
  %2803 = vmatprep.subr.mxu0 0.0
  %2804 = vmatpush1.msra.mxu0 0.0
  %2805 = vmatprep.subr.mxu0 0.0
  %2806 = vmatpush1.msra.mxu0 0.0
  %2807 = vmatprep.subr.mxu0 0.0
  %2808 = vmatpush1.msra.mxu0 0.0
  %2809 = vmatprep.subr.mxu0 0.0
  %2810 = vmatpush1.msra.mxu0 0.0
  %2811 = vmatprep.subr.mxu0 0.0
  %2812 = vmatpush1.msra.mxu0 0.0
  %2813 = vmatprep.subr.mxu0 0.0
  %2814 = vmatpush1.msra.mxu0 0.0
  %2815 = vmatprep.subr.mxu0 0.0
  %2816 = vmatpush1.msra.mxu0 0.0
  %2817 = vmatprep.subr.mxu0 0.0
  %2818 = vmatpush1.msra.mxu0 0.0
  %2819 = vmatprep.subr.mxu0 0.0
  %2820 = vmatpush1.msra.mxu0 0.0
  %2821 = vmatprep.subr.mxu0 0.0
  %2822 = vmatpush1.msra.mxu0 0.0
  %2823 = vmatprep.subr.mxu0 0.0
  %2824 = vmatpush1.msra.mxu0 0.0
  %2825 = vmatprep.mubr.f32.mxu0 0.0
  %2826 = vmatmul.mubr.f32.gmra.mrb[0].mxu0 %v2295
  %v2827 = vpop.f32.mrb[0].mxu0
  %v2828 = vadd.f32 0.0, %v2827
  %v2829 = vpop.f32.mrb[0].mxu0
  %2830 = vmatprep.mubr.f32.mxu0 0.0
  %2831 = vmatmul.mubr.f32.gmra.mrb[0].mxu0 %v2296
  %v2832 = vpop.f32.mrb[0].mxu0
  %v2833 = vadd.f32 0.0, %v2832
  %v2834 = vpop.f32.mrb[0].mxu0
  %2835 = vmatprep.mubr.f32.mxu0 0.0
  %2836 = vmatmul.mubr.f32.gmra.mrb[0].mxu0 %v2297
  %v2837 = vpop.f32.mrb[0].mxu0
  %v2838 = vadd.f32 0.0, %v2837
  %v2839 = vpop.f32.mrb[0].mxu0
  %2840 = vmatprep.mubr.f32.mxu0 0.0
  %2841 = vmatmul.mubr.f32.gmra.mrb[0].mxu0 %v2298
  %v2842 = vpop.f32.mrb[0].mxu0
  %v2843 = vadd.f32 0.0, %v2842
  %v2844 = vpop.f32.mrb[0].mxu0
  %2845 = vmatprep.mubr.f32.mxu0 0.0
  %2846 = vmatmul.mubr.f32.gmra.mrb[0].mxu0 %v2299
  %v2847 = vpop.f32.mrb[0].mxu0
  %v2848 = vadd.f32 0.0, %v2847
  %v2849 = vpop.f32.mrb[0].mxu0
  %2850 = vmatprep.mubr.f32.mxu0 0.0
  %2851 = vmatmul.mubr.f32.gmra.mrb[0].mxu0 %v2300
  %v2852 = vpop.f32.mrb[0].mxu0
  %v2853 = vadd.f32 0.0, %v2852
  %v2854 = vpop.f32.mrb[0].mxu0
  %2855 = vmatprep.mubr.f32.mxu0 0.0
  %2856 = vmatmul.mubr.f32.gmra.mrb[0].mxu0 %v2301
  %v2857 = vpop.f32.mrb[0].mxu0
  %v2858 = vadd.f32 0.0, %v2857
  %v2859 = vpop.f32.mrb[0].mxu0
  %2860 = vmatprep.mubr.f32.mxu0 0.0
  %2861 = vmatmul.mubr.f32.gmra.mrb[0].mxu0 %v2302
  %v2862 = vpop.f32.mrb[0].mxu0
  %v2863 = vadd.f32 0.0, %v2862
  %v2864 = vpop.f32.mrb[0].mxu0
  %2865 = vmatprep.mubr.f32.mxu0 0.0
  %2866 = vmatmul.mubr.f32.gmra.mrb[0].mxu0 %v2303
  %v2867 = vpop.f32.mrb[0].mxu0
  %v2868 = vadd.f32 0.0, %v2867
  %v2869 = vpop.f32.mrb[0].mxu0
  %2870 = vmatprep.mubr.f32.mxu0 0.0
  %2871 = vmatmul.mubr.f32.gmra.mrb[0].mxu0 %v2304
  %v2872 = vpop.f32.mrb[0].mxu0
  %v2873 = vadd.f32 0.0, %v2872
  %v2874 = vpop.f32.mrb[0].mxu0
  %2875 = vmatprep.mubr.f32.mxu0 0.0
  %2876 = vmatmul.mubr.f32.gmra.mrb[0].mxu0 %v2305
  %v2877 = vpop.f32.mrb[0].mxu0
  %v2878 = vadd.f32 0.0, %v2877
  %v2879 = vpop.f32.mrb[0].mxu0
  %2880 = vmatprep.mubr.f32.mxu0 0.0
  %2881 = vmatmul.mubr.f32.gmra.mrb[0].mxu0 %v2306
  %v2882 = vpop.f32.mrb[0].mxu0
  %v2883 = vadd.f32 0.0, %v2882
  %v2884 = vpop.f32.mrb[0].mxu0
  %2885 = vmatprep.mubr.f32.mxu0 0.0
  %2886 = vmatmul.mubr.f32.gmra.mrb[0].mxu0 %v2307
  %v2887 = vpop.f32.mrb[0].mxu0
  %v2888 = vadd.f32 0.0, %v2887
  %v2889 = vpop.f32.mrb[0].mxu0
  %2890 = vmatprep.mubr.f32.mxu0 0.0
  %2891 = vmatmul.mubr.f32.gmra.mrb[0].mxu0 %v2308
  %v2892 = vpop.f32.mrb[0].mxu0
  %v2893 = vadd.f32 0.0, %v2892
  %v2894 = vpop.f32.mrb[0].mxu0
  %2895 = vmatprep.mubr.f32.mxu0 0.0
  %2896 = vmatmul.mubr.f32.gmra.mrb[0].mxu0 %v2309
  %v2897 = vpop.f32.mrb[0].mxu0
  %v2898 = vadd.f32 0.0, %v2897
  %v2899 = vpop.f32.mrb[0].mxu0
  %2900 = vmatprep.mubr.f32.mxu0 0.0
  %2901 = vmatmul.mubr.f32.gmra.mrb[0].mxu0 %v2310
  %v2902 = vpop.f32.mrb[0].mxu0
  %v2903 = vadd.f32 0.0, %v2902
  %v2904 = vpop.f32.mrb[0].mxu0
  %2905 = vdwg.mxu0
  %2906 = vmatprep.subr.mxu0 0.0
  %2907 = vmatpush1.msra.mxu0 %v2828
  %2908 = vmatprep.subr.mxu0 0.0
  %2909 = vmatpush1.msra.mxu0 %v2833
  %2910 = vmatprep.subr.mxu0 0.0
  %2911 = vmatpush1.msra.mxu0 %v2838
  %2912 = vmatprep.subr.mxu0 0.0
  %2913 = vmatpush1.msra.mxu0 %v2843
  %2914 = vmatprep.subr.mxu0 0.0
  %2915 = vmatpush1.msra.mxu0 %v2848
  %2916 = vmatprep.subr.mxu0 0.0
  %2917 = vmatpush1.msra.mxu0 %v2853
  %2918 = vmatprep.subr.mxu0 0.0
  %2919 = vmatpush1.msra.mxu0 %v2858
  %2920 = vmatprep.subr.mxu0 0.0
  %2921 = vmatpush1.msra.mxu0 %v2863
  %2922 = vmatprep.subr.mxu0 0.0
  %2923 = vmatpush1.msra.mxu0 %v2868
  %2924 = vmatprep.subr.mxu0 0.0
  %2925 = vmatpush1.msra.mxu0 %v2873
  %2926 = vmatprep.subr.mxu0 0.0
  %2927 = vmatpush1.msra.mxu0 %v2878
  %2928 = vmatprep.subr.mxu0 0.0
  %2929 = vmatpush1.msra.mxu0 %v2883
  %2930 = vmatprep.subr.mxu0 0.0
  %2931 = vmatpush1.msra.mxu0 %v2888
  %2932 = vmatprep.subr.mxu0 0.0
  %2933 = vmatpush1.msra.mxu0 %v2893
  %2934 = vmatprep.subr.mxu0 0.0
  %2935 = vmatpush1.msra.mxu0 %v2898
  %2936 = vmatprep.subr.mxu0 0.0
  %2937 = vmatpush1.msra.mxu0 %v2903
  %2938 = vmatprep.subr.mxu0 0.0
  %2939 = vmatpush1.msra.mxu0 0.0
  %2940 = vmatprep.subr.mxu0 0.0
  %2941 = vmatpush1.msra.mxu0 0.0
  %2942 = vmatprep.subr.mxu0 0.0
  %2943 = vmatpush1.msra.mxu0 0.0
  %2944 = vmatprep.subr.mxu0 0.0
  %2945 = vmatpush1.msra.mxu0 0.0
  %2946 = vmatprep.subr.mxu0 0.0
  %2947 = vmatpush1.msra.mxu0 0.0
  %2948 = vmatprep.subr.mxu0 0.0
  %2949 = vmatpush1.msra.mxu0 0.0
  %2950 = vmatprep.subr.mxu0 0.0
  %2951 = vmatpush1.msra.mxu0 0.0
  %2952 = vmatprep.subr.mxu0 0.0
  %2953 = vmatpush1.msra.mxu0 0.0
  %2954 = vmatprep.subr.mxu0 0.0
  %2955 = vmatpush1.msra.mxu0 0.0
  %2956 = vmatprep.subr.mxu0 0.0
  %2957 = vmatpush1.msra.mxu0 0.0
  %2958 = vmatprep.subr.mxu0 0.0
  %2959 = vmatpush1.msra.mxu0 0.0
  %2960 = vmatprep.subr.mxu0 0.0
  %2961 = vmatpush1.msra.mxu0 0.0
  %2962 = vmatprep.subr.mxu0 0.0
  %2963 = vmatpush1.msra.mxu0 0.0
  %2964 = vmatprep.subr.mxu0 0.0
  %2965 = vmatpush1.msra.mxu0 0.0
  %2966 = vmatprep.subr.mxu0 0.0
  %2967 = vmatpush1.msra.mxu0 0.0
  %2968 = vmatprep.subr.mxu0 0.0
  %2969 = vmatpush1.msra.mxu0 0.0
  %2970 = vmatprep.mubr.f32.mxu0 0.0
  %2971 = vmatmul.mubr.f32.gmra.mrb[0].mxu0 %v61
  %v2972 = vpop.f32.mrb[0].mxu0
  %v2973 = vadd.f32 0.0, %v2972
  %v2974 = vpop.f32.mrb[0].mxu0
  %2975 = vmatprep.mubr.f32.mxu0 0.0
  %2976 = vmatmul.mubr.f32.gmra.mrb[0].mxu0 %v62
  %v2977 = vpop.f32.mrb[0].mxu0
  %v2978 = vadd.f32 0.0, %v2977
  %v2979 = vpop.f32.mrb[0].mxu0
  %2980 = vmatprep.mubr.f32.mxu0 0.0
  %2981 = vmatmul.mubr.f32.gmra.mrb[0].mxu0 %v63
  %v2982 = vpop.f32.mrb[0].mxu0
  %v2983 = vadd.f32 0.0, %v2982
  %v2984 = vpop.f32.mrb[0].mxu0
  %2985 = vmatprep.mubr.f32.mxu0 0.0
  %2986 = vmatmul.mubr.f32.gmra.mrb[0].mxu0 %v64
  %v2987 = vpop.f32.mrb[0].mxu0
  %v2988 = vadd.f32 0.0, %v2987
  %v2989 = vpop.f32.mrb[0].mxu0
  %2990 = vmatprep.mubr.f32.mxu0 0.0
  %2991 = vmatmul.mubr.f32.gmra.mrb[0].mxu0 %v65
  %v2992 = vpop.f32.mrb[0].mxu0
  %v2993 = vadd.f32 0.0, %v2992
  %v2994 = vpop.f32.mrb[0].mxu0
  %2995 = vmatprep.mubr.f32.mxu0 0.0
  %2996 = vmatmul.mubr.f32.gmra.mrb[0].mxu0 %v66
  %v2997 = vpop.f32.mrb[0].mxu0
  %v2998 = vadd.f32 0.0, %v2997
  %v2999 = vpop.f32.mrb[0].mxu0
  %3000 = vmatprep.mubr.f32.mxu0 0.0
  %3001 = vmatmul.mubr.f32.gmra.mrb[0].mxu0 %v67
  %v3002 = vpop.f32.mrb[0].mxu0
  %v3003 = vadd.f32 0.0, %v3002
  %v3004 = vpop.f32.mrb[0].mxu0
  %3005 = vmatprep.mubr.f32.mxu0 0.0
  %3006 = vmatmul.mubr.f32.gmra.mrb[0].mxu0 %v68
  %v3007 = vpop.f32.mrb[0].mxu0
  %v3008 = vadd.f32 0.0, %v3007
  %v3009 = vpop.f32.mrb[0].mxu0
  %3010 = vmatprep.mubr.f32.mxu0 0.0
  %3011 = vmatmul.mubr.f32.gmra.mrb[0].mxu0 %v69
  %v3012 = vpop.f32.mrb[0].mxu0
  %v3013 = vadd.f32 0.0, %v3012
  %v3014 = vpop.f32.mrb[0].mxu0
  %3015 = vmatprep.mubr.f32.mxu0 0.0
  %3016 = vmatmul.mubr.f32.gmra.mrb[0].mxu0 %v70
  %v3017 = vpop.f32.mrb[0].mxu0
  %v3018 = vadd.f32 0.0, %v3017
  %v3019 = vpop.f32.mrb[0].mxu0
  %3020 = vmatprep.mubr.f32.mxu0 0.0
  %3021 = vmatmul.mubr.f32.gmra.mrb[0].mxu0 %v71
  %v3022 = vpop.f32.mrb[0].mxu0
  %v3023 = vadd.f32 0.0, %v3022
  %v3024 = vpop.f32.mrb[0].mxu0
  %3025 = vmatprep.mubr.f32.mxu0 0.0
  %3026 = vmatmul.mubr.f32.gmra.mrb[0].mxu0 %v72
  %v3027 = vpop.f32.mrb[0].mxu0
  %v3028 = vadd.f32 0.0, %v3027
  %v3029 = vpop.f32.mrb[0].mxu0
  %3030 = vmatprep.mubr.f32.mxu0 0.0
  %3031 = vmatmul.mubr.f32.gmra.mrb[0].mxu0 %v73
  %v3032 = vpop.f32.mrb[0].mxu0
  %v3033 = vadd.f32 0.0, %v3032
  %v3034 = vpop.f32.mrb[0].mxu0
  %3035 = vmatprep.mubr.f32.mxu0 0.0
  %3036 = vmatmul.mubr.f32.gmra.mrb[0].mxu0 %v74
  %v3037 = vpop.f32.mrb[0].mxu0
  %v3038 = vadd.f32 0.0, %v3037
  %v3039 = vpop.f32.mrb[0].mxu0
  %3040 = vmatprep.mubr.f32.mxu0 0.0
  %3041 = vmatmul.mubr.f32.gmra.mrb[0].mxu0 %v75
  %v3042 = vpop.f32.mrb[0].mxu0
  %v3043 = vadd.f32 0.0, %v3042
  %v3044 = vpop.f32.mrb[0].mxu0
  %3045 = vmatprep.mubr.f32.mxu0 0.0
  %3046 = vmatmul.mubr.f32.gmra.mrb[0].mxu0 %v76
  %v3047 = vpop.f32.mrb[0].mxu0
  %v3048 = vadd.f32 0.0, %v3047
  %v3049 = vpop.f32.mrb[0].mxu0
  %3050 = vdwg.mxu0
  %v3051 = vmax.f32 %v2973, 0.0
  %v3052 = vmax.f32 %v2978, 0.0
  %v3053 = vmax.f32 %v2983, 0.0
  %v3054 = vmax.f32 %v2988, 0.0
  %v3055 = vmax.f32 %v2993, 0.0
  %v3056 = vmax.f32 %v2998, 0.0
  %v3057 = vmax.f32 %v3003, 0.0
  %v3058 = vmax.f32 %v3008, 0.0
  %v3059 = vmax.f32 %v3013, 0.0
  %v3060 = vmax.f32 %v3018, 0.0
  %v3061 = vmax.f32 %v3023, 0.0
  %v3062 = vmax.f32 %v3028, 0.0
  %v3063 = vmax.f32 %v3033, 0.0
  %v3064 = vmax.f32 %v3038, 0.0
  %v3065 = vmax.f32 %v3043, 0.0
  %v3066 = vmax.f32 %v3048, 0.0
  %v3067 = vmul.f32 %v3051, %v3051
  %v3068 = vmul.f32 %v3052, %v3052
  %v3069 = vmul.f32 %v3053, %v3053
  %v3070 = vmul.f32 %v3054, %v3054
  %v3071 = vmul.f32 %v3055, %v3055
  %v3072 = vmul.f32 %v3056, %v3056
  %v3073 = vmul.f32 %v3057, %v3057
  %v3074 = vmul.f32 %v3058, %v3058
  %v3075 = vmul.f32 %v3059, %v3059
  %v3076 = vmul.f32 %v3060, %v3060
  %v3077 = vmul.f32 %v3061, %v3061
  %v3078 = vmul.f32 %v3062, %v3062
  %v3079 = vmul.f32 %v3063, %v3063
  %v3080 = vmul.f32 %v3064, %v3064
  %v3081 = vmul.f32 %v3065, %v3065
  %v3082 = vmul.f32 %v3066, %v3066
  %3083 = vadd.xlane.f32.xlu0 %v3067
  %v3084 = vpop.xlane.xlu0 %3083
  %3085 = vadd.xlane.f32.xlu0 %v3068
  %v3086 = vpop.xlane.xlu0 %3085
  %3087 = vadd.xlane.f32.xlu0 %v3069
  %v3088 = vpop.xlane.xlu0 %3087
  %3089 = vadd.xlane.f32.xlu0 %v3070
  %v3090 = vpop.xlane.xlu0 %3089
  %3091 = vadd.xlane.f32.xlu0 %v3071
  %v3092 = vpop.xlane.xlu0 %3091
  %3093 = vadd.xlane.f32.xlu0 %v3072
  %v3094 = vpop.xlane.xlu0 %3093
  %3095 = vadd.xlane.f32.xlu0 %v3073
  %v3096 = vpop.xlane.xlu0 %3095
  %3097 = vadd.xlane.f32.xlu0 %v3074
  %v3098 = vpop.xlane.xlu0 %3097
  %3099 = vadd.xlane.f32.xlu0 %v3075
  %v3100 = vpop.xlane.xlu0 %3099
  %3101 = vadd.xlane.f32.xlu0 %v3076
  %v3102 = vpop.xlane.xlu0 %3101
  %3103 = vadd.xlane.f32.xlu0 %v3077
  %v3104 = vpop.xlane.xlu0 %3103
  %3105 = vadd.xlane.f32.xlu0 %v3078
  %v3106 = vpop.xlane.xlu0 %3105
  %3107 = vadd.xlane.f32.xlu0 %v3079
  %v3108 = vpop.xlane.xlu0 %3107
  %3109 = vadd.xlane.f32.xlu0 %v3080
  %v3110 = vpop.xlane.xlu0 %3109
  %3111 = vadd.xlane.f32.xlu0 %v3081
  %v3112 = vpop.xlane.xlu0 %3111
  %3113 = vadd.xlane.f32.xlu0 %v3082
  %v3114 = vpop.xlane.xlu0 %3113
  %v3115 = vmax.f32 %v3084, 1e-24
  %v3116 = vmax.f32 %v3086, 1e-24
  %v3117 = vmax.f32 %v3088, 1e-24
  %v3118 = vmax.f32 %v3090, 1e-24
  %v3119 = vmax.f32 %v3092, 1e-24
  %v3120 = vmax.f32 %v3094, 1e-24
  %v3121 = vmax.f32 %v3096, 1e-24
  %v3122 = vmax.f32 %v3098, 1e-24
  %v3123 = vmax.f32 %v3100, 1e-24
  %v3124 = vmax.f32 %v3102, 1e-24
  %v3125 = vmax.f32 %v3104, 1e-24
  %v3126 = vmax.f32 %v3106, 1e-24
  %v3127 = vmax.f32 %v3108, 1e-24
  %v3128 = vmax.f32 %v3110, 1e-24
  %v3129 = vmax.f32 %v3112, 1e-24
  %v3130 = vmax.f32 %v3114, 1e-24
  %v3131 = vrsqrt.pop %v3115
  %v3132 = vrsqrt.pop %v3116
  %v3133 = vrsqrt.pop %v3117
  %v3134 = vrsqrt.pop %v3118
  %v3135 = vrsqrt.pop %v3119
  %v3136 = vrsqrt.pop %v3120
  %v3137 = vrsqrt.pop %v3121
  %v3138 = vrsqrt.pop %v3122
  %v3139 = vrsqrt.pop %v3123
  %v3140 = vrsqrt.pop %v3124
  %v3141 = vrsqrt.pop %v3125
  %v3142 = vrsqrt.pop %v3126
  %v3143 = vrsqrt.pop %v3127
  %v3144 = vrsqrt.pop %v3128
  %v3145 = vrsqrt.pop %v3129
  %v3146 = vrsqrt.pop %v3130
  %v3147 = vmul.f32 %v3051, %v3131
  %v3148 = vmul.f32 %v3052, %v3132
  %v3149 = vmul.f32 %v3053, %v3133
  %v3150 = vmul.f32 %v3054, %v3134
  %v3151 = vmul.f32 %v3055, %v3135
  %v3152 = vmul.f32 %v3056, %v3136
  %v3153 = vmul.f32 %v3057, %v3137
  %v3154 = vmul.f32 %v3058, %v3138
  %v3155 = vmul.f32 %v3059, %v3139
  %v3156 = vmul.f32 %v3060, %v3140
  %v3157 = vmul.f32 %v3061, %v3141
  %v3158 = vmul.f32 %v3062, %v3142
  %v3159 = vmul.f32 %v3063, %v3143
  %v3160 = vmul.f32 %v3064, %v3144
  %v3161 = vmul.f32 %v3065, %v3145
  %v3162 = vmul.f32 %v3066, %v3146
  %3163 = vst [vmem:[#allocation2 + $0x180] sm:$0xff] %v2745
  %3164 = vst [vmem:[#allocation2 + $0x188] sm:$0xff] %v2746
  %3165 = vst [vmem:[#allocation2 + $0x190] sm:$0xff] %v2747
  %3166 = vst [vmem:[#allocation2 + $0x198] sm:$0xff] %v2748
  %3167 = vst [vmem:[#allocation2 + $0x1a0] sm:$0xff] %v2749
  %3168 = vst [vmem:[#allocation2 + $0x1a8] sm:$0xff] %v2750
  %3169 = vst [vmem:[#allocation2 + $0x1b0] sm:$0xff] %v2751
  %3170 = vst [vmem:[#allocation2 + $0x1b8] sm:$0xff] %v2752
  %3171 = vst [vmem:[#allocation2 + $0x1c0] sm:$0xff] %v2753
  %3172 = vst [vmem:[#allocation2 + $0x1c8] sm:$0xff] %v2754
  %3173 = vst [vmem:[#allocation2 + $0x1d0] sm:$0xff] %v2755
  %3174 = vst [vmem:[#allocation2 + $0x1d8] sm:$0xff] %v2756
  %3175 = vst [vmem:[#allocation2 + $0x1e0] sm:$0xff] %v2757
  %3176 = vst [vmem:[#allocation2 + $0x1e8] sm:$0xff] %v2758
  %3177 = vst [vmem:[#allocation2 + $0x1f0] sm:$0xff] %v2759
  %3178 = vst [vmem:[#allocation2 + $0x1f8] sm:$0xff] %v2760
  %3179 = vst [vmem:[#allocation2 + $0x400] sm:$0xff] %v3147
  %3180 = vst [vmem:[#allocation2 + $0x408] sm:$0xff] %v3148
  %3181 = vst [vmem:[#allocation2 + $0x410] sm:$0xff] %v3149
  %3182 = vst [vmem:[#allocation2 + $0x418] sm:$0xff] %v3150
  %3183 = vst [vmem:[#allocation2 + $0x420] sm:$0xff] %v3151
  %3184 = vst [vmem:[#allocation2 + $0x428] sm:$0xff] %v3152
  %3185 = vst [vmem:[#allocation2 + $0x430] sm:$0xff] %v3153
  %3186 = vst [vmem:[#allocation2 + $0x438] sm:$0xff] %v3154
  %3187 = vst [vmem:[#allocation2 + $0x440] sm:$0xff] %v3155
  %3188 = vst [vmem:[#allocation2 + $0x448] sm:$0xff] %v3156
  %3189 = vst [vmem:[#allocation2 + $0x450] sm:$0xff] %v3157
  %3190 = vst [vmem:[#allocation2 + $0x458] sm:$0xff] %v3158
  %3191 = vst [vmem:[#allocation2 + $0x460] sm:$0xff] %v3159
  %3192 = vst [vmem:[#allocation2 + $0x468] sm:$0xff] %v3160
  %3193 = vst [vmem:[#allocation2 + $0x470] sm:$0xff] %v3161
  %3194 = vst [vmem:[#allocation2 + $0x478] sm:$0xff] %v3162
  %v3195 = vld [vmem:[%s6] sm:$0xff]
  %v3196 = vld [vmem:[%s6 + $0x8] sm:$0xff]
  %v3197 = vld [vmem:[%s6 + $0x10] sm:$0xff]
  %v3198 = vld [vmem:[%s6 + $0x18] sm:$0xff]
  %v3199 = vld [vmem:[%s6 + $0x20] sm:$0xff]
  %v3200 = vld [vmem:[%s6 + $0x28] sm:$0xff]
  %v3201 = vld [vmem:[%s6 + $0x30] sm:$0xff]
  %v3202 = vld [vmem:[%s6 + $0x38] sm:$0xff]
  %v3203 = vld [vmem:[%s6 + $0x40] sm:$0xff]
  %v3204 = vld [vmem:[%s6 + $0x48] sm:$0xff]
  %v3205 = vld [vmem:[%s6 + $0x50] sm:$0xff]
  %v3206 = vld [vmem:[%s6 + $0x58] sm:$0xff]
  %v3207 = vld [vmem:[%s6 + $0x60] sm:$0xff]
  %v3208 = vld [vmem:[%s6 + $0x68] sm:$0xff]
  %v3209 = vld [vmem:[%s6 + $0x70] sm:$0xff]
  %v3210 = vld [vmem:[%s6 + $0x78] sm:$0xff]
  %3211 = vmatprep.subr.mxu0 0.0
  %3212 = vmatpush1.msra.mxu0 %v3195
  %3213 = vmatprep.subr.mxu0 0.0
  %3214 = vmatpush1.msra.mxu0 %v3196
  %3215 = vmatprep.subr.mxu0 0.0
  %3216 = vmatpush1.msra.mxu0 %v3197
  %3217 = vmatprep.subr.mxu0 0.0
  %3218 = vmatpush1.msra.mxu0 %v3198
  %3219 = vmatprep.subr.mxu0 0.0
  %3220 = vmatpush1.msra.mxu0 %v3199
  %3221 = vmatprep.subr.mxu0 0.0
  %3222 = vmatpush1.msra.mxu0 %v3200
  %3223 = vmatprep.subr.mxu0 0.0
  %3224 = vmatpush1.msra.mxu0 %v3201
  %3225 = vmatprep.subr.mxu0 0.0
  %3226 = vmatpush1.msra.mxu0 %v3202
  %3227 = vmatprep.subr.mxu0 0.0
  %3228 = vmatpush1.msra.mxu0 %v3203
  %3229 = vmatprep.subr.mxu0 0.0
  %3230 = vmatpush1.msra.mxu0 %v3204
  %3231 = vmatprep.subr.mxu0 0.0
  %3232 = vmatpush1.msra.mxu0 %v3205
  %3233 = vmatprep.subr.mxu0 0.0
  %3234 = vmatpush1.msra.mxu0 %v3206
  %3235 = vmatprep.subr.mxu0 0.0
  %3236 = vmatpush1.msra.mxu0 %v3207
  %3237 = vmatprep.subr.mxu0 0.0
  %3238 = vmatpush1.msra.mxu0 %v3208
  %3239 = vmatprep.subr.mxu0 0.0
  %3240 = vmatpush1.msra.mxu0 %v3209
  %3241 = vmatprep.subr.mxu0 0.0
  %3242 = vmatpush1.msra.mxu0 %v3210
  %3243 = vmatprep.subr.mxu0 0.0
  %3244 = vmatpush1.msra.mxu0 0.0
  %3245 = vmatprep.subr.mxu0 0.0
  %3246 = vmatpush1.msra.mxu0 0.0
  %3247 = vmatprep.subr.mxu0 0.0
  %3248 = vmatpush1.msra.mxu0 0.0
  %3249 = vmatprep.subr.mxu0 0.0
  %3250 = vmatpush1.msra.mxu0 0.0
  %3251 = vmatprep.subr.mxu0 0.0
  %3252 = vmatpush1.msra.mxu0 0.0
  %3253 = vmatprep.subr.mxu0 0.0
  %3254 = vmatpush1.msra.mxu0 0.0
  %3255 = vmatprep.subr.mxu0 0.0
  %3256 = vmatpush1.msra.mxu0 0.0
  %3257 = vmatprep.subr.mxu0 0.0
  %3258 = vmatpush1.msra.mxu0 0.0
  %3259 = vmatprep.subr.mxu0 0.0
  %3260 = vmatpush1.msra.mxu0 0.0
  %3261 = vmatprep.subr.mxu0 0.0
  %3262 = vmatpush1.msra.mxu0 0.0
  %3263 = vmatprep.subr.mxu0 0.0
  %3264 = vmatpush1.msra.mxu0 0.0
  %3265 = vmatprep.subr.mxu0 0.0
  %3266 = vmatpush1.msra.mxu0 0.0
  %3267 = vmatprep.subr.mxu0 0.0
  %3268 = vmatpush1.msra.mxu0 0.0
  %3269 = vmatprep.subr.mxu0 0.0
  %3270 = vmatpush1.msra.mxu0 0.0
  %3271 = vmatprep.subr.mxu0 0.0
  %3272 = vmatpush1.msra.mxu0 0.0
  %3273 = vmatprep.subr.mxu0 0.0
  %3274 = vmatpush1.msra.mxu0 0.0
  %3275 = vmatprep.mubr.f32.mxu0 0.0
  %3276 = vmatmul.mubr.f32.gmra.mrb[0].mxu0 %v2745
  %v3277 = vpop.f32.mrb[0].mxu0
  %v3278 = vadd.f32 0.0, %v3277
  %v3279 = vpop.f32.mrb[0].mxu0
  %3280 = vmatprep.mubr.f32.mxu0 0.0
  %3281 = vmatmul.mubr.f32.gmra.mrb[0].mxu0 %v2746
  %v3282 = vpop.f32.mrb[0].mxu0
  %v3283 = vadd.f32 0.0, %v3282
  %v3284 = vpop.f32.mrb[0].mxu0
  %3285 = vmatprep.mubr.f32.mxu0 0.0
  %3286 = vmatmul.mubr.f32.gmra.mrb[0].mxu0 %v2747
  %v3287 = vpop.f32.mrb[0].mxu0
  %v3288 = vadd.f32 0.0, %v3287
  %v3289 = vpop.f32.mrb[0].mxu0
  %3290 = vmatprep.mubr.f32.mxu0 0.0
  %3291 = vmatmul.mubr.f32.gmra.mrb[0].mxu0 %v2748
  %v3292 = vpop.f32.mrb[0].mxu0
  %v3293 = vadd.f32 0.0, %v3292
  %v3294 = vpop.f32.mrb[0].mxu0
  %3295 = vmatprep.mubr.f32.mxu0 0.0
  %3296 = vmatmul.mubr.f32.gmra.mrb[0].mxu0 %v2749
  %v3297 = vpop.f32.mrb[0].mxu0
  %v3298 = vadd.f32 0.0, %v3297
  %v3299 = vpop.f32.mrb[0].mxu0
  %3300 = vmatprep.mubr.f32.mxu0 0.0
  %3301 = vmatmul.mubr.f32.gmra.mrb[0].mxu0 %v2750
  %v3302 = vpop.f32.mrb[0].mxu0
  %v3303 = vadd.f32 0.0, %v3302
  %v3304 = vpop.f32.mrb[0].mxu0
  %3305 = vmatprep.mubr.f32.mxu0 0.0
  %3306 = vmatmul.mubr.f32.gmra.mrb[0].mxu0 %v2751
  %v3307 = vpop.f32.mrb[0].mxu0
  %v3308 = vadd.f32 0.0, %v3307
  %v3309 = vpop.f32.mrb[0].mxu0
  %3310 = vmatprep.mubr.f32.mxu0 0.0
  %3311 = vmatmul.mubr.f32.gmra.mrb[0].mxu0 %v2752
  %v3312 = vpop.f32.mrb[0].mxu0
  %v3313 = vadd.f32 0.0, %v3312
  %v3314 = vpop.f32.mrb[0].mxu0
  %3315 = vmatprep.mubr.f32.mxu0 0.0
  %3316 = vmatmul.mubr.f32.gmra.mrb[0].mxu0 %v2753
  %v3317 = vpop.f32.mrb[0].mxu0
  %v3318 = vadd.f32 0.0, %v3317
  %v3319 = vpop.f32.mrb[0].mxu0
  %3320 = vmatprep.mubr.f32.mxu0 0.0
  %3321 = vmatmul.mubr.f32.gmra.mrb[0].mxu0 %v2754
  %v3322 = vpop.f32.mrb[0].mxu0
  %v3323 = vadd.f32 0.0, %v3322
  %v3324 = vpop.f32.mrb[0].mxu0
  %3325 = vmatprep.mubr.f32.mxu0 0.0
  %3326 = vmatmul.mubr.f32.gmra.mrb[0].mxu0 %v2755
  %v3327 = vpop.f32.mrb[0].mxu0
  %v3328 = vadd.f32 0.0, %v3327
  %v3329 = vpop.f32.mrb[0].mxu0
  %3330 = vmatprep.mubr.f32.mxu0 0.0
  %3331 = vmatmul.mubr.f32.gmra.mrb[0].mxu0 %v2756
  %v3332 = vpop.f32.mrb[0].mxu0
  %v3333 = vadd.f32 0.0, %v3332
  %v3334 = vpop.f32.mrb[0].mxu0
  %3335 = vmatprep.mubr.f32.mxu0 0.0
  %3336 = vmatmul.mubr.f32.gmra.mrb[0].mxu0 %v2757
  %v3337 = vpop.f32.mrb[0].mxu0
  %v3338 = vadd.f32 0.0, %v3337
  %v3339 = vpop.f32.mrb[0].mxu0
  %3340 = vmatprep.mubr.f32.mxu0 0.0
  %3341 = vmatmul.mubr.f32.gmra.mrb[0].mxu0 %v2758
  %v3342 = vpop.f32.mrb[0].mxu0
  %v3343 = vadd.f32 0.0, %v3342
  %v3344 = vpop.f32.mrb[0].mxu0
  %3345 = vmatprep.mubr.f32.mxu0 0.0
  %3346 = vmatmul.mubr.f32.gmra.mrb[0].mxu0 %v2759
  %v3347 = vpop.f32.mrb[0].mxu0
  %v3348 = vadd.f32 0.0, %v3347
  %v3349 = vpop.f32.mrb[0].mxu0
  %3350 = vmatprep.mubr.f32.mxu0 0.0
  %3351 = vmatmul.mubr.f32.gmra.mrb[0].mxu0 %v2760
  %v3352 = vpop.f32.mrb[0].mxu0
  %v3353 = vadd.f32 0.0, %v3352
  %v3354 = vpop.f32.mrb[0].mxu0
  %3355 = vdwg.mxu0
  %3356 = vmatprep.subr.mxu0 0.0
  %3357 = vmatpush1.msra.mxu0 %v3278
  %3358 = vmatprep.subr.mxu0 0.0
  %3359 = vmatpush1.msra.mxu0 %v3283
  %3360 = vmatprep.subr.mxu0 0.0
  %3361 = vmatpush1.msra.mxu0 %v3288
  %3362 = vmatprep.subr.mxu0 0.0
  %3363 = vmatpush1.msra.mxu0 %v3293
  %3364 = vmatprep.subr.mxu0 0.0
  %3365 = vmatpush1.msra.mxu0 %v3298
  %3366 = vmatprep.subr.mxu0 0.0
  %3367 = vmatpush1.msra.mxu0 %v3303
  %3368 = vmatprep.subr.mxu0 0.0
  %3369 = vmatpush1.msra.mxu0 %v3308
  %3370 = vmatprep.subr.mxu0 0.0
  %3371 = vmatpush1.msra.mxu0 %v3313
  %3372 = vmatprep.subr.mxu0 0.0
  %3373 = vmatpush1.msra.mxu0 %v3318
  %3374 = vmatprep.subr.mxu0 0.0
  %3375 = vmatpush1.msra.mxu0 %v3323
  %3376 = vmatprep.subr.mxu0 0.0
  %3377 = vmatpush1.msra.mxu0 %v3328
  %3378 = vmatprep.subr.mxu0 0.0
  %3379 = vmatpush1.msra.mxu0 %v3333
  %3380 = vmatprep.subr.mxu0 0.0
  %3381 = vmatpush1.msra.mxu0 %v3338
  %3382 = vmatprep.subr.mxu0 0.0
  %3383 = vmatpush1.msra.mxu0 %v3343
  %3384 = vmatprep.subr.mxu0 0.0
  %3385 = vmatpush1.msra.mxu0 %v3348
  %3386 = vmatprep.subr.mxu0 0.0
  %3387 = vmatpush1.msra.mxu0 %v3353
  %3388 = vmatprep.subr.mxu0 0.0
  %3389 = vmatpush1.msra.mxu0 0.0
  %3390 = vmatprep.subr.mxu0 0.0
  %3391 = vmatpush1.msra.mxu0 0.0
  %3392 = vmatprep.subr.mxu0 0.0
  %3393 = vmatpush1.msra.mxu0 0.0
  %3394 = vmatprep.subr.mxu0 0.0
  %3395 = vmatpush1.msra.mxu0 0.0
  %3396 = vmatprep.subr.mxu0 0.0
  %3397 = vmatpush1.msra.mxu0 0.0
  %3398 = vmatprep.subr.mxu0 0.0
  %3399 = vmatpush1.msra.mxu0 0.0
  %3400 = vmatprep.subr.mxu0 0.0
  %3401 = vmatpush1.msra.mxu0 0.0
  %3402 = vmatprep.subr.mxu0 0.0
  %3403 = vmatpush1.msra.mxu0 0.0
  %3404 = vmatprep.subr.mxu0 0.0
  %3405 = vmatpush1.msra.mxu0 0.0
  %3406 = vmatprep.subr.mxu0 0.0
  %3407 = vmatpush1.msra.mxu0 0.0
  %3408 = vmatprep.subr.mxu0 0.0
  %3409 = vmatpush1.msra.mxu0 0.0
  %3410 = vmatprep.subr.mxu0 0.0
  %3411 = vmatpush1.msra.mxu0 0.0
  %3412 = vmatprep.subr.mxu0 0.0
  %3413 = vmatpush1.msra.mxu0 0.0
  %3414 = vmatprep.subr.mxu0 0.0
  %3415 = vmatpush1.msra.mxu0 0.0
  %3416 = vmatprep.subr.mxu0 0.0
  %3417 = vmatpush1.msra.mxu0 0.0
  %3418 = vmatprep.subr.mxu0 0.0
  %3419 = vmatpush1.msra.mxu0 0.0
  %3420 = vmatprep.mubr.f32.mxu0 0.0
  %3421 = vmatmul.mubr.f32.gmra.mrb[0].mxu0 %v45
  %v3422 = vpop.f32.mrb[0].mxu0
  %v3423 = vadd.f32 0.0, %v3422
  %v3424 = vpop.f32.mrb[0].mxu0
  %3425 = vmatprep.mubr.f32.mxu0 0.0
  %3426 = vmatmul.mubr.f32.gmra.mrb[0].mxu0 %v46
  %v3427 = vpop.f32.mrb[0].mxu0
  %v3428 = vadd.f32 0.0, %v3427
  %v3429 = vpop.f32.mrb[0].mxu0
  %3430 = vmatprep.mubr.f32.mxu0 0.0
  %3431 = vmatmul.mubr.f32.gmra.mrb[0].mxu0 %v47
  %v3432 = vpop.f32.mrb[0].mxu0
  %v3433 = vadd.f32 0.0, %v3432
  %v3434 = vpop.f32.mrb[0].mxu0
  %3435 = vmatprep.mubr.f32.mxu0 0.0
  %3436 = vmatmul.mubr.f32.gmra.mrb[0].mxu0 %v48
  %v3437 = vpop.f32.mrb[0].mxu0
  %v3438 = vadd.f32 0.0, %v3437
  %v3439 = vpop.f32.mrb[0].mxu0
  %3440 = vmatprep.mubr.f32.mxu0 0.0
  %3441 = vmatmul.mubr.f32.gmra.mrb[0].mxu0 %v49
  %v3442 = vpop.f32.mrb[0].mxu0
  %v3443 = vadd.f32 0.0, %v3442
  %v3444 = vpop.f32.mrb[0].mxu0
  %3445 = vmatprep.mubr.f32.mxu0 0.0
  %3446 = vmatmul.mubr.f32.gmra.mrb[0].mxu0 %v50
  %v3447 = vpop.f32.mrb[0].mxu0
  %v3448 = vadd.f32 0.0, %v3447
  %v3449 = vpop.f32.mrb[0].mxu0
  %3450 = vmatprep.mubr.f32.mxu0 0.0
  %3451 = vmatmul.mubr.f32.gmra.mrb[0].mxu0 %v51
  %v3452 = vpop.f32.mrb[0].mxu0
  %v3453 = vadd.f32 0.0, %v3452
  %v3454 = vpop.f32.mrb[0].mxu0
  %3455 = vmatprep.mubr.f32.mxu0 0.0
  %3456 = vmatmul.mubr.f32.gmra.mrb[0].mxu0 %v52
  %v3457 = vpop.f32.mrb[0].mxu0
  %v3458 = vadd.f32 0.0, %v3457
  %v3459 = vpop.f32.mrb[0].mxu0
  %3460 = vmatprep.mubr.f32.mxu0 0.0
  %3461 = vmatmul.mubr.f32.gmra.mrb[0].mxu0 %v53
  %v3462 = vpop.f32.mrb[0].mxu0
  %v3463 = vadd.f32 0.0, %v3462
  %v3464 = vpop.f32.mrb[0].mxu0
  %3465 = vmatprep.mubr.f32.mxu0 0.0
  %3466 = vmatmul.mubr.f32.gmra.mrb[0].mxu0 %v54
  %v3467 = vpop.f32.mrb[0].mxu0
  %v3468 = vadd.f32 0.0, %v3467
  %v3469 = vpop.f32.mrb[0].mxu0
  %3470 = vmatprep.mubr.f32.mxu0 0.0
  %3471 = vmatmul.mubr.f32.gmra.mrb[0].mxu0 %v55
  %v3472 = vpop.f32.mrb[0].mxu0
  %v3473 = vadd.f32 0.0, %v3472
  %v3474 = vpop.f32.mrb[0].mxu0
  %3475 = vmatprep.mubr.f32.mxu0 0.0
  %3476 = vmatmul.mubr.f32.gmra.mrb[0].mxu0 %v56
  %v3477 = vpop.f32.mrb[0].mxu0
  %v3478 = vadd.f32 0.0, %v3477
  %v3479 = vpop.f32.mrb[0].mxu0
  %3480 = vmatprep.mubr.f32.mxu0 0.0
  %3481 = vmatmul.mubr.f32.gmra.mrb[0].mxu0 %v57
  %v3482 = vpop.f32.mrb[0].mxu0
  %v3483 = vadd.f32 0.0, %v3482
  %v3484 = vpop.f32.mrb[0].mxu0
  %3485 = vmatprep.mubr.f32.mxu0 0.0
  %3486 = vmatmul.mubr.f32.gmra.mrb[0].mxu0 %v58
  %v3487 = vpop.f32.mrb[0].mxu0
  %v3488 = vadd.f32 0.0, %v3487
  %v3489 = vpop.f32.mrb[0].mxu0
  %3490 = vmatprep.mubr.f32.mxu0 0.0
  %3491 = vmatmul.mubr.f32.gmra.mrb[0].mxu0 %v59
  %v3492 = vpop.f32.mrb[0].mxu0
  %v3493 = vadd.f32 0.0, %v3492
  %v3494 = vpop.f32.mrb[0].mxu0
  %3495 = vmatprep.mubr.f32.mxu0 0.0
  %3496 = vmatmul.mubr.f32.gmra.mrb[0].mxu0 %v60
  %v3497 = vpop.f32.mrb[0].mxu0
  %v3498 = vadd.f32 0.0, %v3497
  %v3499 = vpop.f32.mrb[0].mxu0
  %3500 = vdwg.mxu0
  %v3501 = vmax.f32 %v3423, 0.0
  %v3502 = vmax.f32 %v3428, 0.0
  %v3503 = vmax.f32 %v3433, 0.0
  %v3504 = vmax.f32 %v3438, 0.0
  %v3505 = vmax.f32 %v3443, 0.0
  %v3506 = vmax.f32 %v3448, 0.0
  %v3507 = vmax.f32 %v3453, 0.0
  %v3508 = vmax.f32 %v3458, 0.0
  %v3509 = vmax.f32 %v3463, 0.0
  %v3510 = vmax.f32 %v3468, 0.0
  %v3511 = vmax.f32 %v3473, 0.0
  %v3512 = vmax.f32 %v3478, 0.0
  %v3513 = vmax.f32 %v3483, 0.0
  %v3514 = vmax.f32 %v3488, 0.0
  %v3515 = vmax.f32 %v3493, 0.0
  %v3516 = vmax.f32 %v3498, 0.0
  %3517 = vmatprep.subr.mxu0 0.0
  %3518 = vmatpush1.msra.mxu0 %v3195
  %3519 = vmatprep.subr.mxu0 0.0
  %3520 = vmatpush1.msra.mxu0 %v3196
  %3521 = vmatprep.subr.mxu0 0.0
  %3522 = vmatpush1.msra.mxu0 %v3197
  %3523 = vmatprep.subr.mxu0 0.0
  %3524 = vmatpush1.msra.mxu0 %v3198
  %3525 = vmatprep.subr.mxu0 0.0
  %3526 = vmatpush1.msra.mxu0 %v3199
  %3527 = vmatprep.subr.mxu0 0.0
  %3528 = vmatpush1.msra.mxu0 %v3200
  %3529 = vmatprep.subr.mxu0 0.0
  %3530 = vmatpush1.msra.mxu0 %v3201
  %3531 = vmatprep.subr.mxu0 0.0
  %3532 = vmatpush1.msra.mxu0 %v3202
  %3533 = vmatprep.subr.mxu0 0.0
  %3534 = vmatpush1.msra.mxu0 %v3203
  %3535 = vmatprep.subr.mxu0 0.0
  %3536 = vmatpush1.msra.mxu0 %v3204
  %3537 = vmatprep.subr.mxu0 0.0
  %3538 = vmatpush1.msra.mxu0 %v3205
  %3539 = vmatprep.subr.mxu0 0.0
  %3540 = vmatpush1.msra.mxu0 %v3206
  %3541 = vmatprep.subr.mxu0 0.0
  %3542 = vmatpush1.msra.mxu0 %v3207
  %3543 = vmatprep.subr.mxu0 0.0
  %3544 = vmatpush1.msra.mxu0 %v3208
  %3545 = vmatprep.subr.mxu0 0.0
  %3546 = vmatpush1.msra.mxu0 %v3209
  %3547 = vmatprep.subr.mxu0 0.0
  %3548 = vmatpush1.msra.mxu0 %v3210
  %3549 = vmatprep.subr.mxu0 0.0
  %3550 = vmatpush1.msra.mxu0 0.0
  %3551 = vmatprep.subr.mxu0 0.0
  %3552 = vmatpush1.msra.mxu0 0.0
  %3553 = vmatprep.subr.mxu0 0.0
  %3554 = vmatpush1.msra.mxu0 0.0
  %3555 = vmatprep.subr.mxu0 0.0
  %3556 = vmatpush1.msra.mxu0 0.0
  %3557 = vmatprep.subr.mxu0 0.0
  %3558 = vmatpush1.msra.mxu0 0.0
  %3559 = vmatprep.subr.mxu0 0.0
  %3560 = vmatpush1.msra.mxu0 0.0
  %3561 = vmatprep.subr.mxu0 0.0
  %3562 = vmatpush1.msra.mxu0 0.0
  %3563 = vmatprep.subr.mxu0 0.0
  %3564 = vmatpush1.msra.mxu0 0.0
  %3565 = vmatprep.subr.mxu0 0.0
  %3566 = vmatpush1.msra.mxu0 0.0
  %3567 = vmatprep.subr.mxu0 0.0
  %3568 = vmatpush1.msra.mxu0 0.0
  %3569 = vmatprep.subr.mxu0 0.0
  %3570 = vmatpush1.msra.mxu0 0.0
  %3571 = vmatprep.subr.mxu0 0.0
  %3572 = vmatpush1.msra.mxu0 0.0
  %3573 = vmatprep.subr.mxu0 0.0
  %3574 = vmatpush1.msra.mxu0 0.0
  %3575 = vmatprep.subr.mxu0 0.0
  %3576 = vmatpush1.msra.mxu0 0.0
  %3577 = vmatprep.subr.mxu0 0.0
  %3578 = vmatpush1.msra.mxu0 0.0
  %3579 = vmatprep.subr.mxu0 0.0
  %3580 = vmatpush1.msra.mxu0 0.0
  %3581 = vmatprep.mubr.f32.mxu0 0.0
  %3582 = vmatmul.mubr.f32.gmra.mrb[0].mxu0 %v3147
  %v3583 = vpop.f32.mrb[0].mxu0
  %v3584 = vadd.f32 0.0, %v3583
  %v3585 = vpop.f32.mrb[0].mxu0
  %3586 = vmatprep.mubr.f32.mxu0 0.0
  %3587 = vmatmul.mubr.f32.gmra.mrb[0].mxu0 %v3148
  %v3588 = vpop.f32.mrb[0].mxu0
  %v3589 = vadd.f32 0.0, %v3588
  %v3590 = vpop.f32.mrb[0].mxu0
  %3591 = vmatprep.mubr.f32.mxu0 0.0
  %3592 = vmatmul.mubr.f32.gmra.mrb[0].mxu0 %v3149
  %v3593 = vpop.f32.mrb[0].mxu0
  %v3594 = vadd.f32 0.0, %v3593
  %v3595 = vpop.f32.mrb[0].mxu0
  %3596 = vmatprep.mubr.f32.mxu0 0.0
  %3597 = vmatmul.mubr.f32.gmra.mrb[0].mxu0 %v3150
  %v3598 = vpop.f32.mrb[0].mxu0
  %v3599 = vadd.f32 0.0, %v3598
  %v3600 = vpop.f32.mrb[0].mxu0
  %3601 = vmatprep.mubr.f32.mxu0 0.0
  %3602 = vmatmul.mubr.f32.gmra.mrb[0].mxu0 %v3151
  %v3603 = vpop.f32.mrb[0].mxu0
  %v3604 = vadd.f32 0.0, %v3603
  %v3605 = vpop.f32.mrb[0].mxu0
  %3606 = vmatprep.mubr.f32.mxu0 0.0
  %3607 = vmatmul.mubr.f32.gmra.mrb[0].mxu0 %v3152
  %v3608 = vpop.f32.mrb[0].mxu0
  %v3609 = vadd.f32 0.0, %v3608
  %v3610 = vpop.f32.mrb[0].mxu0
  %3611 = vmatprep.mubr.f32.mxu0 0.0
  %3612 = vmatmul.mubr.f32.gmra.mrb[0].mxu0 %v3153
  %v3613 = vpop.f32.mrb[0].mxu0
  %v3614 = vadd.f32 0.0, %v3613
  %v3615 = vpop.f32.mrb[0].mxu0
  %3616 = vmatprep.mubr.f32.mxu0 0.0
  %3617 = vmatmul.mubr.f32.gmra.mrb[0].mxu0 %v3154
  %v3618 = vpop.f32.mrb[0].mxu0
  %v3619 = vadd.f32 0.0, %v3618
  %v3620 = vpop.f32.mrb[0].mxu0
  %3621 = vmatprep.mubr.f32.mxu0 0.0
  %3622 = vmatmul.mubr.f32.gmra.mrb[0].mxu0 %v3155
  %v3623 = vpop.f32.mrb[0].mxu0
  %v3624 = vadd.f32 0.0, %v3623
  %v3625 = vpop.f32.mrb[0].mxu0
  %3626 = vmatprep.mubr.f32.mxu0 0.0
  %3627 = vmatmul.mubr.f32.gmra.mrb[0].mxu0 %v3156
  %v3628 = vpop.f32.mrb[0].mxu0
  %v3629 = vadd.f32 0.0, %v3628
  %v3630 = vpop.f32.mrb[0].mxu0
  %3631 = vmatprep.mubr.f32.mxu0 0.0
  %3632 = vmatmul.mubr.f32.gmra.mrb[0].mxu0 %v3157
  %v3633 = vpop.f32.mrb[0].mxu0
  %v3634 = vadd.f32 0.0, %v3633
  %v3635 = vpop.f32.mrb[0].mxu0
  %3636 = vmatprep.mubr.f32.mxu0 0.0
  %3637 = vmatmul.mubr.f32.gmra.mrb[0].mxu0 %v3158
  %v3638 = vpop.f32.mrb[0].mxu0
  %v3639 = vadd.f32 0.0, %v3638
  %v3640 = vpop.f32.mrb[0].mxu0
  %3641 = vmatprep.mubr.f32.mxu0 0.0
  %3642 = vmatmul.mubr.f32.gmra.mrb[0].mxu0 %v3159
  %v3643 = vpop.f32.mrb[0].mxu0
  %v3644 = vadd.f32 0.0, %v3643
  %v3645 = vpop.f32.mrb[0].mxu0
  %3646 = vmatprep.mubr.f32.mxu0 0.0
  %3647 = vmatmul.mubr.f32.gmra.mrb[0].mxu0 %v3160
  %v3648 = vpop.f32.mrb[0].mxu0
  %v3649 = vadd.f32 0.0, %v3648
  %v3650 = vpop.f32.mrb[0].mxu0
  %3651 = vmatprep.mubr.f32.mxu0 0.0
  %3652 = vmatmul.mubr.f32.gmra.mrb[0].mxu0 %v3161
  %v3653 = vpop.f32.mrb[0].mxu0
  %v3654 = vadd.f32 0.0, %v3653
  %v3655 = vpop.f32.mrb[0].mxu0
  %3656 = vmatprep.mubr.f32.mxu0 0.0
  %3657 = vmatmul.mubr.f32.gmra.mrb[0].mxu0 %v3162
  %v3658 = vpop.f32.mrb[0].mxu0
  %v3659 = vadd.f32 0.0, %v3658
  %v3660 = vpop.f32.mrb[0].mxu0
  %3661 = vdwg.mxu0
  %3662 = vmatprep.subr.mxu0 0.0
  %3663 = vmatpush1.msra.mxu0 %v3584
  %3664 = vmatprep.subr.mxu0 0.0
  %3665 = vmatpush1.msra.mxu0 %v3589
  %3666 = vmatprep.subr.mxu0 0.0
  %3667 = vmatpush1.msra.mxu0 %v3594
  %3668 = vmatprep.subr.mxu0 0.0
  %3669 = vmatpush1.msra.mxu0 %v3599
  %3670 = vmatprep.subr.mxu0 0.0
  %3671 = vmatpush1.msra.mxu0 %v3604
  %3672 = vmatprep.subr.mxu0 0.0
  %3673 = vmatpush1.msra.mxu0 %v3609
  %3674 = vmatprep.subr.mxu0 0.0
  %3675 = vmatpush1.msra.mxu0 %v3614
  %3676 = vmatprep.subr.mxu0 0.0
  %3677 = vmatpush1.msra.mxu0 %v3619
  %3678 = vmatprep.subr.mxu0 0.0
  %3679 = vmatpush1.msra.mxu0 %v3624
  %3680 = vmatprep.subr.mxu0 0.0
  %3681 = vmatpush1.msra.mxu0 %v3629
  %3682 = vmatprep.subr.mxu0 0.0
  %3683 = vmatpush1.msra.mxu0 %v3634
  %3684 = vmatprep.subr.mxu0 0.0
  %3685 = vmatpush1.msra.mxu0 %v3639
  %3686 = vmatprep.subr.mxu0 0.0
  %3687 = vmatpush1.msra.mxu0 %v3644
  %3688 = vmatprep.subr.mxu0 0.0
  %3689 = vmatpush1.msra.mxu0 %v3649
  %3690 = vmatprep.subr.mxu0 0.0
  %3691 = vmatpush1.msra.mxu0 %v3654
  %3692 = vmatprep.subr.mxu0 0.0
  %3693 = vmatpush1.msra.mxu0 %v3659
  %3694 = vmatprep.subr.mxu0 0.0
  %3695 = vmatpush1.msra.mxu0 0.0
  %3696 = vmatprep.subr.mxu0 0.0
  %3697 = vmatpush1.msra.mxu0 0.0
  %3698 = vmatprep.subr.mxu0 0.0
  %3699 = vmatpush1.msra.mxu0 0.0
  %3700 = vmatprep.subr.mxu0 0.0
  %3701 = vmatpush1.msra.mxu0 0.0
  %3702 = vmatprep.subr.mxu0 0.0
  %3703 = vmatpush1.msra.mxu0 0.0
  %3704 = vmatprep.subr.mxu0 0.0
  %3705 = vmatpush1.msra.mxu0 0.0
  %3706 = vmatprep.subr.mxu0 0.0
  %3707 = vmatpush1.msra.mxu0 0.0
  %3708 = vmatprep.subr.mxu0 0.0
  %3709 = vmatpush1.msra.mxu0 0.0
  %3710 = vmatprep.subr.mxu0 0.0
  %3711 = vmatpush1.msra.mxu0 0.0
  %3712 = vmatprep.subr.mxu0 0.0
  %3713 = vmatpush1.msra.mxu0 0.0
  %3714 = vmatprep.subr.mxu0 0.0
  %3715 = vmatpush1.msra.mxu0 0.0
  %3716 = vmatprep.subr.mxu0 0.0
  %3717 = vmatpush1.msra.mxu0 0.0
  %3718 = vmatprep.subr.mxu0 0.0
  %3719 = vmatpush1.msra.mxu0 0.0
  %3720 = vmatprep.subr.mxu0 0.0
  %3721 = vmatpush1.msra.mxu0 0.0
  %3722 = vmatprep.subr.mxu0 0.0
  %3723 = vmatpush1.msra.mxu0 0.0
  %3724 = vmatprep.subr.mxu0 0.0
  %3725 = vmatpush1.msra.mxu0 0.0
  %3726 = vmatprep.mubr.f32.mxu0 0.0
  %3727 = vmatmul.mubr.f32.gmra.mrb[0].mxu0 %v61
  %v3728 = vpop.f32.mrb[0].mxu0
  %v3729 = vadd.f32 0.0, %v3728
  %v3730 = vpop.f32.mrb[0].mxu0
  %3731 = vmatprep.mubr.f32.mxu0 0.0
  %3732 = vmatmul.mubr.f32.gmra.mrb[0].mxu0 %v62
  %v3733 = vpop.f32.mrb[0].mxu0
  %v3734 = vadd.f32 0.0, %v3733
  %v3735 = vpop.f32.mrb[0].mxu0
  %3736 = vmatprep.mubr.f32.mxu0 0.0
  %3737 = vmatmul.mubr.f32.gmra.mrb[0].mxu0 %v63
  %v3738 = vpop.f32.mrb[0].mxu0
  %v3739 = vadd.f32 0.0, %v3738
  %v3740 = vpop.f32.mrb[0].mxu0
  %3741 = vmatprep.mubr.f32.mxu0 0.0
  %3742 = vmatmul.mubr.f32.gmra.mrb[0].mxu0 %v64
  %v3743 = vpop.f32.mrb[0].mxu0
  %v3744 = vadd.f32 0.0, %v3743
  %v3745 = vpop.f32.mrb[0].mxu0
  %3746 = vmatprep.mubr.f32.mxu0 0.0
  %3747 = vmatmul.mubr.f32.gmra.mrb[0].mxu0 %v65
  %v3748 = vpop.f32.mrb[0].mxu0
  %v3749 = vadd.f32 0.0, %v3748
  %v3750 = vpop.f32.mrb[0].mxu0
  %3751 = vmatprep.mubr.f32.mxu0 0.0
  %3752 = vmatmul.mubr.f32.gmra.mrb[0].mxu0 %v66
  %v3753 = vpop.f32.mrb[0].mxu0
  %v3754 = vadd.f32 0.0, %v3753
  %v3755 = vpop.f32.mrb[0].mxu0
  %3756 = vmatprep.mubr.f32.mxu0 0.0
  %3757 = vmatmul.mubr.f32.gmra.mrb[0].mxu0 %v67
  %v3758 = vpop.f32.mrb[0].mxu0
  %v3759 = vadd.f32 0.0, %v3758
  %v3760 = vpop.f32.mrb[0].mxu0
  %3761 = vmatprep.mubr.f32.mxu0 0.0
  %3762 = vmatmul.mubr.f32.gmra.mrb[0].mxu0 %v68
  %v3763 = vpop.f32.mrb[0].mxu0
  %v3764 = vadd.f32 0.0, %v3763
  %v3765 = vpop.f32.mrb[0].mxu0
  %3766 = vmatprep.mubr.f32.mxu0 0.0
  %3767 = vmatmul.mubr.f32.gmra.mrb[0].mxu0 %v69
  %v3768 = vpop.f32.mrb[0].mxu0
  %v3769 = vadd.f32 0.0, %v3768
  %v3770 = vpop.f32.mrb[0].mxu0
  %3771 = vmatprep.mubr.f32.mxu0 0.0
  %3772 = vmatmul.mubr.f32.gmra.mrb[0].mxu0 %v70
  %v3773 = vpop.f32.mrb[0].mxu0
  %v3774 = vadd.f32 0.0, %v3773
  %v3775 = vpop.f32.mrb[0].mxu0
  %3776 = vmatprep.mubr.f32.mxu0 0.0
  %3777 = vmatmul.mubr.f32.gmra.mrb[0].mxu0 %v71
  %v3778 = vpop.f32.mrb[0].mxu0
  %v3779 = vadd.f32 0.0, %v3778
  %v3780 = vpop.f32.mrb[0].mxu0
  %3781 = vmatprep.mubr.f32.mxu0 0.0
  %3782 = vmatmul.mubr.f32.gmra.mrb[0].mxu0 %v72
  %v3783 = vpop.f32.mrb[0].mxu0
  %v3784 = vadd.f32 0.0, %v3783
  %v3785 = vpop.f32.mrb[0].mxu0
  %3786 = vmatprep.mubr.f32.mxu0 0.0
  %3787 = vmatmul.mubr.f32.gmra.mrb[0].mxu0 %v73
  %v3788 = vpop.f32.mrb[0].mxu0
  %v3789 = vadd.f32 0.0, %v3788
  %v3790 = vpop.f32.mrb[0].mxu0
  %3791 = vmatprep.mubr.f32.mxu0 0.0
  %3792 = vmatmul.mubr.f32.gmra.mrb[0].mxu0 %v74
  %v3793 = vpop.f32.mrb[0].mxu0
  %v3794 = vadd.f32 0.0, %v3793
  %v3795 = vpop.f32.mrb[0].mxu0
  %3796 = vmatprep.mubr.f32.mxu0 0.0
  %3797 = vmatmul.mubr.f32.gmra.mrb[0].mxu0 %v75
  %v3798 = vpop.f32.mrb[0].mxu0
  %v3799 = vadd.f32 0.0, %v3798
  %v3800 = vpop.f32.mrb[0].mxu0
  %3801 = vmatprep.mubr.f32.mxu0 0.0
  %3802 = vmatmul.mubr.f32.gmra.mrb[0].mxu0 %v76
  %v3803 = vpop.f32.mrb[0].mxu0
  %v3804 = vadd.f32 0.0, %v3803
  %v3805 = vpop.f32.mrb[0].mxu0
  %3806 = vdwg.mxu0
  %v3807 = vmax.f32 %v3729, 0.0
  %v3808 = vmax.f32 %v3734, 0.0
  %v3809 = vmax.f32 %v3739, 0.0
  %v3810 = vmax.f32 %v3744, 0.0
  %v3811 = vmax.f32 %v3749, 0.0
  %v3812 = vmax.f32 %v3754, 0.0
  %v3813 = vmax.f32 %v3759, 0.0
  %v3814 = vmax.f32 %v3764, 0.0
  %v3815 = vmax.f32 %v3769, 0.0
  %v3816 = vmax.f32 %v3774, 0.0
  %v3817 = vmax.f32 %v3779, 0.0
  %v3818 = vmax.f32 %v3784, 0.0
  %v3819 = vmax.f32 %v3789, 0.0
  %v3820 = vmax.f32 %v3794, 0.0
  %v3821 = vmax.f32 %v3799, 0.0
  %v3822 = vmax.f32 %v3804, 0.0
  %3823 = vst [vmem:[#allocation2 + $0x200] sm:$0xff] %v3501
  %3824 = vst [vmem:[#allocation2 + $0x208] sm:$0xff] %v3502
  %3825 = vst [vmem:[#allocation2 + $0x210] sm:$0xff] %v3503
  %3826 = vst [vmem:[#allocation2 + $0x218] sm:$0xff] %v3504
  %3827 = vst [vmem:[#allocation2 + $0x220] sm:$0xff] %v3505
  %3828 = vst [vmem:[#allocation2 + $0x228] sm:$0xff] %v3506
  %3829 = vst [vmem:[#allocation2 + $0x230] sm:$0xff] %v3507
  %3830 = vst [vmem:[#allocation2 + $0x238] sm:$0xff] %v3508
  %3831 = vst [vmem:[#allocation2 + $0x240] sm:$0xff] %v3509
  %3832 = vst [vmem:[#allocation2 + $0x248] sm:$0xff] %v3510
  %3833 = vst [vmem:[#allocation2 + $0x250] sm:$0xff] %v3511
  %3834 = vst [vmem:[#allocation2 + $0x258] sm:$0xff] %v3512
  %3835 = vst [vmem:[#allocation2 + $0x260] sm:$0xff] %v3513
  %3836 = vst [vmem:[#allocation2 + $0x268] sm:$0xff] %v3514
  %3837 = vst [vmem:[#allocation2 + $0x270] sm:$0xff] %v3515
  %3838 = vst [vmem:[#allocation2 + $0x278] sm:$0xff] %v3516
  %3839 = vst [vmem:[#allocation2 + $0x480] sm:$0xff] %v3807
  %3840 = vst [vmem:[#allocation2 + $0x488] sm:$0xff] %v3808
  %3841 = vst [vmem:[#allocation2 + $0x490] sm:$0xff] %v3809
  %3842 = vst [vmem:[#allocation2 + $0x498] sm:$0xff] %v3810
  %3843 = vst [vmem:[#allocation2 + $0x4a0] sm:$0xff] %v3811
  %3844 = vst [vmem:[#allocation2 + $0x4a8] sm:$0xff] %v3812
  %3845 = vst [vmem:[#allocation2 + $0x4b0] sm:$0xff] %v3813
  %3846 = vst [vmem:[#allocation2 + $0x4b8] sm:$0xff] %v3814
  %3847 = vst [vmem:[#allocation2 + $0x4c0] sm:$0xff] %v3815
  %3848 = vst [vmem:[#allocation2 + $0x4c8] sm:$0xff] %v3816
  %3849 = vst [vmem:[#allocation2 + $0x4d0] sm:$0xff] %v3817
  %3850 = vst [vmem:[#allocation2 + $0x4d8] sm:$0xff] %v3818
  %3851 = vst [vmem:[#allocation2 + $0x4e0] sm:$0xff] %v3819
  %3852 = vst [vmem:[#allocation2 + $0x4e8] sm:$0xff] %v3820
  %3853 = vst [vmem:[#allocation2 + $0x4f0] sm:$0xff] %v3821
  %3854 = vst [vmem:[#allocation2 + $0x4f8] sm:$0xff] %v3822
  %v3855 = vld [vmem:[#allocation2] sm:$0xff]
  %v3856 = vld [vmem:[#allocation2 + $0x8] sm:$0xff]
  %v3857 = vld [vmem:[#allocation2 + $0x10] sm:$0xff]
  %v3858 = vld [vmem:[#allocation2 + $0x18] sm:$0xff]
  %v3859 = vld [vmem:[#allocation2 + $0x20] sm:$0xff]
  %v3860 = vld [vmem:[#allocation2 + $0x28] sm:$0xff]
  %v3861 = vld [vmem:[#allocation2 + $0x30] sm:$0xff]
  %v3862 = vld [vmem:[#allocation2 + $0x38] sm:$0xff]
  %v3863 = vld [vmem:[#allocation2 + $0x40] sm:$0xff]
  %v3864 = vld [vmem:[#allocation2 + $0x48] sm:$0xff]
  %v3865 = vld [vmem:[#allocation2 + $0x50] sm:$0xff]
  %v3866 = vld [vmem:[#allocation2 + $0x58] sm:$0xff]
  %v3867 = vld [vmem:[#allocation2 + $0x60] sm:$0xff]
  %v3868 = vld [vmem:[#allocation2 + $0x68] sm:$0xff]
  %v3869 = vld [vmem:[#allocation2 + $0x70] sm:$0xff]
  %v3870 = vld [vmem:[#allocation2 + $0x78] sm:$0xff]
  %v3871 = vld [vmem:[#allocation2 + $0x80] sm:$0xff]
  %v3872 = vld [vmem:[#allocation2 + $0x88] sm:$0xff]
  %v3873 = vld [vmem:[#allocation2 + $0x90] sm:$0xff]
  %v3874 = vld [vmem:[#allocation2 + $0x98] sm:$0xff]
  %v3875 = vld [vmem:[#allocation2 + $0xa0] sm:$0xff]
  %v3876 = vld [vmem:[#allocation2 + $0xa8] sm:$0xff]
  %v3877 = vld [vmem:[#allocation2 + $0xb0] sm:$0xff]
  %v3878 = vld [vmem:[#allocation2 + $0xb8] sm:$0xff]
  %v3879 = vld [vmem:[#allocation2 + $0xc0] sm:$0xff]
  %v3880 = vld [vmem:[#allocation2 + $0xc8] sm:$0xff]
  %v3881 = vld [vmem:[#allocation2 + $0xd0] sm:$0xff]
  %v3882 = vld [vmem:[#allocation2 + $0xd8] sm:$0xff]
  %v3883 = vld [vmem:[#allocation2 + $0xe0] sm:$0xff]
  %v3884 = vld [vmem:[#allocation2 + $0xe8] sm:$0xff]
  %v3885 = vld [vmem:[#allocation2 + $0xf0] sm:$0xff]
  %v3886 = vld [vmem:[#allocation2 + $0xf8] sm:$0xff]
  %v3887 = vld [vmem:[#allocation2 + $0x100] sm:$0xff]
  %v3888 = vld [vmem:[#allocation2 + $0x108] sm:$0xff]
  %v3889 = vld [vmem:[#allocation2 + $0x110] sm:$0xff]
  %v3890 = vld [vmem:[#allocation2 + $0x118] sm:$0xff]
  %v3891 = vld [vmem:[#allocation2 + $0x120] sm:$0xff]
  %v3892 = vld [vmem:[#allocation2 + $0x128] sm:$0xff]
  %v3893 = vld [vmem:[#allocation2 + $0x130] sm:$0xff]
  %v3894 = vld [vmem:[#allocation2 + $0x138] sm:$0xff]
  %v3895 = vld [vmem:[#allocation2 + $0x140] sm:$0xff]
  %v3896 = vld [vmem:[#allocation2 + $0x148] sm:$0xff]
  %v3897 = vld [vmem:[#allocation2 + $0x150] sm:$0xff]
  %v3898 = vld [vmem:[#allocation2 + $0x158] sm:$0xff]
  %v3899 = vld [vmem:[#allocation2 + $0x160] sm:$0xff]
  %v3900 = vld [vmem:[#allocation2 + $0x168] sm:$0xff]
  %v3901 = vld [vmem:[#allocation2 + $0x170] sm:$0xff]
  %v3902 = vld [vmem:[#allocation2 + $0x178] sm:$0xff]
  %v3903 = vld [vmem:[#allocation2 + $0x180] sm:$0xff]
  %v3904 = vld [vmem:[#allocation2 + $0x188] sm:$0xff]
  %v3905 = vld [vmem:[#allocation2 + $0x190] sm:$0xff]
  %v3906 = vld [vmem:[#allocation2 + $0x198] sm:$0xff]
  %v3907 = vld [vmem:[#allocation2 + $0x1a0] sm:$0xff]
  %v3908 = vld [vmem:[#allocation2 + $0x1a8] sm:$0xff]
  %v3909 = vld [vmem:[#allocation2 + $0x1b0] sm:$0xff]
  %v3910 = vld [vmem:[#allocation2 + $0x1b8] sm:$0xff]
  %v3911 = vld [vmem:[#allocation2 + $0x1c0] sm:$0xff]
  %v3912 = vld [vmem:[#allocation2 + $0x1c8] sm:$0xff]
  %v3913 = vld [vmem:[#allocation2 + $0x1d0] sm:$0xff]
  %v3914 = vld [vmem:[#allocation2 + $0x1d8] sm:$0xff]
  %v3915 = vld [vmem:[#allocation2 + $0x1e0] sm:$0xff]
  %v3916 = vld [vmem:[#allocation2 + $0x1e8] sm:$0xff]
  %v3917 = vld [vmem:[#allocation2 + $0x1f0] sm:$0xff]
  %v3918 = vld [vmem:[#allocation2 + $0x1f8] sm:$0xff]
  %v3919 = vld [vmem:[#allocation2 + $0x200] sm:$0xff]
  %v3920 = vld [vmem:[#allocation2 + $0x208] sm:$0xff]
  %v3921 = vld [vmem:[#allocation2 + $0x210] sm:$0xff]
  %v3922 = vld [vmem:[#allocation2 + $0x218] sm:$0xff]
  %v3923 = vld [vmem:[#allocation2 + $0x220] sm:$0xff]
  %v3924 = vld [vmem:[#allocation2 + $0x228] sm:$0xff]
  %v3925 = vld [vmem:[#allocation2 + $0x230] sm:$0xff]
  %v3926 = vld [vmem:[#allocation2 + $0x238] sm:$0xff]
  %v3927 = vld [vmem:[#allocation2 + $0x240] sm:$0xff]
  %v3928 = vld [vmem:[#allocation2 + $0x248] sm:$0xff]
  %v3929 = vld [vmem:[#allocation2 + $0x250] sm:$0xff]
  %v3930 = vld [vmem:[#allocation2 + $0x258] sm:$0xff]
  %v3931 = vld [vmem:[#allocation2 + $0x260] sm:$0xff]
  %v3932 = vld [vmem:[#allocation2 + $0x268] sm:$0xff]
  %v3933 = vld [vmem:[#allocation2 + $0x270] sm:$0xff]
  %v3934 = vld [vmem:[#allocation2 + $0x278] sm:$0xff]
  %v3935 = vld [vmem:[#allocation2 + $0x280] sm:$0xff]
  %v3936 = vld [vmem:[#allocation2 + $0x288] sm:$0xff]
  %v3937 = vld [vmem:[#allocation2 + $0x290] sm:$0xff]
  %v3938 = vld [vmem:[#allocation2 + $0x298] sm:$0xff]
  %v3939 = vld [vmem:[#allocation2 + $0x2a0] sm:$0xff]
  %v3940 = vld [vmem:[#allocation2 + $0x2a8] sm:$0xff]
  %v3941 = vld [vmem:[#allocation2 + $0x2b0] sm:$0xff]
  %v3942 = vld [vmem:[#allocation2 + $0x2b8] sm:$0xff]
  %v3943 = vld [vmem:[#allocation2 + $0x2c0] sm:$0xff]
  %v3944 = vld [vmem:[#allocation2 + $0x2c8] sm:$0xff]
  %v3945 = vld [vmem:[#allocation2 + $0x2d0] sm:$0xff]
  %v3946 = vld [vmem:[#allocation2 + $0x2d8] sm:$0xff]
  %v3947 = vld [vmem:[#allocation2 + $0x2e0] sm:$0xff]
  %v3948 = vld [vmem:[#allocation2 + $0x2e8] sm:$0xff]
  %v3949 = vld [vmem:[#allocation2 + $0x2f0] sm:$0xff]
  %v3950 = vld [vmem:[#allocation2 + $0x2f8] sm:$0xff]
  %v3951 = vld [vmem:[#allocation2 + $0x300] sm:$0xff]
  %v3952 = vld [vmem:[#allocation2 + $0x308] sm:$0xff]
  %v3953 = vld [vmem:[#allocation2 + $0x310] sm:$0xff]
  %v3954 = vld [vmem:[#allocation2 + $0x318] sm:$0xff]
  %v3955 = vld [vmem:[#allocation2 + $0x320] sm:$0xff]
  %v3956 = vld [vmem:[#allocation2 + $0x328] sm:$0xff]
  %v3957 = vld [vmem:[#allocation2 + $0x330] sm:$0xff]
  %v3958 = vld [vmem:[#allocation2 + $0x338] sm:$0xff]
  %v3959 = vld [vmem:[#allocation2 + $0x340] sm:$0xff]
  %v3960 = vld [vmem:[#allocation2 + $0x348] sm:$0xff]
  %v3961 = vld [vmem:[#allocation2 + $0x350] sm:$0xff]
  %v3962 = vld [vmem:[#allocation2 + $0x358] sm:$0xff]
  %v3963 = vld [vmem:[#allocation2 + $0x360] sm:$0xff]
  %v3964 = vld [vmem:[#allocation2 + $0x368] sm:$0xff]
  %v3965 = vld [vmem:[#allocation2 + $0x370] sm:$0xff]
  %v3966 = vld [vmem:[#allocation2 + $0x378] sm:$0xff]
  %v3967 = vld [vmem:[#allocation2 + $0x380] sm:$0xff]
  %v3968 = vld [vmem:[#allocation2 + $0x388] sm:$0xff]
  %v3969 = vld [vmem:[#allocation2 + $0x390] sm:$0xff]
  %v3970 = vld [vmem:[#allocation2 + $0x398] sm:$0xff]
  %v3971 = vld [vmem:[#allocation2 + $0x3a0] sm:$0xff]
  %v3972 = vld [vmem:[#allocation2 + $0x3a8] sm:$0xff]
  %v3973 = vld [vmem:[#allocation2 + $0x3b0] sm:$0xff]
  %v3974 = vld [vmem:[#allocation2 + $0x3b8] sm:$0xff]
  %v3975 = vld [vmem:[#allocation2 + $0x3c0] sm:$0xff]
  %v3976 = vld [vmem:[#allocation2 + $0x3c8] sm:$0xff]
  %v3977 = vld [vmem:[#allocation2 + $0x3d0] sm:$0xff]
  %v3978 = vld [vmem:[#allocation2 + $0x3d8] sm:$0xff]
  %v3979 = vld [vmem:[#allocation2 + $0x3e0] sm:$0xff]
  %v3980 = vld [vmem:[#allocation2 + $0x3e8] sm:$0xff]
  %v3981 = vld [vmem:[#allocation2 + $0x3f0] sm:$0xff]
  %v3982 = vld [vmem:[#allocation2 + $0x3f8] sm:$0xff]
  %v3983 = vld [vmem:[#allocation2 + $0x400] sm:$0xff]
  %v3984 = vld [vmem:[#allocation2 + $0x408] sm:$0xff]
  %v3985 = vld [vmem:[#allocation2 + $0x410] sm:$0xff]
  %v3986 = vld [vmem:[#allocation2 + $0x418] sm:$0xff]
  %v3987 = vld [vmem:[#allocation2 + $0x420] sm:$0xff]
  %v3988 = vld [vmem:[#allocation2 + $0x428] sm:$0xff]
  %v3989 = vld [vmem:[#allocation2 + $0x430] sm:$0xff]
  %v3990 = vld [vmem:[#allocation2 + $0x438] sm:$0xff]
  %v3991 = vld [vmem:[#allocation2 + $0x440] sm:$0xff]
  %v3992 = vld [vmem:[#allocation2 + $0x448] sm:$0xff]
  %v3993 = vld [vmem:[#allocation2 + $0x450] sm:$0xff]
  %v3994 = vld [vmem:[#allocation2 + $0x458] sm:$0xff]
  %v3995 = vld [vmem:[#allocation2 + $0x460] sm:$0xff]
  %v3996 = vld [vmem:[#allocation2 + $0x468] sm:$0xff]
  %v3997 = vld [vmem:[#allocation2 + $0x470] sm:$0xff]
  %v3998 = vld [vmem:[#allocation2 + $0x478] sm:$0xff]
  %v3999 = vld [vmem:[#allocation2 + $0x480] sm:$0xff]
  %v4000 = vld [vmem:[#allocation2 + $0x488] sm:$0xff]
  %v4001 = vld [vmem:[#allocation2 + $0x490] sm:$0xff]
  %v4002 = vld [vmem:[#allocation2 + $0x498] sm:$0xff]
  %v4003 = vld [vmem:[#allocation2 + $0x4a0] sm:$0xff]
  %v4004 = vld [vmem:[#allocation2 + $0x4a8] sm:$0xff]
  %v4005 = vld [vmem:[#allocation2 + $0x4b0] sm:$0xff]
  %v4006 = vld [vmem:[#allocation2 + $0x4b8] sm:$0xff]
  %v4007 = vld [vmem:[#allocation2 + $0x4c0] sm:$0xff]
  %v4008 = vld [vmem:[#allocation2 + $0x4c8] sm:$0xff]
  %v4009 = vld [vmem:[#allocation2 + $0x4d0] sm:$0xff]
  %v4010 = vld [vmem:[#allocation2 + $0x4d8] sm:$0xff]
  %v4011 = vld [vmem:[#allocation2 + $0x4e0] sm:$0xff]
  %v4012 = vld [vmem:[#allocation2 + $0x4e8] sm:$0xff]
  %v4013 = vld [vmem:[#allocation2 + $0x4f0] sm:$0xff]
  %v4014 = vld [vmem:[#allocation2 + $0x4f8] sm:$0xff]
  %v4015 = vld [vmem:[%s7] sm:$0xff]
  %v4016 = vld [vmem:[%s7 + $0x8] sm:$0xff]
  %v4017 = vld [vmem:[%s7 + $0x10] sm:$0xff]
  %v4018 = vld [vmem:[%s7 + $0x18] sm:$0xff]
  %v4019 = vld [vmem:[%s7 + $0x20] sm:$0xff]
  %v4020 = vld [vmem:[%s7 + $0x28] sm:$0xff]
  %v4021 = vld [vmem:[%s7 + $0x30] sm:$0xff]
  %v4022 = vld [vmem:[%s7 + $0x38] sm:$0xff]
  %v4023 = vld [vmem:[%s7 + $0x40] sm:$0xff]
  %v4024 = vld [vmem:[%s7 + $0x48] sm:$0xff]
  %v4025 = vld [vmem:[%s7 + $0x50] sm:$0xff]
  %v4026 = vld [vmem:[%s7 + $0x58] sm:$0xff]
  %v4027 = vld [vmem:[%s7 + $0x60] sm:$0xff]
  %v4028 = vld [vmem:[%s7 + $0x68] sm:$0xff]
  %v4029 = vld [vmem:[%s7 + $0x70] sm:$0xff]
  %v4030 = vld [vmem:[%s7 + $0x78] sm:$0xff]
  %v4031 = vld [vmem:[%s8] sm:$0x1]
  %v4033 = vlaneseq
  %v4034 = vshrl.u32 %v4033, 7
  %v4035 = vsub.s32 0, %v4034
  %v4036 = vrot.slane %v4031, %v4035
  %4038 = vmatprep.subr.mxu0 0.0
  %4039 = vmatpush1.msra.mxu0 %v4015
  %4040 = vmatprep.subr.mxu0 0.0
  %4041 = vmatpush1.msra.mxu0 %v4016
  %4042 = vmatprep.subr.mxu0 0.0
  %4043 = vmatpush1.msra.mxu0 %v4017
  %4044 = vmatprep.subr.mxu0 0.0
  %4045 = vmatpush1.msra.mxu0 %v4018
  %4046 = vmatprep.subr.mxu0 0.0
  %4047 = vmatpush1.msra.mxu0 %v4019
  %4048 = vmatprep.subr.mxu0 0.0
  %4049 = vmatpush1.msra.mxu0 %v4020
  %4050 = vmatprep.subr.mxu0 0.0
  %4051 = vmatpush1.msra.mxu0 %v4021
  %4052 = vmatprep.subr.mxu0 0.0
  %4053 = vmatpush1.msra.mxu0 %v4022
  %4054 = vmatprep.subr.mxu0 0.0
  %4055 = vmatpush1.msra.mxu0 %v4023
  %4056 = vmatprep.subr.mxu0 0.0
  %4057 = vmatpush1.msra.mxu0 %v4024
  %4058 = vmatprep.subr.mxu0 0.0
  %4059 = vmatpush1.msra.mxu0 %v4025
  %4060 = vmatprep.subr.mxu0 0.0
  %4061 = vmatpush1.msra.mxu0 %v4026
  %4062 = vmatprep.subr.mxu0 0.0
  %4063 = vmatpush1.msra.mxu0 %v4027
  %4064 = vmatprep.subr.mxu0 0.0
  %4065 = vmatpush1.msra.mxu0 %v4028
  %4066 = vmatprep.subr.mxu0 0.0
  %4067 = vmatpush1.msra.mxu0 %v4029
  %4068 = vmatprep.subr.mxu0 0.0
  %4069 = vmatpush1.msra.mxu0 %v4030
  %4070 = vmatprep.subr.mxu0 0.0
  %4071 = vmatpush1.msra.mxu0 0.0
  %4072 = vmatprep.subr.mxu0 0.0
  %4073 = vmatpush1.msra.mxu0 0.0
  %4074 = vmatprep.subr.mxu0 0.0
  %4075 = vmatpush1.msra.mxu0 0.0
  %4076 = vmatprep.subr.mxu0 0.0
  %4077 = vmatpush1.msra.mxu0 0.0
  %4078 = vmatprep.subr.mxu0 0.0
  %4079 = vmatpush1.msra.mxu0 0.0
  %4080 = vmatprep.subr.mxu0 0.0
  %4081 = vmatpush1.msra.mxu0 0.0
  %4082 = vmatprep.subr.mxu0 0.0
  %4083 = vmatpush1.msra.mxu0 0.0
  %4084 = vmatprep.subr.mxu0 0.0
  %4085 = vmatpush1.msra.mxu0 0.0
  %4086 = vmatprep.subr.mxu0 0.0
  %4087 = vmatpush1.msra.mxu0 0.0
  %4088 = vmatprep.subr.mxu0 0.0
  %4089 = vmatpush1.msra.mxu0 0.0
  %4090 = vmatprep.subr.mxu0 0.0
  %4091 = vmatpush1.msra.mxu0 0.0
  %4092 = vmatprep.subr.mxu0 0.0
  %4093 = vmatpush1.msra.mxu0 0.0
  %4094 = vmatprep.subr.mxu0 0.0
  %4095 = vmatpush1.msra.mxu0 0.0
  %4096 = vmatprep.subr.mxu0 0.0
  %4097 = vmatpush1.msra.mxu0 0.0
  %4098 = vmatprep.subr.mxu0 0.0
  %4099 = vmatpush1.msra.mxu0 0.0
  %4100 = vmatprep.subr.mxu0 0.0
  %4101 = vmatpush1.msra.mxu0 0.0
  %4102 = vmatprep.mubr.f32.mxu0 0.0
  %4103 = vmatmul.mubr.f32.gmra.mrb[0].mxu0 %v3855
  %v4104 = vpop.f32.mrb[0].mxu0
  %v4105 = vadd.f32 %v4036, %v4104
  %v4106 = vpop.f32.mrb[0].mxu0
  %4107 = vmatprep.mubr.f32.mxu0 0.0
  %4108 = vmatmul.mubr.f32.gmra.mrb[0].mxu0 %v3856
  %v4109 = vpop.f32.mrb[0].mxu0
  %v4110 = vadd.f32 %v4036, %v4109
  %v4111 = vpop.f32.mrb[0].mxu0
  %4112 = vmatprep.mubr.f32.mxu0 0.0
  %4113 = vmatmul.mubr.f32.gmra.mrb[0].mxu0 %v3857
  %v4114 = vpop.f32.mrb[0].mxu0
  %v4115 = vadd.f32 %v4036, %v4114
  %v4116 = vpop.f32.mrb[0].mxu0
  %4117 = vmatprep.mubr.f32.mxu0 0.0
  %4118 = vmatmul.mubr.f32.gmra.mrb[0].mxu0 %v3858
  %v4119 = vpop.f32.mrb[0].mxu0
  %v4120 = vadd.f32 %v4036, %v4119
  %v4121 = vpop.f32.mrb[0].mxu0
  %4122 = vmatprep.mubr.f32.mxu0 0.0
  %4123 = vmatmul.mubr.f32.gmra.mrb[0].mxu0 %v3859
  %v4124 = vpop.f32.mrb[0].mxu0
  %v4125 = vadd.f32 %v4036, %v4124
  %v4126 = vpop.f32.mrb[0].mxu0
  %4127 = vmatprep.mubr.f32.mxu0 0.0
  %4128 = vmatmul.mubr.f32.gmra.mrb[0].mxu0 %v3860
  %v4129 = vpop.f32.mrb[0].mxu0
  %v4130 = vadd.f32 %v4036, %v4129
  %v4131 = vpop.f32.mrb[0].mxu0
  %4132 = vmatprep.mubr.f32.mxu0 0.0
  %4133 = vmatmul.mubr.f32.gmra.mrb[0].mxu0 %v3861
  %v4134 = vpop.f32.mrb[0].mxu0
  %v4135 = vadd.f32 %v4036, %v4134
  %v4136 = vpop.f32.mrb[0].mxu0
  %4137 = vmatprep.mubr.f32.mxu0 0.0
  %4138 = vmatmul.mubr.f32.gmra.mrb[0].mxu0 %v3862
  %v4139 = vpop.f32.mrb[0].mxu0
  %v4140 = vadd.f32 %v4036, %v4139
  %v4141 = vpop.f32.mrb[0].mxu0
  %4142 = vmatprep.mubr.f32.mxu0 0.0
  %4143 = vmatmul.mubr.f32.gmra.mrb[0].mxu0 %v3863
  %v4144 = vpop.f32.mrb[0].mxu0
  %v4145 = vadd.f32 %v4036, %v4144
  %v4146 = vpop.f32.mrb[0].mxu0
  %4147 = vmatprep.mubr.f32.mxu0 0.0
  %4148 = vmatmul.mubr.f32.gmra.mrb[0].mxu0 %v3864
  %v4149 = vpop.f32.mrb[0].mxu0
  %v4150 = vadd.f32 %v4036, %v4149
  %v4151 = vpop.f32.mrb[0].mxu0
  %4152 = vmatprep.mubr.f32.mxu0 0.0
  %4153 = vmatmul.mubr.f32.gmra.mrb[0].mxu0 %v3865
  %v4154 = vpop.f32.mrb[0].mxu0
  %v4155 = vadd.f32 %v4036, %v4154
  %v4156 = vpop.f32.mrb[0].mxu0
  %4157 = vmatprep.mubr.f32.mxu0 0.0
  %4158 = vmatmul.mubr.f32.gmra.mrb[0].mxu0 %v3866
  %v4159 = vpop.f32.mrb[0].mxu0
  %v4160 = vadd.f32 %v4036, %v4159
  %v4161 = vpop.f32.mrb[0].mxu0
  %4162 = vmatprep.mubr.f32.mxu0 0.0
  %4163 = vmatmul.mubr.f32.gmra.mrb[0].mxu0 %v3867
  %v4164 = vpop.f32.mrb[0].mxu0
  %v4165 = vadd.f32 %v4036, %v4164
  %v4166 = vpop.f32.mrb[0].mxu0
  %4167 = vmatprep.mubr.f32.mxu0 0.0
  %4168 = vmatmul.mubr.f32.gmra.mrb[0].mxu0 %v3868
  %v4169 = vpop.f32.mrb[0].mxu0
  %v4170 = vadd.f32 %v4036, %v4169
  %v4171 = vpop.f32.mrb[0].mxu0
  %4172 = vmatprep.mubr.f32.mxu0 0.0
  %4173 = vmatmul.mubr.f32.gmra.mrb[0].mxu0 %v3869
  %v4174 = vpop.f32.mrb[0].mxu0
  %v4175 = vadd.f32 %v4036, %v4174
  %v4176 = vpop.f32.mrb[0].mxu0
  %4177 = vmatprep.mubr.f32.mxu0 0.0
  %4178 = vmatmul.mubr.f32.gmra.mrb[0].mxu0 %v3870
  %v4179 = vpop.f32.mrb[0].mxu0
  %v4180 = vadd.f32 %v4036, %v4179
  %v4181 = vpop.f32.mrb[0].mxu0
  %4182 = vmatprep.mubr.f32.mxu0 0.0
  %4183 = vmatmul.mubr.f32.gmra.mrb[0].mxu0 %v3871
  %v4184 = vpop.f32.mrb[0].mxu0
  %v4185 = vadd.f32 %v4036, %v4184
  %v4186 = vpop.f32.mrb[0].mxu0
  %4187 = vmatprep.mubr.f32.mxu0 0.0
  %4188 = vmatmul.mubr.f32.gmra.mrb[0].mxu0 %v3872
  %v4189 = vpop.f32.mrb[0].mxu0
  %v4190 = vadd.f32 %v4036, %v4189
  %v4191 = vpop.f32.mrb[0].mxu0
  %4192 = vmatprep.mubr.f32.mxu0 0.0
  %4193 = vmatmul.mubr.f32.gmra.mrb[0].mxu0 %v3873
  %v4194 = vpop.f32.mrb[0].mxu0
  %v4195 = vadd.f32 %v4036, %v4194
  %v4196 = vpop.f32.mrb[0].mxu0
  %4197 = vmatprep.mubr.f32.mxu0 0.0
  %4198 = vmatmul.mubr.f32.gmra.mrb[0].mxu0 %v3874
  %v4199 = vpop.f32.mrb[0].mxu0
  %v4200 = vadd.f32 %v4036, %v4199
  %v4201 = vpop.f32.mrb[0].mxu0
  %4202 = vmatprep.mubr.f32.mxu0 0.0
  %4203 = vmatmul.mubr.f32.gmra.mrb[0].mxu0 %v3875
  %v4204 = vpop.f32.mrb[0].mxu0
  %v4205 = vadd.f32 %v4036, %v4204
  %v4206 = vpop.f32.mrb[0].mxu0
  %4207 = vmatprep.mubr.f32.mxu0 0.0
  %4208 = vmatmul.mubr.f32.gmra.mrb[0].mxu0 %v3876
  %v4209 = vpop.f32.mrb[0].mxu0
  %v4210 = vadd.f32 %v4036, %v4209
  %v4211 = vpop.f32.mrb[0].mxu0
  %4212 = vmatprep.mubr.f32.mxu0 0.0
  %4213 = vmatmul.mubr.f32.gmra.mrb[0].mxu0 %v3877
  %v4214 = vpop.f32.mrb[0].mxu0
  %v4215 = vadd.f32 %v4036, %v4214
  %v4216 = vpop.f32.mrb[0].mxu0
  %4217 = vmatprep.mubr.f32.mxu0 0.0
  %4218 = vmatmul.mubr.f32.gmra.mrb[0].mxu0 %v3878
  %v4219 = vpop.f32.mrb[0].mxu0
  %v4220 = vadd.f32 %v4036, %v4219
  %v4221 = vpop.f32.mrb[0].mxu0
  %4222 = vmatprep.mubr.f32.mxu0 0.0
  %4223 = vmatmul.mubr.f32.gmra.mrb[0].mxu0 %v3879
  %v4224 = vpop.f32.mrb[0].mxu0
  %v4225 = vadd.f32 %v4036, %v4224
  %v4226 = vpop.f32.mrb[0].mxu0
  %4227 = vmatprep.mubr.f32.mxu0 0.0
  %4228 = vmatmul.mubr.f32.gmra.mrb[0].mxu0 %v3880
  %v4229 = vpop.f32.mrb[0].mxu0
  %v4230 = vadd.f32 %v4036, %v4229
  %v4231 = vpop.f32.mrb[0].mxu0
  %4232 = vmatprep.mubr.f32.mxu0 0.0
  %4233 = vmatmul.mubr.f32.gmra.mrb[0].mxu0 %v3881
  %v4234 = vpop.f32.mrb[0].mxu0
  %v4235 = vadd.f32 %v4036, %v4234
  %v4236 = vpop.f32.mrb[0].mxu0
  %4237 = vmatprep.mubr.f32.mxu0 0.0
  %4238 = vmatmul.mubr.f32.gmra.mrb[0].mxu0 %v3882
  %v4239 = vpop.f32.mrb[0].mxu0
  %v4240 = vadd.f32 %v4036, %v4239
  %v4241 = vpop.f32.mrb[0].mxu0
  %4242 = vmatprep.mubr.f32.mxu0 0.0
  %4243 = vmatmul.mubr.f32.gmra.mrb[0].mxu0 %v3883
  %v4244 = vpop.f32.mrb[0].mxu0
  %v4245 = vadd.f32 %v4036, %v4244
  %v4246 = vpop.f32.mrb[0].mxu0
  %4247 = vmatprep.mubr.f32.mxu0 0.0
  %4248 = vmatmul.mubr.f32.gmra.mrb[0].mxu0 %v3884
  %v4249 = vpop.f32.mrb[0].mxu0
  %v4250 = vadd.f32 %v4036, %v4249
  %v4251 = vpop.f32.mrb[0].mxu0
  %4252 = vmatprep.mubr.f32.mxu0 0.0
  %4253 = vmatmul.mubr.f32.gmra.mrb[0].mxu0 %v3885
  %v4254 = vpop.f32.mrb[0].mxu0
  %v4255 = vadd.f32 %v4036, %v4254
  %v4256 = vpop.f32.mrb[0].mxu0
  %4257 = vmatprep.mubr.f32.mxu0 0.0
  %4258 = vmatmul.mubr.f32.gmra.mrb[0].mxu0 %v3886
  %v4259 = vpop.f32.mrb[0].mxu0
  %v4260 = vadd.f32 %v4036, %v4259
  %v4261 = vpop.f32.mrb[0].mxu0
  %4262 = vmatprep.mubr.f32.mxu0 0.0
  %4263 = vmatmul.mubr.f32.gmra.mrb[0].mxu0 %v3887
  %v4264 = vpop.f32.mrb[0].mxu0
  %v4265 = vadd.f32 %v4036, %v4264
  %v4266 = vpop.f32.mrb[0].mxu0
  %4267 = vmatprep.mubr.f32.mxu0 0.0
  %4268 = vmatmul.mubr.f32.gmra.mrb[0].mxu0 %v3888
  %v4269 = vpop.f32.mrb[0].mxu0
  %v4270 = vadd.f32 %v4036, %v4269
  %v4271 = vpop.f32.mrb[0].mxu0
  %4272 = vmatprep.mubr.f32.mxu0 0.0
  %4273 = vmatmul.mubr.f32.gmra.mrb[0].mxu0 %v3889
  %v4274 = vpop.f32.mrb[0].mxu0
  %v4275 = vadd.f32 %v4036, %v4274
  %v4276 = vpop.f32.mrb[0].mxu0
  %4277 = vmatprep.mubr.f32.mxu0 0.0
  %4278 = vmatmul.mubr.f32.gmra.mrb[0].mxu0 %v3890
  %v4279 = vpop.f32.mrb[0].mxu0
  %v4280 = vadd.f32 %v4036, %v4279
  %v4281 = vpop.f32.mrb[0].mxu0
  %4282 = vmatprep.mubr.f32.mxu0 0.0
  %4283 = vmatmul.mubr.f32.gmra.mrb[0].mxu0 %v3891
  %v4284 = vpop.f32.mrb[0].mxu0
  %v4285 = vadd.f32 %v4036, %v4284
  %v4286 = vpop.f32.mrb[0].mxu0
  %4287 = vmatprep.mubr.f32.mxu0 0.0
  %4288 = vmatmul.mubr.f32.gmra.mrb[0].mxu0 %v3892
  %v4289 = vpop.f32.mrb[0].mxu0
  %v4290 = vadd.f32 %v4036, %v4289
  %v4291 = vpop.f32.mrb[0].mxu0
  %4292 = vmatprep.mubr.f32.mxu0 0.0
  %4293 = vmatmul.mubr.f32.gmra.mrb[0].mxu0 %v3893
  %v4294 = vpop.f32.mrb[0].mxu0
  %v4295 = vadd.f32 %v4036, %v4294
  %v4296 = vpop.f32.mrb[0].mxu0
  %4297 = vmatprep.mubr.f32.mxu0 0.0
  %4298 = vmatmul.mubr.f32.gmra.mrb[0].mxu0 %v3894
  %v4299 = vpop.f32.mrb[0].mxu0
  %v4300 = vadd.f32 %v4036, %v4299
  %v4301 = vpop.f32.mrb[0].mxu0
  %4302 = vmatprep.mubr.f32.mxu0 0.0
  %4303 = vmatmul.mubr.f32.gmra.mrb[0].mxu0 %v3895
  %v4304 = vpop.f32.mrb[0].mxu0
  %v4305 = vadd.f32 %v4036, %v4304
  %v4306 = vpop.f32.mrb[0].mxu0
  %4307 = vmatprep.mubr.f32.mxu0 0.0
  %4308 = vmatmul.mubr.f32.gmra.mrb[0].mxu0 %v3896
  %v4309 = vpop.f32.mrb[0].mxu0
  %v4310 = vadd.f32 %v4036, %v4309
  %v4311 = vpop.f32.mrb[0].mxu0
  %4312 = vmatprep.mubr.f32.mxu0 0.0
  %4313 = vmatmul.mubr.f32.gmra.mrb[0].mxu0 %v3897
  %v4314 = vpop.f32.mrb[0].mxu0
  %v4315 = vadd.f32 %v4036, %v4314
  %v4316 = vpop.f32.mrb[0].mxu0
  %4317 = vmatprep.mubr.f32.mxu0 0.0
  %4318 = vmatmul.mubr.f32.gmra.mrb[0].mxu0 %v3898
  %v4319 = vpop.f32.mrb[0].mxu0
  %v4320 = vadd.f32 %v4036, %v4319
  %v4321 = vpop.f32.mrb[0].mxu0
  %4322 = vmatprep.mubr.f32.mxu0 0.0
  %4323 = vmatmul.mubr.f32.gmra.mrb[0].mxu0 %v3899
  %v4324 = vpop.f32.mrb[0].mxu0
  %v4325 = vadd.f32 %v4036, %v4324
  %v4326 = vpop.f32.mrb[0].mxu0
  %4327 = vmatprep.mubr.f32.mxu0 0.0
  %4328 = vmatmul.mubr.f32.gmra.mrb[0].mxu0 %v3900
  %v4329 = vpop.f32.mrb[0].mxu0
  %v4330 = vadd.f32 %v4036, %v4329
  %v4331 = vpop.f32.mrb[0].mxu0
  %4332 = vmatprep.mubr.f32.mxu0 0.0
  %4333 = vmatmul.mubr.f32.gmra.mrb[0].mxu0 %v3901
  %v4334 = vpop.f32.mrb[0].mxu0
  %v4335 = vadd.f32 %v4036, %v4334
  %v4336 = vpop.f32.mrb[0].mxu0
  %4337 = vmatprep.mubr.f32.mxu0 0.0
  %4338 = vmatmul.mubr.f32.gmra.mrb[0].mxu0 %v3902
  %v4339 = vpop.f32.mrb[0].mxu0
  %v4340 = vadd.f32 %v4036, %v4339
  %v4341 = vpop.f32.mrb[0].mxu0
  %4342 = vmatprep.mubr.f32.mxu0 0.0
  %4343 = vmatmul.mubr.f32.gmra.mrb[0].mxu0 %v3903
  %v4344 = vpop.f32.mrb[0].mxu0
  %v4345 = vadd.f32 %v4036, %v4344
  %v4346 = vpop.f32.mrb[0].mxu0
  %4347 = vmatprep.mubr.f32.mxu0 0.0
  %4348 = vmatmul.mubr.f32.gmra.mrb[0].mxu0 %v3904
  %v4349 = vpop.f32.mrb[0].mxu0
  %v4350 = vadd.f32 %v4036, %v4349
  %v4351 = vpop.f32.mrb[0].mxu0
  %4352 = vmatprep.mubr.f32.mxu0 0.0
  %4353 = vmatmul.mubr.f32.gmra.mrb[0].mxu0 %v3905
  %v4354 = vpop.f32.mrb[0].mxu0
  %v4355 = vadd.f32 %v4036, %v4354
  %v4356 = vpop.f32.mrb[0].mxu0
  %4357 = vmatprep.mubr.f32.mxu0 0.0
  %4358 = vmatmul.mubr.f32.gmra.mrb[0].mxu0 %v3906
  %v4359 = vpop.f32.mrb[0].mxu0
  %v4360 = vadd.f32 %v4036, %v4359
  %v4361 = vpop.f32.mrb[0].mxu0
  %4362 = vmatprep.mubr.f32.mxu0 0.0
  %4363 = vmatmul.mubr.f32.gmra.mrb[0].mxu0 %v3907
  %v4364 = vpop.f32.mrb[0].mxu0
  %v4365 = vadd.f32 %v4036, %v4364
  %v4366 = vpop.f32.mrb[0].mxu0
  %4367 = vmatprep.mubr.f32.mxu0 0.0
  %4368 = vmatmul.mubr.f32.gmra.mrb[0].mxu0 %v3908
  %v4369 = vpop.f32.mrb[0].mxu0
  %v4370 = vadd.f32 %v4036, %v4369
  %v4371 = vpop.f32.mrb[0].mxu0
  %4372 = vmatprep.mubr.f32.mxu0 0.0
  %4373 = vmatmul.mubr.f32.gmra.mrb[0].mxu0 %v3909
  %v4374 = vpop.f32.mrb[0].mxu0
  %v4375 = vadd.f32 %v4036, %v4374
  %v4376 = vpop.f32.mrb[0].mxu0
  %4377 = vmatprep.mubr.f32.mxu0 0.0
  %4378 = vmatmul.mubr.f32.gmra.mrb[0].mxu0 %v3910
  %v4379 = vpop.f32.mrb[0].mxu0
  %v4380 = vadd.f32 %v4036, %v4379
  %v4381 = vpop.f32.mrb[0].mxu0
  %4382 = vmatprep.mubr.f32.mxu0 0.0
  %4383 = vmatmul.mubr.f32.gmra.mrb[0].mxu0 %v3911
  %v4384 = vpop.f32.mrb[0].mxu0
  %v4385 = vadd.f32 %v4036, %v4384
  %v4386 = vpop.f32.mrb[0].mxu0
  %4387 = vmatprep.mubr.f32.mxu0 0.0
  %4388 = vmatmul.mubr.f32.gmra.mrb[0].mxu0 %v3912
  %v4389 = vpop.f32.mrb[0].mxu0
  %v4390 = vadd.f32 %v4036, %v4389
  %v4391 = vpop.f32.mrb[0].mxu0
  %4392 = vmatprep.mubr.f32.mxu0 0.0
  %4393 = vmatmul.mubr.f32.gmra.mrb[0].mxu0 %v3913
  %v4394 = vpop.f32.mrb[0].mxu0
  %v4395 = vadd.f32 %v4036, %v4394
  %v4396 = vpop.f32.mrb[0].mxu0
  %4397 = vmatprep.mubr.f32.mxu0 0.0
  %4398 = vmatmul.mubr.f32.gmra.mrb[0].mxu0 %v3914
  %v4399 = vpop.f32.mrb[0].mxu0
  %v4400 = vadd.f32 %v4036, %v4399
  %v4401 = vpop.f32.mrb[0].mxu0
  %4402 = vmatprep.mubr.f32.mxu0 0.0
  %4403 = vmatmul.mubr.f32.gmra.mrb[0].mxu0 %v3915
  %v4404 = vpop.f32.mrb[0].mxu0
  %v4405 = vadd.f32 %v4036, %v4404
  %v4406 = vpop.f32.mrb[0].mxu0
  %4407 = vmatprep.mubr.f32.mxu0 0.0
  %4408 = vmatmul.mubr.f32.gmra.mrb[0].mxu0 %v3916
  %v4409 = vpop.f32.mrb[0].mxu0
  %v4410 = vadd.f32 %v4036, %v4409
  %v4411 = vpop.f32.mrb[0].mxu0
  %4412 = vmatprep.mubr.f32.mxu0 0.0
  %4413 = vmatmul.mubr.f32.gmra.mrb[0].mxu0 %v3917
  %v4414 = vpop.f32.mrb[0].mxu0
  %v4415 = vadd.f32 %v4036, %v4414
  %v4416 = vpop.f32.mrb[0].mxu0
  %4417 = vmatprep.mubr.f32.mxu0 0.0
  %4418 = vmatmul.mubr.f32.gmra.mrb[0].mxu0 %v3918
  %v4419 = vpop.f32.mrb[0].mxu0
  %v4420 = vadd.f32 %v4036, %v4419
  %v4421 = vpop.f32.mrb[0].mxu0
  %4422 = vmatprep.mubr.f32.mxu0 0.0
  %4423 = vmatmul.mubr.f32.gmra.mrb[0].mxu0 %v3919
  %v4424 = vpop.f32.mrb[0].mxu0
  %v4425 = vadd.f32 %v4036, %v4424
  %v4426 = vpop.f32.mrb[0].mxu0
  %4427 = vmatprep.mubr.f32.mxu0 0.0
  %4428 = vmatmul.mubr.f32.gmra.mrb[0].mxu0 %v3920
  %v4429 = vpop.f32.mrb[0].mxu0
  %v4430 = vadd.f32 %v4036, %v4429
  %v4431 = vpop.f32.mrb[0].mxu0
  %4432 = vmatprep.mubr.f32.mxu0 0.0
  %4433 = vmatmul.mubr.f32.gmra.mrb[0].mxu0 %v3921
  %v4434 = vpop.f32.mrb[0].mxu0
  %v4435 = vadd.f32 %v4036, %v4434
  %v4436 = vpop.f32.mrb[0].mxu0
  %4437 = vmatprep.mubr.f32.mxu0 0.0
  %4438 = vmatmul.mubr.f32.gmra.mrb[0].mxu0 %v3922
  %v4439 = vpop.f32.mrb[0].mxu0
  %v4440 = vadd.f32 %v4036, %v4439
  %v4441 = vpop.f32.mrb[0].mxu0
  %4442 = vmatprep.mubr.f32.mxu0 0.0
  %4443 = vmatmul.mubr.f32.gmra.mrb[0].mxu0 %v3923
  %v4444 = vpop.f32.mrb[0].mxu0
  %v4445 = vadd.f32 %v4036, %v4444
  %v4446 = vpop.f32.mrb[0].mxu0
  %4447 = vmatprep.mubr.f32.mxu0 0.0
  %4448 = vmatmul.mubr.f32.gmra.mrb[0].mxu0 %v3924
  %v4449 = vpop.f32.mrb[0].mxu0
  %v4450 = vadd.f32 %v4036, %v4449
  %v4451 = vpop.f32.mrb[0].mxu0
  %4452 = vmatprep.mubr.f32.mxu0 0.0
  %4453 = vmatmul.mubr.f32.gmra.mrb[0].mxu0 %v3925
  %v4454 = vpop.f32.mrb[0].mxu0
  %v4455 = vadd.f32 %v4036, %v4454
  %v4456 = vpop.f32.mrb[0].mxu0
  %4457 = vmatprep.mubr.f32.mxu0 0.0
  %4458 = vmatmul.mubr.f32.gmra.mrb[0].mxu0 %v3926
  %v4459 = vpop.f32.mrb[0].mxu0
  %v4460 = vadd.f32 %v4036, %v4459
  %v4461 = vpop.f32.mrb[0].mxu0
  %4462 = vmatprep.mubr.f32.mxu0 0.0
  %4463 = vmatmul.mubr.f32.gmra.mrb[0].mxu0 %v3927
  %v4464 = vpop.f32.mrb[0].mxu0
  %v4465 = vadd.f32 %v4036, %v4464
  %v4466 = vpop.f32.mrb[0].mxu0
  %4467 = vmatprep.mubr.f32.mxu0 0.0
  %4468 = vmatmul.mubr.f32.gmra.mrb[0].mxu0 %v3928
  %v4469 = vpop.f32.mrb[0].mxu0
  %v4470 = vadd.f32 %v4036, %v4469
  %v4471 = vpop.f32.mrb[0].mxu0
  %4472 = vmatprep.mubr.f32.mxu0 0.0
  %4473 = vmatmul.mubr.f32.gmra.mrb[0].mxu0 %v3929
  %v4474 = vpop.f32.mrb[0].mxu0
  %v4475 = vadd.f32 %v4036, %v4474
  %v4476 = vpop.f32.mrb[0].mxu0
  %4477 = vmatprep.mubr.f32.mxu0 0.0
  %4478 = vmatmul.mubr.f32.gmra.mrb[0].mxu0 %v3930
  %v4479 = vpop.f32.mrb[0].mxu0
  %v4480 = vadd.f32 %v4036, %v4479
  %v4481 = vpop.f32.mrb[0].mxu0
  %4482 = vmatprep.mubr.f32.mxu0 0.0
  %4483 = vmatmul.mubr.f32.gmra.mrb[0].mxu0 %v3931
  %v4484 = vpop.f32.mrb[0].mxu0
  %v4485 = vadd.f32 %v4036, %v4484
  %v4486 = vpop.f32.mrb[0].mxu0
  %4487 = vmatprep.mubr.f32.mxu0 0.0
  %4488 = vmatmul.mubr.f32.gmra.mrb[0].mxu0 %v3932
  %v4489 = vpop.f32.mrb[0].mxu0
  %v4490 = vadd.f32 %v4036, %v4489
  %v4491 = vpop.f32.mrb[0].mxu0
  %4492 = vmatprep.mubr.f32.mxu0 0.0
  %4493 = vmatmul.mubr.f32.gmra.mrb[0].mxu0 %v3933
  %v4494 = vpop.f32.mrb[0].mxu0
  %v4495 = vadd.f32 %v4036, %v4494
  %v4496 = vpop.f32.mrb[0].mxu0
  %4497 = vmatprep.mubr.f32.mxu0 0.0
  %4498 = vmatmul.mubr.f32.gmra.mrb[0].mxu0 %v3934
  %v4499 = vpop.f32.mrb[0].mxu0
  %v4500 = vadd.f32 %v4036, %v4499
  %v4501 = vpop.f32.mrb[0].mxu0
  %4502 = vmatprep.mubr.f32.mxu0 0.0
  %4503 = vmatmul.mubr.f32.gmra.mrb[0].mxu0 %v3935
  %v4504 = vpop.f32.mrb[0].mxu0
  %v4505 = vadd.f32 %v4036, %v4504
  %v4506 = vpop.f32.mrb[0].mxu0
  %4507 = vmatprep.mubr.f32.mxu0 0.0
  %4508 = vmatmul.mubr.f32.gmra.mrb[0].mxu0 %v3936
  %v4509 = vpop.f32.mrb[0].mxu0
  %v4510 = vadd.f32 %v4036, %v4509
  %v4511 = vpop.f32.mrb[0].mxu0
  %4512 = vmatprep.mubr.f32.mxu0 0.0
  %4513 = vmatmul.mubr.f32.gmra.mrb[0].mxu0 %v3937
  %v4514 = vpop.f32.mrb[0].mxu0
  %v4515 = vadd.f32 %v4036, %v4514
  %v4516 = vpop.f32.mrb[0].mxu0
  %4517 = vmatprep.mubr.f32.mxu0 0.0
  %4518 = vmatmul.mubr.f32.gmra.mrb[0].mxu0 %v3938
  %v4519 = vpop.f32.mrb[0].mxu0
  %v4520 = vadd.f32 %v4036, %v4519
  %v4521 = vpop.f32.mrb[0].mxu0
  %4522 = vmatprep.mubr.f32.mxu0 0.0
  %4523 = vmatmul.mubr.f32.gmra.mrb[0].mxu0 %v3939
  %v4524 = vpop.f32.mrb[0].mxu0
  %v4525 = vadd.f32 %v4036, %v4524
  %v4526 = vpop.f32.mrb[0].mxu0
  %4527 = vmatprep.mubr.f32.mxu0 0.0
  %4528 = vmatmul.mubr.f32.gmra.mrb[0].mxu0 %v3940
  %v4529 = vpop.f32.mrb[0].mxu0
  %v4530 = vadd.f32 %v4036, %v4529
  %v4531 = vpop.f32.mrb[0].mxu0
  %4532 = vmatprep.mubr.f32.mxu0 0.0
  %4533 = vmatmul.mubr.f32.gmra.mrb[0].mxu0 %v3941
  %v4534 = vpop.f32.mrb[0].mxu0
  %v4535 = vadd.f32 %v4036, %v4534
  %v4536 = vpop.f32.mrb[0].mxu0
  %4537 = vmatprep.mubr.f32.mxu0 0.0
  %4538 = vmatmul.mubr.f32.gmra.mrb[0].mxu0 %v3942
  %v4539 = vpop.f32.mrb[0].mxu0
  %v4540 = vadd.f32 %v4036, %v4539
  %v4541 = vpop.f32.mrb[0].mxu0
  %4542 = vmatprep.mubr.f32.mxu0 0.0
  %4543 = vmatmul.mubr.f32.gmra.mrb[0].mxu0 %v3943
  %v4544 = vpop.f32.mrb[0].mxu0
  %v4545 = vadd.f32 %v4036, %v4544
  %v4546 = vpop.f32.mrb[0].mxu0
  %4547 = vmatprep.mubr.f32.mxu0 0.0
  %4548 = vmatmul.mubr.f32.gmra.mrb[0].mxu0 %v3944
  %v4549 = vpop.f32.mrb[0].mxu0
  %v4550 = vadd.f32 %v4036, %v4549
  %v4551 = vpop.f32.mrb[0].mxu0
  %4552 = vmatprep.mubr.f32.mxu0 0.0
  %4553 = vmatmul.mubr.f32.gmra.mrb[0].mxu0 %v3945
  %v4554 = vpop.f32.mrb[0].mxu0
  %v4555 = vadd.f32 %v4036, %v4554
  %v4556 = vpop.f32.mrb[0].mxu0
  %4557 = vmatprep.mubr.f32.mxu0 0.0
  %4558 = vmatmul.mubr.f32.gmra.mrb[0].mxu0 %v3946
  %v4559 = vpop.f32.mrb[0].mxu0
  %v4560 = vadd.f32 %v4036, %v4559
  %v4561 = vpop.f32.mrb[0].mxu0
  %4562 = vmatprep.mubr.f32.mxu0 0.0
  %4563 = vmatmul.mubr.f32.gmra.mrb[0].mxu0 %v3947
  %v4564 = vpop.f32.mrb[0].mxu0
  %v4565 = vadd.f32 %v4036, %v4564
  %v4566 = vpop.f32.mrb[0].mxu0
  %4567 = vmatprep.mubr.f32.mxu0 0.0
  %4568 = vmatmul.mubr.f32.gmra.mrb[0].mxu0 %v3948
  %v4569 = vpop.f32.mrb[0].mxu0
  %v4570 = vadd.f32 %v4036, %v4569
  %v4571 = vpop.f32.mrb[0].mxu0
  %4572 = vmatprep.mubr.f32.mxu0 0.0
  %4573 = vmatmul.mubr.f32.gmra.mrb[0].mxu0 %v3949
  %v4574 = vpop.f32.mrb[0].mxu0
  %v4575 = vadd.f32 %v4036, %v4574
  %v4576 = vpop.f32.mrb[0].mxu0
  %4577 = vmatprep.mubr.f32.mxu0 0.0
  %4578 = vmatmul.mubr.f32.gmra.mrb[0].mxu0 %v3950
  %v4579 = vpop.f32.mrb[0].mxu0
  %v4580 = vadd.f32 %v4036, %v4579
  %v4581 = vpop.f32.mrb[0].mxu0
  %4582 = vmatprep.mubr.f32.mxu0 0.0
  %4583 = vmatmul.mubr.f32.gmra.mrb[0].mxu0 %v3951
  %v4584 = vpop.f32.mrb[0].mxu0
  %v4585 = vadd.f32 %v4036, %v4584
  %v4586 = vpop.f32.mrb[0].mxu0
  %4587 = vmatprep.mubr.f32.mxu0 0.0
  %4588 = vmatmul.mubr.f32.gmra.mrb[0].mxu0 %v3952
  %v4589 = vpop.f32.mrb[0].mxu0
  %v4590 = vadd.f32 %v4036, %v4589
  %v4591 = vpop.f32.mrb[0].mxu0
  %4592 = vmatprep.mubr.f32.mxu0 0.0
  %4593 = vmatmul.mubr.f32.gmra.mrb[0].mxu0 %v3953
  %v4594 = vpop.f32.mrb[0].mxu0
  %v4595 = vadd.f32 %v4036, %v4594
  %v4596 = vpop.f32.mrb[0].mxu0
  %4597 = vmatprep.mubr.f32.mxu0 0.0
  %4598 = vmatmul.mubr.f32.gmra.mrb[0].mxu0 %v3954
  %v4599 = vpop.f32.mrb[0].mxu0
  %v4600 = vadd.f32 %v4036, %v4599
  %v4601 = vpop.f32.mrb[0].mxu0
  %4602 = vmatprep.mubr.f32.mxu0 0.0
  %4603 = vmatmul.mubr.f32.gmra.mrb[0].mxu0 %v3955
  %v4604 = vpop.f32.mrb[0].mxu0
  %v4605 = vadd.f32 %v4036, %v4604
  %v4606 = vpop.f32.mrb[0].mxu0
  %4607 = vmatprep.mubr.f32.mxu0 0.0
  %4608 = vmatmul.mubr.f32.gmra.mrb[0].mxu0 %v3956
  %v4609 = vpop.f32.mrb[0].mxu0
  %v4610 = vadd.f32 %v4036, %v4609
  %v4611 = vpop.f32.mrb[0].mxu0
  %4612 = vmatprep.mubr.f32.mxu0 0.0
  %4613 = vmatmul.mubr.f32.gmra.mrb[0].mxu0 %v3957
  %v4614 = vpop.f32.mrb[0].mxu0
  %v4615 = vadd.f32 %v4036, %v4614
  %v4616 = vpop.f32.mrb[0].mxu0
  %4617 = vmatprep.mubr.f32.mxu0 0.0
  %4618 = vmatmul.mubr.f32.gmra.mrb[0].mxu0 %v3958
  %v4619 = vpop.f32.mrb[0].mxu0
  %v4620 = vadd.f32 %v4036, %v4619
  %v4621 = vpop.f32.mrb[0].mxu0
  %4622 = vmatprep.mubr.f32.mxu0 0.0
  %4623 = vmatmul.mubr.f32.gmra.mrb[0].mxu0 %v3959
  %v4624 = vpop.f32.mrb[0].mxu0
  %v4625 = vadd.f32 %v4036, %v4624
  %v4626 = vpop.f32.mrb[0].mxu0
  %4627 = vmatprep.mubr.f32.mxu0 0.0
  %4628 = vmatmul.mubr.f32.gmra.mrb[0].mxu0 %v3960
  %v4629 = vpop.f32.mrb[0].mxu0
  %v4630 = vadd.f32 %v4036, %v4629
  %v4631 = vpop.f32.mrb[0].mxu0
  %4632 = vmatprep.mubr.f32.mxu0 0.0
  %4633 = vmatmul.mubr.f32.gmra.mrb[0].mxu0 %v3961
  %v4634 = vpop.f32.mrb[0].mxu0
  %v4635 = vadd.f32 %v4036, %v4634
  %v4636 = vpop.f32.mrb[0].mxu0
  %4637 = vmatprep.mubr.f32.mxu0 0.0
  %4638 = vmatmul.mubr.f32.gmra.mrb[0].mxu0 %v3962
  %v4639 = vpop.f32.mrb[0].mxu0
  %v4640 = vadd.f32 %v4036, %v4639
  %v4641 = vpop.f32.mrb[0].mxu0
  %4642 = vmatprep.mubr.f32.mxu0 0.0
  %4643 = vmatmul.mubr.f32.gmra.mrb[0].mxu0 %v3963
  %v4644 = vpop.f32.mrb[0].mxu0
  %v4645 = vadd.f32 %v4036, %v4644
  %v4646 = vpop.f32.mrb[0].mxu0
  %4647 = vmatprep.mubr.f32.mxu0 0.0
  %4648 = vmatmul.mubr.f32.gmra.mrb[0].mxu0 %v3964
  %v4649 = vpop.f32.mrb[0].mxu0
  %v4650 = vadd.f32 %v4036, %v4649
  %v4651 = vpop.f32.mrb[0].mxu0
  %4652 = vmatprep.mubr.f32.mxu0 0.0
  %4653 = vmatmul.mubr.f32.gmra.mrb[0].mxu0 %v3965
  %v4654 = vpop.f32.mrb[0].mxu0
  %v4655 = vadd.f32 %v4036, %v4654
  %v4656 = vpop.f32.mrb[0].mxu0
  %4657 = vmatprep.mubr.f32.mxu0 0.0
  %4658 = vmatmul.mubr.f32.gmra.mrb[0].mxu0 %v3966
  %v4659 = vpop.f32.mrb[0].mxu0
  %v4660 = vadd.f32 %v4036, %v4659
  %v4661 = vpop.f32.mrb[0].mxu0
  %4662 = vmatprep.mubr.f32.mxu0 0.0
  %4663 = vmatmul.mubr.f32.gmra.mrb[0].mxu0 %v3967
  %v4664 = vpop.f32.mrb[0].mxu0
  %v4665 = vadd.f32 %v4036, %v4664
  %v4666 = vpop.f32.mrb[0].mxu0
  %4667 = vmatprep.mubr.f32.mxu0 0.0
  %4668 = vmatmul.mubr.f32.gmra.mrb[0].mxu0 %v3968
  %v4669 = vpop.f32.mrb[0].mxu0
  %v4670 = vadd.f32 %v4036, %v4669
  %v4671 = vpop.f32.mrb[0].mxu0
  %4672 = vmatprep.mubr.f32.mxu0 0.0
  %4673 = vmatmul.mubr.f32.gmra.mrb[0].mxu0 %v3969
  %v4674 = vpop.f32.mrb[0].mxu0
  %v4675 = vadd.f32 %v4036, %v4674
  %v4676 = vpop.f32.mrb[0].mxu0
  %4677 = vmatprep.mubr.f32.mxu0 0.0
  %4678 = vmatmul.mubr.f32.gmra.mrb[0].mxu0 %v3970
  %v4679 = vpop.f32.mrb[0].mxu0
  %v4680 = vadd.f32 %v4036, %v4679
  %v4681 = vpop.f32.mrb[0].mxu0
  %4682 = vmatprep.mubr.f32.mxu0 0.0
  %4683 = vmatmul.mubr.f32.gmra.mrb[0].mxu0 %v3971
  %v4684 = vpop.f32.mrb[0].mxu0
  %v4685 = vadd.f32 %v4036, %v4684
  %v4686 = vpop.f32.mrb[0].mxu0
  %4687 = vmatprep.mubr.f32.mxu0 0.0
  %4688 = vmatmul.mubr.f32.gmra.mrb[0].mxu0 %v3972
  %v4689 = vpop.f32.mrb[0].mxu0
  %v4690 = vadd.f32 %v4036, %v4689
  %v4691 = vpop.f32.mrb[0].mxu0
  %4692 = vmatprep.mubr.f32.mxu0 0.0
  %4693 = vmatmul.mubr.f32.gmra.mrb[0].mxu0 %v3973
  %v4694 = vpop.f32.mrb[0].mxu0
  %v4695 = vadd.f32 %v4036, %v4694
  %v4696 = vpop.f32.mrb[0].mxu0
  %4697 = vmatprep.mubr.f32.mxu0 0.0
  %4698 = vmatmul.mubr.f32.gmra.mrb[0].mxu0 %v3974
  %v4699 = vpop.f32.mrb[0].mxu0
  %v4700 = vadd.f32 %v4036, %v4699
  %v4701 = vpop.f32.mrb[0].mxu0
  %4702 = vmatprep.mubr.f32.mxu0 0.0
  %4703 = vmatmul.mubr.f32.gmra.mrb[0].mxu0 %v3975
  %v4704 = vpop.f32.mrb[0].mxu0
  %v4705 = vadd.f32 %v4036, %v4704
  %v4706 = vpop.f32.mrb[0].mxu0
  %4707 = vmatprep.mubr.f32.mxu0 0.0
  %4708 = vmatmul.mubr.f32.gmra.mrb[0].mxu0 %v3976
  %v4709 = vpop.f32.mrb[0].mxu0
  %v4710 = vadd.f32 %v4036, %v4709
  %v4711 = vpop.f32.mrb[0].mxu0
  %4712 = vmatprep.mubr.f32.mxu0 0.0
  %4713 = vmatmul.mubr.f32.gmra.mrb[0].mxu0 %v3977
  %v4714 = vpop.f32.mrb[0].mxu0
  %v4715 = vadd.f32 %v4036, %v4714
  %v4716 = vpop.f32.mrb[0].mxu0
  %4717 = vmatprep.mubr.f32.mxu0 0.0
  %4718 = vmatmul.mubr.f32.gmra.mrb[0].mxu0 %v3978
  %v4719 = vpop.f32.mrb[0].mxu0
  %v4720 = vadd.f32 %v4036, %v4719
  %v4721 = vpop.f32.mrb[0].mxu0
  %4722 = vmatprep.mubr.f32.mxu0 0.0
  %4723 = vmatmul.mubr.f32.gmra.mrb[0].mxu0 %v3979
  %v4724 = vpop.f32.mrb[0].mxu0
  %v4725 = vadd.f32 %v4036, %v4724
  %v4726 = vpop.f32.mrb[0].mxu0
  %4727 = vmatprep.mubr.f32.mxu0 0.0
  %4728 = vmatmul.mubr.f32.gmra.mrb[0].mxu0 %v3980
  %v4729 = vpop.f32.mrb[0].mxu0
  %v4730 = vadd.f32 %v4036, %v4729
  %v4731 = vpop.f32.mrb[0].mxu0
  %4732 = vmatprep.mubr.f32.mxu0 0.0
  %4733 = vmatmul.mubr.f32.gmra.mrb[0].mxu0 %v3981
  %v4734 = vpop.f32.mrb[0].mxu0
  %v4735 = vadd.f32 %v4036, %v4734
  %v4736 = vpop.f32.mrb[0].mxu0
  %4737 = vmatprep.mubr.f32.mxu0 0.0
  %4738 = vmatmul.mubr.f32.gmra.mrb[0].mxu0 %v3982
  %v4739 = vpop.f32.mrb[0].mxu0
  %v4740 = vadd.f32 %v4036, %v4739
  %v4741 = vpop.f32.mrb[0].mxu0
  %4742 = vmatprep.mubr.f32.mxu0 0.0
  %4743 = vmatmul.mubr.f32.gmra.mrb[0].mxu0 %v3983
  %v4744 = vpop.f32.mrb[0].mxu0
  %v4745 = vadd.f32 %v4036, %v4744
  %v4746 = vpop.f32.mrb[0].mxu0
  %4747 = vmatprep.mubr.f32.mxu0 0.0
  %4748 = vmatmul.mubr.f32.gmra.mrb[0].mxu0 %v3984
  %v4749 = vpop.f32.mrb[0].mxu0
  %v4750 = vadd.f32 %v4036, %v4749
  %v4751 = vpop.f32.mrb[0].mxu0
  %4752 = vmatprep.mubr.f32.mxu0 0.0
  %4753 = vmatmul.mubr.f32.gmra.mrb[0].mxu0 %v3985
  %v4754 = vpop.f32.mrb[0].mxu0
  %v4755 = vadd.f32 %v4036, %v4754
  %v4756 = vpop.f32.mrb[0].mxu0
  %4757 = vmatprep.mubr.f32.mxu0 0.0
  %4758 = vmatmul.mubr.f32.gmra.mrb[0].mxu0 %v3986
  %v4759 = vpop.f32.mrb[0].mxu0
  %v4760 = vadd.f32 %v4036, %v4759
  %v4761 = vpop.f32.mrb[0].mxu0
  %4762 = vmatprep.mubr.f32.mxu0 0.0
  %4763 = vmatmul.mubr.f32.gmra.mrb[0].mxu0 %v3987
  %v4764 = vpop.f32.mrb[0].mxu0
  %v4765 = vadd.f32 %v4036, %v4764
  %v4766 = vpop.f32.mrb[0].mxu0
  %4767 = vmatprep.mubr.f32.mxu0 0.0
  %4768 = vmatmul.mubr.f32.gmra.mrb[0].mxu0 %v3988
  %v4769 = vpop.f32.mrb[0].mxu0
  %v4770 = vadd.f32 %v4036, %v4769
  %v4771 = vpop.f32.mrb[0].mxu0
  %4772 = vmatprep.mubr.f32.mxu0 0.0
  %4773 = vmatmul.mubr.f32.gmra.mrb[0].mxu0 %v3989
  %v4774 = vpop.f32.mrb[0].mxu0
  %v4775 = vadd.f32 %v4036, %v4774
  %v4776 = vpop.f32.mrb[0].mxu0
  %4777 = vmatprep.mubr.f32.mxu0 0.0
  %4778 = vmatmul.mubr.f32.gmra.mrb[0].mxu0 %v3990
  %v4779 = vpop.f32.mrb[0].mxu0
  %v4780 = vadd.f32 %v4036, %v4779
  %v4781 = vpop.f32.mrb[0].mxu0
  %4782 = vmatprep.mubr.f32.mxu0 0.0
  %4783 = vmatmul.mubr.f32.gmra.mrb[0].mxu0 %v3991
  %v4784 = vpop.f32.mrb[0].mxu0
  %v4785 = vadd.f32 %v4036, %v4784
  %v4786 = vpop.f32.mrb[0].mxu0
  %4787 = vmatprep.mubr.f32.mxu0 0.0
  %4788 = vmatmul.mubr.f32.gmra.mrb[0].mxu0 %v3992
  %v4789 = vpop.f32.mrb[0].mxu0
  %v4790 = vadd.f32 %v4036, %v4789
  %v4791 = vpop.f32.mrb[0].mxu0
  %4792 = vmatprep.mubr.f32.mxu0 0.0
  %4793 = vmatmul.mubr.f32.gmra.mrb[0].mxu0 %v3993
  %v4794 = vpop.f32.mrb[0].mxu0
  %v4795 = vadd.f32 %v4036, %v4794
  %v4796 = vpop.f32.mrb[0].mxu0
  %4797 = vmatprep.mubr.f32.mxu0 0.0
  %4798 = vmatmul.mubr.f32.gmra.mrb[0].mxu0 %v3994
  %v4799 = vpop.f32.mrb[0].mxu0
  %v4800 = vadd.f32 %v4036, %v4799
  %v4801 = vpop.f32.mrb[0].mxu0
  %4802 = vmatprep.mubr.f32.mxu0 0.0
  %4803 = vmatmul.mubr.f32.gmra.mrb[0].mxu0 %v3995
  %v4804 = vpop.f32.mrb[0].mxu0
  %v4805 = vadd.f32 %v4036, %v4804
  %v4806 = vpop.f32.mrb[0].mxu0
  %4807 = vmatprep.mubr.f32.mxu0 0.0
  %4808 = vmatmul.mubr.f32.gmra.mrb[0].mxu0 %v3996
  %v4809 = vpop.f32.mrb[0].mxu0
  %v4810 = vadd.f32 %v4036, %v4809
  %v4811 = vpop.f32.mrb[0].mxu0
  %4812 = vmatprep.mubr.f32.mxu0 0.0
  %4813 = vmatmul.mubr.f32.gmra.mrb[0].mxu0 %v3997
  %v4814 = vpop.f32.mrb[0].mxu0
  %v4815 = vadd.f32 %v4036, %v4814
  %v4816 = vpop.f32.mrb[0].mxu0
  %4817 = vmatprep.mubr.f32.mxu0 0.0
  %4818 = vmatmul.mubr.f32.gmra.mrb[0].mxu0 %v3998
  %v4819 = vpop.f32.mrb[0].mxu0
  %v4820 = vadd.f32 %v4036, %v4819
  %v4821 = vpop.f32.mrb[0].mxu0
  %4822 = vmatprep.mubr.f32.mxu0 0.0
  %4823 = vmatmul.mubr.f32.gmra.mrb[0].mxu0 %v3999
  %v4824 = vpop.f32.mrb[0].mxu0
  %v4825 = vadd.f32 %v4036, %v4824
  %v4826 = vpop.f32.mrb[0].mxu0
  %4827 = vmatprep.mubr.f32.mxu0 0.0
  %4828 = vmatmul.mubr.f32.gmra.mrb[0].mxu0 %v4000
  %v4829 = vpop.f32.mrb[0].mxu0
  %v4830 = vadd.f32 %v4036, %v4829
  %v4831 = vpop.f32.mrb[0].mxu0
  %4832 = vmatprep.mubr.f32.mxu0 0.0
  %4833 = vmatmul.mubr.f32.gmra.mrb[0].mxu0 %v4001
  %v4834 = vpop.f32.mrb[0].mxu0
  %v4835 = vadd.f32 %v4036, %v4834
  %v4836 = vpop.f32.mrb[0].mxu0
  %4837 = vmatprep.mubr.f32.mxu0 0.0
  %4838 = vmatmul.mubr.f32.gmra.mrb[0].mxu0 %v4002
  %v4839 = vpop.f32.mrb[0].mxu0
  %v4840 = vadd.f32 %v4036, %v4839
  %v4841 = vpop.f32.mrb[0].mxu0
  %4842 = vmatprep.mubr.f32.mxu0 0.0
  %4843 = vmatmul.mubr.f32.gmra.mrb[0].mxu0 %v4003
  %v4844 = vpop.f32.mrb[0].mxu0
  %v4845 = vadd.f32 %v4036, %v4844
  %v4846 = vpop.f32.mrb[0].mxu0
  %4847 = vmatprep.mubr.f32.mxu0 0.0
  %4848 = vmatmul.mubr.f32.gmra.mrb[0].mxu0 %v4004
  %v4849 = vpop.f32.mrb[0].mxu0
  %v4850 = vadd.f32 %v4036, %v4849
  %v4851 = vpop.f32.mrb[0].mxu0
  %4852 = vmatprep.mubr.f32.mxu0 0.0
  %4853 = vmatmul.mubr.f32.gmra.mrb[0].mxu0 %v4005
  %v4854 = vpop.f32.mrb[0].mxu0
  %v4855 = vadd.f32 %v4036, %v4854
  %v4856 = vpop.f32.mrb[0].mxu0
  %4857 = vmatprep.mubr.f32.mxu0 0.0
  %4858 = vmatmul.mubr.f32.gmra.mrb[0].mxu0 %v4006
  %v4859 = vpop.f32.mrb[0].mxu0
  %v4860 = vadd.f32 %v4036, %v4859
  %v4861 = vpop.f32.mrb[0].mxu0
  %4862 = vmatprep.mubr.f32.mxu0 0.0
  %4863 = vmatmul.mubr.f32.gmra.mrb[0].mxu0 %v4007
  %v4864 = vpop.f32.mrb[0].mxu0
  %v4865 = vadd.f32 %v4036, %v4864
  %v4866 = vpop.f32.mrb[0].mxu0
  %4867 = vmatprep.mubr.f32.mxu0 0.0
  %4868 = vmatmul.mubr.f32.gmra.mrb[0].mxu0 %v4008
  %v4869 = vpop.f32.mrb[0].mxu0
  %v4870 = vadd.f32 %v4036, %v4869
  %v4871 = vpop.f32.mrb[0].mxu0
  %4872 = vmatprep.mubr.f32.mxu0 0.0
  %4873 = vmatmul.mubr.f32.gmra.mrb[0].mxu0 %v4009
  %v4874 = vpop.f32.mrb[0].mxu0
  %v4875 = vadd.f32 %v4036, %v4874
  %v4876 = vpop.f32.mrb[0].mxu0
  %4877 = vmatprep.mubr.f32.mxu0 0.0
  %4878 = vmatmul.mubr.f32.gmra.mrb[0].mxu0 %v4010
  %v4879 = vpop.f32.mrb[0].mxu0
  %v4880 = vadd.f32 %v4036, %v4879
  %v4881 = vpop.f32.mrb[0].mxu0
  %4882 = vmatprep.mubr.f32.mxu0 0.0
  %4883 = vmatmul.mubr.f32.gmra.mrb[0].mxu0 %v4011
  %v4884 = vpop.f32.mrb[0].mxu0
  %v4885 = vadd.f32 %v4036, %v4884
  %v4886 = vpop.f32.mrb[0].mxu0
  %4887 = vmatprep.mubr.f32.mxu0 0.0
  %4888 = vmatmul.mubr.f32.gmra.mrb[0].mxu0 %v4012
  %v4889 = vpop.f32.mrb[0].mxu0
  %v4890 = vadd.f32 %v4036, %v4889
  %v4891 = vpop.f32.mrb[0].mxu0
  %4892 = vmatprep.mubr.f32.mxu0 0.0
  %4893 = vmatmul.mubr.f32.gmra.mrb[0].mxu0 %v4013
  %v4894 = vpop.f32.mrb[0].mxu0
  %v4895 = vadd.f32 %v4036, %v4894
  %v4896 = vpop.f32.mrb[0].mxu0
  %4897 = vmatprep.mubr.f32.mxu0 0.0
  %4898 = vmatmul.mubr.f32.gmra.mrb[0].mxu0 %v4014
  %v4899 = vpop.f32.mrb[0].mxu0
  %v4900 = vadd.f32 %v4036, %v4899
  %v4901 = vpop.f32.mrb[0].mxu0
  %4902 = vdwg.mxu0
  %v4903 = vmax.f32 %v4105, 0.0
  %v4904 = vmax.f32 %v4110, 0.0
  %v4905 = vmax.f32 %v4115, 0.0
  %v4906 = vmax.f32 %v4120, 0.0
  %v4907 = vmax.f32 %v4125, 0.0
  %v4908 = vmax.f32 %v4130, 0.0
  %v4909 = vmax.f32 %v4135, 0.0
  %v4910 = vmax.f32 %v4140, 0.0
  %v4911 = vmax.f32 %v4145, 0.0
  %v4912 = vmax.f32 %v4150, 0.0
  %v4913 = vmax.f32 %v4155, 0.0
  %v4914 = vmax.f32 %v4160, 0.0
  %v4915 = vmax.f32 %v4165, 0.0
  %v4916 = vmax.f32 %v4170, 0.0
  %v4917 = vmax.f32 %v4175, 0.0
  %v4918 = vmax.f32 %v4180, 0.0
  %v4919 = vmax.f32 %v4185, 0.0
  %v4920 = vmax.f32 %v4190, 0.0
  %v4921 = vmax.f32 %v4195, 0.0
  %v4922 = vmax.f32 %v4200, 0.0
  %v4923 = vmax.f32 %v4205, 0.0
  %v4924 = vmax.f32 %v4210, 0.0
  %v4925 = vmax.f32 %v4215, 0.0
  %v4926 = vmax.f32 %v4220, 0.0
  %v4927 = vmax.f32 %v4225, 0.0
  %v4928 = vmax.f32 %v4230, 0.0
  %v4929 = vmax.f32 %v4235, 0.0
  %v4930 = vmax.f32 %v4240, 0.0
  %v4931 = vmax.f32 %v4245, 0.0
  %v4932 = vmax.f32 %v4250, 0.0
  %v4933 = vmax.f32 %v4255, 0.0
  %v4934 = vmax.f32 %v4260, 0.0
  %v4935 = vmax.f32 %v4265, 0.0
  %v4936 = vmax.f32 %v4270, 0.0
  %v4937 = vmax.f32 %v4275, 0.0
  %v4938 = vmax.f32 %v4280, 0.0
  %v4939 = vmax.f32 %v4285, 0.0
  %v4940 = vmax.f32 %v4290, 0.0
  %v4941 = vmax.f32 %v4295, 0.0
  %v4942 = vmax.f32 %v4300, 0.0
  %v4943 = vmax.f32 %v4305, 0.0
  %v4944 = vmax.f32 %v4310, 0.0
  %v4945 = vmax.f32 %v4315, 0.0
  %v4946 = vmax.f32 %v4320, 0.0
  %v4947 = vmax.f32 %v4325, 0.0
  %v4948 = vmax.f32 %v4330, 0.0
  %v4949 = vmax.f32 %v4335, 0.0
  %v4950 = vmax.f32 %v4340, 0.0
  %v4951 = vmax.f32 %v4345, 0.0
  %v4952 = vmax.f32 %v4350, 0.0
  %v4953 = vmax.f32 %v4355, 0.0
  %v4954 = vmax.f32 %v4360, 0.0
  %v4955 = vmax.f32 %v4365, 0.0
  %v4956 = vmax.f32 %v4370, 0.0
  %v4957 = vmax.f32 %v4375, 0.0
  %v4958 = vmax.f32 %v4380, 0.0
  %v4959 = vmax.f32 %v4385, 0.0
  %v4960 = vmax.f32 %v4390, 0.0
  %v4961 = vmax.f32 %v4395, 0.0
  %v4962 = vmax.f32 %v4400, 0.0
  %v4963 = vmax.f32 %v4405, 0.0
  %v4964 = vmax.f32 %v4410, 0.0
  %v4965 = vmax.f32 %v4415, 0.0
  %v4966 = vmax.f32 %v4420, 0.0
  %v4967 = vmax.f32 %v4425, 0.0
  %v4968 = vmax.f32 %v4430, 0.0
  %v4969 = vmax.f32 %v4435, 0.0
  %v4970 = vmax.f32 %v4440, 0.0
  %v4971 = vmax.f32 %v4445, 0.0
  %v4972 = vmax.f32 %v4450, 0.0
  %v4973 = vmax.f32 %v4455, 0.0
  %v4974 = vmax.f32 %v4460, 0.0
  %v4975 = vmax.f32 %v4465, 0.0
  %v4976 = vmax.f32 %v4470, 0.0
  %v4977 = vmax.f32 %v4475, 0.0
  %v4978 = vmax.f32 %v4480, 0.0
  %v4979 = vmax.f32 %v4485, 0.0
  %v4980 = vmax.f32 %v4490, 0.0
  %v4981 = vmax.f32 %v4495, 0.0
  %v4982 = vmax.f32 %v4500, 0.0
  %v4983 = vmax.f32 %v4505, 0.0
  %v4984 = vmax.f32 %v4510, 0.0
  %v4985 = vmax.f32 %v4515, 0.0
  %v4986 = vmax.f32 %v4520, 0.0
  %v4987 = vmax.f32 %v4525, 0.0
  %v4988 = vmax.f32 %v4530, 0.0
  %v4989 = vmax.f32 %v4535, 0.0
  %v4990 = vmax.f32 %v4540, 0.0
  %v4991 = vmax.f32 %v4545, 0.0
  %v4992 = vmax.f32 %v4550, 0.0
  %v4993 = vmax.f32 %v4555, 0.0
  %v4994 = vmax.f32 %v4560, 0.0
  %v4995 = vmax.f32 %v4565, 0.0
  %v4996 = vmax.f32 %v4570, 0.0
  %v4997 = vmax.f32 %v4575, 0.0
  %v4998 = vmax.f32 %v4580, 0.0
  %v4999 = vmax.f32 %v4585, 0.0
  %v5000 = vmax.f32 %v4590, 0.0
  %v5001 = vmax.f32 %v4595, 0.0
  %v5002 = vmax.f32 %v4600, 0.0
  %v5003 = vmax.f32 %v4605, 0.0
  %v5004 = vmax.f32 %v4610, 0.0
  %v5005 = vmax.f32 %v4615, 0.0
  %v5006 = vmax.f32 %v4620, 0.0
  %v5007 = vmax.f32 %v4625, 0.0
  %v5008 = vmax.f32 %v4630, 0.0
  %v5009 = vmax.f32 %v4635, 0.0
  %v5010 = vmax.f32 %v4640, 0.0
  %v5011 = vmax.f32 %v4645, 0.0
  %v5012 = vmax.f32 %v4650, 0.0
  %v5013 = vmax.f32 %v4655, 0.0
  %v5014 = vmax.f32 %v4660, 0.0
  %v5015 = vmax.f32 %v4665, 0.0
  %v5016 = vmax.f32 %v4670, 0.0
  %v5017 = vmax.f32 %v4675, 0.0
  %v5018 = vmax.f32 %v4680, 0.0
  %v5019 = vmax.f32 %v4685, 0.0
  %v5020 = vmax.f32 %v4690, 0.0
  %v5021 = vmax.f32 %v4695, 0.0
  %v5022 = vmax.f32 %v4700, 0.0
  %v5023 = vmax.f32 %v4705, 0.0
  %v5024 = vmax.f32 %v4710, 0.0
  %v5025 = vmax.f32 %v4715, 0.0
  %v5026 = vmax.f32 %v4720, 0.0
  %v5027 = vmax.f32 %v4725, 0.0
  %v5028 = vmax.f32 %v4730, 0.0
  %v5029 = vmax.f32 %v4735, 0.0
  %v5030 = vmax.f32 %v4740, 0.0
  %v5031 = vmax.f32 %v4745, 0.0
  %v5032 = vmax.f32 %v4750, 0.0
  %v5033 = vmax.f32 %v4755, 0.0
  %v5034 = vmax.f32 %v4760, 0.0
  %v5035 = vmax.f32 %v4765, 0.0
  %v5036 = vmax.f32 %v4770, 0.0
  %v5037 = vmax.f32 %v4775, 0.0
  %v5038 = vmax.f32 %v4780, 0.0
  %v5039 = vmax.f32 %v4785, 0.0
  %v5040 = vmax.f32 %v4790, 0.0
  %v5041 = vmax.f32 %v4795, 0.0
  %v5042 = vmax.f32 %v4800, 0.0
  %v5043 = vmax.f32 %v4805, 0.0
  %v5044 = vmax.f32 %v4810, 0.0
  %v5045 = vmax.f32 %v4815, 0.0
  %v5046 = vmax.f32 %v4820, 0.0
  %v5047 = vmax.f32 %v4825, 0.0
  %v5048 = vmax.f32 %v4830, 0.0
  %v5049 = vmax.f32 %v4835, 0.0
  %v5050 = vmax.f32 %v4840, 0.0
  %v5051 = vmax.f32 %v4845, 0.0
  %v5052 = vmax.f32 %v4850, 0.0
  %v5053 = vmax.f32 %v4855, 0.0
  %v5054 = vmax.f32 %v4860, 0.0
  %v5055 = vmax.f32 %v4865, 0.0
  %v5056 = vmax.f32 %v4870, 0.0
  %v5057 = vmax.f32 %v4875, 0.0
  %v5058 = vmax.f32 %v4880, 0.0
  %v5059 = vmax.f32 %v4885, 0.0
  %v5060 = vmax.f32 %v4890, 0.0
  %v5061 = vmax.f32 %v4895, 0.0
  %v5062 = vmax.f32 %v4900, 0.0
  %v5063 = vld [vmem:[%s9] sm:$0xff]
  %v5064 = vld [vmem:[%s9 + $0x8] sm:$0xff]
  %v5065 = vld [vmem:[%s9 + $0x10] sm:$0xff]
  %v5066 = vld [vmem:[%s9 + $0x18] sm:$0xff]
  %v5067 = vld [vmem:[%s9 + $0x20] sm:$0xff]
  %v5068 = vld [vmem:[%s9 + $0x28] sm:$0xff]
  %v5069 = vld [vmem:[%s9 + $0x30] sm:$0xff]
  %v5070 = vld [vmem:[%s9 + $0x38] sm:$0xff]
  %v5071 = vld [vmem:[%s9 + $0x40] sm:$0xff]
  %v5072 = vld [vmem:[%s9 + $0x48] sm:$0xff]
  %v5073 = vld [vmem:[%s9 + $0x50] sm:$0xff]
  %v5074 = vld [vmem:[%s9 + $0x58] sm:$0xff]
  %v5075 = vld [vmem:[%s9 + $0x60] sm:$0xff]
  %v5076 = vld [vmem:[%s9 + $0x68] sm:$0xff]
  %v5077 = vld [vmem:[%s9 + $0x70] sm:$0xff]
  %v5078 = vld [vmem:[%s9 + $0x78] sm:$0xff]
  %v5079 = vld [vmem:[%s10] sm:$0x1]
  %v5081 = vlaneseq
  %v5082 = vshrl.u32 %v5081, 7
  %v5083 = vsub.s32 0, %v5082
  %v5084 = vrot.slane %v5079, %v5083
  %5086 = vmatprep.subr.mxu0 0.0
  %5087 = vmatpush1.msra.mxu0 %v5063
  %5088 = vmatprep.subr.mxu0 0.0
  %5089 = vmatpush1.msra.mxu0 %v5064
  %5090 = vmatprep.subr.mxu0 0.0
  %5091 = vmatpush1.msra.mxu0 %v5065
  %5092 = vmatprep.subr.mxu0 0.0
  %5093 = vmatpush1.msra.mxu0 %v5066
  %5094 = vmatprep.subr.mxu0 0.0
  %5095 = vmatpush1.msra.mxu0 %v5067
  %5096 = vmatprep.subr.mxu0 0.0
  %5097 = vmatpush1.msra.mxu0 %v5068
  %5098 = vmatprep.subr.mxu0 0.0
  %5099 = vmatpush1.msra.mxu0 %v5069
  %5100 = vmatprep.subr.mxu0 0.0
  %5101 = vmatpush1.msra.mxu0 %v5070
  %5102 = vmatprep.subr.mxu0 0.0
  %5103 = vmatpush1.msra.mxu0 %v5071
  %5104 = vmatprep.subr.mxu0 0.0
  %5105 = vmatpush1.msra.mxu0 %v5072
  %5106 = vmatprep.subr.mxu0 0.0
  %5107 = vmatpush1.msra.mxu0 %v5073
  %5108 = vmatprep.subr.mxu0 0.0
  %5109 = vmatpush1.msra.mxu0 %v5074
  %5110 = vmatprep.subr.mxu0 0.0
  %5111 = vmatpush1.msra.mxu0 %v5075
  %5112 = vmatprep.subr.mxu0 0.0
  %5113 = vmatpush1.msra.mxu0 %v5076
  %5114 = vmatprep.subr.mxu0 0.0
  %5115 = vmatpush1.msra.mxu0 %v5077
  %5116 = vmatprep.subr.mxu0 0.0
  %5117 = vmatpush1.msra.mxu0 %v5078
  %5118 = vmatprep.subr.mxu0 0.0
  %5119 = vmatpush1.msra.mxu0 0.0
  %5120 = vmatprep.subr.mxu0 0.0
  %5121 = vmatpush1.msra.mxu0 0.0
  %5122 = vmatprep.subr.mxu0 0.0
  %5123 = vmatpush1.msra.mxu0 0.0
  %5124 = vmatprep.subr.mxu0 0.0
  %5125 = vmatpush1.msra.mxu0 0.0
  %5126 = vmatprep.subr.mxu0 0.0
  %5127 = vmatpush1.msra.mxu0 0.0
  %5128 = vmatprep.subr.mxu0 0.0
  %5129 = vmatpush1.msra.mxu0 0.0
  %5130 = vmatprep.subr.mxu0 0.0
  %5131 = vmatpush1.msra.mxu0 0.0
  %5132 = vmatprep.subr.mxu0 0.0
  %5133 = vmatpush1.msra.mxu0 0.0
  %5134 = vmatprep.subr.mxu0 0.0
  %5135 = vmatpush1.msra.mxu0 0.0
  %5136 = vmatprep.subr.mxu0 0.0
  %5137 = vmatpush1.msra.mxu0 0.0
  %5138 = vmatprep.subr.mxu0 0.0
  %5139 = vmatpush1.msra.mxu0 0.0
  %5140 = vmatprep.subr.mxu0 0.0
  %5141 = vmatpush1.msra.mxu0 0.0
  %5142 = vmatprep.subr.mxu0 0.0
  %5143 = vmatpush1.msra.mxu0 0.0
  %5144 = vmatprep.subr.mxu0 0.0
  %5145 = vmatpush1.msra.mxu0 0.0
  %5146 = vmatprep.subr.mxu0 0.0
  %5147 = vmatpush1.msra.mxu0 0.0
  %5148 = vmatprep.subr.mxu0 0.0
  %5149 = vmatpush1.msra.mxu0 0.0
  %5150 = vmatprep.mubr.f32.mxu0 0.0
  %5151 = vmatmul.mubr.f32.gmra.mrb[0].mxu0 %v4903
  %v5152 = vpop.f32.mrb[0].mxu0
  %v5153 = vadd.f32 %v5084, %v5152
  %v5154 = vpop.f32.mrb[0].mxu0
  %5155 = vmatprep.mubr.f32.mxu0 0.0
  %5156 = vmatmul.mubr.f32.gmra.mrb[0].mxu0 %v4904
  %v5157 = vpop.f32.mrb[0].mxu0
  %v5158 = vadd.f32 %v5084, %v5157
  %v5159 = vpop.f32.mrb[0].mxu0
  %5160 = vmatprep.mubr.f32.mxu0 0.0
  %5161 = vmatmul.mubr.f32.gmra.mrb[0].mxu0 %v4905
  %v5162 = vpop.f32.mrb[0].mxu0
  %v5163 = vadd.f32 %v5084, %v5162
  %v5164 = vpop.f32.mrb[0].mxu0
  %5165 = vmatprep.mubr.f32.mxu0 0.0
  %5166 = vmatmul.mubr.f32.gmra.mrb[0].mxu0 %v4906
  %v5167 = vpop.f32.mrb[0].mxu0
  %v5168 = vadd.f32 %v5084, %v5167
  %v5169 = vpop.f32.mrb[0].mxu0
  %5170 = vmatprep.mubr.f32.mxu0 0.0
  %5171 = vmatmul.mubr.f32.gmra.mrb[0].mxu0 %v4907
  %v5172 = vpop.f32.mrb[0].mxu0
  %v5173 = vadd.f32 %v5084, %v5172
  %v5174 = vpop.f32.mrb[0].mxu0
  %5175 = vmatprep.mubr.f32.mxu0 0.0
  %5176 = vmatmul.mubr.f32.gmra.mrb[0].mxu0 %v4908
  %v5177 = vpop.f32.mrb[0].mxu0
  %v5178 = vadd.f32 %v5084, %v5177
  %v5179 = vpop.f32.mrb[0].mxu0
  %5180 = vmatprep.mubr.f32.mxu0 0.0
  %5181 = vmatmul.mubr.f32.gmra.mrb[0].mxu0 %v4909
  %v5182 = vpop.f32.mrb[0].mxu0
  %v5183 = vadd.f32 %v5084, %v5182
  %v5184 = vpop.f32.mrb[0].mxu0
  %5185 = vmatprep.mubr.f32.mxu0 0.0
  %5186 = vmatmul.mubr.f32.gmra.mrb[0].mxu0 %v4910
  %v5187 = vpop.f32.mrb[0].mxu0
  %v5188 = vadd.f32 %v5084, %v5187
  %v5189 = vpop.f32.mrb[0].mxu0
  %5190 = vmatprep.mubr.f32.mxu0 0.0
  %5191 = vmatmul.mubr.f32.gmra.mrb[0].mxu0 %v4911
  %v5192 = vpop.f32.mrb[0].mxu0
  %v5193 = vadd.f32 %v5084, %v5192
  %v5194 = vpop.f32.mrb[0].mxu0
  %5195 = vmatprep.mubr.f32.mxu0 0.0
  %5196 = vmatmul.mubr.f32.gmra.mrb[0].mxu0 %v4912
  %v5197 = vpop.f32.mrb[0].mxu0
  %v5198 = vadd.f32 %v5084, %v5197
  %v5199 = vpop.f32.mrb[0].mxu0
  %5200 = vmatprep.mubr.f32.mxu0 0.0
  %5201 = vmatmul.mubr.f32.gmra.mrb[0].mxu0 %v4913
  %v5202 = vpop.f32.mrb[0].mxu0
  %v5203 = vadd.f32 %v5084, %v5202
  %v5204 = vpop.f32.mrb[0].mxu0
  %5205 = vmatprep.mubr.f32.mxu0 0.0
  %5206 = vmatmul.mubr.f32.gmra.mrb[0].mxu0 %v4914
  %v5207 = vpop.f32.mrb[0].mxu0
  %v5208 = vadd.f32 %v5084, %v5207
  %v5209 = vpop.f32.mrb[0].mxu0
  %5210 = vmatprep.mubr.f32.mxu0 0.0
  %5211 = vmatmul.mubr.f32.gmra.mrb[0].mxu0 %v4915
  %v5212 = vpop.f32.mrb[0].mxu0
  %v5213 = vadd.f32 %v5084, %v5212
  %v5214 = vpop.f32.mrb[0].mxu0
  %5215 = vmatprep.mubr.f32.mxu0 0.0
  %5216 = vmatmul.mubr.f32.gmra.mrb[0].mxu0 %v4916
  %v5217 = vpop.f32.mrb[0].mxu0
  %v5218 = vadd.f32 %v5084, %v5217
  %v5219 = vpop.f32.mrb[0].mxu0
  %5220 = vmatprep.mubr.f32.mxu0 0.0
  %5221 = vmatmul.mubr.f32.gmra.mrb[0].mxu0 %v4917
  %v5222 = vpop.f32.mrb[0].mxu0
  %v5223 = vadd.f32 %v5084, %v5222
  %v5224 = vpop.f32.mrb[0].mxu0
  %5225 = vmatprep.mubr.f32.mxu0 0.0
  %5226 = vmatmul.mubr.f32.gmra.mrb[0].mxu0 %v4918
  %v5227 = vpop.f32.mrb[0].mxu0
  %v5228 = vadd.f32 %v5084, %v5227
  %v5229 = vpop.f32.mrb[0].mxu0
  %5230 = vmatprep.mubr.f32.mxu0 0.0
  %5231 = vmatmul.mubr.f32.gmra.mrb[0].mxu0 %v4919
  %v5232 = vpop.f32.mrb[0].mxu0
  %v5233 = vadd.f32 %v5084, %v5232
  %v5234 = vpop.f32.mrb[0].mxu0
  %5235 = vmatprep.mubr.f32.mxu0 0.0
  %5236 = vmatmul.mubr.f32.gmra.mrb[0].mxu0 %v4920
  %v5237 = vpop.f32.mrb[0].mxu0
  %v5238 = vadd.f32 %v5084, %v5237
  %v5239 = vpop.f32.mrb[0].mxu0
  %5240 = vmatprep.mubr.f32.mxu0 0.0
  %5241 = vmatmul.mubr.f32.gmra.mrb[0].mxu0 %v4921
  %v5242 = vpop.f32.mrb[0].mxu0
  %v5243 = vadd.f32 %v5084, %v5242
  %v5244 = vpop.f32.mrb[0].mxu0
  %5245 = vmatprep.mubr.f32.mxu0 0.0
  %5246 = vmatmul.mubr.f32.gmra.mrb[0].mxu0 %v4922
  %v5247 = vpop.f32.mrb[0].mxu0
  %v5248 = vadd.f32 %v5084, %v5247
  %v5249 = vpop.f32.mrb[0].mxu0
  %5250 = vmatprep.mubr.f32.mxu0 0.0
  %5251 = vmatmul.mubr.f32.gmra.mrb[0].mxu0 %v4923
  %v5252 = vpop.f32.mrb[0].mxu0
  %v5253 = vadd.f32 %v5084, %v5252
  %v5254 = vpop.f32.mrb[0].mxu0
  %5255 = vmatprep.mubr.f32.mxu0 0.0
  %5256 = vmatmul.mubr.f32.gmra.mrb[0].mxu0 %v4924
  %v5257 = vpop.f32.mrb[0].mxu0
  %v5258 = vadd.f32 %v5084, %v5257
  %v5259 = vpop.f32.mrb[0].mxu0
  %5260 = vmatprep.mubr.f32.mxu0 0.0
  %5261 = vmatmul.mubr.f32.gmra.mrb[0].mxu0 %v4925
  %v5262 = vpop.f32.mrb[0].mxu0
  %v5263 = vadd.f32 %v5084, %v5262
  %v5264 = vpop.f32.mrb[0].mxu0
  %5265 = vmatprep.mubr.f32.mxu0 0.0
  %5266 = vmatmul.mubr.f32.gmra.mrb[0].mxu0 %v4926
  %v5267 = vpop.f32.mrb[0].mxu0
  %v5268 = vadd.f32 %v5084, %v5267
  %v5269 = vpop.f32.mrb[0].mxu0
  %5270 = vmatprep.mubr.f32.mxu0 0.0
  %5271 = vmatmul.mubr.f32.gmra.mrb[0].mxu0 %v4927
  %v5272 = vpop.f32.mrb[0].mxu0
  %v5273 = vadd.f32 %v5084, %v5272
  %v5274 = vpop.f32.mrb[0].mxu0
  %5275 = vmatprep.mubr.f32.mxu0 0.0
  %5276 = vmatmul.mubr.f32.gmra.mrb[0].mxu0 %v4928
  %v5277 = vpop.f32.mrb[0].mxu0
  %v5278 = vadd.f32 %v5084, %v5277
  %v5279 = vpop.f32.mrb[0].mxu0
  %5280 = vmatprep.mubr.f32.mxu0 0.0
  %5281 = vmatmul.mubr.f32.gmra.mrb[0].mxu0 %v4929
  %v5282 = vpop.f32.mrb[0].mxu0
  %v5283 = vadd.f32 %v5084, %v5282
  %v5284 = vpop.f32.mrb[0].mxu0
  %5285 = vmatprep.mubr.f32.mxu0 0.0
  %5286 = vmatmul.mubr.f32.gmra.mrb[0].mxu0 %v4930
  %v5287 = vpop.f32.mrb[0].mxu0
  %v5288 = vadd.f32 %v5084, %v5287
  %v5289 = vpop.f32.mrb[0].mxu0
  %5290 = vmatprep.mubr.f32.mxu0 0.0
  %5291 = vmatmul.mubr.f32.gmra.mrb[0].mxu0 %v4931
  %v5292 = vpop.f32.mrb[0].mxu0
  %v5293 = vadd.f32 %v5084, %v5292
  %v5294 = vpop.f32.mrb[0].mxu0
  %5295 = vmatprep.mubr.f32.mxu0 0.0
  %5296 = vmatmul.mubr.f32.gmra.mrb[0].mxu0 %v4932
  %v5297 = vpop.f32.mrb[0].mxu0
  %v5298 = vadd.f32 %v5084, %v5297
  %v5299 = vpop.f32.mrb[0].mxu0
  %5300 = vmatprep.mubr.f32.mxu0 0.0
  %5301 = vmatmul.mubr.f32.gmra.mrb[0].mxu0 %v4933
  %v5302 = vpop.f32.mrb[0].mxu0
  %v5303 = vadd.f32 %v5084, %v5302
  %v5304 = vpop.f32.mrb[0].mxu0
  %5305 = vmatprep.mubr.f32.mxu0 0.0
  %5306 = vmatmul.mubr.f32.gmra.mrb[0].mxu0 %v4934
  %v5307 = vpop.f32.mrb[0].mxu0
  %v5308 = vadd.f32 %v5084, %v5307
  %v5309 = vpop.f32.mrb[0].mxu0
  %5310 = vmatprep.mubr.f32.mxu0 0.0
  %5311 = vmatmul.mubr.f32.gmra.mrb[0].mxu0 %v4935
  %v5312 = vpop.f32.mrb[0].mxu0
  %v5313 = vadd.f32 %v5084, %v5312
  %v5314 = vpop.f32.mrb[0].mxu0
  %5315 = vmatprep.mubr.f32.mxu0 0.0
  %5316 = vmatmul.mubr.f32.gmra.mrb[0].mxu0 %v4936
  %v5317 = vpop.f32.mrb[0].mxu0
  %v5318 = vadd.f32 %v5084, %v5317
  %v5319 = vpop.f32.mrb[0].mxu0
  %5320 = vmatprep.mubr.f32.mxu0 0.0
  %5321 = vmatmul.mubr.f32.gmra.mrb[0].mxu0 %v4937
  %v5322 = vpop.f32.mrb[0].mxu0
  %v5323 = vadd.f32 %v5084, %v5322
  %v5324 = vpop.f32.mrb[0].mxu0
  %5325 = vmatprep.mubr.f32.mxu0 0.0
  %5326 = vmatmul.mubr.f32.gmra.mrb[0].mxu0 %v4938
  %v5327 = vpop.f32.mrb[0].mxu0
  %v5328 = vadd.f32 %v5084, %v5327
  %v5329 = vpop.f32.mrb[0].mxu0
  %5330 = vmatprep.mubr.f32.mxu0 0.0
  %5331 = vmatmul.mubr.f32.gmra.mrb[0].mxu0 %v4939
  %v5332 = vpop.f32.mrb[0].mxu0
  %v5333 = vadd.f32 %v5084, %v5332
  %v5334 = vpop.f32.mrb[0].mxu0
  %5335 = vmatprep.mubr.f32.mxu0 0.0
  %5336 = vmatmul.mubr.f32.gmra.mrb[0].mxu0 %v4940
  %v5337 = vpop.f32.mrb[0].mxu0
  %v5338 = vadd.f32 %v5084, %v5337
  %v5339 = vpop.f32.mrb[0].mxu0
  %5340 = vmatprep.mubr.f32.mxu0 0.0
  %5341 = vmatmul.mubr.f32.gmra.mrb[0].mxu0 %v4941
  %v5342 = vpop.f32.mrb[0].mxu0
  %v5343 = vadd.f32 %v5084, %v5342
  %v5344 = vpop.f32.mrb[0].mxu0
  %5345 = vmatprep.mubr.f32.mxu0 0.0
  %5346 = vmatmul.mubr.f32.gmra.mrb[0].mxu0 %v4942
  %v5347 = vpop.f32.mrb[0].mxu0
  %v5348 = vadd.f32 %v5084, %v5347
  %v5349 = vpop.f32.mrb[0].mxu0
  %5350 = vmatprep.mubr.f32.mxu0 0.0
  %5351 = vmatmul.mubr.f32.gmra.mrb[0].mxu0 %v4943
  %v5352 = vpop.f32.mrb[0].mxu0
  %v5353 = vadd.f32 %v5084, %v5352
  %v5354 = vpop.f32.mrb[0].mxu0
  %5355 = vmatprep.mubr.f32.mxu0 0.0
  %5356 = vmatmul.mubr.f32.gmra.mrb[0].mxu0 %v4944
  %v5357 = vpop.f32.mrb[0].mxu0
  %v5358 = vadd.f32 %v5084, %v5357
  %v5359 = vpop.f32.mrb[0].mxu0
  %5360 = vmatprep.mubr.f32.mxu0 0.0
  %5361 = vmatmul.mubr.f32.gmra.mrb[0].mxu0 %v4945
  %v5362 = vpop.f32.mrb[0].mxu0
  %v5363 = vadd.f32 %v5084, %v5362
  %v5364 = vpop.f32.mrb[0].mxu0
  %5365 = vmatprep.mubr.f32.mxu0 0.0
  %5366 = vmatmul.mubr.f32.gmra.mrb[0].mxu0 %v4946
  %v5367 = vpop.f32.mrb[0].mxu0
  %v5368 = vadd.f32 %v5084, %v5367
  %v5369 = vpop.f32.mrb[0].mxu0
  %5370 = vmatprep.mubr.f32.mxu0 0.0
  %5371 = vmatmul.mubr.f32.gmra.mrb[0].mxu0 %v4947
  %v5372 = vpop.f32.mrb[0].mxu0
  %v5373 = vadd.f32 %v5084, %v5372
  %v5374 = vpop.f32.mrb[0].mxu0
  %5375 = vmatprep.mubr.f32.mxu0 0.0
  %5376 = vmatmul.mubr.f32.gmra.mrb[0].mxu0 %v4948
  %v5377 = vpop.f32.mrb[0].mxu0
  %v5378 = vadd.f32 %v5084, %v5377
  %v5379 = vpop.f32.mrb[0].mxu0
  %5380 = vmatprep.mubr.f32.mxu0 0.0
  %5381 = vmatmul.mubr.f32.gmra.mrb[0].mxu0 %v4949
  %v5382 = vpop.f32.mrb[0].mxu0
  %v5383 = vadd.f32 %v5084, %v5382
  %v5384 = vpop.f32.mrb[0].mxu0
  %5385 = vmatprep.mubr.f32.mxu0 0.0
  %5386 = vmatmul.mubr.f32.gmra.mrb[0].mxu0 %v4950
  %v5387 = vpop.f32.mrb[0].mxu0
  %v5388 = vadd.f32 %v5084, %v5387
  %v5389 = vpop.f32.mrb[0].mxu0
  %5390 = vmatprep.mubr.f32.mxu0 0.0
  %5391 = vmatmul.mubr.f32.gmra.mrb[0].mxu0 %v4951
  %v5392 = vpop.f32.mrb[0].mxu0
  %v5393 = vadd.f32 %v5084, %v5392
  %v5394 = vpop.f32.mrb[0].mxu0
  %5395 = vmatprep.mubr.f32.mxu0 0.0
  %5396 = vmatmul.mubr.f32.gmra.mrb[0].mxu0 %v4952
  %v5397 = vpop.f32.mrb[0].mxu0
  %v5398 = vadd.f32 %v5084, %v5397
  %v5399 = vpop.f32.mrb[0].mxu0
  %5400 = vmatprep.mubr.f32.mxu0 0.0
  %5401 = vmatmul.mubr.f32.gmra.mrb[0].mxu0 %v4953
  %v5402 = vpop.f32.mrb[0].mxu0
  %v5403 = vadd.f32 %v5084, %v5402
  %v5404 = vpop.f32.mrb[0].mxu0
  %5405 = vmatprep.mubr.f32.mxu0 0.0
  %5406 = vmatmul.mubr.f32.gmra.mrb[0].mxu0 %v4954
  %v5407 = vpop.f32.mrb[0].mxu0
  %v5408 = vadd.f32 %v5084, %v5407
  %v5409 = vpop.f32.mrb[0].mxu0
  %5410 = vmatprep.mubr.f32.mxu0 0.0
  %5411 = vmatmul.mubr.f32.gmra.mrb[0].mxu0 %v4955
  %v5412 = vpop.f32.mrb[0].mxu0
  %v5413 = vadd.f32 %v5084, %v5412
  %v5414 = vpop.f32.mrb[0].mxu0
  %5415 = vmatprep.mubr.f32.mxu0 0.0
  %5416 = vmatmul.mubr.f32.gmra.mrb[0].mxu0 %v4956
  %v5417 = vpop.f32.mrb[0].mxu0
  %v5418 = vadd.f32 %v5084, %v5417
  %v5419 = vpop.f32.mrb[0].mxu0
  %5420 = vmatprep.mubr.f32.mxu0 0.0
  %5421 = vmatmul.mubr.f32.gmra.mrb[0].mxu0 %v4957
  %v5422 = vpop.f32.mrb[0].mxu0
  %v5423 = vadd.f32 %v5084, %v5422
  %v5424 = vpop.f32.mrb[0].mxu0
  %5425 = vmatprep.mubr.f32.mxu0 0.0
  %5426 = vmatmul.mubr.f32.gmra.mrb[0].mxu0 %v4958
  %v5427 = vpop.f32.mrb[0].mxu0
  %v5428 = vadd.f32 %v5084, %v5427
  %v5429 = vpop.f32.mrb[0].mxu0
  %5430 = vmatprep.mubr.f32.mxu0 0.0
  %5431 = vmatmul.mubr.f32.gmra.mrb[0].mxu0 %v4959
  %v5432 = vpop.f32.mrb[0].mxu0
  %v5433 = vadd.f32 %v5084, %v5432
  %v5434 = vpop.f32.mrb[0].mxu0
  %5435 = vmatprep.mubr.f32.mxu0 0.0
  %5436 = vmatmul.mubr.f32.gmra.mrb[0].mxu0 %v4960
  %v5437 = vpop.f32.mrb[0].mxu0
  %v5438 = vadd.f32 %v5084, %v5437
  %v5439 = vpop.f32.mrb[0].mxu0
  %5440 = vmatprep.mubr.f32.mxu0 0.0
  %5441 = vmatmul.mubr.f32.gmra.mrb[0].mxu0 %v4961
  %v5442 = vpop.f32.mrb[0].mxu0
  %v5443 = vadd.f32 %v5084, %v5442
  %v5444 = vpop.f32.mrb[0].mxu0
  %5445 = vmatprep.mubr.f32.mxu0 0.0
  %5446 = vmatmul.mubr.f32.gmra.mrb[0].mxu0 %v4962
  %v5447 = vpop.f32.mrb[0].mxu0
  %v5448 = vadd.f32 %v5084, %v5447
  %v5449 = vpop.f32.mrb[0].mxu0
  %5450 = vmatprep.mubr.f32.mxu0 0.0
  %5451 = vmatmul.mubr.f32.gmra.mrb[0].mxu0 %v4963
  %v5452 = vpop.f32.mrb[0].mxu0
  %v5453 = vadd.f32 %v5084, %v5452
  %v5454 = vpop.f32.mrb[0].mxu0
  %5455 = vmatprep.mubr.f32.mxu0 0.0
  %5456 = vmatmul.mubr.f32.gmra.mrb[0].mxu0 %v4964
  %v5457 = vpop.f32.mrb[0].mxu0
  %v5458 = vadd.f32 %v5084, %v5457
  %v5459 = vpop.f32.mrb[0].mxu0
  %5460 = vmatprep.mubr.f32.mxu0 0.0
  %5461 = vmatmul.mubr.f32.gmra.mrb[0].mxu0 %v4965
  %v5462 = vpop.f32.mrb[0].mxu0
  %v5463 = vadd.f32 %v5084, %v5462
  %v5464 = vpop.f32.mrb[0].mxu0
  %5465 = vmatprep.mubr.f32.mxu0 0.0
  %5466 = vmatmul.mubr.f32.gmra.mrb[0].mxu0 %v4966
  %v5467 = vpop.f32.mrb[0].mxu0
  %v5468 = vadd.f32 %v5084, %v5467
  %v5469 = vpop.f32.mrb[0].mxu0
  %5470 = vmatprep.mubr.f32.mxu0 0.0
  %5471 = vmatmul.mubr.f32.gmra.mrb[0].mxu0 %v4967
  %v5472 = vpop.f32.mrb[0].mxu0
  %v5473 = vadd.f32 %v5084, %v5472
  %v5474 = vpop.f32.mrb[0].mxu0
  %5475 = vmatprep.mubr.f32.mxu0 0.0
  %5476 = vmatmul.mubr.f32.gmra.mrb[0].mxu0 %v4968
  %v5477 = vpop.f32.mrb[0].mxu0
  %v5478 = vadd.f32 %v5084, %v5477
  %v5479 = vpop.f32.mrb[0].mxu0
  %5480 = vmatprep.mubr.f32.mxu0 0.0
  %5481 = vmatmul.mubr.f32.gmra.mrb[0].mxu0 %v4969
  %v5482 = vpop.f32.mrb[0].mxu0
  %v5483 = vadd.f32 %v5084, %v5482
  %v5484 = vpop.f32.mrb[0].mxu0
  %5485 = vmatprep.mubr.f32.mxu0 0.0
  %5486 = vmatmul.mubr.f32.gmra.mrb[0].mxu0 %v4970
  %v5487 = vpop.f32.mrb[0].mxu0
  %v5488 = vadd.f32 %v5084, %v5487
  %v5489 = vpop.f32.mrb[0].mxu0
  %5490 = vmatprep.mubr.f32.mxu0 0.0
  %5491 = vmatmul.mubr.f32.gmra.mrb[0].mxu0 %v4971
  %v5492 = vpop.f32.mrb[0].mxu0
  %v5493 = vadd.f32 %v5084, %v5492
  %v5494 = vpop.f32.mrb[0].mxu0
  %5495 = vmatprep.mubr.f32.mxu0 0.0
  %5496 = vmatmul.mubr.f32.gmra.mrb[0].mxu0 %v4972
  %v5497 = vpop.f32.mrb[0].mxu0
  %v5498 = vadd.f32 %v5084, %v5497
  %v5499 = vpop.f32.mrb[0].mxu0
  %5500 = vmatprep.mubr.f32.mxu0 0.0
  %5501 = vmatmul.mubr.f32.gmra.mrb[0].mxu0 %v4973
  %v5502 = vpop.f32.mrb[0].mxu0
  %v5503 = vadd.f32 %v5084, %v5502
  %v5504 = vpop.f32.mrb[0].mxu0
  %5505 = vmatprep.mubr.f32.mxu0 0.0
  %5506 = vmatmul.mubr.f32.gmra.mrb[0].mxu0 %v4974
  %v5507 = vpop.f32.mrb[0].mxu0
  %v5508 = vadd.f32 %v5084, %v5507
  %v5509 = vpop.f32.mrb[0].mxu0
  %5510 = vmatprep.mubr.f32.mxu0 0.0
  %5511 = vmatmul.mubr.f32.gmra.mrb[0].mxu0 %v4975
  %v5512 = vpop.f32.mrb[0].mxu0
  %v5513 = vadd.f32 %v5084, %v5512
  %v5514 = vpop.f32.mrb[0].mxu0
  %5515 = vmatprep.mubr.f32.mxu0 0.0
  %5516 = vmatmul.mubr.f32.gmra.mrb[0].mxu0 %v4976
  %v5517 = vpop.f32.mrb[0].mxu0
  %v5518 = vadd.f32 %v5084, %v5517
  %v5519 = vpop.f32.mrb[0].mxu0
  %5520 = vmatprep.mubr.f32.mxu0 0.0
  %5521 = vmatmul.mubr.f32.gmra.mrb[0].mxu0 %v4977
  %v5522 = vpop.f32.mrb[0].mxu0
  %v5523 = vadd.f32 %v5084, %v5522
  %v5524 = vpop.f32.mrb[0].mxu0
  %5525 = vmatprep.mubr.f32.mxu0 0.0
  %5526 = vmatmul.mubr.f32.gmra.mrb[0].mxu0 %v4978
  %v5527 = vpop.f32.mrb[0].mxu0
  %v5528 = vadd.f32 %v5084, %v5527
  %v5529 = vpop.f32.mrb[0].mxu0
  %5530 = vmatprep.mubr.f32.mxu0 0.0
  %5531 = vmatmul.mubr.f32.gmra.mrb[0].mxu0 %v4979
  %v5532 = vpop.f32.mrb[0].mxu0
  %v5533 = vadd.f32 %v5084, %v5532
  %v5534 = vpop.f32.mrb[0].mxu0
  %5535 = vmatprep.mubr.f32.mxu0 0.0
  %5536 = vmatmul.mubr.f32.gmra.mrb[0].mxu0 %v4980
  %v5537 = vpop.f32.mrb[0].mxu0
  %v5538 = vadd.f32 %v5084, %v5537
  %v5539 = vpop.f32.mrb[0].mxu0
  %5540 = vmatprep.mubr.f32.mxu0 0.0
  %5541 = vmatmul.mubr.f32.gmra.mrb[0].mxu0 %v4981
  %v5542 = vpop.f32.mrb[0].mxu0
  %v5543 = vadd.f32 %v5084, %v5542
  %v5544 = vpop.f32.mrb[0].mxu0
  %5545 = vmatprep.mubr.f32.mxu0 0.0
  %5546 = vmatmul.mubr.f32.gmra.mrb[0].mxu0 %v4982
  %v5547 = vpop.f32.mrb[0].mxu0
  %v5548 = vadd.f32 %v5084, %v5547
  %v5549 = vpop.f32.mrb[0].mxu0
  %5550 = vmatprep.mubr.f32.mxu0 0.0
  %5551 = vmatmul.mubr.f32.gmra.mrb[0].mxu0 %v4983
  %v5552 = vpop.f32.mrb[0].mxu0
  %v5553 = vadd.f32 %v5084, %v5552
  %v5554 = vpop.f32.mrb[0].mxu0
  %5555 = vmatprep.mubr.f32.mxu0 0.0
  %5556 = vmatmul.mubr.f32.gmra.mrb[0].mxu0 %v4984
  %v5557 = vpop.f32.mrb[0].mxu0
  %v5558 = vadd.f32 %v5084, %v5557
  %v5559 = vpop.f32.mrb[0].mxu0
  %5560 = vmatprep.mubr.f32.mxu0 0.0
  %5561 = vmatmul.mubr.f32.gmra.mrb[0].mxu0 %v4985
  %v5562 = vpop.f32.mrb[0].mxu0
  %v5563 = vadd.f32 %v5084, %v5562
  %v5564 = vpop.f32.mrb[0].mxu0
  %5565 = vmatprep.mubr.f32.mxu0 0.0
  %5566 = vmatmul.mubr.f32.gmra.mrb[0].mxu0 %v4986
  %v5567 = vpop.f32.mrb[0].mxu0
  %v5568 = vadd.f32 %v5084, %v5567
  %v5569 = vpop.f32.mrb[0].mxu0
  %5570 = vmatprep.mubr.f32.mxu0 0.0
  %5571 = vmatmul.mubr.f32.gmra.mrb[0].mxu0 %v4987
  %v5572 = vpop.f32.mrb[0].mxu0
  %v5573 = vadd.f32 %v5084, %v5572
  %v5574 = vpop.f32.mrb[0].mxu0
  %5575 = vmatprep.mubr.f32.mxu0 0.0
  %5576 = vmatmul.mubr.f32.gmra.mrb[0].mxu0 %v4988
  %v5577 = vpop.f32.mrb[0].mxu0
  %v5578 = vadd.f32 %v5084, %v5577
  %v5579 = vpop.f32.mrb[0].mxu0
  %5580 = vmatprep.mubr.f32.mxu0 0.0
  %5581 = vmatmul.mubr.f32.gmra.mrb[0].mxu0 %v4989
  %v5582 = vpop.f32.mrb[0].mxu0
  %v5583 = vadd.f32 %v5084, %v5582
  %v5584 = vpop.f32.mrb[0].mxu0
  %5585 = vmatprep.mubr.f32.mxu0 0.0
  %5586 = vmatmul.mubr.f32.gmra.mrb[0].mxu0 %v4990
  %v5587 = vpop.f32.mrb[0].mxu0
  %v5588 = vadd.f32 %v5084, %v5587
  %v5589 = vpop.f32.mrb[0].mxu0
  %5590 = vmatprep.mubr.f32.mxu0 0.0
  %5591 = vmatmul.mubr.f32.gmra.mrb[0].mxu0 %v4991
  %v5592 = vpop.f32.mrb[0].mxu0
  %v5593 = vadd.f32 %v5084, %v5592
  %v5594 = vpop.f32.mrb[0].mxu0
  %5595 = vmatprep.mubr.f32.mxu0 0.0
  %5596 = vmatmul.mubr.f32.gmra.mrb[0].mxu0 %v4992
  %v5597 = vpop.f32.mrb[0].mxu0
  %v5598 = vadd.f32 %v5084, %v5597
  %v5599 = vpop.f32.mrb[0].mxu0
  %5600 = vmatprep.mubr.f32.mxu0 0.0
  %5601 = vmatmul.mubr.f32.gmra.mrb[0].mxu0 %v4993
  %v5602 = vpop.f32.mrb[0].mxu0
  %v5603 = vadd.f32 %v5084, %v5602
  %v5604 = vpop.f32.mrb[0].mxu0
  %5605 = vmatprep.mubr.f32.mxu0 0.0
  %5606 = vmatmul.mubr.f32.gmra.mrb[0].mxu0 %v4994
  %v5607 = vpop.f32.mrb[0].mxu0
  %v5608 = vadd.f32 %v5084, %v5607
  %v5609 = vpop.f32.mrb[0].mxu0
  %5610 = vmatprep.mubr.f32.mxu0 0.0
  %5611 = vmatmul.mubr.f32.gmra.mrb[0].mxu0 %v4995
  %v5612 = vpop.f32.mrb[0].mxu0
  %v5613 = vadd.f32 %v5084, %v5612
  %v5614 = vpop.f32.mrb[0].mxu0
  %5615 = vmatprep.mubr.f32.mxu0 0.0
  %5616 = vmatmul.mubr.f32.gmra.mrb[0].mxu0 %v4996
  %v5617 = vpop.f32.mrb[0].mxu0
  %v5618 = vadd.f32 %v5084, %v5617
  %v5619 = vpop.f32.mrb[0].mxu0
  %5620 = vmatprep.mubr.f32.mxu0 0.0
  %5621 = vmatmul.mubr.f32.gmra.mrb[0].mxu0 %v4997
  %v5622 = vpop.f32.mrb[0].mxu0
  %v5623 = vadd.f32 %v5084, %v5622
  %v5624 = vpop.f32.mrb[0].mxu0
  %5625 = vmatprep.mubr.f32.mxu0 0.0
  %5626 = vmatmul.mubr.f32.gmra.mrb[0].mxu0 %v4998
  %v5627 = vpop.f32.mrb[0].mxu0
  %v5628 = vadd.f32 %v5084, %v5627
  %v5629 = vpop.f32.mrb[0].mxu0
  %5630 = vmatprep.mubr.f32.mxu0 0.0
  %5631 = vmatmul.mubr.f32.gmra.mrb[0].mxu0 %v4999
  %v5632 = vpop.f32.mrb[0].mxu0
  %v5633 = vadd.f32 %v5084, %v5632
  %v5634 = vpop.f32.mrb[0].mxu0
  %5635 = vmatprep.mubr.f32.mxu0 0.0
  %5636 = vmatmul.mubr.f32.gmra.mrb[0].mxu0 %v5000
  %v5637 = vpop.f32.mrb[0].mxu0
  %v5638 = vadd.f32 %v5084, %v5637
  %v5639 = vpop.f32.mrb[0].mxu0
  %5640 = vmatprep.mubr.f32.mxu0 0.0
  %5641 = vmatmul.mubr.f32.gmra.mrb[0].mxu0 %v5001
  %v5642 = vpop.f32.mrb[0].mxu0
  %v5643 = vadd.f32 %v5084, %v5642
  %v5644 = vpop.f32.mrb[0].mxu0
  %5645 = vmatprep.mubr.f32.mxu0 0.0
  %5646 = vmatmul.mubr.f32.gmra.mrb[0].mxu0 %v5002
  %v5647 = vpop.f32.mrb[0].mxu0
  %v5648 = vadd.f32 %v5084, %v5647
  %v5649 = vpop.f32.mrb[0].mxu0
  %5650 = vmatprep.mubr.f32.mxu0 0.0
  %5651 = vmatmul.mubr.f32.gmra.mrb[0].mxu0 %v5003
  %v5652 = vpop.f32.mrb[0].mxu0
  %v5653 = vadd.f32 %v5084, %v5652
  %v5654 = vpop.f32.mrb[0].mxu0
  %5655 = vmatprep.mubr.f32.mxu0 0.0
  %5656 = vmatmul.mubr.f32.gmra.mrb[0].mxu0 %v5004
  %v5657 = vpop.f32.mrb[0].mxu0
  %v5658 = vadd.f32 %v5084, %v5657
  %v5659 = vpop.f32.mrb[0].mxu0
  %5660 = vmatprep.mubr.f32.mxu0 0.0
  %5661 = vmatmul.mubr.f32.gmra.mrb[0].mxu0 %v5005
  %v5662 = vpop.f32.mrb[0].mxu0
  %v5663 = vadd.f32 %v5084, %v5662
  %v5664 = vpop.f32.mrb[0].mxu0
  %5665 = vmatprep.mubr.f32.mxu0 0.0
  %5666 = vmatmul.mubr.f32.gmra.mrb[0].mxu0 %v5006
  %v5667 = vpop.f32.mrb[0].mxu0
  %v5668 = vadd.f32 %v5084, %v5667
  %v5669 = vpop.f32.mrb[0].mxu0
  %5670 = vmatprep.mubr.f32.mxu0 0.0
  %5671 = vmatmul.mubr.f32.gmra.mrb[0].mxu0 %v5007
  %v5672 = vpop.f32.mrb[0].mxu0
  %v5673 = vadd.f32 %v5084, %v5672
  %v5674 = vpop.f32.mrb[0].mxu0
  %5675 = vmatprep.mubr.f32.mxu0 0.0
  %5676 = vmatmul.mubr.f32.gmra.mrb[0].mxu0 %v5008
  %v5677 = vpop.f32.mrb[0].mxu0
  %v5678 = vadd.f32 %v5084, %v5677
  %v5679 = vpop.f32.mrb[0].mxu0
  %5680 = vmatprep.mubr.f32.mxu0 0.0
  %5681 = vmatmul.mubr.f32.gmra.mrb[0].mxu0 %v5009
  %v5682 = vpop.f32.mrb[0].mxu0
  %v5683 = vadd.f32 %v5084, %v5682
  %v5684 = vpop.f32.mrb[0].mxu0
  %5685 = vmatprep.mubr.f32.mxu0 0.0
  %5686 = vmatmul.mubr.f32.gmra.mrb[0].mxu0 %v5010
  %v5687 = vpop.f32.mrb[0].mxu0
  %v5688 = vadd.f32 %v5084, %v5687
  %v5689 = vpop.f32.mrb[0].mxu0
  %5690 = vmatprep.mubr.f32.mxu0 0.0
  %5691 = vmatmul.mubr.f32.gmra.mrb[0].mxu0 %v5011
  %v5692 = vpop.f32.mrb[0].mxu0
  %v5693 = vadd.f32 %v5084, %v5692
  %v5694 = vpop.f32.mrb[0].mxu0
  %5695 = vmatprep.mubr.f32.mxu0 0.0
  %5696 = vmatmul.mubr.f32.gmra.mrb[0].mxu0 %v5012
  %v5697 = vpop.f32.mrb[0].mxu0
  %v5698 = vadd.f32 %v5084, %v5697
  %v5699 = vpop.f32.mrb[0].mxu0
  %5700 = vmatprep.mubr.f32.mxu0 0.0
  %5701 = vmatmul.mubr.f32.gmra.mrb[0].mxu0 %v5013
  %v5702 = vpop.f32.mrb[0].mxu0
  %v5703 = vadd.f32 %v5084, %v5702
  %v5704 = vpop.f32.mrb[0].mxu0
  %5705 = vmatprep.mubr.f32.mxu0 0.0
  %5706 = vmatmul.mubr.f32.gmra.mrb[0].mxu0 %v5014
  %v5707 = vpop.f32.mrb[0].mxu0
  %v5708 = vadd.f32 %v5084, %v5707
  %v5709 = vpop.f32.mrb[0].mxu0
  %5710 = vmatprep.mubr.f32.mxu0 0.0
  %5711 = vmatmul.mubr.f32.gmra.mrb[0].mxu0 %v5015
  %v5712 = vpop.f32.mrb[0].mxu0
  %v5713 = vadd.f32 %v5084, %v5712
  %v5714 = vpop.f32.mrb[0].mxu0
  %5715 = vmatprep.mubr.f32.mxu0 0.0
  %5716 = vmatmul.mubr.f32.gmra.mrb[0].mxu0 %v5016
  %v5717 = vpop.f32.mrb[0].mxu0
  %v5718 = vadd.f32 %v5084, %v5717
  %v5719 = vpop.f32.mrb[0].mxu0
  %5720 = vmatprep.mubr.f32.mxu0 0.0
  %5721 = vmatmul.mubr.f32.gmra.mrb[0].mxu0 %v5017
  %v5722 = vpop.f32.mrb[0].mxu0
  %v5723 = vadd.f32 %v5084, %v5722
  %v5724 = vpop.f32.mrb[0].mxu0
  %5725 = vmatprep.mubr.f32.mxu0 0.0
  %5726 = vmatmul.mubr.f32.gmra.mrb[0].mxu0 %v5018
  %v5727 = vpop.f32.mrb[0].mxu0
  %v5728 = vadd.f32 %v5084, %v5727
  %v5729 = vpop.f32.mrb[0].mxu0
  %5730 = vmatprep.mubr.f32.mxu0 0.0
  %5731 = vmatmul.mubr.f32.gmra.mrb[0].mxu0 %v5019
  %v5732 = vpop.f32.mrb[0].mxu0
  %v5733 = vadd.f32 %v5084, %v5732
  %v5734 = vpop.f32.mrb[0].mxu0
  %5735 = vmatprep.mubr.f32.mxu0 0.0
  %5736 = vmatmul.mubr.f32.gmra.mrb[0].mxu0 %v5020
  %v5737 = vpop.f32.mrb[0].mxu0
  %v5738 = vadd.f32 %v5084, %v5737
  %v5739 = vpop.f32.mrb[0].mxu0
  %5740 = vmatprep.mubr.f32.mxu0 0.0
  %5741 = vmatmul.mubr.f32.gmra.mrb[0].mxu0 %v5021
  %v5742 = vpop.f32.mrb[0].mxu0
  %v5743 = vadd.f32 %v5084, %v5742
  %v5744 = vpop.f32.mrb[0].mxu0
  %5745 = vmatprep.mubr.f32.mxu0 0.0
  %5746 = vmatmul.mubr.f32.gmra.mrb[0].mxu0 %v5022
  %v5747 = vpop.f32.mrb[0].mxu0
  %v5748 = vadd.f32 %v5084, %v5747
  %v5749 = vpop.f32.mrb[0].mxu0
  %5750 = vmatprep.mubr.f32.mxu0 0.0
  %5751 = vmatmul.mubr.f32.gmra.mrb[0].mxu0 %v5023
  %v5752 = vpop.f32.mrb[0].mxu0
  %v5753 = vadd.f32 %v5084, %v5752
  %v5754 = vpop.f32.mrb[0].mxu0
  %5755 = vmatprep.mubr.f32.mxu0 0.0
  %5756 = vmatmul.mubr.f32.gmra.mrb[0].mxu0 %v5024
  %v5757 = vpop.f32.mrb[0].mxu0
  %v5758 = vadd.f32 %v5084, %v5757
  %v5759 = vpop.f32.mrb[0].mxu0
  %5760 = vmatprep.mubr.f32.mxu0 0.0
  %5761 = vmatmul.mubr.f32.gmra.mrb[0].mxu0 %v5025
  %v5762 = vpop.f32.mrb[0].mxu0
  %v5763 = vadd.f32 %v5084, %v5762
  %v5764 = vpop.f32.mrb[0].mxu0
  %5765 = vmatprep.mubr.f32.mxu0 0.0
  %5766 = vmatmul.mubr.f32.gmra.mrb[0].mxu0 %v5026
  %v5767 = vpop.f32.mrb[0].mxu0
  %v5768 = vadd.f32 %v5084, %v5767
  %v5769 = vpop.f32.mrb[0].mxu0
  %5770 = vmatprep.mubr.f32.mxu0 0.0
  %5771 = vmatmul.mubr.f32.gmra.mrb[0].mxu0 %v5027
  %v5772 = vpop.f32.mrb[0].mxu0
  %v5773 = vadd.f32 %v5084, %v5772
  %v5774 = vpop.f32.mrb[0].mxu0
  %5775 = vmatprep.mubr.f32.mxu0 0.0
  %5776 = vmatmul.mubr.f32.gmra.mrb[0].mxu0 %v5028
  %v5777 = vpop.f32.mrb[0].mxu0
  %v5778 = vadd.f32 %v5084, %v5777
  %v5779 = vpop.f32.mrb[0].mxu0
  %5780 = vmatprep.mubr.f32.mxu0 0.0
  %5781 = vmatmul.mubr.f32.gmra.mrb[0].mxu0 %v5029
  %v5782 = vpop.f32.mrb[0].mxu0
  %v5783 = vadd.f32 %v5084, %v5782
  %v5784 = vpop.f32.mrb[0].mxu0
  %5785 = vmatprep.mubr.f32.mxu0 0.0
  %5786 = vmatmul.mubr.f32.gmra.mrb[0].mxu0 %v5030
  %v5787 = vpop.f32.mrb[0].mxu0
  %v5788 = vadd.f32 %v5084, %v5787
  %v5789 = vpop.f32.mrb[0].mxu0
  %5790 = vmatprep.mubr.f32.mxu0 0.0
  %5791 = vmatmul.mubr.f32.gmra.mrb[0].mxu0 %v5031
  %v5792 = vpop.f32.mrb[0].mxu0
  %v5793 = vadd.f32 %v5084, %v5792
  %v5794 = vpop.f32.mrb[0].mxu0
  %5795 = vmatprep.mubr.f32.mxu0 0.0
  %5796 = vmatmul.mubr.f32.gmra.mrb[0].mxu0 %v5032
  %v5797 = vpop.f32.mrb[0].mxu0
  %v5798 = vadd.f32 %v5084, %v5797
  %v5799 = vpop.f32.mrb[0].mxu0
  %5800 = vmatprep.mubr.f32.mxu0 0.0
  %5801 = vmatmul.mubr.f32.gmra.mrb[0].mxu0 %v5033
  %v5802 = vpop.f32.mrb[0].mxu0
  %v5803 = vadd.f32 %v5084, %v5802
  %v5804 = vpop.f32.mrb[0].mxu0
  %5805 = vmatprep.mubr.f32.mxu0 0.0
  %5806 = vmatmul.mubr.f32.gmra.mrb[0].mxu0 %v5034
  %v5807 = vpop.f32.mrb[0].mxu0
  %v5808 = vadd.f32 %v5084, %v5807
  %v5809 = vpop.f32.mrb[0].mxu0
  %5810 = vmatprep.mubr.f32.mxu0 0.0
  %5811 = vmatmul.mubr.f32.gmra.mrb[0].mxu0 %v5035
  %v5812 = vpop.f32.mrb[0].mxu0
  %v5813 = vadd.f32 %v5084, %v5812
  %v5814 = vpop.f32.mrb[0].mxu0
  %5815 = vmatprep.mubr.f32.mxu0 0.0
  %5816 = vmatmul.mubr.f32.gmra.mrb[0].mxu0 %v5036
  %v5817 = vpop.f32.mrb[0].mxu0
  %v5818 = vadd.f32 %v5084, %v5817
  %v5819 = vpop.f32.mrb[0].mxu0
  %5820 = vmatprep.mubr.f32.mxu0 0.0
  %5821 = vmatmul.mubr.f32.gmra.mrb[0].mxu0 %v5037
  %v5822 = vpop.f32.mrb[0].mxu0
  %v5823 = vadd.f32 %v5084, %v5822
  %v5824 = vpop.f32.mrb[0].mxu0
  %5825 = vmatprep.mubr.f32.mxu0 0.0
  %5826 = vmatmul.mubr.f32.gmra.mrb[0].mxu0 %v5038
  %v5827 = vpop.f32.mrb[0].mxu0
  %v5828 = vadd.f32 %v5084, %v5827
  %v5829 = vpop.f32.mrb[0].mxu0
  %5830 = vmatprep.mubr.f32.mxu0 0.0
  %5831 = vmatmul.mubr.f32.gmra.mrb[0].mxu0 %v5039
  %v5832 = vpop.f32.mrb[0].mxu0
  %v5833 = vadd.f32 %v5084, %v5832
  %v5834 = vpop.f32.mrb[0].mxu0
  %5835 = vmatprep.mubr.f32.mxu0 0.0
  %5836 = vmatmul.mubr.f32.gmra.mrb[0].mxu0 %v5040
  %v5837 = vpop.f32.mrb[0].mxu0
  %v5838 = vadd.f32 %v5084, %v5837
  %v5839 = vpop.f32.mrb[0].mxu0
  %5840 = vmatprep.mubr.f32.mxu0 0.0
  %5841 = vmatmul.mubr.f32.gmra.mrb[0].mxu0 %v5041
  %v5842 = vpop.f32.mrb[0].mxu0
  %v5843 = vadd.f32 %v5084, %v5842
  %v5844 = vpop.f32.mrb[0].mxu0
  %5845 = vmatprep.mubr.f32.mxu0 0.0
  %5846 = vmatmul.mubr.f32.gmra.mrb[0].mxu0 %v5042
  %v5847 = vpop.f32.mrb[0].mxu0
  %v5848 = vadd.f32 %v5084, %v5847
  %v5849 = vpop.f32.mrb[0].mxu0
  %5850 = vmatprep.mubr.f32.mxu0 0.0
  %5851 = vmatmul.mubr.f32.gmra.mrb[0].mxu0 %v5043
  %v5852 = vpop.f32.mrb[0].mxu0
  %v5853 = vadd.f32 %v5084, %v5852
  %v5854 = vpop.f32.mrb[0].mxu0
  %5855 = vmatprep.mubr.f32.mxu0 0.0
  %5856 = vmatmul.mubr.f32.gmra.mrb[0].mxu0 %v5044
  %v5857 = vpop.f32.mrb[0].mxu0
  %v5858 = vadd.f32 %v5084, %v5857
  %v5859 = vpop.f32.mrb[0].mxu0
  %5860 = vmatprep.mubr.f32.mxu0 0.0
  %5861 = vmatmul.mubr.f32.gmra.mrb[0].mxu0 %v5045
  %v5862 = vpop.f32.mrb[0].mxu0
  %v5863 = vadd.f32 %v5084, %v5862
  %v5864 = vpop.f32.mrb[0].mxu0
  %5865 = vmatprep.mubr.f32.mxu0 0.0
  %5866 = vmatmul.mubr.f32.gmra.mrb[0].mxu0 %v5046
  %v5867 = vpop.f32.mrb[0].mxu0
  %v5868 = vadd.f32 %v5084, %v5867
  %v5869 = vpop.f32.mrb[0].mxu0
  %5870 = vmatprep.mubr.f32.mxu0 0.0
  %5871 = vmatmul.mubr.f32.gmra.mrb[0].mxu0 %v5047
  %v5872 = vpop.f32.mrb[0].mxu0
  %v5873 = vadd.f32 %v5084, %v5872
  %v5874 = vpop.f32.mrb[0].mxu0
  %5875 = vmatprep.mubr.f32.mxu0 0.0
  %5876 = vmatmul.mubr.f32.gmra.mrb[0].mxu0 %v5048
  %v5877 = vpop.f32.mrb[0].mxu0
  %v5878 = vadd.f32 %v5084, %v5877
  %v5879 = vpop.f32.mrb[0].mxu0
  %5880 = vmatprep.mubr.f32.mxu0 0.0
  %5881 = vmatmul.mubr.f32.gmra.mrb[0].mxu0 %v5049
  %v5882 = vpop.f32.mrb[0].mxu0
  %v5883 = vadd.f32 %v5084, %v5882
  %v5884 = vpop.f32.mrb[0].mxu0
  %5885 = vmatprep.mubr.f32.mxu0 0.0
  %5886 = vmatmul.mubr.f32.gmra.mrb[0].mxu0 %v5050
  %v5887 = vpop.f32.mrb[0].mxu0
  %v5888 = vadd.f32 %v5084, %v5887
  %v5889 = vpop.f32.mrb[0].mxu0
  %5890 = vmatprep.mubr.f32.mxu0 0.0
  %5891 = vmatmul.mubr.f32.gmra.mrb[0].mxu0 %v5051
  %v5892 = vpop.f32.mrb[0].mxu0
  %v5893 = vadd.f32 %v5084, %v5892
  %v5894 = vpop.f32.mrb[0].mxu0
  %5895 = vmatprep.mubr.f32.mxu0 0.0
  %5896 = vmatmul.mubr.f32.gmra.mrb[0].mxu0 %v5052
  %v5897 = vpop.f32.mrb[0].mxu0
  %v5898 = vadd.f32 %v5084, %v5897
  %v5899 = vpop.f32.mrb[0].mxu0
  %5900 = vmatprep.mubr.f32.mxu0 0.0
  %5901 = vmatmul.mubr.f32.gmra.mrb[0].mxu0 %v5053
  %v5902 = vpop.f32.mrb[0].mxu0
  %v5903 = vadd.f32 %v5084, %v5902
  %v5904 = vpop.f32.mrb[0].mxu0
  %5905 = vmatprep.mubr.f32.mxu0 0.0
  %5906 = vmatmul.mubr.f32.gmra.mrb[0].mxu0 %v5054
  %v5907 = vpop.f32.mrb[0].mxu0
  %v5908 = vadd.f32 %v5084, %v5907
  %v5909 = vpop.f32.mrb[0].mxu0
  %5910 = vmatprep.mubr.f32.mxu0 0.0
  %5911 = vmatmul.mubr.f32.gmra.mrb[0].mxu0 %v5055
  %v5912 = vpop.f32.mrb[0].mxu0
  %v5913 = vadd.f32 %v5084, %v5912
  %v5914 = vpop.f32.mrb[0].mxu0
  %5915 = vmatprep.mubr.f32.mxu0 0.0
  %5916 = vmatmul.mubr.f32.gmra.mrb[0].mxu0 %v5056
  %v5917 = vpop.f32.mrb[0].mxu0
  %v5918 = vadd.f32 %v5084, %v5917
  %v5919 = vpop.f32.mrb[0].mxu0
  %5920 = vmatprep.mubr.f32.mxu0 0.0
  %5921 = vmatmul.mubr.f32.gmra.mrb[0].mxu0 %v5057
  %v5922 = vpop.f32.mrb[0].mxu0
  %v5923 = vadd.f32 %v5084, %v5922
  %v5924 = vpop.f32.mrb[0].mxu0
  %5925 = vmatprep.mubr.f32.mxu0 0.0
  %5926 = vmatmul.mubr.f32.gmra.mrb[0].mxu0 %v5058
  %v5927 = vpop.f32.mrb[0].mxu0
  %v5928 = vadd.f32 %v5084, %v5927
  %v5929 = vpop.f32.mrb[0].mxu0
  %5930 = vmatprep.mubr.f32.mxu0 0.0
  %5931 = vmatmul.mubr.f32.gmra.mrb[0].mxu0 %v5059
  %v5932 = vpop.f32.mrb[0].mxu0
  %v5933 = vadd.f32 %v5084, %v5932
  %v5934 = vpop.f32.mrb[0].mxu0
  %5935 = vmatprep.mubr.f32.mxu0 0.0
  %5936 = vmatmul.mubr.f32.gmra.mrb[0].mxu0 %v5060
  %v5937 = vpop.f32.mrb[0].mxu0
  %v5938 = vadd.f32 %v5084, %v5937
  %v5939 = vpop.f32.mrb[0].mxu0
  %5940 = vmatprep.mubr.f32.mxu0 0.0
  %5941 = vmatmul.mubr.f32.gmra.mrb[0].mxu0 %v5061
  %v5942 = vpop.f32.mrb[0].mxu0
  %v5943 = vadd.f32 %v5084, %v5942
  %v5944 = vpop.f32.mrb[0].mxu0
  %5945 = vmatprep.mubr.f32.mxu0 0.0
  %5946 = vmatmul.mubr.f32.gmra.mrb[0].mxu0 %v5062
  %v5947 = vpop.f32.mrb[0].mxu0
  %v5948 = vadd.f32 %v5084, %v5947
  %v5949 = vpop.f32.mrb[0].mxu0
  %5950 = vdwg.mxu0
  %v5951 = vmax.f32 %v5153, 0.0
  %v5952 = vmax.f32 %v5158, 0.0
  %v5953 = vmax.f32 %v5163, 0.0
  %v5954 = vmax.f32 %v5168, 0.0
  %v5955 = vmax.f32 %v5173, 0.0
  %v5956 = vmax.f32 %v5178, 0.0
  %v5957 = vmax.f32 %v5183, 0.0
  %v5958 = vmax.f32 %v5188, 0.0
  %v5959 = vmax.f32 %v5193, 0.0
  %v5960 = vmax.f32 %v5198, 0.0
  %v5961 = vmax.f32 %v5203, 0.0
  %v5962 = vmax.f32 %v5208, 0.0
  %v5963 = vmax.f32 %v5213, 0.0
  %v5964 = vmax.f32 %v5218, 0.0
  %v5965 = vmax.f32 %v5223, 0.0
  %v5966 = vmax.f32 %v5228, 0.0
  %v5967 = vmax.f32 %v5233, 0.0
  %v5968 = vmax.f32 %v5238, 0.0
  %v5969 = vmax.f32 %v5243, 0.0
  %v5970 = vmax.f32 %v5248, 0.0
  %v5971 = vmax.f32 %v5253, 0.0
  %v5972 = vmax.f32 %v5258, 0.0
  %v5973 = vmax.f32 %v5263, 0.0
  %v5974 = vmax.f32 %v5268, 0.0
  %v5975 = vmax.f32 %v5273, 0.0
  %v5976 = vmax.f32 %v5278, 0.0
  %v5977 = vmax.f32 %v5283, 0.0
  %v5978 = vmax.f32 %v5288, 0.0
  %v5979 = vmax.f32 %v5293, 0.0
  %v5980 = vmax.f32 %v5298, 0.0
  %v5981 = vmax.f32 %v5303, 0.0
  %v5982 = vmax.f32 %v5308, 0.0
  %v5983 = vmax.f32 %v5313, 0.0
  %v5984 = vmax.f32 %v5318, 0.0
  %v5985 = vmax.f32 %v5323, 0.0
  %v5986 = vmax.f32 %v5328, 0.0
  %v5987 = vmax.f32 %v5333, 0.0
  %v5988 = vmax.f32 %v5338, 0.0
  %v5989 = vmax.f32 %v5343, 0.0
  %v5990 = vmax.f32 %v5348, 0.0
  %v5991 = vmax.f32 %v5353, 0.0
  %v5992 = vmax.f32 %v5358, 0.0
  %v5993 = vmax.f32 %v5363, 0.0
  %v5994 = vmax.f32 %v5368, 0.0
  %v5995 = vmax.f32 %v5373, 0.0
  %v5996 = vmax.f32 %v5378, 0.0
  %v5997 = vmax.f32 %v5383, 0.0
  %v5998 = vmax.f32 %v5388, 0.0
  %v5999 = vmax.f32 %v5393, 0.0
  %v6000 = vmax.f32 %v5398, 0.0
  %v6001 = vmax.f32 %v5403, 0.0
  %v6002 = vmax.f32 %v5408, 0.0
  %v6003 = vmax.f32 %v5413, 0.0
  %v6004 = vmax.f32 %v5418, 0.0
  %v6005 = vmax.f32 %v5423, 0.0
  %v6006 = vmax.f32 %v5428, 0.0
  %v6007 = vmax.f32 %v5433, 0.0
  %v6008 = vmax.f32 %v5438, 0.0
  %v6009 = vmax.f32 %v5443, 0.0
  %v6010 = vmax.f32 %v5448, 0.0
  %v6011 = vmax.f32 %v5453, 0.0
  %v6012 = vmax.f32 %v5458, 0.0
  %v6013 = vmax.f32 %v5463, 0.0
  %v6014 = vmax.f32 %v5468, 0.0
  %v6015 = vmax.f32 %v5473, 0.0
  %v6016 = vmax.f32 %v5478, 0.0
  %v6017 = vmax.f32 %v5483, 0.0
  %v6018 = vmax.f32 %v5488, 0.0
  %v6019 = vmax.f32 %v5493, 0.0
  %v6020 = vmax.f32 %v5498, 0.0
  %v6021 = vmax.f32 %v5503, 0.0
  %v6022 = vmax.f32 %v5508, 0.0
  %v6023 = vmax.f32 %v5513, 0.0
  %v6024 = vmax.f32 %v5518, 0.0
  %v6025 = vmax.f32 %v5523, 0.0
  %v6026 = vmax.f32 %v5528, 0.0
  %v6027 = vmax.f32 %v5533, 0.0
  %v6028 = vmax.f32 %v5538, 0.0
  %v6029 = vmax.f32 %v5543, 0.0
  %v6030 = vmax.f32 %v5548, 0.0
  %v6031 = vmax.f32 %v5553, 0.0
  %v6032 = vmax.f32 %v5558, 0.0
  %v6033 = vmax.f32 %v5563, 0.0
  %v6034 = vmax.f32 %v5568, 0.0
  %v6035 = vmax.f32 %v5573, 0.0
  %v6036 = vmax.f32 %v5578, 0.0
  %v6037 = vmax.f32 %v5583, 0.0
  %v6038 = vmax.f32 %v5588, 0.0
  %v6039 = vmax.f32 %v5593, 0.0
  %v6040 = vmax.f32 %v5598, 0.0
  %v6041 = vmax.f32 %v5603, 0.0
  %v6042 = vmax.f32 %v5608, 0.0
  %v6043 = vmax.f32 %v5613, 0.0
  %v6044 = vmax.f32 %v5618, 0.0
  %v6045 = vmax.f32 %v5623, 0.0
  %v6046 = vmax.f32 %v5628, 0.0
  %v6047 = vmax.f32 %v5633, 0.0
  %v6048 = vmax.f32 %v5638, 0.0
  %v6049 = vmax.f32 %v5643, 0.0
  %v6050 = vmax.f32 %v5648, 0.0
  %v6051 = vmax.f32 %v5653, 0.0
  %v6052 = vmax.f32 %v5658, 0.0
  %v6053 = vmax.f32 %v5663, 0.0
  %v6054 = vmax.f32 %v5668, 0.0
  %v6055 = vmax.f32 %v5673, 0.0
  %v6056 = vmax.f32 %v5678, 0.0
  %v6057 = vmax.f32 %v5683, 0.0
  %v6058 = vmax.f32 %v5688, 0.0
  %v6059 = vmax.f32 %v5693, 0.0
  %v6060 = vmax.f32 %v5698, 0.0
  %v6061 = vmax.f32 %v5703, 0.0
  %v6062 = vmax.f32 %v5708, 0.0
  %v6063 = vmax.f32 %v5713, 0.0
  %v6064 = vmax.f32 %v5718, 0.0
  %v6065 = vmax.f32 %v5723, 0.0
  %v6066 = vmax.f32 %v5728, 0.0
  %v6067 = vmax.f32 %v5733, 0.0
  %v6068 = vmax.f32 %v5738, 0.0
  %v6069 = vmax.f32 %v5743, 0.0
  %v6070 = vmax.f32 %v5748, 0.0
  %v6071 = vmax.f32 %v5753, 0.0
  %v6072 = vmax.f32 %v5758, 0.0
  %v6073 = vmax.f32 %v5763, 0.0
  %v6074 = vmax.f32 %v5768, 0.0
  %v6075 = vmax.f32 %v5773, 0.0
  %v6076 = vmax.f32 %v5778, 0.0
  %v6077 = vmax.f32 %v5783, 0.0
  %v6078 = vmax.f32 %v5788, 0.0
  %v6079 = vmax.f32 %v5793, 0.0
  %v6080 = vmax.f32 %v5798, 0.0
  %v6081 = vmax.f32 %v5803, 0.0
  %v6082 = vmax.f32 %v5808, 0.0
  %v6083 = vmax.f32 %v5813, 0.0
  %v6084 = vmax.f32 %v5818, 0.0
  %v6085 = vmax.f32 %v5823, 0.0
  %v6086 = vmax.f32 %v5828, 0.0
  %v6087 = vmax.f32 %v5833, 0.0
  %v6088 = vmax.f32 %v5838, 0.0
  %v6089 = vmax.f32 %v5843, 0.0
  %v6090 = vmax.f32 %v5848, 0.0
  %v6091 = vmax.f32 %v5853, 0.0
  %v6092 = vmax.f32 %v5858, 0.0
  %v6093 = vmax.f32 %v5863, 0.0
  %v6094 = vmax.f32 %v5868, 0.0
  %v6095 = vmax.f32 %v5873, 0.0
  %v6096 = vmax.f32 %v5878, 0.0
  %v6097 = vmax.f32 %v5883, 0.0
  %v6098 = vmax.f32 %v5888, 0.0
  %v6099 = vmax.f32 %v5893, 0.0
  %v6100 = vmax.f32 %v5898, 0.0
  %v6101 = vmax.f32 %v5903, 0.0
  %v6102 = vmax.f32 %v5908, 0.0
  %v6103 = vmax.f32 %v5913, 0.0
  %v6104 = vmax.f32 %v5918, 0.0
  %v6105 = vmax.f32 %v5923, 0.0
  %v6106 = vmax.f32 %v5928, 0.0
  %v6107 = vmax.f32 %v5933, 0.0
  %v6108 = vmax.f32 %v5938, 0.0
  %v6109 = vmax.f32 %v5943, 0.0
  %v6110 = vmax.f32 %v5948, 0.0
  %v6111 = vadd.f32 %v5951, %v5967
  %v6112 = vadd.f32 %v5952, %v5968
  %v6113 = vadd.f32 %v5953, %v5969
  %v6114 = vadd.f32 %v5954, %v5970
  %v6115 = vadd.f32 %v5955, %v5971
  %v6116 = vadd.f32 %v5956, %v5972
  %v6117 = vadd.f32 %v5957, %v5973
  %v6118 = vadd.f32 %v5958, %v5974
  %v6119 = vadd.f32 %v5959, %v5975
  %v6120 = vadd.f32 %v5960, %v5976
  %v6121 = vadd.f32 %v5961, %v5977
  %v6122 = vadd.f32 %v5962, %v5978
  %v6123 = vadd.f32 %v5963, %v5979
  %v6124 = vadd.f32 %v5964, %v5980
  %v6125 = vadd.f32 %v5965, %v5981
  %v6126 = vadd.f32 %v5966, %v5982
  %v6127 = vadd.f32 %v6031, %v6047
  %v6128 = vadd.f32 %v6032, %v6048
  %v6129 = vadd.f32 %v6033, %v6049
  %v6130 = vadd.f32 %v6034, %v6050
  %v6131 = vadd.f32 %v6035, %v6051
  %v6132 = vadd.f32 %v6036, %v6052
  %v6133 = vadd.f32 %v6037, %v6053
  %v6134 = vadd.f32 %v6038, %v6054
  %v6135 = vadd.f32 %v6039, %v6055
  %v6136 = vadd.f32 %v6040, %v6056
  %v6137 = vadd.f32 %v6041, %v6057
  %v6138 = vadd.f32 %v6042, %v6058
  %v6139 = vadd.f32 %v6043, %v6059
  %v6140 = vadd.f32 %v6044, %v6060
  %v6141 = vadd.f32 %v6045, %v6061
  %v6142 = vadd.f32 %v6046, %v6062
  %v6143 = vadd.f32 %v6111, %v5983
  %v6144 = vadd.f32 %v6112, %v5984
  %v6145 = vadd.f32 %v6113, %v5985
  %v6146 = vadd.f32 %v6114, %v5986
  %v6147 = vadd.f32 %v6115, %v5987
  %v6148 = vadd.f32 %v6116, %v5988
  %v6149 = vadd.f32 %v6117, %v5989
  %v6150 = vadd.f32 %v6118, %v5990
  %v6151 = vadd.f32 %v6119, %v5991
  %v6152 = vadd.f32 %v6120, %v5992
  %v6153 = vadd.f32 %v6121, %v5993
  %v6154 = vadd.f32 %v6122, %v5994
  %v6155 = vadd.f32 %v6123, %v5995
  %v6156 = vadd.f32 %v6124, %v5996
  %v6157 = vadd.f32 %v6125, %v5997
  %v6158 = vadd.f32 %v6126, %v5998
  %v6159 = vadd.f32 %v6127, %v6063
  %v6160 = vadd.f32 %v6128, %v6064
  %v6161 = vadd.f32 %v6129, %v6065
  %v6162 = vadd.f32 %v6130, %v6066
  %v6163 = vadd.f32 %v6131, %v6067
  %v6164 = vadd.f32 %v6132, %v6068
  %v6165 = vadd.f32 %v6133, %v6069
  %v6166 = vadd.f32 %v6134, %v6070
  %v6167 = vadd.f32 %v6135, %v6071
  %v6168 = vadd.f32 %v6136, %v6072
  %v6169 = vadd.f32 %v6137, %v6073
  %v6170 = vadd.f32 %v6138, %v6074
  %v6171 = vadd.f32 %v6139, %v6075
  %v6172 = vadd.f32 %v6140, %v6076
  %v6173 = vadd.f32 %v6141, %v6077
  %v6174 = vadd.f32 %v6142, %v6078
  %v6175 = vadd.f32 %v6143, %v5999
  %v6176 = vadd.f32 %v6144, %v6000
  %v6177 = vadd.f32 %v6145, %v6001
  %v6178 = vadd.f32 %v6146, %v6002
  %v6179 = vadd.f32 %v6147, %v6003
  %v6180 = vadd.f32 %v6148, %v6004
  %v6181 = vadd.f32 %v6149, %v6005
  %v6182 = vadd.f32 %v6150, %v6006
  %v6183 = vadd.f32 %v6151, %v6007
  %v6184 = vadd.f32 %v6152, %v6008
  %v6185 = vadd.f32 %v6153, %v6009
  %v6186 = vadd.f32 %v6154, %v6010
  %v6187 = vadd.f32 %v6155, %v6011
  %v6188 = vadd.f32 %v6156, %v6012
  %v6189 = vadd.f32 %v6157, %v6013
  %v6190 = vadd.f32 %v6158, %v6014
  %v6191 = vadd.f32 %v6159, %v6079
  %v6192 = vadd.f32 %v6160, %v6080
  %v6193 = vadd.f32 %v6161, %v6081
  %v6194 = vadd.f32 %v6162, %v6082
  %v6195 = vadd.f32 %v6163, %v6083
  %v6196 = vadd.f32 %v6164, %v6084
  %v6197 = vadd.f32 %v6165, %v6085
  %v6198 = vadd.f32 %v6166, %v6086
  %v6199 = vadd.f32 %v6167, %v6087
  %v6200 = vadd.f32 %v6168, %v6088
  %v6201 = vadd.f32 %v6169, %v6089
  %v6202 = vadd.f32 %v6170, %v6090
  %v6203 = vadd.f32 %v6171, %v6091
  %v6204 = vadd.f32 %v6172, %v6092
  %v6205 = vadd.f32 %v6173, %v6093
  %v6206 = vadd.f32 %v6174, %v6094
  %v6207 = vadd.f32 %v6175, %v6015
  %v6208 = vadd.f32 %v6176, %v6016
  %v6209 = vadd.f32 %v6177, %v6017
  %v6210 = vadd.f32 %v6178, %v6018
  %v6211 = vadd.f32 %v6179, %v6019
  %v6212 = vadd.f32 %v6180, %v6020
  %v6213 = vadd.f32 %v6181, %v6021
  %v6214 = vadd.f32 %v6182, %v6022
  %v6215 = vadd.f32 %v6183, %v6023
  %v6216 = vadd.f32 %v6184, %v6024
  %v6217 = vadd.f32 %v6185, %v6025
  %v6218 = vadd.f32 %v6186, %v6026
  %v6219 = vadd.f32 %v6187, %v6027
  %v6220 = vadd.f32 %v6188, %v6028
  %v6221 = vadd.f32 %v6189, %v6029
  %v6222 = vadd.f32 %v6190, %v6030
  %v6223 = vadd.f32 %v6191, %v6095
  %v6224 = vadd.f32 %v6192, %v6096
  %v6225 = vadd.f32 %v6193, %v6097
  %v6226 = vadd.f32 %v6194, %v6098
  %v6227 = vadd.f32 %v6195, %v6099
  %v6228 = vadd.f32 %v6196, %v6100
  %v6229 = vadd.f32 %v6197, %v6101
  %v6230 = vadd.f32 %v6198, %v6102
  %v6231 = vadd.f32 %v6199, %v6103
  %v6232 = vadd.f32 %v6200, %v6104
  %v6233 = vadd.f32 %v6201, %v6105
  %v6234 = vadd.f32 %v6202, %v6106
  %v6235 = vadd.f32 %v6203, %v6107
  %v6236 = vadd.f32 %v6204, %v6108
  %v6237 = vadd.f32 %v6205, %v6109
  %v6238 = vadd.f32 %v6206, %v6110
  %s6239 = sld [smem:[#allocation3]]
  %v6240 = vld [vmem:[%s11] sm:$0xff]
  %v6241 = vld [vmem:[%s11 + $0x8] sm:$0xff]
  %v6242 = vld [vmem:[%s11 + $0x10] sm:$0xff]
  %v6243 = vld [vmem:[%s11 + $0x18] sm:$0xff]
  %v6244 = vld [vmem:[%s11 + $0x20] sm:$0xff]
  %v6245 = vld [vmem:[%s11 + $0x28] sm:$0xff]
  %v6246 = vld [vmem:[%s11 + $0x30] sm:$0xff]
  %v6247 = vld [vmem:[%s11 + $0x38] sm:$0xff]
  %v6248 = vld [vmem:[%s11 + $0x40] sm:$0xff]
  %v6249 = vld [vmem:[%s11 + $0x48] sm:$0xff]
  %v6250 = vld [vmem:[%s11 + $0x50] sm:$0xff]
  %v6251 = vld [vmem:[%s11 + $0x58] sm:$0xff]
  %v6252 = vld [vmem:[%s11 + $0x60] sm:$0xff]
  %v6253 = vld [vmem:[%s11 + $0x68] sm:$0xff]
  %v6254 = vld [vmem:[%s11 + $0x70] sm:$0xff]
  %v6255 = vld [vmem:[%s11 + $0x78] sm:$0xff]
  %s6256 = smul.f32 %s6239, 5.0
  %v6257 = vstv %s6256
  %6258 = vmatprep.subr.mxu0 0.0
  %6259 = vmatpush1.msra.mxu0 %v6240
  %6260 = vmatprep.subr.mxu0 0.0
  %6261 = vmatpush1.msra.mxu0 %v6241
  %6262 = vmatprep.subr.mxu0 0.0
  %6263 = vmatpush1.msra.mxu0 %v6242
  %6264 = vmatprep.subr.mxu0 0.0
  %6265 = vmatpush1.msra.mxu0 %v6243
  %6266 = vmatprep.subr.mxu0 0.0
  %6267 = vmatpush1.msra.mxu0 %v6244
  %6268 = vmatprep.subr.mxu0 0.0
  %6269 = vmatpush1.msra.mxu0 %v6245
  %6270 = vmatprep.subr.mxu0 0.0
  %6271 = vmatpush1.msra.mxu0 %v6246
  %6272 = vmatprep.subr.mxu0 0.0
  %6273 = vmatpush1.msra.mxu0 %v6247
  %6274 = vmatprep.subr.mxu0 0.0
  %6275 = vmatpush1.msra.mxu0 %v6248
  %6276 = vmatprep.subr.mxu0 0.0
  %6277 = vmatpush1.msra.mxu0 %v6249
  %6278 = vmatprep.subr.mxu0 0.0
  %6279 = vmatpush1.msra.mxu0 %v6250
  %6280 = vmatprep.subr.mxu0 0.0
  %6281 = vmatpush1.msra.mxu0 %v6251
  %6282 = vmatprep.subr.mxu0 0.0
  %6283 = vmatpush1.msra.mxu0 %v6252
  %6284 = vmatprep.subr.mxu0 0.0
  %6285 = vmatpush1.msra.mxu0 %v6253
  %6286 = vmatprep.subr.mxu0 0.0
  %6287 = vmatpush1.msra.mxu0 %v6254
  %6288 = vmatprep.subr.mxu0 0.0
  %6289 = vmatpush1.msra.mxu0 %v6255
  %6290 = vmatprep.subr.mxu0 0.0
  %6291 = vmatpush1.msra.mxu0 0.0
  %6292 = vmatprep.subr.mxu0 0.0
  %6293 = vmatpush1.msra.mxu0 0.0
  %6294 = vmatprep.subr.mxu0 0.0
  %6295 = vmatpush1.msra.mxu0 0.0
  %6296 = vmatprep.subr.mxu0 0.0
  %6297 = vmatpush1.msra.mxu0 0.0
  %6298 = vmatprep.subr.mxu0 0.0
  %6299 = vmatpush1.msra.mxu0 0.0
  %6300 = vmatprep.subr.mxu0 0.0
  %6301 = vmatpush1.msra.mxu0 0.0
  %6302 = vmatprep.subr.mxu0 0.0
  %6303 = vmatpush1.msra.mxu0 0.0
  %6304 = vmatprep.subr.mxu0 0.0
  %6305 = vmatpush1.msra.mxu0 0.0
  %6306 = vmatprep.subr.mxu0 0.0
  %6307 = vmatpush1.msra.mxu0 0.0
  %6308 = vmatprep.subr.mxu0 0.0
  %6309 = vmatpush1.msra.mxu0 0.0
  %6310 = vmatprep.subr.mxu0 0.0
  %6311 = vmatpush1.msra.mxu0 0.0
  %6312 = vmatprep.subr.mxu0 0.0
  %6313 = vmatpush1.msra.mxu0 0.0
  %6314 = vmatprep.subr.mxu0 0.0
  %6315 = vmatpush1.msra.mxu0 0.0
  %6316 = vmatprep.subr.mxu0 0.0
  %6317 = vmatpush1.msra.mxu0 0.0
  %6318 = vmatprep.subr.mxu0 0.0
  %6319 = vmatpush1.msra.mxu0 0.0
  %6320 = vmatprep.subr.mxu0 0.0
  %6321 = vmatpush1.msra.mxu0 0.0
  %6322 = vmatprep.mubr.f32.mxu0 0.0
  %6323 = vmatmul.mubr.f32.gmra.mrb[0].mxu0 %v6207
  %v6324 = vpop.f32.mrb[0].mxu0
  %v6325 = vadd.f32 %v6257, %v6324
  %v6326 = vpop.f32.mrb[0].mxu0
  %6327 = vmatprep.mubr.f32.mxu0 0.0
  %6328 = vmatmul.mubr.f32.gmra.mrb[0].mxu0 %v6208
  %v6329 = vpop.f32.mrb[0].mxu0
  %v6330 = vadd.f32 %v6257, %v6329
  %v6331 = vpop.f32.mrb[0].mxu0
  %6332 = vmatprep.mubr.f32.mxu0 0.0
  %6333 = vmatmul.mubr.f32.gmra.mrb[0].mxu0 %v6209
  %v6334 = vpop.f32.mrb[0].mxu0
  %v6335 = vadd.f32 %v6257, %v6334
  %v6336 = vpop.f32.mrb[0].mxu0
  %6337 = vmatprep.mubr.f32.mxu0 0.0
  %6338 = vmatmul.mubr.f32.gmra.mrb[0].mxu0 %v6210
  %v6339 = vpop.f32.mrb[0].mxu0
  %v6340 = vadd.f32 %v6257, %v6339
  %v6341 = vpop.f32.mrb[0].mxu0
  %6342 = vmatprep.mubr.f32.mxu0 0.0
  %6343 = vmatmul.mubr.f32.gmra.mrb[0].mxu0 %v6211
  %v6344 = vpop.f32.mrb[0].mxu0
  %v6345 = vadd.f32 %v6257, %v6344
  %v6346 = vpop.f32.mrb[0].mxu0
  %6347 = vmatprep.mubr.f32.mxu0 0.0
  %6348 = vmatmul.mubr.f32.gmra.mrb[0].mxu0 %v6212
  %v6349 = vpop.f32.mrb[0].mxu0
  %v6350 = vadd.f32 %v6257, %v6349
  %v6351 = vpop.f32.mrb[0].mxu0
  %6352 = vmatprep.mubr.f32.mxu0 0.0
  %6353 = vmatmul.mubr.f32.gmra.mrb[0].mxu0 %v6213
  %v6354 = vpop.f32.mrb[0].mxu0
  %v6355 = vadd.f32 %v6257, %v6354
  %v6356 = vpop.f32.mrb[0].mxu0
  %6357 = vmatprep.mubr.f32.mxu0 0.0
  %6358 = vmatmul.mubr.f32.gmra.mrb[0].mxu0 %v6214
  %v6359 = vpop.f32.mrb[0].mxu0
  %v6360 = vadd.f32 %v6257, %v6359
  %v6361 = vpop.f32.mrb[0].mxu0
  %6362 = vmatprep.mubr.f32.mxu0 0.0
  %6363 = vmatmul.mubr.f32.gmra.mrb[0].mxu0 %v6215
  %v6364 = vpop.f32.mrb[0].mxu0
  %v6365 = vadd.f32 %v6257, %v6364
  %v6366 = vpop.f32.mrb[0].mxu0
  %6367 = vmatprep.mubr.f32.mxu0 0.0
  %6368 = vmatmul.mubr.f32.gmra.mrb[0].mxu0 %v6216
  %v6369 = vpop.f32.mrb[0].mxu0
  %v6370 = vadd.f32 %v6257, %v6369
  %v6371 = vpop.f32.mrb[0].mxu0
  %6372 = vmatprep.mubr.f32.mxu0 0.0
  %6373 = vmatmul.mubr.f32.gmra.mrb[0].mxu0 %v6217
  %v6374 = vpop.f32.mrb[0].mxu0
  %v6375 = vadd.f32 %v6257, %v6374
  %v6376 = vpop.f32.mrb[0].mxu0
  %6377 = vmatprep.mubr.f32.mxu0 0.0
  %6378 = vmatmul.mubr.f32.gmra.mrb[0].mxu0 %v6218
  %v6379 = vpop.f32.mrb[0].mxu0
  %v6380 = vadd.f32 %v6257, %v6379
  %v6381 = vpop.f32.mrb[0].mxu0
  %6382 = vmatprep.mubr.f32.mxu0 0.0
  %6383 = vmatmul.mubr.f32.gmra.mrb[0].mxu0 %v6219
  %v6384 = vpop.f32.mrb[0].mxu0
  %v6385 = vadd.f32 %v6257, %v6384
  %v6386 = vpop.f32.mrb[0].mxu0
  %6387 = vmatprep.mubr.f32.mxu0 0.0
  %6388 = vmatmul.mubr.f32.gmra.mrb[0].mxu0 %v6220
  %v6389 = vpop.f32.mrb[0].mxu0
  %v6390 = vadd.f32 %v6257, %v6389
  %v6391 = vpop.f32.mrb[0].mxu0
  %6392 = vmatprep.mubr.f32.mxu0 0.0
  %6393 = vmatmul.mubr.f32.gmra.mrb[0].mxu0 %v6221
  %v6394 = vpop.f32.mrb[0].mxu0
  %v6395 = vadd.f32 %v6257, %v6394
  %v6396 = vpop.f32.mrb[0].mxu0
  %6397 = vmatprep.mubr.f32.mxu0 0.0
  %6398 = vmatmul.mubr.f32.gmra.mrb[0].mxu0 %v6222
  %v6399 = vpop.f32.mrb[0].mxu0
  %v6400 = vadd.f32 %v6257, %v6399
  %v6401 = vpop.f32.mrb[0].mxu0
  %6402 = vdwg.mxu0
  %6403 = vmatprep.subr.mxu0 0.0
  %6404 = vmatpush1.msra.mxu0 %v6240
  %6405 = vmatprep.subr.mxu0 0.0
  %6406 = vmatpush1.msra.mxu0 %v6241
  %6407 = vmatprep.subr.mxu0 0.0
  %6408 = vmatpush1.msra.mxu0 %v6242
  %6409 = vmatprep.subr.mxu0 0.0
  %6410 = vmatpush1.msra.mxu0 %v6243
  %6411 = vmatprep.subr.mxu0 0.0
  %6412 = vmatpush1.msra.mxu0 %v6244
  %6413 = vmatprep.subr.mxu0 0.0
  %6414 = vmatpush1.msra.mxu0 %v6245
  %6415 = vmatprep.subr.mxu0 0.0
  %6416 = vmatpush1.msra.mxu0 %v6246
  %6417 = vmatprep.subr.mxu0 0.0
  %6418 = vmatpush1.msra.mxu0 %v6247
  %6419 = vmatprep.subr.mxu0 0.0
  %6420 = vmatpush1.msra.mxu0 %v6248
  %6421 = vmatprep.subr.mxu0 0.0
  %6422 = vmatpush1.msra.mxu0 %v6249
  %6423 = vmatprep.subr.mxu0 0.0
  %6424 = vmatpush1.msra.mxu0 %v6250
  %6425 = vmatprep.subr.mxu0 0.0
  %6426 = vmatpush1.msra.mxu0 %v6251
  %6427 = vmatprep.subr.mxu0 0.0
  %6428 = vmatpush1.msra.mxu0 %v6252
  %6429 = vmatprep.subr.mxu0 0.0
  %6430 = vmatpush1.msra.mxu0 %v6253
  %6431 = vmatprep.subr.mxu0 0.0
  %6432 = vmatpush1.msra.mxu0 %v6254
  %6433 = vmatprep.subr.mxu0 0.0
  %6434 = vmatpush1.msra.mxu0 %v6255
  %6435 = vmatprep.subr.mxu0 0.0
  %6436 = vmatpush1.msra.mxu0 0.0
  %6437 = vmatprep.subr.mxu0 0.0
  %6438 = vmatpush1.msra.mxu0 0.0
  %6439 = vmatprep.subr.mxu0 0.0
  %6440 = vmatpush1.msra.mxu0 0.0
  %6441 = vmatprep.subr.mxu0 0.0
  %6442 = vmatpush1.msra.mxu0 0.0
  %6443 = vmatprep.subr.mxu0 0.0
  %6444 = vmatpush1.msra.mxu0 0.0
  %6445 = vmatprep.subr.mxu0 0.0
  %6446 = vmatpush1.msra.mxu0 0.0
  %6447 = vmatprep.subr.mxu0 0.0
  %6448 = vmatpush1.msra.mxu0 0.0
  %6449 = vmatprep.subr.mxu0 0.0
  %6450 = vmatpush1.msra.mxu0 0.0
  %6451 = vmatprep.subr.mxu0 0.0
  %6452 = vmatpush1.msra.mxu0 0.0
  %6453 = vmatprep.subr.mxu0 0.0
  %6454 = vmatpush1.msra.mxu0 0.0
  %6455 = vmatprep.subr.mxu0 0.0
  %6456 = vmatpush1.msra.mxu0 0.0
  %6457 = vmatprep.subr.mxu0 0.0
  %6458 = vmatpush1.msra.mxu0 0.0
  %6459 = vmatprep.subr.mxu0 0.0
  %6460 = vmatpush1.msra.mxu0 0.0
  %6461 = vmatprep.subr.mxu0 0.0
  %6462 = vmatpush1.msra.mxu0 0.0
  %6463 = vmatprep.subr.mxu0 0.0
  %6464 = vmatpush1.msra.mxu0 0.0
  %6465 = vmatprep.subr.mxu0 0.0
  %6466 = vmatpush1.msra.mxu0 0.0
  %6467 = vmatprep.mubr.f32.mxu0 0.0
  %6468 = vmatmul.mubr.f32.gmra.mrb[0].mxu0 %v6223
  %v6469 = vpop.f32.mrb[0].mxu0
  %v6470 = vadd.f32 %v6257, %v6469
  %v6471 = vpop.f32.mrb[0].mxu0
  %6472 = vmatprep.mubr.f32.mxu0 0.0
  %6473 = vmatmul.mubr.f32.gmra.mrb[0].mxu0 %v6224
  %v6474 = vpop.f32.mrb[0].mxu0
  %v6475 = vadd.f32 %v6257, %v6474
  %v6476 = vpop.f32.mrb[0].mxu0
  %6477 = vmatprep.mubr.f32.mxu0 0.0
  %6478 = vmatmul.mubr.f32.gmra.mrb[0].mxu0 %v6225
  %v6479 = vpop.f32.mrb[0].mxu0
  %v6480 = vadd.f32 %v6257, %v6479
  %v6481 = vpop.f32.mrb[0].mxu0
  %6482 = vmatprep.mubr.f32.mxu0 0.0
  %6483 = vmatmul.mubr.f32.gmra.mrb[0].mxu0 %v6226
  %v6484 = vpop.f32.mrb[0].mxu0
  %v6485 = vadd.f32 %v6257, %v6484
  %v6486 = vpop.f32.mrb[0].mxu0
  %6487 = vmatprep.mubr.f32.mxu0 0.0
  %6488 = vmatmul.mubr.f32.gmra.mrb[0].mxu0 %v6227
  %v6489 = vpop.f32.mrb[0].mxu0
  %v6490 = vadd.f32 %v6257, %v6489
  %v6491 = vpop.f32.mrb[0].mxu0
  %6492 = vmatprep.mubr.f32.mxu0 0.0
  %6493 = vmatmul.mubr.f32.gmra.mrb[0].mxu0 %v6228
  %v6494 = vpop.f32.mrb[0].mxu0
  %v6495 = vadd.f32 %v6257, %v6494
  %v6496 = vpop.f32.mrb[0].mxu0
  %6497 = vmatprep.mubr.f32.mxu0 0.0
  %6498 = vmatmul.mubr.f32.gmra.mrb[0].mxu0 %v6229
  %v6499 = vpop.f32.mrb[0].mxu0
  %v6500 = vadd.f32 %v6257, %v6499
  %v6501 = vpop.f32.mrb[0].mxu0
  %6502 = vmatprep.mubr.f32.mxu0 0.0
  %6503 = vmatmul.mubr.f32.gmra.mrb[0].mxu0 %v6230
  %v6504 = vpop.f32.mrb[0].mxu0
  %v6505 = vadd.f32 %v6257, %v6504
  %v6506 = vpop.f32.mrb[0].mxu0
  %6507 = vmatprep.mubr.f32.mxu0 0.0
  %6508 = vmatmul.mubr.f32.gmra.mrb[0].mxu0 %v6231
  %v6509 = vpop.f32.mrb[0].mxu0
  %v6510 = vadd.f32 %v6257, %v6509
  %v6511 = vpop.f32.mrb[0].mxu0
  %6512 = vmatprep.mubr.f32.mxu0 0.0
  %6513 = vmatmul.mubr.f32.gmra.mrb[0].mxu0 %v6232
  %v6514 = vpop.f32.mrb[0].mxu0
  %v6515 = vadd.f32 %v6257, %v6514
  %v6516 = vpop.f32.mrb[0].mxu0
  %6517 = vmatprep.mubr.f32.mxu0 0.0
  %6518 = vmatmul.mubr.f32.gmra.mrb[0].mxu0 %v6233
  %v6519 = vpop.f32.mrb[0].mxu0
  %v6520 = vadd.f32 %v6257, %v6519
  %v6521 = vpop.f32.mrb[0].mxu0
  %6522 = vmatprep.mubr.f32.mxu0 0.0
  %6523 = vmatmul.mubr.f32.gmra.mrb[0].mxu0 %v6234
  %v6524 = vpop.f32.mrb[0].mxu0
  %v6525 = vadd.f32 %v6257, %v6524
  %v6526 = vpop.f32.mrb[0].mxu0
  %6527 = vmatprep.mubr.f32.mxu0 0.0
  %6528 = vmatmul.mubr.f32.gmra.mrb[0].mxu0 %v6235
  %v6529 = vpop.f32.mrb[0].mxu0
  %v6530 = vadd.f32 %v6257, %v6529
  %v6531 = vpop.f32.mrb[0].mxu0
  %6532 = vmatprep.mubr.f32.mxu0 0.0
  %6533 = vmatmul.mubr.f32.gmra.mrb[0].mxu0 %v6236
  %v6534 = vpop.f32.mrb[0].mxu0
  %v6535 = vadd.f32 %v6257, %v6534
  %v6536 = vpop.f32.mrb[0].mxu0
  %6537 = vmatprep.mubr.f32.mxu0 0.0
  %6538 = vmatmul.mubr.f32.gmra.mrb[0].mxu0 %v6237
  %v6539 = vpop.f32.mrb[0].mxu0
  %v6540 = vadd.f32 %v6257, %v6539
  %v6541 = vpop.f32.mrb[0].mxu0
  %6542 = vmatprep.mubr.f32.mxu0 0.0
  %6543 = vmatmul.mubr.f32.gmra.mrb[0].mxu0 %v6238
  %v6544 = vpop.f32.mrb[0].mxu0
  %v6545 = vadd.f32 %v6257, %v6544
  %v6546 = vpop.f32.mrb[0].mxu0
  %6547 = vdwg.mxu0
  %v6548 = vmul.f32 %v6325, %v6470
  %v6549 = vmul.f32 %v6330, %v6475
  %v6550 = vmul.f32 %v6335, %v6480
  %v6551 = vmul.f32 %v6340, %v6485
  %v6552 = vmul.f32 %v6345, %v6490
  %v6553 = vmul.f32 %v6350, %v6495
  %v6554 = vmul.f32 %v6355, %v6500
  %v6555 = vmul.f32 %v6360, %v6505
  %v6556 = vmul.f32 %v6365, %v6510
  %v6557 = vmul.f32 %v6370, %v6515
  %v6558 = vmul.f32 %v6375, %v6520
  %v6559 = vmul.f32 %v6380, %v6525
  %v6560 = vmul.f32 %v6385, %v6530
  %v6561 = vmul.f32 %v6390, %v6535
  %v6562 = vmul.f32 %v6395, %v6540
  %v6563 = vmul.f32 %v6400, %v6545
  %vm6564 = vcmask 7168
  %6565 = vst.msk [vmem:[%s13] sm:$0xff] %vm6564, %v6548
  %6566 = vst.msk [vmem:[%s13 + $0x8] sm:$0xff] %vm6564, %v6549
  %6567 = vst.msk [vmem:[%s13 + $0x10] sm:$0xff] %vm6564, %v6550
  %6568 = vst.msk [vmem:[%s13 + $0x18] sm:$0xff] %vm6564, %v6551
  %6569 = vst.msk [vmem:[%s13 + $0x20] sm:$0xff] %vm6564, %v6552
  %6570 = vst.msk [vmem:[%s13 + $0x28] sm:$0xff] %vm6564, %v6553
  %6571 = vst.msk [vmem:[%s13 + $0x30] sm:$0xff] %vm6564, %v6554
  %6572 = vst.msk [vmem:[%s13 + $0x38] sm:$0xff] %vm6564, %v6555
  %6573 = vst.msk [vmem:[%s13 + $0x40] sm:$0xff] %vm6564, %v6556
  %6574 = vst.msk [vmem:[%s13 + $0x48] sm:$0xff] %vm6564, %v6557
  %6575 = vst.msk [vmem:[%s13 + $0x50] sm:$0xff] %vm6564, %v6558
  %6576 = vst.msk [vmem:[%s13 + $0x58] sm:$0xff] %vm6564, %v6559
  %6577 = vst.msk [vmem:[%s13 + $0x60] sm:$0xff] %vm6564, %v6560
  %6578 = vst.msk [vmem:[%s13 + $0x68] sm:$0xff] %vm6564, %v6561
  %6579 = vst.msk [vmem:[%s13 + $0x70] sm:$0xff] %vm6564, %v6562
  %6580 = vst.msk [vmem:[%s13 + $0x78] sm:$0xff] %vm6564, %v6563
  // Predicated region
  $region54: #{gnn_bet_forward.1} parent=0 // pred_check
    _
  $region55: #{gnn_bet_forward.1} parent=0 // pred_check_branch
    %6582 = sbr.rel (0) target = $region57
  $region56: #{gnn_bet_forward.1} parent=0 // pred_region
    _
  $region57: #{gnn_bet_forward.1} parent=0 // pred_fallthru
    _
  // Predicated region
  $region58: #{gnn_bet_forward.1} parent=0 // pred_check
    _
  $region59: #{gnn_bet_forward.1} parent=0 // pred_check_branch
    %6584 = sbr.rel (0) target = $region61
  $region60: #{gnn_bet_forward.1} parent=0 // pred_region
    _
  $region61: #{gnn_bet_forward.1} parent=0 // pred_fallthru
    _

</llo_original>
